<compile_context>
chip_gen: v7x
topology: tpu7x:2x2x1
jax: 0.10.0
libtpu: 0.0.40
codegen_flags: <defaults>
</compile_context>

<pallas_src>
import functools

import numpy as np
import jax
import jax.numpy as jnp
from jax.experimental import pallas as pl
from jax.experimental.pallas import tpu as pltpu

# ----------------------------- config (matches the module) -------------------
FEAT_CH = 256                     # hardcoded 256 in Corrector.__init__
NUM_PATCHES = 4
PATCH_CH = NUM_PATCHES + 1        # 5
SEGM_CH = PATCH_CH + 2            # fine(5)+coarse(2)=7 ; also the fused head Cout
HIDDEN = 32                       # cfg.MODEL.SEMI.COR.CONV_HEAD_DIM
KSIZE = 3                         # cfg.MODEL.SEMI.COR.CONV_HEAD_KERNEL
N_STACKED = 4                     # cfg.MODEL.SEMI.COR.NUM_STACKED_CONVS
DECONV_K = 4                      # cfg.MODEL.ROI_DENSEPOSE_HEAD.DECONV_KERNEL
UP_SCALE = 2                      # cfg.MODEL.ROI_DENSEPOSE_HEAD.UP_SCALE
IN_CH = FEAT_CH + 2 + PATCH_CH + 1    # 264
INTER_CH = HIDDEN // 2            # NonLocalBlock inter_channels = 16
BN_EPS = 1e-5

# Polyphase decomposition of ConvTranspose2d(k=4, stride=2, padding=1):
#   output parity -> ((window offset into the zero-padded input, kernel tap), ..)
_DECONV_TAPS = {0: ((0, 3), (1, 1)), 1: ((1, 2), (2, 0))}
_PHASES = ((0, 0), (0, 1), (1, 0), (1, 1))
_X0 = 8   # sublane offset of the image inside the padded VMEM scratch (aligned)


# ----------------------------- the fused Pallas kernel -----------------------
def _corrector_kernel(feat_ref, segm_ref, r8_ref,
                      w1_ref, b1_ref, w234_ref, b234_ref,
                      wtpg_ref, btpg_ref, wz_ref, bz_ref,
                      wdec_ref, bdec_ref, cup_ref,
                      o_ref, pad_ref, *, H, W):
    f32 = jnp.float32
    HW = H * W
    PW = pad_ref.shape[1]          # W + 16
    CMAX = pad_ref.shape[2]        # IN_CH

    # ---- zero the halo of the padded activation scratch (aligned stores) ----
    pad_ref[0:1, :, :] = jnp.zeros((1, PW, CMAX), f32)
    pad_ref[H + 1:H + 2, :, :] = jnp.zeros((1, PW, CMAX), f32)
    pad_ref[:, 0:_X0, :] = jnp.zeros((H + 2, _X0, CMAX), f32)
    pad_ref[:, _X0 + W:_X0 + W + 8, :] = jnp.zeros((H + 2, 8, CMAX), f32)

    def write_act(act2d, cin):
        # image interior lives at rows [1, H], sublanes [_X0, _X0 + W)  (aligned)
        pad_ref[1:H + 1, _X0:_X0 + W, :cin] = act2d.reshape(H, W, cin)

    def im2col(offsets, cin):
        # window for offset (dr, dc): rows [dr, dr+H), sublanes [_X0-1+dc, ..+W)
        taps = [pad_ref[dr:dr + H, _X0 - 1 + dc:_X0 - 1 + dc + W, :cin].astype(f32)
                for dr, dc in offsets]
        return jnp.concatenate(taps, axis=-1).reshape(HW, len(offsets) * cin)

    # ---- preprocessing (the torch.no_grad block): bilinear resize of the segm
    #      logits to (H, W) as ONE matmul, channel softmaxes, entropy ----------
    seg = jnp.dot(r8_ref[...].astype(f32), segm_ref[0].astype(f32),
                  preferred_element_type=f32)                       # [HW, 7]
    fine = seg[:, :PATCH_CH]
    coarse = seg[:, PATCH_CH:SEGM_CH]

    mf = jnp.max(fine, axis=-1, keepdims=True)
    ef = jnp.exp(fine - mf)
    sf = jnp.sum(ef, axis=-1, keepdims=True)
    p = ef / sf                                                     # softmax(fine)
    logp = (fine - mf) - jnp.log(sf)                                # log_softmax
    ent = jnp.sum(-p * logp, axis=-1, keepdims=True)                # [HW, 1]

    mc = jnp.max(coarse, axis=-1, keepdims=True)
    ec = jnp.exp(coarse - mc)
    cs = ec / jnp.sum(ec, axis=-1, keepdims=True)                   # softmax(coarse)

    # cat((features, coarse_segm, p, entropy), dim=1) == lane-axis concat (NHWC)
    x = jnp.concatenate([feat_ref[0].astype(f32), cs, p, ent], axis=-1)  # [HW, 264]

    # ---- stacked 3x3 convs (+ReLU); non-local block after conv #2 -----------
    conv_offs = [(ky, kx) for ky in range(KSIZE) for kx in range(KSIZE)]

    write_act(x, IN_CH)
    act = jnp.dot(im2col(conv_offs, IN_CH), w1_ref[...].astype(f32),
                  preferred_element_type=f32) + b1_ref[...].astype(f32)
    act = jnp.maximum(act, 0.0)                                     # [HW, 32]

    def nonlocal_block(xin):                                        # xin: [HW, 32]
        # fused theta/phi/g 1x1 convs: one [HW,32]@[32,48] matmul
        tpg = jnp.dot(xin, wtpg_ref[...].astype(f32),
                      preferred_element_type=f32) + btpg_ref[...].astype(f32)
        theta = tpg[:, :INTER_CH]
        phi = tpg[:, INTER_CH:2 * INTER_CH]
        g = tpg[:, 2 * INTER_CH:3 * INTER_CH]
        f = jnp.dot(theta, phi.T, preferred_element_type=f32)       # [HW, HW]
        # reference: F.softmax(f, dim=1) on [B, HW_q, HW_k]  ->  normalize over
        # the query axis, i.e. axis 0 of the per-batch [HW, HW] matrix.
        fm = jnp.max(f, axis=0, keepdims=True)
        fe = jnp.exp(f - fm)
        f_div_c = fe / jnp.sum(fe, axis=0, keepdims=True)
        y = jnp.dot(f_div_c, g, preferred_element_type=f32)         # [HW, 16]
        # W_z (1x1 conv with eval-mode BN folded in) + residual
        wy = jnp.dot(y, wz_ref[...].astype(f32),
                     preferred_element_type=f32) + bz_ref[...].astype(f32)
        return wy + xin

    for layer in range(1, N_STACKED):
        if layer == N_STACKED // 2:
            act = nonlocal_block(act)
        write_act(act, HIDDEN)
        act = jnp.dot(im2col(conv_offs, HIDDEN), w234_ref[layer - 1].astype(f32),
                      preferred_element_type=f32) + b234_ref[layer - 1].astype(f32)
        act = jnp.maximum(act, 0.0)

    # ---- fused predictor: the 3 ConvTranspose2d heads (Cout=1+1+5) done as 4
    #      polyphase stride-1 convs; phase interleave + 2x bilinear up-sample
    #      folded into a single precomputed matmul. -----------------------------
    write_act(act, HIDDEN)
    ys = []
    for p_idx, (r, s) in enumerate(_PHASES):
        offs = [(dr, dc) for dr, _ in _DECONV_TAPS[r] for dc, _ in _DECONV_TAPS[s]]
        ys.append(jnp.dot(im2col(offs, HIDDEN), wdec_ref[p_idx].astype(f32),
                          preferred_element_type=f32) + bdec_ref[...].astype(f32))
    y_all = jnp.concatenate(ys, axis=0)                             # [4*HW, 7]
    out = jnp.dot(cup_ref[...].astype(f32), y_all,
                  preferred_element_type=f32)                       # [(4H*4W), 7]
    oh = 2 * UP_SCALE * H
    ow = 2 * UP_SCALE * W
    o_ref[...] = out.reshape(1, oh, ow, SEGM_CH).astype(o_ref.dtype)


# ----------------------------- interpolation operators -----------------------
def _bilinear_matrix(in_size, out_size):
    """Row-stochastic matrix of F.interpolate(mode='bilinear', align_corners=False)."""
    scale = in_size / out_size
    o = np.arange(out_size)
    src = np.maximum(scale * (o + 0.5) - 0.5, 0.0)
    i0 = np.minimum(np.floor(src).astype(np.int64), in_size - 1)
    i1 = np.minimum(i0 + 1, in_size - 1)
    frac = (src - i0).astype(np.float32)
    a = np.zeros((out_size, in_size), np.float32)
    a[np.arange(out_size), i0] += (1.0 - frac)
    a[np.arange(out_size), i1] += frac
    return a


# ----------------------------- forward wrapper --------------------------------
def corrector_forward(params, features_dp, fine_segm, coarse_segm):
    """features_dp: [N,256,H,W]; fine_segm: [N,5,hs,ws]; coarse_segm: [N,2,hs,ws].
    Returns NCHW: coarse_segm [N,1,4H,4W], fine_segm [N,1,4H,4W], sigma [N,5,4H,4W]."""
    N, fc, H, W = features_dp.shape
    assert fc == FEAT_CH
    hs, ws = fine_segm.shape[-2:]
    HW = H * W
    OH, OW = 2 * UP_SCALE * H, 2 * UP_SCALE * W

    # ---- tiny layout glue (KB-sized XLA ops at the kernel boundary) ----
    feat2d = jnp.transpose(features_dp, (0, 2, 3, 1)).reshape(N, HW, FEAT_CH)
    segm = jnp.concatenate([fine_segm, coarse_segm], axis=1)               # [N,7,hs,ws]
    segm2d = jnp.transpose(segm, (0, 2, 3, 1)).reshape(N, hs * ws, SEGM_CH)

    # ---- constant interpolation operators (numpy at trace time) ----
    a_h = _bilinear_matrix(hs, H)                                          # [H, hs]
    a_w = _bilinear_matrix(ws, W)                                          # [W, ws]
    r8 = np.einsum('ph,qw->pqhw', a_h, a_w).reshape(HW, hs * ws).astype(np.float32)

    a_uh = _bilinear_matrix(2 * H, OH)                                     # [4H, 2H]
    a_uw = _bilinear_matrix(2 * W, OW)                                     # [4W, 2W]
    c_blocks = []
    for (r, s) in _PHASES:   # fold deconv-phase interleave + 2x resize into one op
        c_blocks.append(np.einsum('um,vn->uvmn', a_uh[:, r::2], a_uw[:, s::2])
                        .reshape(OH * OW, HW))
    c_up = np.concatenate(c_blocks, axis=1).astype(np.float32)             # [16HW, 4HW]

    # ---- weight preprocessing into matmul-ready layouts ----
    def conv_mat(w):            # [Cout, Cin, K, K] -> [K*K*Cin, Cout]  (im2col order)
        co, ci, kh, kw = w.shape
        return jnp.transpose(w, (2, 3, 1, 0)).reshape(kh * kw * ci, co)

    def conv1x1_mat(w):         # [Cout, Cin, 1, 1] -> [Cin, Cout]
        return jnp.transpose(w[:, :, 0, 0], (1, 0))

    w1 = conv_mat(params["convs"][0][0])                                   # [2376, 32]
    b1 = params["convs"][0][1].reshape(1, HIDDEN)
    w234 = jnp.stack([conv_mat(params["convs"][i][0]) for i in range(1, N_STACKED)])
    b234 = jnp.stack([params["convs"][i][1].reshape(1, HIDDEN)
                      for i in range(1, N_STACKED)])

    wtpg = jnp.concatenate([conv1x1_mat(params["nl_theta_w"]),
                            conv1x1_mat(params["nl_phi_w"]),
                            conv1x1_mat(params["nl_g_w"])], axis=1)        # [32, 48]
    btpg = jnp.concatenate([params["nl_theta_b"], params["nl_phi_b"],
                            params["nl_g_b"]]).reshape(1, 3 * INTER_CH)
    # W_z = Conv1x1 + BatchNorm2d (eval); fold the BN into the conv.
    scale = params["nl_bn_gamma"] / jnp.sqrt(params["nl_bn_var"] + BN_EPS)
    wz = conv1x1_mat(params["nl_wz_w"] * scale[:, None, None, None])       # [16, 32]
    bz = ((params["nl_wz_b"] - params["nl_bn_mean"]) * scale
          + params["nl_bn_beta"]).reshape(1, HIDDEN)

    # three deconv heads fused along Cout: channels = [coarse(1), fine(1), sigma(5)]
    wc = jnp.concatenate([params["ann_w"], params["segm_w"], params["sigma_w"]],
                         axis=1)                                           # [32, 7, 4, 4]
    bdec = jnp.concatenate([params["ann_b"], params["segm_b"],
                            params["sigma_b"]]).reshape(1, SEGM_CH)
    wdec = jnp.stack([
        jnp.concatenate([wc[:, :, ky, kx]
                         for _, ky in _DECONV_TAPS[r] for _, kx in _DECONV_TAPS[s]],
                        axis=0)
        for (r, s) in _PHASES])                                            # [4, 128, 7]

    kernel = functools.partial(_corrector_kernel, H=H, W=W)
    out_nhwc = pl.pallas_call(
        kernel,
        out_shape=jax.ShapeDtypeStruct((N, OH, OW, SEGM_CH), jnp.float32),
        grid=(N,),
        in_specs=[
            pl.BlockSpec((1, HW, FEAT_CH), lambda n: (n, 0, 0)),
            pl.BlockSpec((1, hs * ws, SEGM_CH), lambda n: (n, 0, 0)),
            pl.BlockSpec((HW, hs * ws), lambda n: (0, 0)),
            pl.BlockSpec((KSIZE * KSIZE * IN_CH, HIDDEN), lambda n: (0, 0)),
            pl.BlockSpec((1, HIDDEN), lambda n: (0, 0)),
            pl.BlockSpec((N_STACKED - 1, KSIZE * KSIZE * HIDDEN, HIDDEN),
                         lambda n: (0, 0, 0)),
            pl.BlockSpec((N_STACKED - 1, 1, HIDDEN), lambda n: (0, 0, 0)),
            pl.BlockSpec((HIDDEN, 3 * INTER_CH), lambda n: (0, 0)),
            pl.BlockSpec((1, 3 * INTER_CH), lambda n: (0, 0)),
            pl.BlockSpec((INTER_CH, HIDDEN), lambda n: (0, 0)),
            pl.BlockSpec((1, HIDDEN), lambda n: (0, 0)),
            pl.BlockSpec((len(_PHASES), 4 * HIDDEN, SEGM_CH), lambda n: (0, 0, 0)),
            pl.BlockSpec((1, SEGM_CH), lambda n: (0, 0)),
            pl.BlockSpec((OH * OW, 4 * HW), lambda n: (0, 0)),
        ],
        out_specs=pl.BlockSpec((1, OH, OW, SEGM_CH), lambda n: (n, 0, 0, 0)),
        scratch_shapes=[pltpu.VMEM((H + 2, W + 16, IN_CH), jnp.float32)],
        compiler_params=pltpu.CompilerParams(
            # batch elements are fully independent -> both TensorCores on v7x
            dimension_semantics=("parallel",),
        ),
    )(feat2d, segm2d, jnp.asarray(r8), w1, b1, w234, b234,
      wtpg, btpg, wz, bz, wdec, bdec, jnp.asarray(c_up))

    out_nchw = jnp.transpose(out_nhwc, (0, 3, 1, 2))
    return {"coarse_segm": out_nchw[:, 0:1],
            "fine_segm": out_nchw[:, 1:2],
            "sigma": out_nchw[:, 2:2 + PATCH_CH]}


# ----------------------------- deterministic parameter init ------------------
def init_params(key):
    def msra(k, shape):
        fan_in = int(np.prod(shape[1:]))
        return jax.random.normal(k, shape, jnp.float32) * np.sqrt(2.0 / fan_in)

    keys = jax.random.split(key, 16)
    params = {}
    convs = []
    n_ch = IN_CH
    for i in range(N_STACKED):
        w = msra(keys[i], (HIDDEN, n_ch, KSIZE, KSIZE))
        b = jnp.zeros((HIDDEN,), jnp.float32)
        convs.append((w, b))
        n_ch = HIDDEN
    params["convs"] = convs

    params["nl_g_w"] = msra(keys[4], (INTER_CH, HIDDEN, 1, 1))
    params["nl_g_b"] = jnp.zeros((INTER_CH,), jnp.float32)
    params["nl_theta_w"] = msra(keys[5], (INTER_CH, HIDDEN, 1, 1))
    params["nl_theta_b"] = jnp.zeros((INTER_CH,), jnp.float32)
    params["nl_phi_w"] = msra(keys[6], (INTER_CH, HIDDEN, 1, 1))
    params["nl_phi_b"] = jnp.zeros((INTER_CH,), jnp.float32)
    params["nl_wz_w"] = msra(keys[7], (HIDDEN, INTER_CH, 1, 1))
    params["nl_wz_b"] = jnp.zeros((HIDDEN,), jnp.float32)
    # NOTE: the module initializes BN gamma of W_z to 0 (identity block at init);
    # use gamma=1 here so the attention path is exercised numerically.
    params["nl_bn_gamma"] = jnp.ones((HIDDEN,), jnp.float32)
    params["nl_bn_beta"] = jnp.zeros((HIDDEN,), jnp.float32)
    params["nl_bn_mean"] = jnp.zeros((HIDDEN,), jnp.float32)
    params["nl_bn_var"] = jnp.ones((HIDDEN,), jnp.float32)

    # ConvTranspose2d weights: [Cin, Cout, K, K]
    params["ann_w"] = msra(keys[8], (HIDDEN, 1, DECONV_K, DECONV_K))
    params["ann_b"] = jnp.zeros((1,), jnp.float32)
    params["segm_w"] = msra(keys[9], (HIDDEN, 1, DECONV_K, DECONV_K))
    params["segm_b"] = jnp.zeros((1,), jnp.float32)
    params["sigma_w"] = msra(keys[10], (HIDDEN, PATCH_CH, DECONV_K, DECONV_K))
    params["sigma_b"] = jnp.zeros((PATCH_CH,), jnp.float32)
    return params


# ----------------------------- main -------------------------------------------
if __name__ == "__main__":
    key = jax.random.PRNGKey(0)
    kp, k1, k2, k3 = jax.random.split(key, 4)
    params = init_params(kp)

    N, H, W = 2, 8, 8
    features_dp = jax.random.normal(k1, (N, FEAT_CH, H, W), jnp.float32)
    fine_segm = jax.random.normal(k2, (N, PATCH_CH, 16, 16), jnp.float32)
    coarse_segm = jax.random.normal(k3, (N, 2, 16, 16), jnp.float32)

    fwd = jax.jit(corrector_forward)
    out = fwd(params, features_dp, fine_segm, coarse_segm)
    jax.block_until_ready(out)

    OH, OW = 2 * H * UP_SCALE, 2 * W * UP_SCALE
    assert out["coarse_segm"].shape == (N, 1, OH, OW)
    assert out["fine_segm"].shape == (N, 1, OH, OW)
    assert out["sigma"].shape == (N, PATCH_CH, OH, OW)
    assert all(bool(jnp.all(jnp.isfinite(v))) for v in out.values())
    print("KERNEL_OK")
</pallas_src>

<mosaic_0001>
module attributes {stable_mosaic.version = 11 : i64} {
  func.func @_corrector_kernel(%arg0: i32, %arg1: memref<1x64x256xf32, #tpu.memory_space<vmem>>, %arg2: memref<1x256x7xf32, #tpu.memory_space<vmem>>, %arg3: memref<64x256xf32, #tpu.memory_space<vmem>>, %arg4: memref<2376x32xf32, #tpu.memory_space<vmem>>, %arg5: memref<1x32xf32, #tpu.memory_space<vmem>>, %arg6: memref<3x288x32xf32, #tpu.memory_space<vmem>>, %arg7: memref<3x1x32xf32, #tpu.memory_space<vmem>>, %arg8: memref<32x48xf32, #tpu.memory_space<vmem>>, %arg9: memref<1x48xf32, #tpu.memory_space<vmem>>, %arg10: memref<16x32xf32, #tpu.memory_space<vmem>>, %arg11: memref<1x32xf32, #tpu.memory_space<vmem>>, %arg12: memref<4x128x7xf32, #tpu.memory_space<vmem>>, %arg13: memref<1x7xf32, #tpu.memory_space<vmem>>, %arg14: memref<1024x256xf32, #tpu.memory_space<vmem>>, %arg15: memref<1x32x32x7xf32, #tpu.memory_space<vmem>>, %arg16: memref<10x24x264xf32, #tpu.memory_space<vmem>>) attributes {dimension_semantics = [#tpu.dimension_semantics<parallel>], iteration_bounds = array<i64: 2>, scalar_prefetch = 0 : i64, scratch_operands = 1 : i64, tpu.core_type = #tpu.core_type<tc>, window_params = [{transform_indices = @transform_0, window_bounds = array<i64: 1, 64, 256>}, {transform_indices = @transform_1, window_bounds = array<i64: 1, 256, 7>}, {pipeline_mode = #tpu.pipeline_mode<synchronous>, transform_indices = @transform_2, window_bounds = array<i64: 64, 256>}, {pipeline_mode = #tpu.pipeline_mode<synchronous>, transform_indices = @transform_3, window_bounds = array<i64: 2376, 32>}, {pipeline_mode = #tpu.pipeline_mode<synchronous>, transform_indices = @transform_4, window_bounds = array<i64: 1, 32>}, {pipeline_mode = #tpu.pipeline_mode<synchronous>, transform_indices = @transform_5, window_bounds = array<i64: 3, 288, 32>}, {pipeline_mode = #tpu.pipeline_mode<synchronous>, transform_indices = @transform_6, window_bounds = array<i64: 3, 1, 32>}, {pipeline_mode = #tpu.pipeline_mode<synchronous>, transform_indices = @transform_7, window_bounds = array<i64: 32, 48>}, {pipeline_mode = #tpu.pipeline_mode<synchronous>, transform_indices = @transform_8, window_bounds = array<i64: 1, 48>}, {pipeline_mode = #tpu.pipeline_mode<synchronous>, transform_indices = @transform_9, window_bounds = array<i64: 16, 32>}, {pipeline_mode = #tpu.pipeline_mode<synchronous>, transform_indices = @transform_10, window_bounds = array<i64: 1, 32>}, {pipeline_mode = #tpu.pipeline_mode<synchronous>, transform_indices = @transform_11, window_bounds = array<i64: 4, 128, 7>}, {pipeline_mode = #tpu.pipeline_mode<synchronous>, transform_indices = @transform_12, window_bounds = array<i64: 1, 7>}, {pipeline_mode = #tpu.pipeline_mode<synchronous>, transform_indices = @transform_13, window_bounds = array<i64: 1024, 256>}, {transform_indices = @transform_14, window_bounds = array<i64: 1, 32, 32, 7>}]} {
    %cst = arith.constant 0.000000e+00 : f32
    %0 = vector.broadcast %cst : f32 to vector<1x24x264xf32>
    %c0 = arith.constant 0 : index
    %c0_0 = arith.constant 0 : index
    %c0_1 = arith.constant 0 : index
    %1 = vector.load %arg16[%c0, %c0_0, %c0_1] : memref<10x24x264xf32, #tpu.memory_space<vmem>>, vector<1x24x264xf32>
    tpu.vector_store %arg16[%c0, %c0_0, %c0_1], %0 {strides = array<i32>} : memref<10x24x264xf32, #tpu.memory_space<vmem>>, vector<1x24x264xf32>,
    %cst_2 = arith.constant 0.000000e+00 : f32
    %2 = vector.broadcast %cst_2 : f32 to vector<1x24x264xf32>
    %c9 = arith.constant 9 : index
    %c0_3 = arith.constant 0 : index
    %c0_4 = arith.constant 0 : index
    %3 = vector.load %arg16[%c9, %c0_3, %c0_4] : memref<10x24x264xf32, #tpu.memory_space<vmem>>, vector<1x24x264xf32>
    tpu.vector_store %arg16[%c9, %c0_3, %c0_4], %2 {strides = array<i32>} : memref<10x24x264xf32, #tpu.memory_space<vmem>>, vector<1x24x264xf32>,
    %cst_5 = arith.constant 0.000000e+00 : f32
    %4 = vector.broadcast %cst_5 : f32 to vector<10x8x264xf32>
    %c0_6 = arith.constant 0 : index
    %c0_7 = arith.constant 0 : index
    %c0_8 = arith.constant 0 : index
    %5 = vector.load %arg16[%c0_6, %c0_7, %c0_8] : memref<10x24x264xf32, #tpu.memory_space<vmem>>, vector<10x8x264xf32>
    tpu.vector_store %arg16[%c0_6, %c0_7, %c0_8], %4 {strides = array<i32>} : memref<10x24x264xf32, #tpu.memory_space<vmem>>, vector<10x8x264xf32>,
    %cst_9 = arith.constant 0.000000e+00 : f32
    %6 = vector.broadcast %cst_9 : f32 to vector<10x8x264xf32>
    %c0_10 = arith.constant 0 : index
    %c16 = arith.constant 16 : index
    %c0_11 = arith.constant 0 : index
    %7 = vector.load %arg16[%c0_10, %c16, %c0_11] : memref<10x24x264xf32, #tpu.memory_space<vmem>>, vector<10x8x264xf32>
    tpu.vector_store %arg16[%c0_10, %c16, %c0_11], %6 {strides = array<i32>} : memref<10x24x264xf32, #tpu.memory_space<vmem>>, vector<10x8x264xf32>,
    %c0_12 = arith.constant 0 : index
    %c0_13 = arith.constant 0 : index
    %8 = vector.load %arg3[%c0_12, %c0_13] : memref<64x256xf32, #tpu.memory_space<vmem>>, vector<64x256xf32>
    %c0_14 = arith.constant 0 : index
    %c0_15 = arith.constant 0 : index
    %c0_16 = arith.constant 0 : index
    %9 = vector.load %arg2[%c0_14, %c0_15, %c0_16] : memref<1x256x7xf32, #tpu.memory_space<vmem>>, vector<1x256x7xf32>
    %10 = vector.shape_cast %9 : vector<1x256x7xf32> to vector<256x7xf32>
    %cst_17 = arith.constant dense<0.000000e+00> : vector<64x7xf32>
    %11 = tpu.matmul %8, %10, %cst_17 {dimension_numbers = #tpu.dot_dimension_numbers<[1], [0], [0], [1], [0, 0, 1, 1], [], []>} : vector<64x256xf32>, vector<256x7xf32>, vector<64x7xf32> -> vector<64x7xf32>
    %12 = vector.extract_strided_slice %11 {offsets = [0, 0], sizes = [64, 5], strides = [1, 1]} : vector<64x7xf32> to vector<64x5xf32>
    %13 = vector.extract_strided_slice %11 {offsets = [0, 5], sizes = [64, 2], strides = [1, 1]} : vector<64x7xf32> to vector<64x2xf32>
    %cst_18 = arith.constant dense<0xFF800000> : vector<64xf32>
    %14 = vector.multi_reduction <maximumf>, %12, %cst_18 [1] : vector<64x5xf32> to vector<64xf32>
    %15 = vector.shape_cast %14 : vector<64xf32> to vector<64x1xf32>
    %16 = vector.broadcast %15 : vector<64x1xf32> to vector<64x5xf32>
    %17 = arith.subf %12, %16 : vector<64x5xf32>
    %18 = math.exp %17 : vector<64x5xf32>
    %cst_19 = arith.constant dense<0.000000e+00> : vector<64xf32>
    %19 = vector.multi_reduction <add>, %18, %cst_19 [1] : vector<64x5xf32> to vector<64xf32>
    %20 = vector.shape_cast %19 : vector<64xf32> to vector<64x1xf32>
    %21 = vector.broadcast %20 : vector<64x1xf32> to vector<64x5xf32>
    %22 = arith.divf %18, %21 : vector<64x5xf32>
    %23 = vector.broadcast %15 : vector<64x1xf32> to vector<64x5xf32>
    %24 = arith.subf %12, %23 : vector<64x5xf32>
    %25 = math.log %20 : vector<64x1xf32>
    %26 = vector.broadcast %25 : vector<64x1xf32> to vector<64x5xf32>
    %27 = arith.subf %24, %26 : vector<64x5xf32>
    %cst_20 = arith.constant 0.000000e+00 : f32
    %28 = vector.broadcast %cst_20 : f32 to vector<64x5xf32>
    %29 = arith.subf %28, %22 : vector<64x5xf32>
    %30 = arith.mulf %29, %27 : vector<64x5xf32>
    %cst_21 = arith.constant dense<0.000000e+00> : vector<64xf32>
    %31 = vector.multi_reduction <add>, %30, %cst_21 [1] : vector<64x5xf32> to vector<64xf32>
    %32 = vector.shape_cast %31 : vector<64xf32> to vector<64x1xf32>
    %cst_22 = arith.constant dense<0xFF800000> : vector<64xf32>
    %33 = vector.multi_reduction <maximumf>, %13, %cst_22 [1] : vector<64x2xf32> to vector<64xf32>
    %34 = vector.shape_cast %33 : vector<64xf32> to vector<64x1xf32>
    %35 = vector.broadcast %34 : vector<64x1xf32> to vector<64x2xf32>
    %36 = arith.subf %13, %35 : vector<64x2xf32>
    %37 = math.exp %36 : vector<64x2xf32>
    %cst_23 = arith.constant dense<0.000000e+00> : vector<64xf32>
    %38 = vector.multi_reduction <add>, %37, %cst_23 [1] : vector<64x2xf32> to vector<64xf32>
    %39 = vector.shape_cast %38 : vector<64xf32> to vector<64x1xf32>
    %40 = vector.broadcast %39 : vector<64x1xf32> to vector<64x2xf32>
    %41 = arith.divf %37, %40 : vector<64x2xf32>
    %c0_24 = arith.constant 0 : index
    %c0_25 = arith.constant 0 : index
    %c0_26 = arith.constant 0 : index
    %42 = vector.load %arg1[%c0_24, %c0_25, %c0_26] : memref<1x64x256xf32, #tpu.memory_space<vmem>>, vector<1x64x256xf32>
    %43 = vector.shape_cast %42 : vector<1x64x256xf32> to vector<64x256xf32>
    %44 = tpu.concatenate %43, %41, %22, %32 in 1 : vector<64x256xf32>, vector<64x2xf32>, vector<64x5xf32>, vector<64x1xf32> -> vector<64x264xf32>
    %45 = vector.shape_cast %44 : vector<64x264xf32> to vector<8x8x264xf32>
    %c1 = arith.constant 1 : index
    %c8 = arith.constant 8 : index
    %c0_27 = arith.constant 0 : index
    %46 = vector.load %arg16[%c1, %c8, %c0_27] : memref<10x24x264xf32, #tpu.memory_space<vmem>>, vector<8x8x264xf32>
    tpu.vector_store %arg16[%c1, %c8, %c0_27], %45 {strides = array<i32>} : memref<10x24x264xf32, #tpu.memory_space<vmem>>, vector<8x8x264xf32>,
    %c0_28 = arith.constant 0 : index
    %c7 = arith.constant 7 : index
    %c0_29 = arith.constant 0 : index
    %47 = vector.load %arg16[%c0_28, %c7, %c0_29] : memref<10x24x264xf32, #tpu.memory_space<vmem>>, vector<8x8x264xf32>
    %c0_30 = arith.constant 0 : index
    %c8_31 = arith.constant 8 : index
    %c0_32 = arith.constant 0 : index
    %48 = vector.load %arg16[%c0_30, %c8_31, %c0_32] : memref<10x24x264xf32, #tpu.memory_space<vmem>>, vector<8x8x264xf32>
    %c0_33 = arith.constant 0 : index
    %c9_34 = arith.constant 9 : index
    %c0_35 = arith.constant 0 : index
    %49 = vector.load %arg16[%c0_33, %c9_34, %c0_35] : memref<10x24x264xf32, #tpu.memory_space<vmem>>, vector<8x8x264xf32>
    %c1_36 = arith.constant 1 : index
    %c7_37 = arith.constant 7 : index
    %c0_38 = arith.constant 0 : index
    %50 = vector.load %arg16[%c1_36, %c7_37, %c0_38] : memref<10x24x264xf32, #tpu.memory_space<vmem>>, vector<8x8x264xf32>
    %c1_39 = arith.constant 1 : index
    %c8_40 = arith.constant 8 : index
    %c0_41 = arith.constant 0 : index
    %51 = vector.load %arg16[%c1_39, %c8_40, %c0_41] : memref<10x24x264xf32, #tpu.memory_space<vmem>>, vector<8x8x264xf32>
    %c1_42 = arith.constant 1 : index
    %c9_43 = arith.constant 9 : index
    %c0_44 = arith.constant 0 : index
    %52 = vector.load %arg16[%c1_42, %c9_43, %c0_44] : memref<10x24x264xf32, #tpu.memory_space<vmem>>, vector<8x8x264xf32>
    %c2 = arith.constant 2 : index
    %c7_45 = arith.constant 7 : index
    %c0_46 = arith.constant 0 : index
    %53 = vector.load %arg16[%c2, %c7_45, %c0_46] : memref<10x24x264xf32, #tpu.memory_space<vmem>>, vector<8x8x264xf32>
    %c2_47 = arith.constant 2 : index
    %c8_48 = arith.constant 8 : index
    %c0_49 = arith.constant 0 : index
    %54 = vector.load %arg16[%c2_47, %c8_48, %c0_49] : memref<10x24x264xf32, #tpu.memory_space<vmem>>, vector<8x8x264xf32>
    %c2_50 = arith.constant 2 : index
    %c9_51 = arith.constant 9 : index
    %c0_52 = arith.constant 0 : index
    %55 = vector.load %arg16[%c2_50, %c9_51, %c0_52] : memref<10x24x264xf32, #tpu.memory_space<vmem>>, vector<8x8x264xf32>
    %56 = tpu.concatenate %47, %48, %49, %50, %51, %52, %53, %54, %55 in 2 : vector<8x8x264xf32>, vector<8x8x264xf32>, vector<8x8x264xf32>, vector<8x8x264xf32>, vector<8x8x264xf32>, vector<8x8x264xf32>, vector<8x8x264xf32>, vector<8x8x264xf32>, vector<8x8x264xf32> -> vector<8x8x2376xf32>
    %57 = vector.shape_cast %56 : vector<8x8x2376xf32> to vector<64x2376xf32>
    %c0_53 = arith.constant 0 : index
    %c0_54 = arith.constant 0 : index
    %58 = vector.load %arg4[%c0_53, %c0_54] : memref<2376x32xf32, #tpu.memory_space<vmem>>, vector<2376x32xf32>
    %cst_55 = arith.constant dense<0.000000e+00> : vector<64x32xf32>
    %59 = tpu.matmul %57, %58, %cst_55 {dimension_numbers = #tpu.dot_dimension_numbers<[1], [0], [0], [1], [0, 0, 1, 1], [], []>} : vector<64x2376xf32>, vector<2376x32xf32>, vector<64x32xf32> -> vector<64x32xf32>
    %c0_56 = arith.constant 0 : index
    %c0_57 = arith.constant 0 : index
    %60 = vector.load %arg5[%c0_56, %c0_57] : memref<1x32xf32, #tpu.memory_space<vmem>>, vector<1x32xf32>
    %61 = vector.broadcast %60 : vector<1x32xf32> to vector<64x32xf32>
    %62 = arith.addf %59, %61 : vector<64x32xf32>
    %cst_58 = arith.constant 0.000000e+00 : f32
    %63 = vector.broadcast %cst_58 : f32 to vector<64x32xf32>
    %64 = arith.maximumf %62, %63 : vector<64x32xf32>
    %65 = vector.shape_cast %64 : vector<64x32xf32> to vector<8x8x32xf32>
    %c1_59 = arith.constant 1 : index
    %c8_60 = arith.constant 8 : index
    %c0_61 = arith.constant 0 : index
    %66 = vector.load %arg16[%c1_59, %c8_60, %c0_61] : memref<10x24x264xf32, #tpu.memory_space<vmem>>, vector<8x8x32xf32>
    tpu.vector_store %arg16[%c1_59, %c8_60, %c0_61], %65 {strides = array<i32>} : memref<10x24x264xf32, #tpu.memory_space<vmem>>, vector<8x8x32xf32>,
    %c0_62 = arith.constant 0 : index
    %c7_63 = arith.constant 7 : index
    %c0_64 = arith.constant 0 : index
    %67 = vector.load %arg16[%c0_62, %c7_63, %c0_64] : memref<10x24x264xf32, #tpu.memory_space<vmem>>, vector<8x8x32xf32>
    %c0_65 = arith.constant 0 : index
    %c8_66 = arith.constant 8 : index
    %c0_67 = arith.constant 0 : index
    %68 = vector.load %arg16[%c0_65, %c8_66, %c0_67] : memref<10x24x264xf32, #tpu.memory_space<vmem>>, vector<8x8x32xf32>
    %c0_68 = arith.constant 0 : index
    %c9_69 = arith.constant 9 : index
    %c0_70 = arith.constant 0 : index
    %69 = vector.load %arg16[%c0_68, %c9_69, %c0_70] : memref<10x24x264xf32, #tpu.memory_space<vmem>>, vector<8x8x32xf32>
    %c1_71 = arith.constant 1 : index
    %c7_72 = arith.constant 7 : index
    %c0_73 = arith.constant 0 : index
    %70 = vector.load %arg16[%c1_71, %c7_72, %c0_73] : memref<10x24x264xf32, #tpu.memory_space<vmem>>, vector<8x8x32xf32>
    %c1_74 = arith.constant 1 : index
    %c8_75 = arith.constant 8 : index
    %c0_76 = arith.constant 0 : index
    %71 = vector.load %arg16[%c1_74, %c8_75, %c0_76] : memref<10x24x264xf32, #tpu.memory_space<vmem>>, vector<8x8x32xf32>
    %c1_77 = arith.constant 1 : index
    %c9_78 = arith.constant 9 : index
    %c0_79 = arith.constant 0 : index
    %72 = vector.load %arg16[%c1_77, %c9_78, %c0_79] : memref<10x24x264xf32, #tpu.memory_space<vmem>>, vector<8x8x32xf32>
    %c2_80 = arith.constant 2 : index
    %c7_81 = arith.constant 7 : index
    %c0_82 = arith.constant 0 : index
    %73 = vector.load %arg16[%c2_80, %c7_81, %c0_82] : memref<10x24x264xf32, #tpu.memory_space<vmem>>, vector<8x8x32xf32>
    %c2_83 = arith.constant 2 : index
    %c8_84 = arith.constant 8 : index
    %c0_85 = arith.constant 0 : index
    %74 = vector.load %arg16[%c2_83, %c8_84, %c0_85] : memref<10x24x264xf32, #tpu.memory_space<vmem>>, vector<8x8x32xf32>
    %c2_86 = arith.constant 2 : index
    %c9_87 = arith.constant 9 : index
    %c0_88 = arith.constant 0 : index
    %75 = vector.load %arg16[%c2_86, %c9_87, %c0_88] : memref<10x24x264xf32, #tpu.memory_space<vmem>>, vector<8x8x32xf32>
    %76 = tpu.concatenate %67, %68, %69, %70, %71, %72, %73, %74, %75 in 2 : vector<8x8x32xf32>, vector<8x8x32xf32>, vector<8x8x32xf32>, vector<8x8x32xf32>, vector<8x8x32xf32>, vector<8x8x32xf32>, vector<8x8x32xf32>, vector<8x8x32xf32>, vector<8x8x32xf32> -> vector<8x8x288xf32>
    %77 = vector.shape_cast %76 : vector<8x8x288xf32> to vector<64x288xf32>
    %c0_89 = arith.constant 0 : index
    %c0_90 = arith.constant 0 : index
    %c0_91 = arith.constant 0 : index
    %78 = vector.load %arg6[%c0_89, %c0_90, %c0_91] : memref<3x288x32xf32, #tpu.memory_space<vmem>>, vector<1x288x32xf32>
    %79 = vector.shape_cast %78 : vector<1x288x32xf32> to vector<288x32xf32>
    %cst_92 = arith.constant dense<0.000000e+00> : vector<64x32xf32>
    %80 = tpu.matmul %77, %79, %cst_92 {dimension_numbers = #tpu.dot_dimension_numbers<[1], [0], [0], [1], [0, 0, 1, 1], [], []>} : vector<64x288xf32>, vector<288x32xf32>, vector<64x32xf32> -> vector<64x32xf32>
    %c0_93 = arith.constant 0 : index
    %c0_94 = arith.constant 0 : index
    %c0_95 = arith.constant 0 : index
    %81 = vector.load %arg7[%c0_93, %c0_94, %c0_95] : memref<3x1x32xf32, #tpu.memory_space<vmem>>, vector<1x1x32xf32>
    %82 = vector.shape_cast %81 : vector<1x1x32xf32> to vector<1x32xf32>
    %83 = vector.broadcast %82 : vector<1x32xf32> to vector<64x32xf32>
    %84 = arith.addf %80, %83 : vector<64x32xf32>
    %cst_96 = arith.constant 0.000000e+00 : f32
    %85 = vector.broadcast %cst_96 : f32 to vector<64x32xf32>
    %86 = arith.maximumf %84, %85 : vector<64x32xf32>
    %c0_97 = arith.constant 0 : index
    %c0_98 = arith.constant 0 : index
    %87 = vector.load %arg8[%c0_97, %c0_98] : memref<32x48xf32, #tpu.memory_space<vmem>>, vector<32x48xf32>
    %cst_99 = arith.constant dense<0.000000e+00> : vector<64x48xf32>
    %88 = tpu.matmul %86, %87, %cst_99 {dimension_numbers = #tpu.dot_dimension_numbers<[1], [0], [0], [1], [0, 0, 1, 1], [], []>} : vector<64x32xf32>, vector<32x48xf32>, vector<64x48xf32> -> vector<64x48xf32>
    %c0_100 = arith.constant 0 : index
    %c0_101 = arith.constant 0 : index
    %89 = vector.load %arg9[%c0_100, %c0_101] : memref<1x48xf32, #tpu.memory_space<vmem>>, vector<1x48xf32>
    %90 = vector.broadcast %89 : vector<1x48xf32> to vector<64x48xf32>
    %91 = arith.addf %88, %90 : vector<64x48xf32>
    %92 = vector.extract_strided_slice %91 {offsets = [0, 0], sizes = [64, 16], strides = [1, 1]} : vector<64x48xf32> to vector<64x16xf32>
    %93 = vector.extract_strided_slice %91 {offsets = [0, 16], sizes = [64, 16], strides = [1, 1]} : vector<64x48xf32> to vector<64x16xf32>
    %94 = vector.extract_strided_slice %91 {offsets = [0, 32], sizes = [64, 16], strides = [1, 1]} : vector<64x48xf32> to vector<64x16xf32>
    %95 = tpu.transpose %93, [1, 0] : vector<64x16xf32> -> vector<16x64xf32>
    %cst_102 = arith.constant dense<0.000000e+00> : vector<64x64xf32>
    %96 = tpu.matmul %92, %95, %cst_102 {dimension_numbers = #tpu.dot_dimension_numbers<[1], [0], [0], [1], [0, 0, 1, 1], [], []>} : vector<64x16xf32>, vector<16x64xf32>, vector<64x64xf32> -> vector<64x64xf32>
    %cst_103 = arith.constant dense<0xFF800000> : vector<64xf32>
    %97 = vector.multi_reduction <maximumf>, %96, %cst_103 [0] : vector<64x64xf32> to vector<64xf32>
    %98 = vector.shape_cast %97 : vector<64xf32> to vector<1x64xf32>
    %99 = vector.broadcast %98 : vector<1x64xf32> to vector<64x64xf32>
    %100 = arith.subf %96, %99 : vector<64x64xf32>
    %101 = math.exp %100 : vector<64x64xf32>
    %cst_104 = arith.constant dense<0.000000e+00> : vector<64xf32>
    %102 = vector.multi_reduction <add>, %101, %cst_104 [0] : vector<64x64xf32> to vector<64xf32>
    %103 = vector.shape_cast %102 : vector<64xf32> to vector<1x64xf32>
    %104 = vector.broadcast %103 : vector<1x64xf32> to vector<64x64xf32>
    %105 = arith.divf %101, %104 : vector<64x64xf32>
    %cst_105 = arith.constant dense<0.000000e+00> : vector<64x16xf32>
    %106 = tpu.matmul %105, %94, %cst_105 {dimension_numbers = #tpu.dot_dimension_numbers<[1], [0], [0], [1], [0, 0, 1, 1], [], []>} : vector<64x64xf32>, vector<64x16xf32>, vector<64x16xf32> -> vector<64x16xf32>
    %c0_106 = arith.constant 0 : index
    %c0_107 = arith.constant 0 : index
    %107 = vector.load %arg10[%c0_106, %c0_107] : memref<16x32xf32, #tpu.memory_space<vmem>>, vector<16x32xf32>
    %cst_108 = arith.constant dense<0.000000e+00> : vector<64x32xf32>
    %108 = tpu.matmul %106, %107, %cst_108 {dimension_numbers = #tpu.dot_dimension_numbers<[1], [0], [0], [1], [0, 0, 1, 1], [], []>} : vector<64x16xf32>, vector<16x32xf32>, vector<64x32xf32> -> vector<64x32xf32>
    %c0_109 = arith.constant 0 : index
    %c0_110 = arith.constant 0 : index
    %109 = vector.load %arg11[%c0_109, %c0_110] : memref<1x32xf32, #tpu.memory_space<vmem>>, vector<1x32xf32>
    %110 = vector.broadcast %109 : vector<1x32xf32> to vector<64x32xf32>
    %111 = arith.addf %108, %110 : vector<64x32xf32>
    %112 = arith.addf %111, %86 : vector<64x32xf32>
    %113 = vector.shape_cast %112 : vector<64x32xf32> to vector<8x8x32xf32>
    %c1_111 = arith.constant 1 : index
    %c8_112 = arith.constant 8 : index
    %c0_113 = arith.constant 0 : index
    %114 = vector.load %arg16[%c1_111, %c8_112, %c0_113] : memref<10x24x264xf32, #tpu.memory_space<vmem>>, vector<8x8x32xf32>
    tpu.vector_store %arg16[%c1_111, %c8_112, %c0_113], %113 {strides = array<i32>} : memref<10x24x264xf32, #tpu.memory_space<vmem>>, vector<8x8x32xf32>,
    %c0_114 = arith.constant 0 : index
    %c7_115 = arith.constant 7 : index
    %c0_116 = arith.constant 0 : index
    %115 = vector.load %arg16[%c0_114, %c7_115, %c0_116] : memref<10x24x264xf32, #tpu.memory_space<vmem>>, vector<8x8x32xf32>
    %c0_117 = arith.constant 0 : index
    %c8_118 = arith.constant 8 : index
    %c0_119 = arith.constant 0 : index
    %116 = vector.load %arg16[%c0_117, %c8_118, %c0_119] : memref<10x24x264xf32, #tpu.memory_space<vmem>>, vector<8x8x32xf32>
    %c0_120 = arith.constant 0 : index
    %c9_121 = arith.constant 9 : index
    %c0_122 = arith.constant 0 : index
    %117 = vector.load %arg16[%c0_120, %c9_121, %c0_122] : memref<10x24x264xf32, #tpu.memory_space<vmem>>, vector<8x8x32xf32>
    %c1_123 = arith.constant 1 : index
    %c7_124 = arith.constant 7 : index
    %c0_125 = arith.constant 0 : index
    %118 = vector.load %arg16[%c1_123, %c7_124, %c0_125] : memref<10x24x264xf32, #tpu.memory_space<vmem>>, vector<8x8x32xf32>
    %c1_126 = arith.constant 1 : index
    %c8_127 = arith.constant 8 : index
    %c0_128 = arith.constant 0 : index
    %119 = vector.load %arg16[%c1_126, %c8_127, %c0_128] : memref<10x24x264xf32, #tpu.memory_space<vmem>>, vector<8x8x32xf32>
    %c1_129 = arith.constant 1 : index
    %c9_130 = arith.constant 9 : index
    %c0_131 = arith.constant 0 : index
    %120 = vector.load %arg16[%c1_129, %c9_130, %c0_131] : memref<10x24x264xf32, #tpu.memory_space<vmem>>, vector<8x8x32xf32>
    %c2_132 = arith.constant 2 : index
    %c7_133 = arith.constant 7 : index
    %c0_134 = arith.constant 0 : index
    %121 = vector.load %arg16[%c2_132, %c7_133, %c0_134] : memref<10x24x264xf32, #tpu.memory_space<vmem>>, vector<8x8x32xf32>
    %c2_135 = arith.constant 2 : index
    %c8_136 = arith.constant 8 : index
    %c0_137 = arith.constant 0 : index
    %122 = vector.load %arg16[%c2_135, %c8_136, %c0_137] : memref<10x24x264xf32, #tpu.memory_space<vmem>>, vector<8x8x32xf32>
    %c2_138 = arith.constant 2 : index
    %c9_139 = arith.constant 9 : index
    %c0_140 = arith.constant 0 : index
    %123 = vector.load %arg16[%c2_138, %c9_139, %c0_140] : memref<10x24x264xf32, #tpu.memory_space<vmem>>, vector<8x8x32xf32>
    %124 = tpu.concatenate %115, %116, %117, %118, %119, %120, %121, %122, %123 in 2 : vector<8x8x32xf32>, vector<8x8x32xf32>, vector<8x8x32xf32>, vector<8x8x32xf32>, vector<8x8x32xf32>, vector<8x8x32xf32>, vector<8x8x32xf32>, vector<8x8x32xf32>, vector<8x8x32xf32> -> vector<8x8x288xf32>
    %125 = vector.shape_cast %124 : vector<8x8x288xf32> to vector<64x288xf32>
    %c1_141 = arith.constant 1 : index
    %c0_142 = arith.constant 0 : index
    %c0_143 = arith.constant 0 : index
    %126 = vector.load %arg6[%c1_141, %c0_142, %c0_143] : memref<3x288x32xf32, #tpu.memory_space<vmem>>, vector<1x288x32xf32>
    %127 = vector.shape_cast %126 : vector<1x288x32xf32> to vector<288x32xf32>
    %cst_144 = arith.constant dense<0.000000e+00> : vector<64x32xf32>
    %128 = tpu.matmul %125, %127, %cst_144 {dimension_numbers = #tpu.dot_dimension_numbers<[1], [0], [0], [1], [0, 0, 1, 1], [], []>} : vector<64x288xf32>, vector<288x32xf32>, vector<64x32xf32> -> vector<64x32xf32>
    %c1_145 = arith.constant 1 : index
    %c0_146 = arith.constant 0 : index
    %c0_147 = arith.constant 0 : index
    %129 = vector.load %arg7[%c1_145, %c0_146, %c0_147] : memref<3x1x32xf32, #tpu.memory_space<vmem>>, vector<1x1x32xf32>
    %130 = vector.shape_cast %129 : vector<1x1x32xf32> to vector<1x32xf32>
    %131 = vector.broadcast %130 : vector<1x32xf32> to vector<64x32xf32>
    %132 = arith.addf %128, %131 : vector<64x32xf32>
    %cst_148 = arith.constant 0.000000e+00 : f32
    %133 = vector.broadcast %cst_148 : f32 to vector<64x32xf32>
    %134 = arith.maximumf %132, %133 : vector<64x32xf32>
    %135 = vector.shape_cast %134 : vector<64x32xf32> to vector<8x8x32xf32>
    %c1_149 = arith.constant 1 : index
    %c8_150 = arith.constant 8 : index
    %c0_151 = arith.constant 0 : index
    %136 = vector.load %arg16[%c1_149, %c8_150, %c0_151] : memref<10x24x264xf32, #tpu.memory_space<vmem>>, vector<8x8x32xf32>
    tpu.vector_store %arg16[%c1_149, %c8_150, %c0_151], %135 {strides = array<i32>} : memref<10x24x264xf32, #tpu.memory_space<vmem>>, vector<8x8x32xf32>,
    %c0_152 = arith.constant 0 : index
    %c7_153 = arith.constant 7 : index
    %c0_154 = arith.constant 0 : index
    %137 = vector.load %arg16[%c0_152, %c7_153, %c0_154] : memref<10x24x264xf32, #tpu.memory_space<vmem>>, vector<8x8x32xf32>
    %c0_155 = arith.constant 0 : index
    %c8_156 = arith.constant 8 : index
    %c0_157 = arith.constant 0 : index
    %138 = vector.load %arg16[%c0_155, %c8_156, %c0_157] : memref<10x24x264xf32, #tpu.memory_space<vmem>>, vector<8x8x32xf32>
    %c0_158 = arith.constant 0 : index
    %c9_159 = arith.constant 9 : index
    %c0_160 = arith.constant 0 : index
    %139 = vector.load %arg16[%c0_158, %c9_159, %c0_160] : memref<10x24x264xf32, #tpu.memory_space<vmem>>, vector<8x8x32xf32>
    %c1_161 = arith.constant 1 : index
    %c7_162 = arith.constant 7 : index
    %c0_163 = arith.constant 0 : index
    %140 = vector.load %arg16[%c1_161, %c7_162, %c0_163] : memref<10x24x264xf32, #tpu.memory_space<vmem>>, vector<8x8x32xf32>
    %c1_164 = arith.constant 1 : index
    %c8_165 = arith.constant 8 : index
    %c0_166 = arith.constant 0 : index
    %141 = vector.load %arg16[%c1_164, %c8_165, %c0_166] : memref<10x24x264xf32, #tpu.memory_space<vmem>>, vector<8x8x32xf32>
    %c1_167 = arith.constant 1 : index
    %c9_168 = arith.constant 9 : index
    %c0_169 = arith.constant 0 : index
    %142 = vector.load %arg16[%c1_167, %c9_168, %c0_169] : memref<10x24x264xf32, #tpu.memory_space<vmem>>, vector<8x8x32xf32>
    %c2_170 = arith.constant 2 : index
    %c7_171 = arith.constant 7 : index
    %c0_172 = arith.constant 0 : index
    %143 = vector.load %arg16[%c2_170, %c7_171, %c0_172] : memref<10x24x264xf32, #tpu.memory_space<vmem>>, vector<8x8x32xf32>
    %c2_173 = arith.constant 2 : index
    %c8_174 = arith.constant 8 : index
    %c0_175 = arith.constant 0 : index
    %144 = vector.load %arg16[%c2_173, %c8_174, %c0_175] : memref<10x24x264xf32, #tpu.memory_space<vmem>>, vector<8x8x32xf32>
    %c2_176 = arith.constant 2 : index
    %c9_177 = arith.constant 9 : index
    %c0_178 = arith.constant 0 : index
    %145 = vector.load %arg16[%c2_176, %c9_177, %c0_178] : memref<10x24x264xf32, #tpu.memory_space<vmem>>, vector<8x8x32xf32>
    %146 = tpu.concatenate %137, %138, %139, %140, %141, %142, %143, %144, %145 in 2 : vector<8x8x32xf32>, vector<8x8x32xf32>, vector<8x8x32xf32>, vector<8x8x32xf32>, vector<8x8x32xf32>, vector<8x8x32xf32>, vector<8x8x32xf32>, vector<8x8x32xf32>, vector<8x8x32xf32> -> vector<8x8x288xf32>
    %147 = vector.shape_cast %146 : vector<8x8x288xf32> to vector<64x288xf32>
    %c2_179 = arith.constant 2 : index
    %c0_180 = arith.constant 0 : index
    %c0_181 = arith.constant 0 : index
    %148 = vector.load %arg6[%c2_179, %c0_180, %c0_181] : memref<3x288x32xf32, #tpu.memory_space<vmem>>, vector<1x288x32xf32>
    %149 = vector.shape_cast %148 : vector<1x288x32xf32> to vector<288x32xf32>
    %cst_182 = arith.constant dense<0.000000e+00> : vector<64x32xf32>
    %150 = tpu.matmul %147, %149, %cst_182 {dimension_numbers = #tpu.dot_dimension_numbers<[1], [0], [0], [1], [0, 0, 1, 1], [], []>} : vector<64x288xf32>, vector<288x32xf32>, vector<64x32xf32> -> vector<64x32xf32>
    %c2_183 = arith.constant 2 : index
    %c0_184 = arith.constant 0 : index
    %c0_185 = arith.constant 0 : index
    %151 = vector.load %arg7[%c2_183, %c0_184, %c0_185] : memref<3x1x32xf32, #tpu.memory_space<vmem>>, vector<1x1x32xf32>
    %152 = vector.shape_cast %151 : vector<1x1x32xf32> to vector<1x32xf32>
    %153 = vector.broadcast %152 : vector<1x32xf32> to vector<64x32xf32>
    %154 = arith.addf %150, %153 : vector<64x32xf32>
    %cst_186 = arith.constant 0.000000e+00 : f32
    %155 = vector.broadcast %cst_186 : f32 to vector<64x32xf32>
    %156 = arith.maximumf %154, %155 : vector<64x32xf32>
    %157 = vector.shape_cast %156 : vector<64x32xf32> to vector<8x8x32xf32>
    %c1_187 = arith.constant 1 : index
    %c8_188 = arith.constant 8 : index
    %c0_189 = arith.constant 0 : index
    %158 = vector.load %arg16[%c1_187, %c8_188, %c0_189] : memref<10x24x264xf32, #tpu.memory_space<vmem>>, vector<8x8x32xf32>
    tpu.vector_store %arg16[%c1_187, %c8_188, %c0_189], %157 {strides = array<i32>} : memref<10x24x264xf32, #tpu.memory_space<vmem>>, vector<8x8x32xf32>,
    %c0_190 = arith.constant 0 : index
    %c7_191 = arith.constant 7 : index
    %c0_192 = arith.constant 0 : index
    %159 = vector.load %arg16[%c0_190, %c7_191, %c0_192] : memref<10x24x264xf32, #tpu.memory_space<vmem>>, vector<8x8x32xf32>
    %c0_193 = arith.constant 0 : index
    %c8_194 = arith.constant 8 : index
    %c0_195 = arith.constant 0 : index
    %160 = vector.load %arg16[%c0_193, %c8_194, %c0_195] : memref<10x24x264xf32, #tpu.memory_space<vmem>>, vector<8x8x32xf32>
    %c1_196 = arith.constant 1 : index
    %c7_197 = arith.constant 7 : index
    %c0_198 = arith.constant 0 : index
    %161 = vector.load %arg16[%c1_196, %c7_197, %c0_198] : memref<10x24x264xf32, #tpu.memory_space<vmem>>, vector<8x8x32xf32>
    %c1_199 = arith.constant 1 : index
    %c8_200 = arith.constant 8 : index
    %c0_201 = arith.constant 0 : index
    %162 = vector.load %arg16[%c1_199, %c8_200, %c0_201] : memref<10x24x264xf32, #tpu.memory_space<vmem>>, vector<8x8x32xf32>
    %163 = tpu.concatenate %159, %160, %161, %162 in 2 : vector<8x8x32xf32>, vector<8x8x32xf32>, vector<8x8x32xf32>, vector<8x8x32xf32> -> vector<8x8x128xf32>
    %164 = vector.shape_cast %163 : vector<8x8x128xf32> to vector<64x128xf32>
    %c0_202 = arith.constant 0 : index
    %c0_203 = arith.constant 0 : index
    %c0_204 = arith.constant 0 : index
    %165 = vector.load %arg12[%c0_202, %c0_203, %c0_204] : memref<4x128x7xf32, #tpu.memory_space<vmem>>, vector<1x128x7xf32>
    %166 = vector.shape_cast %165 : vector<1x128x7xf32> to vector<128x7xf32>
    %cst_205 = arith.constant dense<0.000000e+00> : vector<64x7xf32>
    %167 = tpu.matmul %164, %166, %cst_205 {dimension_numbers = #tpu.dot_dimension_numbers<[1], [0], [0], [1], [0, 0, 1, 1], [], []>} : vector<64x128xf32>, vector<128x7xf32>, vector<64x7xf32> -> vector<64x7xf32>
    %c0_206 = arith.constant 0 : index
    %c0_207 = arith.constant 0 : index
    %168 = vector.load %arg13[%c0_206, %c0_207] : memref<1x7xf32, #tpu.memory_space<vmem>>, vector<1x7xf32>
    %169 = vector.broadcast %168 : vector<1x7xf32> to vector<64x7xf32>
    %170 = arith.addf %167, %169 : vector<64x7xf32>
    %c0_208 = arith.constant 0 : index
    %c8_209 = arith.constant 8 : index
    %c0_210 = arith.constant 0 : index
    %171 = vector.load %arg16[%c0_208, %c8_209, %c0_210] : memref<10x24x264xf32, #tpu.memory_space<vmem>>, vector<8x8x32xf32>
    %c0_211 = arith.constant 0 : index
    %c9_212 = arith.constant 9 : index
    %c0_213 = arith.constant 0 : index
    %172 = vector.load %arg16[%c0_211, %c9_212, %c0_213] : memref<10x24x264xf32, #tpu.memory_space<vmem>>, vector<8x8x32xf32>
    %c1_214 = arith.constant 1 : index
    %c8_215 = arith.constant 8 : index
    %c0_216 = arith.constant 0 : index
    %173 = vector.load %arg16[%c1_214, %c8_215, %c0_216] : memref<10x24x264xf32, #tpu.memory_space<vmem>>, vector<8x8x32xf32>
    %c1_217 = arith.constant 1 : index
    %c9_218 = arith.constant 9 : index
    %c0_219 = arith.constant 0 : index
    %174 = vector.load %arg16[%c1_217, %c9_218, %c0_219] : memref<10x24x264xf32, #tpu.memory_space<vmem>>, vector<8x8x32xf32>
    %175 = tpu.concatenate %171, %172, %173, %174 in 2 : vector<8x8x32xf32>, vector<8x8x32xf32>, vector<8x8x32xf32>, vector<8x8x32xf32> -> vector<8x8x128xf32>
    %176 = vector.shape_cast %175 : vector<8x8x128xf32> to vector<64x128xf32>
    %c1_220 = arith.constant 1 : index
    %c0_221 = arith.constant 0 : index
    %c0_222 = arith.constant 0 : index
    %177 = vector.load %arg12[%c1_220, %c0_221, %c0_222] : memref<4x128x7xf32, #tpu.memory_space<vmem>>, vector<1x128x7xf32>
    %178 = vector.shape_cast %177 : vector<1x128x7xf32> to vector<128x7xf32>
    %cst_223 = arith.constant dense<0.000000e+00> : vector<64x7xf32>
    %179 = tpu.matmul %176, %178, %cst_223 {dimension_numbers = #tpu.dot_dimension_numbers<[1], [0], [0], [1], [0, 0, 1, 1], [], []>} : vector<64x128xf32>, vector<128x7xf32>, vector<64x7xf32> -> vector<64x7xf32>
    %c0_224 = arith.constant 0 : index
    %c0_225 = arith.constant 0 : index
    %180 = vector.load %arg13[%c0_224, %c0_225] : memref<1x7xf32, #tpu.memory_space<vmem>>, vector<1x7xf32>
    %181 = vector.broadcast %180 : vector<1x7xf32> to vector<64x7xf32>
    %182 = arith.addf %179, %181 : vector<64x7xf32>
    %c1_226 = arith.constant 1 : index
    %c7_227 = arith.constant 7 : index
    %c0_228 = arith.constant 0 : index
    %183 = vector.load %arg16[%c1_226, %c7_227, %c0_228] : memref<10x24x264xf32, #tpu.memory_space<vmem>>, vector<8x8x32xf32>
    %c1_229 = arith.constant 1 : index
    %c8_230 = arith.constant 8 : index
    %c0_231 = arith.constant 0 : index
    %184 = vector.load %arg16[%c1_229, %c8_230, %c0_231] : memref<10x24x264xf32, #tpu.memory_space<vmem>>, vector<8x8x32xf32>
    %c2_232 = arith.constant 2 : index
    %c7_233 = arith.constant 7 : index
    %c0_234 = arith.constant 0 : index
    %185 = vector.load %arg16[%c2_232, %c7_233, %c0_234] : memref<10x24x264xf32, #tpu.memory_space<vmem>>, vector<8x8x32xf32>
    %c2_235 = arith.constant 2 : index
    %c8_236 = arith.constant 8 : index
    %c0_237 = arith.constant 0 : index
    %186 = vector.load %arg16[%c2_235, %c8_236, %c0_237] : memref<10x24x264xf32, #tpu.memory_space<vmem>>, vector<8x8x32xf32>
    %187 = tpu.concatenate %183, %184, %185, %186 in 2 : vector<8x8x32xf32>, vector<8x8x32xf32>, vector<8x8x32xf32>, vector<8x8x32xf32> -> vector<8x8x128xf32>
    %188 = vector.shape_cast %187 : vector<8x8x128xf32> to vector<64x128xf32>
    %c2_238 = arith.constant 2 : index
    %c0_239 = arith.constant 0 : index
    %c0_240 = arith.constant 0 : index
    %189 = vector.load %arg12[%c2_238, %c0_239, %c0_240] : memref<4x128x7xf32, #tpu.memory_space<vmem>>, vector<1x128x7xf32>
    %190 = vector.shape_cast %189 : vector<1x128x7xf32> to vector<128x7xf32>
    %cst_241 = arith.constant dense<0.000000e+00> : vector<64x7xf32>
    %191 = tpu.matmul %188, %190, %cst_241 {dimension_numbers = #tpu.dot_dimension_numbers<[1], [0], [0], [1], [0, 0, 1, 1], [], []>} : vector<64x128xf32>, vector<128x7xf32>, vector<64x7xf32> -> vector<64x7xf32>
    %c0_242 = arith.constant 0 : index
    %c0_243 = arith.constant 0 : index
    %192 = vector.load %arg13[%c0_242, %c0_243] : memref<1x7xf32, #tpu.memory_space<vmem>>, vector<1x7xf32>
    %193 = vector.broadcast %192 : vector<1x7xf32> to vector<64x7xf32>
    %194 = arith.addf %191, %193 : vector<64x7xf32>
    %c1_244 = arith.constant 1 : index
    %c8_245 = arith.constant 8 : index
    %c0_246 = arith.constant 0 : index
    %195 = vector.load %arg16[%c1_244, %c8_245, %c0_246] : memref<10x24x264xf32, #tpu.memory_space<vmem>>, vector<8x8x32xf32>
    %c1_247 = arith.constant 1 : index
    %c9_248 = arith.constant 9 : index
    %c0_249 = arith.constant 0 : index
    %196 = vector.load %arg16[%c1_247, %c9_248, %c0_249] : memref<10x24x264xf32, #tpu.memory_space<vmem>>, vector<8x8x32xf32>
    %c2_250 = arith.constant 2 : index
    %c8_251 = arith.constant 8 : index
    %c0_252 = arith.constant 0 : index
    %197 = vector.load %arg16[%c2_250, %c8_251, %c0_252] : memref<10x24x264xf32, #tpu.memory_space<vmem>>, vector<8x8x32xf32>
    %c2_253 = arith.constant 2 : index
    %c9_254 = arith.constant 9 : index
    %c0_255 = arith.constant 0 : index
    %198 = vector.load %arg16[%c2_253, %c9_254, %c0_255] : memref<10x24x264xf32, #tpu.memory_space<vmem>>, vector<8x8x32xf32>
    %199 = tpu.concatenate %195, %196, %197, %198 in 2 : vector<8x8x32xf32>, vector<8x8x32xf32>, vector<8x8x32xf32>, vector<8x8x32xf32> -> vector<8x8x128xf32>
    %200 = vector.shape_cast %199 : vector<8x8x128xf32> to vector<64x128xf32>
    %c3 = arith.constant 3 : index
    %c0_256 = arith.constant 0 : index
    %c0_257 = arith.constant 0 : index
    %201 = vector.load %arg12[%c3, %c0_256, %c0_257] : memref<4x128x7xf32, #tpu.memory_space<vmem>>, vector<1x128x7xf32>
    %202 = vector.shape_cast %201 : vector<1x128x7xf32> to vector<128x7xf32>
    %cst_258 = arith.constant dense<0.000000e+00> : vector<64x7xf32>
    %203 = tpu.matmul %200, %202, %cst_258 {dimension_numbers = #tpu.dot_dimension_numbers<[1], [0], [0], [1], [0, 0, 1, 1], [], []>} : vector<64x128xf32>, vector<128x7xf32>, vector<64x7xf32> -> vector<64x7xf32>
    %c0_259 = arith.constant 0 : index
    %c0_260 = arith.constant 0 : index
    %204 = vector.load %arg13[%c0_259, %c0_260] : memref<1x7xf32, #tpu.memory_space<vmem>>, vector<1x7xf32>
    %205 = vector.broadcast %204 : vector<1x7xf32> to vector<64x7xf32>
    %206 = arith.addf %203, %205 : vector<64x7xf32>
    %207 = tpu.concatenate %170, %182, %194, %206 in 0 : vector<64x7xf32>, vector<64x7xf32>, vector<64x7xf32>, vector<64x7xf32> -> vector<256x7xf32>
    %c0_261 = arith.constant 0 : index
    %c0_262 = arith.constant 0 : index
    %208 = vector.load %arg14[%c0_261, %c0_262] : memref<1024x256xf32, #tpu.memory_space<vmem>>, vector<1024x256xf32>
    %cst_263 = arith.constant dense<0.000000e+00> : vector<1024x7xf32>
    %209 = tpu.matmul %208, %207, %cst_263 {dimension_numbers = #tpu.dot_dimension_numbers<[1], [0], [0], [1], [0, 0, 1, 1], [], []>} : vector<1024x256xf32>, vector<256x7xf32>, vector<1024x7xf32> -> vector<1024x7xf32>
    %210 = vector.shape_cast %209 : vector<1024x7xf32> to vector<1x32x32x7xf32>
    %c0_264 = arith.constant 0 : index
    %c0_265 = arith.constant 0 : index
    %c0_266 = arith.constant 0 : index
    %c0_267 = arith.constant 0 : index
    %211 = vector.load %arg15[%c0_264, %c0_265, %c0_266, %c0_267] : memref<1x32x32x7xf32, #tpu.memory_space<vmem>>, vector<1x32x32x7xf32>
    tpu.vector_store %arg15[%c0_264, %c0_265, %c0_266, %c0_267], %210 {strides = array<i32>} : memref<1x32x32x7xf32, #tpu.memory_space<vmem>>, vector<1x32x32x7xf32>,
    return
  }
  func.func @transform_0(%arg0: i32) -> (i32, i32, i32) {
    %c0_i32 = arith.constant 0 : i32
    %c0_i32_0 = arith.constant 0 : i32
    %c0_i32_1 = arith.constant 0 : i32
    return %arg0, %c0_i32, %c0_i32_0 : i32, i32, i32
  }
  func.func @transform_1(%arg0: i32) -> (i32, i32, i32) {
    %c0_i32 = arith.constant 0 : i32
    %c0_i32_0 = arith.constant 0 : i32
    %c0_i32_1 = arith.constant 0 : i32
    return %arg0, %c0_i32, %c0_i32_0 : i32, i32, i32
  }
  func.func @transform_2(%arg0: i32) -> (i32, i32) {
    %c0_i32 = arith.constant 0 : i32
    %c0_i32_0 = arith.constant 0 : i32
    %c0_i32_1 = arith.constant 0 : i32
    return %c0_i32, %c0_i32_0 : i32, i32
  }
  func.func @transform_3(%arg0: i32) -> (i32, i32) {
    %c0_i32 = arith.constant 0 : i32
    %c0_i32_0 = arith.constant 0 : i32
    %c0_i32_1 = arith.constant 0 : i32
    return %c0_i32, %c0_i32_0 : i32, i32
  }
  func.func @transform_4(%arg0: i32) -> (i32, i32) {
    %c0_i32 = arith.constant 0 : i32
    %c0_i32_0 = arith.constant 0 : i32
    %c0_i32_1 = arith.constant 0 : i32
    return %c0_i32, %c0_i32_0 : i32, i32
  }
  func.func @transform_5(%arg0: i32) -> (i32, i32, i32) {
    %c0_i32 = arith.constant 0 : i32
    %c0_i32_0 = arith.constant 0 : i32
    %c0_i32_1 = arith.constant 0 : i32
    %c0_i32_2 = arith.constant 0 : i32
    return %c0_i32, %c0_i32_0, %c0_i32_1 : i32, i32, i32
  }
  func.func @transform_6(%arg0: i32) -> (i32, i32, i32) {
    %c0_i32 = arith.constant 0 : i32
    %c0_i32_0 = arith.constant 0 : i32
    %c0_i32_1 = arith.constant 0 : i32
    %c0_i32_2 = arith.constant 0 : i32
    return %c0_i32, %c0_i32_0, %c0_i32_1 : i32, i32, i32
  }
  func.func @transform_7(%arg0: i32) -> (i32, i32) {
    %c0_i32 = arith.constant 0 : i32
    %c0_i32_0 = arith.constant 0 : i32
    %c0_i32_1 = arith.constant 0 : i32
    return %c0_i32, %c0_i32_0 : i32, i32
  }
  func.func @transform_8(%arg0: i32) -> (i32, i32) {
    %c0_i32 = arith.constant 0 : i32
    %c0_i32_0 = arith.constant 0 : i32
    %c0_i32_1 = arith.constant 0 : i32
    return %c0_i32, %c0_i32_0 : i32, i32
  }
  func.func @transform_9(%arg0: i32) -> (i32, i32) {
    %c0_i32 = arith.constant 0 : i32
    %c0_i32_0 = arith.constant 0 : i32
    %c0_i32_1 = arith.constant 0 : i32
    return %c0_i32, %c0_i32_0 : i32, i32
  }
  func.func @transform_10(%arg0: i32) -> (i32, i32) {
    %c0_i32 = arith.constant 0 : i32
    %c0_i32_0 = arith.constant 0 : i32
    %c0_i32_1 = arith.constant 0 : i32
    return %c0_i32, %c0_i32_0 : i32, i32
  }
  func.func @transform_11(%arg0: i32) -> (i32, i32, i32) {
    %c0_i32 = arith.constant 0 : i32
    %c0_i32_0 = arith.constant 0 : i32
    %c0_i32_1 = arith.constant 0 : i32
    %c0_i32_2 = arith.constant 0 : i32
    return %c0_i32, %c0_i32_0, %c0_i32_1 : i32, i32, i32
  }
  func.func @transform_12(%arg0: i32) -> (i32, i32) {
    %c0_i32 = arith.constant 0 : i32
    %c0_i32_0 = arith.constant 0 : i32
    %c0_i32_1 = arith.constant 0 : i32
    return %c0_i32, %c0_i32_0 : i32, i32
  }
  func.func @transform_13(%arg0: i32) -> (i32, i32) {
    %c0_i32 = arith.constant 0 : i32
    %c0_i32_0 = arith.constant 0 : i32
    %c0_i32_1 = arith.constant 0 : i32
    return %c0_i32, %c0_i32_0 : i32, i32
  }
  func.func @transform_14(%arg0: i32) -> (i32, i32, i32, i32) {
    %c0_i32 = arith.constant 0 : i32
    %c0_i32_0 = arith.constant 0 : i32
    %c0_i32_1 = arith.constant 0 : i32
    %c0_i32_2 = arith.constant 0 : i32
    return %arg0, %c0_i32, %c0_i32_0, %c0_i32_1 : i32, i32, i32, i32
  }
}

</mosaic_0001>

<llo_original>
// kernel: corrector_forward.1
$region0: #{corrector_forward.1}
  #allocation0 [shape = 'u32[]', space=smem, size = 0x4, offset = 0x4, fixed_abs, tag = 'smem constant byte address 0x4 - core index']
  #allocation1 [shape = 'u32[144,128]{1,0:T(1,128)}', space=vmem, size = 0x12000, scoped, tag = 'internal scratch']
  #allocation2 [shape = 'f32[10,24,264]{2,1,0:T(8,128)}', space=vmem, size = 0x5a000, scoped, tag = 'scratch operand']
  %s0 = inlined_call_operand.vmem [shape: f32[2,64,256], index: 0, kind: input, shape index: {}]
  %s1 = inlined_call_operand.vmem [shape: f32[2,256,7], index: 1, kind: input, shape index: {}]
  %s2 = inlined_call_operand.vmem [shape: f32[64,256], index: 2, kind: input, shape index: {}]
  %s3 = inlined_call_operand.vmem [shape: f32[2376,32], index: 3, kind: input, shape index: {}]
  %s4 = inlined_call_operand.vmem [shape: f32[1,32], index: 4, kind: input, shape index: {}]
  %s5 = inlined_call_operand.vmem [shape: f32[3,288,32], index: 5, kind: input, shape index: {}]
  %s6 = inlined_call_operand.vmem [shape: f32[3,1,32], index: 6, kind: input, shape index: {}]
  %s7 = inlined_call_operand.vmem [shape: f32[32,48], index: 7, kind: input, shape index: {}]
  %s8 = inlined_call_operand.vmem [shape: f32[1,48], index: 8, kind: input, shape index: {}]
  %s9 = inlined_call_operand.vmem [shape: f32[16,32], index: 9, kind: input, shape index: {}]
  %s10 = inlined_call_operand.vmem [shape: f32[1,32], index: 10, kind: input, shape index: {}]
  %s11 = inlined_call_operand.vmem [shape: f32[4,128,7], index: 11, kind: input, shape index: {}]
  %s12 = inlined_call_operand.vmem [shape: f32[1,7], index: 12, kind: input, shape index: {}]
  %s13 = inlined_call_operand.vmem [shape: f32[1024,256], index: 13, kind: input, shape index: {}]
  %s14 = inlined_call_operand.vmem [shape: f32[2,32,32,7], index: 14, kind: output, shape index: {}]
  %s15 = sld [smem:[#allocation0]]
  $region89: #{corrector_forward.1} parent=0
    _
  %s17 = ssub.s32 1, %s15
  %s18 = scalar_select 0, %s17, %s15
  loop: start=0, step=1, limit=4
  $region2: #{corrector_forward.1} parent=0 // loop_pre_header
    _
  $region3: #{corrector_forward.1} parent=0 // loop_header
    %s20 = sphi 0, %s24
    %p21 = scmp.ge.s32.totalorder %s20, 4
    %s30 = sphi 0, %s32
    %s33 = sphi 0, %s30
    %s34 = sphi 0, %s33
    %s50 = sphi 0, %s34
    %s56 = sphi 0, %s58
    %s59 = sphi 0, %s56
    %s60 = sphi 0, %s59
    %s76 = sphi 0, %s60
    %s80 = sphi 0, %s80
    %s82 = sphi 0, %s80
    %s83 = sphi 0, %s82
    %s97 = sphi 0, %s83
    %s101 = sphi 0, %s101
    %s103 = sphi 0, %s101
    %s104 = sphi 0, %s103
    %s118 = sphi 0, %s104
    %s122 = sphi 0, %s122
    %s124 = sphi 0, %s122
    %s125 = sphi 0, %s124
    %s139 = sphi 0, %s125
    %s143 = sphi 0, %s143
    %s145 = sphi 0, %s143
    %s146 = sphi 0, %s145
    %s160 = sphi 0, %s146
    %s164 = sphi 0, %s164
    %s166 = sphi 0, %s164
    %s167 = sphi 0, %s166
    %s181 = sphi 0, %s167
    %s185 = sphi 0, %s185
    %s187 = sphi 0, %s185
    %s188 = sphi 0, %s187
    %s202 = sphi 0, %s188
    %s206 = sphi 0, %s206
    %s208 = sphi 0, %s206
    %s209 = sphi 0, %s208
    %s223 = sphi 0, %s209
    %s227 = sphi 0, %s227
    %s229 = sphi 0, %s227
    %s230 = sphi 0, %s229
    %s244 = sphi 0, %s230
    %s248 = sphi 0, %s248
    %s250 = sphi 0, %s248
    %s251 = sphi 0, %s250
    %s265 = sphi 0, %s251
    %s269 = sphi 0, %s269
    %s271 = sphi 0, %s269
    %s272 = sphi 0, %s271
    %s286 = sphi 0, %s272
    %s290 = sphi 0, %s290
    %s292 = sphi 0, %s290
    %s293 = sphi 0, %s292
    %s307 = sphi 0, %s293
    %s311 = sphi 0, %s311
    %s313 = sphi 0, %s311
    %s314 = sphi 0, %s313
    %s328 = sphi 0, %s314
    %s334 = sphi 0, %s336
    %s337 = sphi 0, %s334
    %s338 = sphi 0, %s337
    %s354 = sphi 0, %s338
  $region4: #{corrector_forward.1} parent=0 // loop_header_branch
    %23 = sbr.rel (%p21) target = $region8
  $region5: #{corrector_forward.1} parent=0 // loop_body
    %s25 = ssub.s32 %s20, 1
    %s26 = ssub.s32 %s20, 2
    %s27 = sadd.s32 %s20, 1
    %s28 = ssub.s32 %s20, %s27
    %p29 = scmp.eq.s32.totalorder %s28, 0
    %s31 = sadd.s32 %s30, 1
    %s32 = scalar_select %p29, %s30, %s31
    %p35 = pneg %p29
    %p36 = scmp.eq.s32.totalorder %s20, 1
    %p37 = por %p35, %p36
    %p38 = scmp.ne.s32.totalorder %s30, %s33
    %p39 = scmp.eq.s32.totalorder %s20, 0
    %p40 = por %p38, %p39
    %p41 = scmp.ne.s32.totalorder %s30, %s33
    %p42 = scmp.eq.s32.totalorder %s25, 1
    %p43 = por %p41, %p42
    %p44 = scmp.ne.s32.totalorder %s33, %s34
    %p45 = scmp.eq.s32.totalorder %s25, 0
    %p46 = por %p44, %p45
    %p47 = scmp.ne.s32.totalorder %s33, %s34
    %p48 = scmp.eq.s32.totalorder %s26, 1
    %p49 = por %p47, %p48
    %p51 = scmp.ne.s32.totalorder %s34, %s50
    %p52 = scmp.eq.s32.totalorder %s26, 0
    %p53 = por %p51, %p52
    %s54 = ssub.s32 %s20, %s27
    %p55 = scmp.eq.s32.totalorder %s54, 0
    %s57 = sadd.s32 %s56, 1
    %s58 = scalar_select %p55, %s56, %s57
    %p61 = pneg %p55
    %p62 = scmp.eq.s32.totalorder %s20, 1
    %p63 = por %p61, %p62
    %p64 = scmp.ne.s32.totalorder %s56, %s59
    %p65 = scmp.eq.s32.totalorder %s20, 0
    %p66 = por %p64, %p65
    %p67 = scmp.ne.s32.totalorder %s56, %s59
    %p68 = scmp.eq.s32.totalorder %s25, 1
    %p69 = por %p67, %p68
    %p70 = scmp.ne.s32.totalorder %s59, %s60
    %p71 = scmp.eq.s32.totalorder %s25, 0
    %p72 = por %p70, %p71
    %p73 = scmp.ne.s32.totalorder %s59, %s60
    %p74 = scmp.eq.s32.totalorder %s26, 1
    %p75 = por %p73, %p74
    %p77 = scmp.ne.s32.totalorder %s60, %s76
    %p78 = scmp.eq.s32.totalorder %s26, 0
    %p79 = por %p77, %p78
    %s81 = sadd.s32 %s80, 1
    %p84 = scmp.eq.s32.totalorder %s20, 1
    %p85 = scmp.ne.s32.totalorder %s80, %s82
    %p86 = scmp.eq.s32.totalorder %s20, 0
    %p87 = por %p85, %p86
    %p88 = scmp.ne.s32.totalorder %s80, %s82
    %p89 = scmp.eq.s32.totalorder %s25, 1
    %p90 = por %p88, %p89
    %p91 = scmp.ne.s32.totalorder %s82, %s83
    %p92 = scmp.eq.s32.totalorder %s25, 0
    %p93 = por %p91, %p92
    %p94 = scmp.ne.s32.totalorder %s82, %s83
    %p95 = scmp.eq.s32.totalorder %s26, 1
    %p96 = por %p94, %p95
    %p98 = scmp.ne.s32.totalorder %s83, %s97
    %p99 = scmp.eq.s32.totalorder %s26, 0
    %p100 = por %p98, %p99
    %s102 = sadd.s32 %s101, 1
    %p105 = scmp.eq.s32.totalorder %s20, 1
    %p106 = scmp.ne.s32.totalorder %s101, %s103
    %p107 = scmp.eq.s32.totalorder %s20, 0
    %p108 = por %p106, %p107
    %p109 = scmp.ne.s32.totalorder %s101, %s103
    %p110 = scmp.eq.s32.totalorder %s25, 1
    %p111 = por %p109, %p110
    %p112 = scmp.ne.s32.totalorder %s103, %s104
    %p113 = scmp.eq.s32.totalorder %s25, 0
    %p114 = por %p112, %p113
    %p115 = scmp.ne.s32.totalorder %s103, %s104
    %p116 = scmp.eq.s32.totalorder %s26, 1
    %p117 = por %p115, %p116
    %p119 = scmp.ne.s32.totalorder %s104, %s118
    %p120 = scmp.eq.s32.totalorder %s26, 0
    %p121 = por %p119, %p120
    %s123 = sadd.s32 %s122, 1
    %p126 = scmp.eq.s32.totalorder %s20, 1
    %p127 = scmp.ne.s32.totalorder %s122, %s124
    %p128 = scmp.eq.s32.totalorder %s20, 0
    %p129 = por %p127, %p128
    %p130 = scmp.ne.s32.totalorder %s122, %s124
    %p131 = scmp.eq.s32.totalorder %s25, 1
    %p132 = por %p130, %p131
    %p133 = scmp.ne.s32.totalorder %s124, %s125
    %p134 = scmp.eq.s32.totalorder %s25, 0
    %p135 = por %p133, %p134
    %p136 = scmp.ne.s32.totalorder %s124, %s125
    %p137 = scmp.eq.s32.totalorder %s26, 1
    %p138 = por %p136, %p137
    %p140 = scmp.ne.s32.totalorder %s125, %s139
    %p141 = scmp.eq.s32.totalorder %s26, 0
    %p142 = por %p140, %p141
    %s144 = sadd.s32 %s143, 1
    %p147 = scmp.eq.s32.totalorder %s20, 1
    %p148 = scmp.ne.s32.totalorder %s143, %s145
    %p149 = scmp.eq.s32.totalorder %s20, 0
    %p150 = por %p148, %p149
    %p151 = scmp.ne.s32.totalorder %s143, %s145
    %p152 = scmp.eq.s32.totalorder %s25, 1
    %p153 = por %p151, %p152
    %p154 = scmp.ne.s32.totalorder %s145, %s146
    %p155 = scmp.eq.s32.totalorder %s25, 0
    %p156 = por %p154, %p155
    %p157 = scmp.ne.s32.totalorder %s145, %s146
    %p158 = scmp.eq.s32.totalorder %s26, 1
    %p159 = por %p157, %p158
    %p161 = scmp.ne.s32.totalorder %s146, %s160
    %p162 = scmp.eq.s32.totalorder %s26, 0
    %p163 = por %p161, %p162
    %s165 = sadd.s32 %s164, 1
    %p168 = scmp.eq.s32.totalorder %s20, 1
    %p169 = scmp.ne.s32.totalorder %s164, %s166
    %p170 = scmp.eq.s32.totalorder %s20, 0
    %p171 = por %p169, %p170
    %p172 = scmp.ne.s32.totalorder %s164, %s166
    %p173 = scmp.eq.s32.totalorder %s25, 1
    %p174 = por %p172, %p173
    %p175 = scmp.ne.s32.totalorder %s166, %s167
    %p176 = scmp.eq.s32.totalorder %s25, 0
    %p177 = por %p175, %p176
    %p178 = scmp.ne.s32.totalorder %s166, %s167
    %p179 = scmp.eq.s32.totalorder %s26, 1
    %p180 = por %p178, %p179
    %p182 = scmp.ne.s32.totalorder %s167, %s181
    %p183 = scmp.eq.s32.totalorder %s26, 0
    %p184 = por %p182, %p183
    %s186 = sadd.s32 %s185, 1
    %p189 = scmp.eq.s32.totalorder %s20, 1
    %p190 = scmp.ne.s32.totalorder %s185, %s187
    %p191 = scmp.eq.s32.totalorder %s20, 0
    %p192 = por %p190, %p191
    %p193 = scmp.ne.s32.totalorder %s185, %s187
    %p194 = scmp.eq.s32.totalorder %s25, 1
    %p195 = por %p193, %p194
    %p196 = scmp.ne.s32.totalorder %s187, %s188
    %p197 = scmp.eq.s32.totalorder %s25, 0
    %p198 = por %p196, %p197
    %p199 = scmp.ne.s32.totalorder %s187, %s188
    %p200 = scmp.eq.s32.totalorder %s26, 1
    %p201 = por %p199, %p200
    %p203 = scmp.ne.s32.totalorder %s188, %s202
    %p204 = scmp.eq.s32.totalorder %s26, 0
    %p205 = por %p203, %p204
    %s207 = sadd.s32 %s206, 1
    %p210 = scmp.eq.s32.totalorder %s20, 1
    %p211 = scmp.ne.s32.totalorder %s206, %s208
    %p212 = scmp.eq.s32.totalorder %s20, 0
    %p213 = por %p211, %p212
    %p214 = scmp.ne.s32.totalorder %s206, %s208
    %p215 = scmp.eq.s32.totalorder %s25, 1
    %p216 = por %p214, %p215
    %p217 = scmp.ne.s32.totalorder %s208, %s209
    %p218 = scmp.eq.s32.totalorder %s25, 0
    %p219 = por %p217, %p218
    %p220 = scmp.ne.s32.totalorder %s208, %s209
    %p221 = scmp.eq.s32.totalorder %s26, 1
    %p222 = por %p220, %p221
    %p224 = scmp.ne.s32.totalorder %s209, %s223
    %p225 = scmp.eq.s32.totalorder %s26, 0
    %p226 = por %p224, %p225
    %s228 = sadd.s32 %s227, 1
    %p231 = scmp.eq.s32.totalorder %s20, 1
    %p232 = scmp.ne.s32.totalorder %s227, %s229
    %p233 = scmp.eq.s32.totalorder %s20, 0
    %p234 = por %p232, %p233
    %p235 = scmp.ne.s32.totalorder %s227, %s229
    %p236 = scmp.eq.s32.totalorder %s25, 1
    %p237 = por %p235, %p236
    %p238 = scmp.ne.s32.totalorder %s229, %s230
    %p239 = scmp.eq.s32.totalorder %s25, 0
    %p240 = por %p238, %p239
    %p241 = scmp.ne.s32.totalorder %s229, %s230
    %p242 = scmp.eq.s32.totalorder %s26, 1
    %p243 = por %p241, %p242
    %p245 = scmp.ne.s32.totalorder %s230, %s244
    %p246 = scmp.eq.s32.totalorder %s26, 0
    %p247 = por %p245, %p246
    %s249 = sadd.s32 %s248, 1
    %p252 = scmp.eq.s32.totalorder %s20, 1
    %p253 = scmp.ne.s32.totalorder %s248, %s250
    %p254 = scmp.eq.s32.totalorder %s20, 0
    %p255 = por %p253, %p254
    %p256 = scmp.ne.s32.totalorder %s248, %s250
    %p257 = scmp.eq.s32.totalorder %s25, 1
    %p258 = por %p256, %p257
    %p259 = scmp.ne.s32.totalorder %s250, %s251
    %p260 = scmp.eq.s32.totalorder %s25, 0
    %p261 = por %p259, %p260
    %p262 = scmp.ne.s32.totalorder %s250, %s251
    %p263 = scmp.eq.s32.totalorder %s26, 1
    %p264 = por %p262, %p263
    %p266 = scmp.ne.s32.totalorder %s251, %s265
    %p267 = scmp.eq.s32.totalorder %s26, 0
    %p268 = por %p266, %p267
    %s270 = sadd.s32 %s269, 1
    %p273 = scmp.eq.s32.totalorder %s20, 1
    %p274 = scmp.ne.s32.totalorder %s269, %s271
    %p275 = scmp.eq.s32.totalorder %s20, 0
    %p276 = por %p274, %p275
    %p277 = scmp.ne.s32.totalorder %s269, %s271
    %p278 = scmp.eq.s32.totalorder %s25, 1
    %p279 = por %p277, %p278
    %p280 = scmp.ne.s32.totalorder %s271, %s272
    %p281 = scmp.eq.s32.totalorder %s25, 0
    %p282 = por %p280, %p281
    %p283 = scmp.ne.s32.totalorder %s271, %s272
    %p284 = scmp.eq.s32.totalorder %s26, 1
    %p285 = por %p283, %p284
    %p287 = scmp.ne.s32.totalorder %s272, %s286
    %p288 = scmp.eq.s32.totalorder %s26, 0
    %p289 = por %p287, %p288
    %s291 = sadd.s32 %s290, 1
    %p294 = scmp.eq.s32.totalorder %s20, 1
    %p295 = scmp.ne.s32.totalorder %s290, %s292
    %p296 = scmp.eq.s32.totalorder %s20, 0
    %p297 = por %p295, %p296
    %p298 = scmp.ne.s32.totalorder %s290, %s292
    %p299 = scmp.eq.s32.totalorder %s25, 1
    %p300 = por %p298, %p299
    %p301 = scmp.ne.s32.totalorder %s292, %s293
    %p302 = scmp.eq.s32.totalorder %s25, 0
    %p303 = por %p301, %p302
    %p304 = scmp.ne.s32.totalorder %s292, %s293
    %p305 = scmp.eq.s32.totalorder %s26, 1
    %p306 = por %p304, %p305
    %p308 = scmp.ne.s32.totalorder %s293, %s307
    %p309 = scmp.eq.s32.totalorder %s26, 0
    %p310 = por %p308, %p309
    %s312 = sadd.s32 %s311, 1
    %p315 = scmp.eq.s32.totalorder %s20, 1
    %p316 = scmp.ne.s32.totalorder %s311, %s313
    %p317 = scmp.eq.s32.totalorder %s20, 0
    %p318 = por %p316, %p317
    %p319 = scmp.ne.s32.totalorder %s311, %s313
    %p320 = scmp.eq.s32.totalorder %s25, 1
    %p321 = por %p319, %p320
    %p322 = scmp.ne.s32.totalorder %s313, %s314
    %p323 = scmp.eq.s32.totalorder %s25, 0
    %p324 = por %p322, %p323
    %p325 = scmp.ne.s32.totalorder %s313, %s314
    %p326 = scmp.eq.s32.totalorder %s26, 1
    %p327 = por %p325, %p326
    %p329 = scmp.ne.s32.totalorder %s314, %s328
    %p330 = scmp.eq.s32.totalorder %s26, 0
    %p331 = por %p329, %p330
    %s332 = ssub.s32 %s20, %s27
    %p333 = scmp.eq.s32.totalorder %s332, 0
    %s335 = sadd.s32 %s334, 1
    %s336 = scalar_select %p333, %s334, %s335
    %p339 = pneg %p333
    %p340 = scmp.eq.s32.totalorder %s20, 1
    %p341 = por %p339, %p340
    %p342 = scmp.ne.s32.totalorder %s334, %s337
    %p343 = scmp.eq.s32.totalorder %s20, 0
    %p344 = por %p342, %p343
    %p345 = scmp.ne.s32.totalorder %s334, %s337
    %p346 = scmp.eq.s32.totalorder %s25, 1
    %p347 = por %p345, %p346
    %p348 = scmp.ne.s32.totalorder %s337, %s338
    %p349 = scmp.eq.s32.totalorder %s25, 0
    %p350 = por %p348, %p349
    %p351 = scmp.ne.s32.totalorder %s337, %s338
    %p352 = scmp.eq.s32.totalorder %s26, 1
    %p353 = por %p351, %p352
    %p355 = scmp.ne.s32.totalorder %s338, %s354
    %p356 = scmp.eq.s32.totalorder %s26, 0
    %p357 = por %p355, %p356
    %p358 = scmp.le.s32.totalorder 1, %s20
    %p359 = scmp.lt.s32.totalorder %s20, 3
    %p360 = pnand %p358, %p359
    %p361 = pneg %p360
    // Predicated region
    $region9: #{corrector_forward.1} parent=5 // pred_check
      _
    $region10: #{corrector_forward.1} parent=5 // pred_check_branch
      %363 = sbr.rel (%p360) target = $region12
    $region11: #{corrector_forward.1} parent=5 // pred_region
      %s364 = ssub.s32 %s20, 1
      // Predicated region
      $region13: #{corrector_forward.1} parent=11 // pred_check
        %p365 = pneg %p93
      $region14: #{corrector_forward.1} parent=11 // pred_check_branch
        %367 = sbr.rel (%p365) target = $region16
      $region15: #{corrector_forward.1} parent=11 // pred_region
        _
      $region16: #{corrector_forward.1} parent=11 // pred_fallthru
        _
      // Predicated region
      $region17: #{corrector_forward.1} parent=11 // pred_check
        %p368 = pneg %p114
      $region18: #{corrector_forward.1} parent=11 // pred_check_branch
        %370 = sbr.rel (%p368) target = $region20
      $region19: #{corrector_forward.1} parent=11 // pred_region
        _
      $region20: #{corrector_forward.1} parent=11 // pred_fallthru
        _
      // Predicated region
      $region21: #{corrector_forward.1} parent=11 // pred_check
        %p371 = pneg %p135
      $region22: #{corrector_forward.1} parent=11 // pred_check_branch
        %373 = sbr.rel (%p371) target = $region24
      $region23: #{corrector_forward.1} parent=11 // pred_region
        _
      $region24: #{corrector_forward.1} parent=11 // pred_fallthru
        _
      // Predicated region
      $region25: #{corrector_forward.1} parent=11 // pred_check
        %p374 = pneg %p156
      $region26: #{corrector_forward.1} parent=11 // pred_check_branch
        %376 = sbr.rel (%p374) target = $region28
      $region27: #{corrector_forward.1} parent=11 // pred_region
        _
      $region28: #{corrector_forward.1} parent=11 // pred_fallthru
        _
      // Predicated region
      $region29: #{corrector_forward.1} parent=11 // pred_check
        %p377 = pneg %p177
      $region30: #{corrector_forward.1} parent=11 // pred_check_branch
        %379 = sbr.rel (%p377) target = $region32
      $region31: #{corrector_forward.1} parent=11 // pred_region
        _
      $region32: #{corrector_forward.1} parent=11 // pred_fallthru
        _
      // Predicated region
      $region33: #{corrector_forward.1} parent=11 // pred_check
        %p380 = pneg %p198
      $region34: #{corrector_forward.1} parent=11 // pred_check_branch
        %382 = sbr.rel (%p380) target = $region36
      $region35: #{corrector_forward.1} parent=11 // pred_region
        _
      $region36: #{corrector_forward.1} parent=11 // pred_fallthru
        _
      // Predicated region
      $region37: #{corrector_forward.1} parent=11 // pred_check
        %p383 = pneg %p219
      $region38: #{corrector_forward.1} parent=11 // pred_check_branch
        %385 = sbr.rel (%p383) target = $region40
      $region39: #{corrector_forward.1} parent=11 // pred_region
        _
      $region40: #{corrector_forward.1} parent=11 // pred_fallthru
        _
      // Predicated region
      $region41: #{corrector_forward.1} parent=11 // pred_check
        %p386 = pneg %p240
      $region42: #{corrector_forward.1} parent=11 // pred_check_branch
        %388 = sbr.rel (%p386) target = $region44
      $region43: #{corrector_forward.1} parent=11 // pred_region
        _
      $region44: #{corrector_forward.1} parent=11 // pred_fallthru
        _
      // Predicated region
      $region45: #{corrector_forward.1} parent=11 // pred_check
        %p389 = pneg %p261
      $region46: #{corrector_forward.1} parent=11 // pred_check_branch
        %391 = sbr.rel (%p389) target = $region48
      $region47: #{corrector_forward.1} parent=11 // pred_region
        _
      $region48: #{corrector_forward.1} parent=11 // pred_fallthru
        _
      // Predicated region
      $region49: #{corrector_forward.1} parent=11 // pred_check
        %p392 = pneg %p282
      $region50: #{corrector_forward.1} parent=11 // pred_check_branch
        %394 = sbr.rel (%p392) target = $region52
      $region51: #{corrector_forward.1} parent=11 // pred_region
        _
      $region52: #{corrector_forward.1} parent=11 // pred_fallthru
        _
      // Predicated region
      $region53: #{corrector_forward.1} parent=11 // pred_check
        %p395 = pneg %p303
      $region54: #{corrector_forward.1} parent=11 // pred_check_branch
        %397 = sbr.rel (%p395) target = $region56
      $region55: #{corrector_forward.1} parent=11 // pred_region
        _
      $region56: #{corrector_forward.1} parent=11 // pred_fallthru
        _
      // Predicated region
      $region57: #{corrector_forward.1} parent=11 // pred_check
        %p398 = pneg %p324
      $region58: #{corrector_forward.1} parent=11 // pred_check_branch
        %400 = sbr.rel (%p398) target = $region60
      $region59: #{corrector_forward.1} parent=11 // pred_region
        _
      $region60: #{corrector_forward.1} parent=11 // pred_fallthru
        _
    $region12: #{corrector_forward.1} parent=5 // pred_fallthru
      _
    %p401 = scmp.lt.s32.totalorder %s20, 2
    // Predicated region
    $region61: #{corrector_forward.1} parent=5 // pred_check
      %p402 = pneg %p401
    $region62: #{corrector_forward.1} parent=5 // pred_check_branch
      %404 = sbr.rel (%p402) target = $region64
    $region63: #{corrector_forward.1} parent=5 // pred_region
      // Predicated region
      $region65: #{corrector_forward.1} parent=63 // pred_check
        %p405 = pneg %p40
      $region66: #{corrector_forward.1} parent=63 // pred_check_branch
        %407 = sbr.rel (%p405) target = $region68
      $region67: #{corrector_forward.1} parent=63 // pred_region
        %p408 = scmp.lt.s32.totalorder %s20, 1
        %s409 = scalar_select %p408, %s20, 1
        %s410 = smul.addr %s409, 16
        %s411 = smul.addr %s410, 8
        %s412 = scalar_lea.vmem %s0, %s411
      $region68: #{corrector_forward.1} parent=63 // pred_fallthru
        _
      // Predicated region
      $region69: #{corrector_forward.1} parent=63 // pred_check
        %p413 = pneg %p66
      $region70: #{corrector_forward.1} parent=63 // pred_check_branch
        %415 = sbr.rel (%p413) target = $region72
      $region71: #{corrector_forward.1} parent=63 // pred_region
        %p416 = scmp.lt.s32.totalorder %s20, 1
        %s417 = scalar_select %p416, %s20, 1
        %s418 = smul.addr %s417, 32
        %s419 = smul.addr %s418, 8
        %s420 = scalar_lea.vmem %s1, %s419
      $region72: #{corrector_forward.1} parent=63 // pred_fallthru
        _
    $region64: #{corrector_forward.1} parent=5 // pred_fallthru
      _
    %p421 = scmp.le.s32.totalorder 1, %s20
    %p422 = scmp.lt.s32.totalorder %s20, 3
    %p423 = pnand %p421, %p422
    %p424 = pneg %p423
    // Predicated region
    $region73: #{corrector_forward.1} parent=5 // pred_check
      _
    $region74: #{corrector_forward.1} parent=5 // pred_check_branch
      %426 = sbr.rel (%p423) target = $region76
    $region75: #{corrector_forward.1} parent=5 // pred_region
      %s427 = ssub.s32 %s20, 1
      %p428 = scmp.lt.s32.totalorder %s25, 1
      %s429 = scalar_select %p428, %s25, 1
      %s430 = smul.addr %s429, 16
      %s431 = smul.addr %s430, 8
      %s432 = scalar_lea.vmem %s0, %s431
      %p433 = pneg %p46
      %p434 = pneg %p43
      %p435 = scmp.lt.s32.totalorder %s25, 1
      %s436 = scalar_select %p435, %s25, 1
      %s437 = smul.addr %s436, 32
      %s438 = smul.addr %s437, 8
      %s439 = scalar_lea.vmem %s1, %s438
      %p440 = pneg %p72
      %p441 = pneg %p69
      %p442 = pneg %p93
      %p443 = pneg %p90
      %p444 = pneg %p114
      %p445 = pneg %p111
      %p446 = pneg %p135
      %p447 = pneg %p132
      %p448 = pneg %p156
      %p449 = pneg %p153
      %p450 = pneg %p177
      %p451 = pneg %p174
      %p452 = pneg %p198
      %p453 = pneg %p195
      %p454 = pneg %p219
      %p455 = pneg %p216
      %p456 = pneg %p240
      %p457 = pneg %p237
      %p458 = pneg %p261
      %p459 = pneg %p258
      %p460 = pneg %p282
      %p461 = pneg %p279
      %p462 = pneg %p303
      %p463 = pneg %p300
      %p464 = pneg %p324
      %p465 = pneg %p321
      %p466 = pneg %p350
      %p467 = pneg %p347
      %p468 = scmp.lt.s32.totalorder %s25, 1
      %s469 = scalar_select %p468, %s25, 1
      %s470 = smul.addr %s469, 128
      %s471 = smul.addr %s470, 8
      %s472 = scalar_lea.vmem %s14, %s471
      %p473 = scmp.lt.s32.totalorder %s25, 1
      %s474 = scalar_select %p473, %s25, 1
      %s475 = smul.addr %s474, 16
      %s476 = smul.addr %s475, 8
      %s477 = scalar_lea.vmem %s0, %s476
      %p478 = scmp.lt.s32.totalorder %s25, 1
      %s479 = scalar_select %p478, %s25, 1
      %s480 = smul.addr %s479, 32
      %s481 = smul.addr %s480, 8
      %s482 = scalar_lea.vmem %s1, %s481
      %p483 = scmp.lt.s32.totalorder %s25, 1
      %s484 = scalar_select %p483, %s25, 1
      %s485 = smul.addr %s484, 128
      %s486 = smul.addr %s485, 8
      %s487 = scalar_lea.vmem %s14, %s486
      %488 = vst [vmem:[#allocation2] sm:$0xff] 0.0
      %489 = vst [vmem:[#allocation2 + $0x8] sm:$0xff] 0.0
      %vm490 = vcmask 64512
      %491 = vst.msk [vmem:[#allocation2 + $0x10] sm:$0xff] %vm490, 0.0
      %492 = vst [vmem:[#allocation2 + $0x18] sm:$0xff] 0.0
      %493 = vst [vmem:[#allocation2 + $0x20] sm:$0xff] 0.0
      %494 = vst.msk [vmem:[#allocation2 + $0x28] sm:$0xff] %vm490, 0.0
      %495 = vst [vmem:[#allocation2 + $0x30] sm:$0xff] 0.0
      %496 = vst [vmem:[#allocation2 + $0x38] sm:$0xff] 0.0
      %497 = vst.msk [vmem:[#allocation2 + $0x40] sm:$0xff] %vm490, 0.0
      %s498 = scalar_lea.vmem [#allocation2], 648
      %499 = vst [vmem:[%s498] sm:$0xff] 0.0
      %500 = vst [vmem:[%s498 + $0x8] sm:$0xff] 0.0
      %501 = vst.msk [vmem:[%s498 + $0x10] sm:$0xff] %vm490, 0.0
      %502 = vst [vmem:[%s498 + $0x18] sm:$0xff] 0.0
      %503 = vst [vmem:[%s498 + $0x20] sm:$0xff] 0.0
      %504 = vst.msk [vmem:[%s498 + $0x28] sm:$0xff] %vm490, 0.0
      %505 = vst [vmem:[%s498 + $0x30] sm:$0xff] 0.0
      %506 = vst [vmem:[%s498 + $0x38] sm:$0xff] 0.0
      %507 = vst.msk [vmem:[%s498 + $0x40] sm:$0xff] %vm490, 0.0
      %508 = vst [vmem:[#allocation2] sm:$0xff] 0.0
      %509 = vst [vmem:[#allocation2 + $0x8] sm:$0xff] 0.0
      %510 = vst.msk [vmem:[#allocation2 + $0x10] sm:$0xff] %vm490, 0.0
      %511 = vst [vmem:[#allocation2 + $0x48] sm:$0xff] 0.0
      %512 = vst [vmem:[#allocation2 + $0x50] sm:$0xff] 0.0
      %513 = vst.msk [vmem:[#allocation2 + $0x58] sm:$0xff] %vm490, 0.0
      %514 = vst [vmem:[#allocation2 + $0x90] sm:$0xff] 0.0
      %515 = vst [vmem:[#allocation2 + $0x98] sm:$0xff] 0.0
      %516 = vst.msk [vmem:[#allocation2 + $0xa0] sm:$0xff] %vm490, 0.0
      %517 = vst [vmem:[#allocation2 + $0xd8] sm:$0xff] 0.0
      %518 = vst [vmem:[#allocation2 + $0xe0] sm:$0xff] 0.0
      %519 = vst.msk [vmem:[#allocation2 + $0xe8] sm:$0xff] %vm490, 0.0
      %520 = vst [vmem:[#allocation2 + $0x120] sm:$0xff] 0.0
      %521 = vst [vmem:[#allocation2 + $0x128] sm:$0xff] 0.0
      %522 = vst.msk [vmem:[#allocation2 + $0x130] sm:$0xff] %vm490, 0.0
      %523 = vst [vmem:[#allocation2 + $0x168] sm:$0xff] 0.0
      %524 = vst [vmem:[#allocation2 + $0x170] sm:$0xff] 0.0
      %525 = vst.msk [vmem:[#allocation2 + $0x178] sm:$0xff] %vm490, 0.0
      %526 = vst [vmem:[#allocation2 + $0x1b0] sm:$0xff] 0.0
      %527 = vst [vmem:[#allocation2 + $0x1b8] sm:$0xff] 0.0
      %528 = vst.msk [vmem:[#allocation2 + $0x1c0] sm:$0xff] %vm490, 0.0
      %529 = vst [vmem:[#allocation2 + $0x1f8] sm:$0xff] 0.0
      %530 = vst [vmem:[#allocation2 + $0x200] sm:$0xff] 0.0
      %531 = vst.msk [vmem:[#allocation2 + $0x208] sm:$0xff] %vm490, 0.0
      %532 = vst [vmem:[#allocation2 + $0x240] sm:$0xff] 0.0
      %533 = vst [vmem:[#allocation2 + $0x248] sm:$0xff] 0.0
      %534 = vst.msk [vmem:[#allocation2 + $0x250] sm:$0xff] %vm490, 0.0
      %535 = vst [vmem:[#allocation2 + $0x288] sm:$0xff] 0.0
      %536 = vst [vmem:[#allocation2 + $0x290] sm:$0xff] 0.0
      %537 = vst.msk [vmem:[#allocation2 + $0x298] sm:$0xff] %vm490, 0.0
      %538 = vst [vmem:[#allocation2 + $0x30] sm:$0xff] 0.0
      %539 = vst [vmem:[#allocation2 + $0x38] sm:$0xff] 0.0
      %540 = vst.msk [vmem:[#allocation2 + $0x40] sm:$0xff] %vm490, 0.0
      %541 = vst [vmem:[#allocation2 + $0x78] sm:$0xff] 0.0
      %542 = vst [vmem:[#allocation2 + $0x80] sm:$0xff] 0.0
      %543 = vst.msk [vmem:[#allocation2 + $0x88] sm:$0xff] %vm490, 0.0
      %544 = vst [vmem:[#allocation2 + $0xc0] sm:$0xff] 0.0
      %545 = vst [vmem:[#allocation2 + $0xc8] sm:$0xff] 0.0
      %546 = vst.msk [vmem:[#allocation2 + $0xd0] sm:$0xff] %vm490, 0.0
      %547 = vst [vmem:[#allocation2 + $0x108] sm:$0xff] 0.0
      %548 = vst [vmem:[#allocation2 + $0x110] sm:$0xff] 0.0
      %549 = vst.msk [vmem:[#allocation2 + $0x118] sm:$0xff] %vm490, 0.0
      %550 = vst [vmem:[#allocation2 + $0x150] sm:$0xff] 0.0
      %551 = vst [vmem:[#allocation2 + $0x158] sm:$0xff] 0.0
      %552 = vst.msk [vmem:[#allocation2 + $0x160] sm:$0xff] %vm490, 0.0
      %553 = vst [vmem:[#allocation2 + $0x198] sm:$0xff] 0.0
      %554 = vst [vmem:[#allocation2 + $0x1a0] sm:$0xff] 0.0
      %555 = vst.msk [vmem:[#allocation2 + $0x1a8] sm:$0xff] %vm490, 0.0
      %556 = vst [vmem:[#allocation2 + $0x1e0] sm:$0xff] 0.0
      %557 = vst [vmem:[#allocation2 + $0x1e8] sm:$0xff] 0.0
      %558 = vst.msk [vmem:[#allocation2 + $0x1f0] sm:$0xff] %vm490, 0.0
      %559 = vst [vmem:[#allocation2 + $0x228] sm:$0xff] 0.0
      %560 = vst [vmem:[#allocation2 + $0x230] sm:$0xff] 0.0
      %561 = vst.msk [vmem:[#allocation2 + $0x238] sm:$0xff] %vm490, 0.0
      %562 = vst [vmem:[#allocation2 + $0x270] sm:$0xff] 0.0
      %563 = vst [vmem:[#allocation2 + $0x278] sm:$0xff] 0.0
      %564 = vst.msk [vmem:[#allocation2 + $0x280] sm:$0xff] %vm490, 0.0
      %565 = vst [vmem:[#allocation2 + $0x2b8] sm:$0xff] 0.0
      %566 = vst [vmem:[#allocation2 + $0x2c0] sm:$0xff] 0.0
      %567 = vst.msk [vmem:[#allocation2 + $0x2c8] sm:$0xff] %vm490, 0.0
      %v568 = vld [vmem:[%s2] sm:$0xff]
      %v569 = vld [vmem:[%s2 + $0x8] sm:$0xff]
      %v570 = vld [vmem:[%s2 + $0x10] sm:$0xff]
      %v571 = vld [vmem:[%s2 + $0x18] sm:$0xff]
      %v572 = vld [vmem:[%s2 + $0x20] sm:$0xff]
      %v573 = vld [vmem:[%s2 + $0x28] sm:$0xff]
      %v574 = vld [vmem:[%s2 + $0x30] sm:$0xff]
      %v575 = vld [vmem:[%s2 + $0x38] sm:$0xff]
      %v576 = vld [vmem:[%s2 + $0x40] sm:$0xff]
      %v577 = vld [vmem:[%s2 + $0x48] sm:$0xff]
      %v578 = vld [vmem:[%s2 + $0x50] sm:$0xff]
      %v579 = vld [vmem:[%s2 + $0x58] sm:$0xff]
      %v580 = vld [vmem:[%s2 + $0x60] sm:$0xff]
      %v581 = vld [vmem:[%s2 + $0x68] sm:$0xff]
      %v582 = vld [vmem:[%s2 + $0x70] sm:$0xff]
      %v583 = vld [vmem:[%s2 + $0x78] sm:$0xff]
      %v584 = vld [vmem:[%s482] sm:$0xff]
      %v585 = vld [vmem:[%s482 + $0x8] sm:$0xff]
      %v586 = vld [vmem:[%s482 + $0x10] sm:$0xff]
      %v587 = vld [vmem:[%s482 + $0x18] sm:$0xff]
      %v588 = vld [vmem:[%s482 + $0x20] sm:$0xff]
      %v589 = vld [vmem:[%s482 + $0x28] sm:$0xff]
      %v590 = vld [vmem:[%s482 + $0x30] sm:$0xff]
      %v591 = vld [vmem:[%s482 + $0x38] sm:$0xff]
      %v592 = vld [vmem:[%s482 + $0x40] sm:$0xff]
      %v593 = vld [vmem:[%s482 + $0x48] sm:$0xff]
      %v594 = vld [vmem:[%s482 + $0x50] sm:$0xff]
      %v595 = vld [vmem:[%s482 + $0x58] sm:$0xff]
      %v596 = vld [vmem:[%s482 + $0x60] sm:$0xff]
      %v597 = vld [vmem:[%s482 + $0x68] sm:$0xff]
      %v598 = vld [vmem:[%s482 + $0x70] sm:$0xff]
      %v599 = vld [vmem:[%s482 + $0x78] sm:$0xff]
      %v600 = vld [vmem:[%s482 + $0x80] sm:$0xff]
      %v601 = vld [vmem:[%s482 + $0x88] sm:$0xff]
      %v602 = vld [vmem:[%s482 + $0x90] sm:$0xff]
      %v603 = vld [vmem:[%s482 + $0x98] sm:$0xff]
      %v604 = vld [vmem:[%s482 + $0xa0] sm:$0xff]
      %v605 = vld [vmem:[%s482 + $0xa8] sm:$0xff]
      %v606 = vld [vmem:[%s482 + $0xb0] sm:$0xff]
      %v607 = vld [vmem:[%s482 + $0xb8] sm:$0xff]
      %v608 = vld [vmem:[%s482 + $0xc0] sm:$0xff]
      %v609 = vld [vmem:[%s482 + $0xc8] sm:$0xff]
      %v610 = vld [vmem:[%s482 + $0xd0] sm:$0xff]
      %v611 = vld [vmem:[%s482 + $0xd8] sm:$0xff]
      %v612 = vld [vmem:[%s482 + $0xe0] sm:$0xff]
      %v613 = vld [vmem:[%s482 + $0xe8] sm:$0xff]
      %v614 = vld [vmem:[%s482 + $0xf0] sm:$0xff]
      %v615 = vld [vmem:[%s482 + $0xf8] sm:$0xff]
      %616 = vmatprep.subr.mxu0 0.0
      %617 = vmatpush1.msra.mxu0 %v584
      %618 = vmatprep.subr.mxu0 0.0
      %619 = vmatpush1.msra.mxu0 %v585
      %620 = vmatprep.subr.mxu0 0.0
      %621 = vmatpush1.msra.mxu0 %v586
      %622 = vmatprep.subr.mxu0 0.0
      %623 = vmatpush1.msra.mxu0 %v587
      %624 = vmatprep.subr.mxu0 0.0
      %625 = vmatpush1.msra.mxu0 %v588
      %626 = vmatprep.subr.mxu0 0.0
      %627 = vmatpush1.msra.mxu0 %v589
      %628 = vmatprep.subr.mxu0 0.0
      %629 = vmatpush1.msra.mxu0 %v590
      %630 = vmatprep.subr.mxu0 0.0
      %631 = vmatpush1.msra.mxu0 %v591
      %632 = vmatprep.subr.mxu0 0.0
      %633 = vmatpush1.msra.mxu0 %v592
      %634 = vmatprep.subr.mxu0 0.0
      %635 = vmatpush1.msra.mxu0 %v593
      %636 = vmatprep.subr.mxu0 0.0
      %637 = vmatpush1.msra.mxu0 %v594
      %638 = vmatprep.subr.mxu0 0.0
      %639 = vmatpush1.msra.mxu0 %v595
      %640 = vmatprep.subr.mxu0 0.0
      %641 = vmatpush1.msra.mxu0 %v596
      %642 = vmatprep.subr.mxu0 0.0
      %643 = vmatpush1.msra.mxu0 %v597
      %644 = vmatprep.subr.mxu0 0.0
      %645 = vmatpush1.msra.mxu0 %v598
      %646 = vmatprep.subr.mxu0 0.0
      %647 = vmatpush1.msra.mxu0 %v599
      %648 = vmatprep.subr.mxu0 0.0
      %649 = vmatpush1.msra.mxu0 %v600
      %650 = vmatprep.subr.mxu0 0.0
      %651 = vmatpush1.msra.mxu0 %v601
      %652 = vmatprep.subr.mxu0 0.0
      %653 = vmatpush1.msra.mxu0 %v602
      %654 = vmatprep.subr.mxu0 0.0
      %655 = vmatpush1.msra.mxu0 %v603
      %656 = vmatprep.subr.mxu0 0.0
      %657 = vmatpush1.msra.mxu0 %v604
      %658 = vmatprep.subr.mxu0 0.0
      %659 = vmatpush1.msra.mxu0 %v605
      %660 = vmatprep.subr.mxu0 0.0
      %661 = vmatpush1.msra.mxu0 %v606
      %662 = vmatprep.subr.mxu0 0.0
      %663 = vmatpush1.msra.mxu0 %v607
      %664 = vmatprep.subr.mxu0 0.0
      %665 = vmatpush1.msra.mxu0 %v608
      %666 = vmatprep.subr.mxu0 0.0
      %667 = vmatpush1.msra.mxu0 %v609
      %668 = vmatprep.subr.mxu0 0.0
      %669 = vmatpush1.msra.mxu0 %v610
      %670 = vmatprep.subr.mxu0 0.0
      %671 = vmatpush1.msra.mxu0 %v611
      %672 = vmatprep.subr.mxu0 0.0
      %673 = vmatpush1.msra.mxu0 %v612
      %674 = vmatprep.subr.mxu0 0.0
      %675 = vmatpush1.msra.mxu0 %v613
      %676 = vmatprep.subr.mxu0 0.0
      %677 = vmatpush1.msra.mxu0 %v614
      %678 = vmatprep.subr.mxu0 0.0
      %679 = vmatpush1.msra.mxu0 %v615
      %680 = vmatprep.mubr.f32.mxu0 %v569
      %681 = vmatmul.mubr.f32.gmra.mrb[0].mxu0 %v568
      %v682 = vpop.f32.mrb[0].mxu0
      %v683 = vadd.f32 0.0, %v682
      %v684 = vpop.f32.mrb[0].mxu0
      %685 = vmatprep.mubr.f32.mxu0 %v571
      %686 = vmatmul.mubr.f32.gmra.mrb[0].mxu0 %v570
      %v687 = vpop.f32.mrb[0].mxu0
      %v688 = vadd.f32 0.0, %v687
      %v689 = vpop.f32.mrb[0].mxu0
      %690 = vmatprep.mubr.f32.mxu0 %v573
      %691 = vmatmul.mubr.f32.gmra.mrb[0].mxu0 %v572
      %v692 = vpop.f32.mrb[0].mxu0
      %v693 = vadd.f32 0.0, %v692
      %v694 = vpop.f32.mrb[0].mxu0
      %695 = vmatprep.mubr.f32.mxu0 %v575
      %696 = vmatmul.mubr.f32.gmra.mrb[0].mxu0 %v574
      %v697 = vpop.f32.mrb[0].mxu0
      %v698 = vadd.f32 0.0, %v697
      %v699 = vpop.f32.mrb[0].mxu0
      %700 = vmatprep.mubr.f32.mxu0 %v577
      %701 = vmatmul.mubr.f32.gmra.mrb[0].mxu0 %v576
      %v702 = vpop.f32.mrb[0].mxu0
      %v703 = vadd.f32 0.0, %v702
      %v704 = vpop.f32.mrb[0].mxu0
      %705 = vmatprep.mubr.f32.mxu0 %v579
      %706 = vmatmul.mubr.f32.gmra.mrb[0].mxu0 %v578
      %v707 = vpop.f32.mrb[0].mxu0
      %v708 = vadd.f32 0.0, %v707
      %v709 = vpop.f32.mrb[0].mxu0
      %710 = vmatprep.mubr.f32.mxu0 %v581
      %711 = vmatmul.mubr.f32.gmra.mrb[0].mxu0 %v580
      %v712 = vpop.f32.mrb[0].mxu0
      %v713 = vadd.f32 0.0, %v712
      %v714 = vpop.f32.mrb[0].mxu0
      %715 = vmatprep.mubr.f32.mxu0 %v583
      %716 = vmatmul.mubr.f32.gmra.mrb[0].mxu0 %v582
      %v717 = vpop.f32.mrb[0].mxu0
      %v718 = vadd.f32 0.0, %v717
      %v719 = vpop.f32.mrb[0].mxu0
      %720 = vdwg.mxu0
      %vm721 = vcmask 39936
      %v722 = vsel %vm721, %v683, -inf
      %723 = vmax.xlane.f32.xlu0 %v722
      %v724 = vpop.xlane.xlu0 %723
      %v725 = vsel %vm721, %v688, -inf
      %726 = vmax.xlane.f32.xlu0 %v725
      %v727 = vpop.xlane.xlu0 %726
      %v728 = vsel %vm721, %v693, -inf
      %729 = vmax.xlane.f32.xlu0 %v728
      %v730 = vpop.xlane.xlu0 %729
      %v731 = vsel %vm721, %v698, -inf
      %732 = vmax.xlane.f32.xlu0 %v731
      %v733 = vpop.xlane.xlu0 %732
      %v734 = vsel %vm721, %v703, -inf
      %735 = vmax.xlane.f32.xlu0 %v734
      %v736 = vpop.xlane.xlu0 %735
      %v737 = vsel %vm721, %v708, -inf
      %738 = vmax.xlane.f32.xlu0 %v737
      %v739 = vpop.xlane.xlu0 %738
      %v740 = vsel %vm721, %v713, -inf
      %741 = vmax.xlane.f32.xlu0 %v740
      %v742 = vpop.xlane.xlu0 %741
      %v743 = vsel %vm721, %v718, -inf
      %744 = vmax.xlane.f32.xlu0 %v743
      %v745 = vpop.xlane.xlu0 %744
      %v746 = vsub.f32 %v683, %v724
      %v747 = vsub.f32 %v688, %v727
      %v748 = vsub.f32 %v693, %v730
      %v749 = vsub.f32 %v698, %v733
      %v750 = vsub.f32 %v703, %v736
      %v751 = vsub.f32 %v708, %v739
      %v752 = vsub.f32 %v713, %v742
      %v753 = vsub.f32 %v718, %v745
      %v754 = vmul.f32 %v746, 1.442695
      %v755 = vpow.pop %v754
      %v756 = vmul.f32 %v747, 1.442695
      %v757 = vpow.pop %v756
      %v758 = vmul.f32 %v748, 1.442695
      %v759 = vpow.pop %v758
      %v760 = vmul.f32 %v749, 1.442695
      %v761 = vpow.pop %v760
      %v762 = vmul.f32 %v750, 1.442695
      %v763 = vpow.pop %v762
      %v764 = vmul.f32 %v751, 1.442695
      %v765 = vpow.pop %v764
      %v766 = vmul.f32 %v752, 1.442695
      %v767 = vpow.pop %v766
      %v768 = vmul.f32 %v753, 1.442695
      %v769 = vpow.pop %v768
      %v770 = vsel %vm721, %v755, 0.0
      %771 = vadd.xlane.f32.xlu0 %v770
      %v772 = vpop.xlane.xlu0 %771
      %v773 = vsel %vm721, %v757, 0.0
      %774 = vadd.xlane.f32.xlu0 %v773
      %v775 = vpop.xlane.xlu0 %774
      %v776 = vsel %vm721, %v759, 0.0
      %777 = vadd.xlane.f32.xlu0 %v776
      %v778 = vpop.xlane.xlu0 %777
      %v779 = vsel %vm721, %v761, 0.0
      %780 = vadd.xlane.f32.xlu0 %v779
      %v781 = vpop.xlane.xlu0 %780
      %v782 = vsel %vm721, %v763, 0.0
      %783 = vadd.xlane.f32.xlu0 %v782
      %v784 = vpop.xlane.xlu0 %783
      %v785 = vsel %vm721, %v765, 0.0
      %786 = vadd.xlane.f32.xlu0 %v785
      %v787 = vpop.xlane.xlu0 %786
      %v788 = vsel %vm721, %v767, 0.0
      %789 = vadd.xlane.f32.xlu0 %v788
      %v790 = vpop.xlane.xlu0 %789
      %v791 = vsel %vm721, %v769, 0.0
      %792 = vadd.xlane.f32.xlu0 %v791
      %v793 = vpop.xlane.xlu0 %792
      %v794 = vrcp.pop %v772
      %v795 = vmul.f32 %v755, %v794
      %v796 = vrcp.pop %v775
      %v797 = vmul.f32 %v757, %v796
      %v798 = vrcp.pop %v778
      %v799 = vmul.f32 %v759, %v798
      %v800 = vrcp.pop %v781
      %v801 = vmul.f32 %v761, %v800
      %v802 = vrcp.pop %v784
      %v803 = vmul.f32 %v763, %v802
      %v804 = vrcp.pop %v787
      %v805 = vmul.f32 %v765, %v804
      %v806 = vrcp.pop %v790
      %v807 = vmul.f32 %v767, %v806
      %v808 = vrcp.pop %v793
      %v809 = vmul.f32 %v769, %v808
      %v810 = vlog2.pop %v772
      %v811 = vmul.f32 %v810, 0.6931472
      %v812 = vlog2.pop %v775
      %v813 = vmul.f32 %v812, 0.6931472
      %v814 = vlog2.pop %v778
      %v815 = vmul.f32 %v814, 0.6931472
      %v816 = vlog2.pop %v781
      %v817 = vmul.f32 %v816, 0.6931472
      %v818 = vlog2.pop %v784
      %v819 = vmul.f32 %v818, 0.6931472
      %v820 = vlog2.pop %v787
      %v821 = vmul.f32 %v820, 0.6931472
      %v822 = vlog2.pop %v790
      %v823 = vmul.f32 %v822, 0.6931472
      %v824 = vlog2.pop %v793
      %v825 = vmul.f32 %v824, 0.6931472
      %v826 = vsub.f32 %v746, %v811
      %v827 = vsub.f32 %v747, %v813
      %v828 = vsub.f32 %v748, %v815
      %v829 = vsub.f32 %v749, %v817
      %v830 = vsub.f32 %v750, %v819
      %v831 = vsub.f32 %v751, %v821
      %v832 = vsub.f32 %v752, %v823
      %v833 = vsub.f32 %v753, %v825
      %v834 = vsub.f32 0.0, %v795
      %v835 = vsub.f32 0.0, %v797
      %v836 = vsub.f32 0.0, %v799
      %v837 = vsub.f32 0.0, %v801
      %v838 = vsub.f32 0.0, %v803
      %v839 = vsub.f32 0.0, %v805
      %v840 = vsub.f32 0.0, %v807
      %v841 = vsub.f32 0.0, %v809
      %v842 = vmul.f32 %v834, %v826
      %v843 = vmul.f32 %v835, %v827
      %v844 = vmul.f32 %v836, %v828
      %v845 = vmul.f32 %v837, %v829
      %v846 = vmul.f32 %v838, %v830
      %v847 = vmul.f32 %v839, %v831
      %v848 = vmul.f32 %v840, %v832
      %v849 = vmul.f32 %v841, %v833
      %v850 = vsel %vm721, %v842, 0.0
      %851 = vadd.xlane.f32.xlu0 %v850
      %v852 = vpop.xlane.xlu0 %851
      %v853 = vsel %vm721, %v843, 0.0
      %854 = vadd.xlane.f32.xlu0 %v853
      %v855 = vpop.xlane.xlu0 %854
      %v856 = vsel %vm721, %v844, 0.0
      %857 = vadd.xlane.f32.xlu0 %v856
      %v858 = vpop.xlane.xlu0 %857
      %v859 = vsel %vm721, %v845, 0.0
      %860 = vadd.xlane.f32.xlu0 %v859
      %v861 = vpop.xlane.xlu0 %860
      %v862 = vsel %vm721, %v846, 0.0
      %863 = vadd.xlane.f32.xlu0 %v862
      %v864 = vpop.xlane.xlu0 %863
      %v865 = vsel %vm721, %v847, 0.0
      %866 = vadd.xlane.f32.xlu0 %v865
      %v867 = vpop.xlane.xlu0 %866
      %v868 = vsel %vm721, %v848, 0.0
      %869 = vadd.xlane.f32.xlu0 %v868
      %v870 = vpop.xlane.xlu0 %869
      %v871 = vsel %vm721, %v849, 0.0
      %872 = vadd.xlane.f32.xlu0 %v871
      %v873 = vpop.xlane.xlu0 %872
      %vm874 = vcmask 56360
      %v875 = vsel %vm874, %v683, -inf
      %876 = vmax.xlane.f32.xlu0 %v875
      %v877 = vpop.xlane.xlu0 %876
      %v878 = vsel %vm874, %v688, -inf
      %879 = vmax.xlane.f32.xlu0 %v878
      %v880 = vpop.xlane.xlu0 %879
      %v881 = vsel %vm874, %v693, -inf
      %882 = vmax.xlane.f32.xlu0 %v881
      %v883 = vpop.xlane.xlu0 %882
      %v884 = vsel %vm874, %v698, -inf
      %885 = vmax.xlane.f32.xlu0 %v884
      %v886 = vpop.xlane.xlu0 %885
      %v887 = vsel %vm874, %v703, -inf
      %888 = vmax.xlane.f32.xlu0 %v887
      %v889 = vpop.xlane.xlu0 %888
      %v890 = vsel %vm874, %v708, -inf
      %891 = vmax.xlane.f32.xlu0 %v890
      %v892 = vpop.xlane.xlu0 %891
      %v893 = vsel %vm874, %v713, -inf
      %894 = vmax.xlane.f32.xlu0 %v893
      %v895 = vpop.xlane.xlu0 %894
      %v896 = vsel %vm874, %v718, -inf
      %897 = vmax.xlane.f32.xlu0 %v896
      %v898 = vpop.xlane.xlu0 %897
      %v899 = vsub.f32 %v683, %v877
      %v900 = vsub.f32 %v688, %v880
      %v901 = vsub.f32 %v693, %v883
      %v902 = vsub.f32 %v698, %v886
      %v903 = vsub.f32 %v703, %v889
      %v904 = vsub.f32 %v708, %v892
      %v905 = vsub.f32 %v713, %v895
      %v906 = vsub.f32 %v718, %v898
      %v907 = vmul.f32 %v899, 1.442695
      %v908 = vpow.pop %v907
      %v909 = vmul.f32 %v900, 1.442695
      %v910 = vpow.pop %v909
      %v911 = vmul.f32 %v901, 1.442695
      %v912 = vpow.pop %v911
      %v913 = vmul.f32 %v902, 1.442695
      %v914 = vpow.pop %v913
      %v915 = vmul.f32 %v903, 1.442695
      %v916 = vpow.pop %v915
      %v917 = vmul.f32 %v904, 1.442695
      %v918 = vpow.pop %v917
      %v919 = vmul.f32 %v905, 1.442695
      %v920 = vpow.pop %v919
      %v921 = vmul.f32 %v906, 1.442695
      %v922 = vpow.pop %v921
      %931 = vrot.lane.b32.xlu0 %v908, 123
      %v932 = vpop.permute.xlu0 %931
      %933 = vrot.lane.b32.xlu0 %v910, 123
      %v934 = vpop.permute.xlu0 %933
      %935 = vrot.lane.b32.xlu0 %v912, 123
      %v936 = vpop.permute.xlu0 %935
      %937 = vrot.lane.b32.xlu0 %v914, 123
      %v938 = vpop.permute.xlu0 %937
      %939 = vrot.lane.b32.xlu0 %v916, 123
      %v940 = vpop.permute.xlu0 %939
      %941 = vrot.lane.b32.xlu0 %v918, 123
      %v942 = vpop.permute.xlu0 %941
      %943 = vrot.lane.b32.xlu0 %v920, 123
      %v944 = vpop.permute.xlu0 %943
      %945 = vrot.lane.b32.xlu0 %v922, 123
      %v946 = vpop.permute.xlu0 %945
      %vm955 = vcmask 15360
      %v956 = vsel %vm955, %v932, 0.0
      %957 = vadd.xlane.f32.xlu0 %v956
      %v958 = vpop.xlane.xlu0 %957
      %v959 = vsel %vm955, %v934, 0.0
      %960 = vadd.xlane.f32.xlu0 %v959
      %v961 = vpop.xlane.xlu0 %960
      %v962 = vsel %vm955, %v936, 0.0
      %963 = vadd.xlane.f32.xlu0 %v962
      %v964 = vpop.xlane.xlu0 %963
      %v965 = vsel %vm955, %v938, 0.0
      %966 = vadd.xlane.f32.xlu0 %v965
      %v967 = vpop.xlane.xlu0 %966
      %v968 = vsel %vm955, %v940, 0.0
      %969 = vadd.xlane.f32.xlu0 %v968
      %v970 = vpop.xlane.xlu0 %969
      %v971 = vsel %vm955, %v942, 0.0
      %972 = vadd.xlane.f32.xlu0 %v971
      %v973 = vpop.xlane.xlu0 %972
      %v974 = vsel %vm955, %v944, 0.0
      %975 = vadd.xlane.f32.xlu0 %v974
      %v976 = vpop.xlane.xlu0 %975
      %v977 = vsel %vm955, %v946, 0.0
      %978 = vadd.xlane.f32.xlu0 %v977
      %v979 = vpop.xlane.xlu0 %978
      %v980 = vrcp.pop %v958
      %v981 = vmul.f32 %v908, %v980
      %v982 = vrcp.pop %v961
      %v983 = vmul.f32 %v910, %v982
      %v984 = vrcp.pop %v964
      %v985 = vmul.f32 %v912, %v984
      %v986 = vrcp.pop %v967
      %v987 = vmul.f32 %v914, %v986
      %v988 = vrcp.pop %v970
      %v989 = vmul.f32 %v916, %v988
      %v990 = vrcp.pop %v973
      %v991 = vmul.f32 %v918, %v990
      %v992 = vrcp.pop %v976
      %v993 = vmul.f32 %v920, %v992
      %v994 = vrcp.pop %v979
      %v995 = vmul.f32 %v922, %v994
      %v996 = vld [vmem:[%s477] sm:$0xff]
      %v997 = vld [vmem:[%s477 + $0x8] sm:$0xff]
      %v998 = vld [vmem:[%s477 + $0x10] sm:$0xff]
      %v999 = vld [vmem:[%s477 + $0x18] sm:$0xff]
      %v1000 = vld [vmem:[%s477 + $0x20] sm:$0xff]
      %v1001 = vld [vmem:[%s477 + $0x28] sm:$0xff]
      %v1002 = vld [vmem:[%s477 + $0x30] sm:$0xff]
      %v1003 = vld [vmem:[%s477 + $0x38] sm:$0xff]
      %v1004 = vld [vmem:[%s477 + $0x40] sm:$0xff]
      %v1005 = vld [vmem:[%s477 + $0x48] sm:$0xff]
      %v1006 = vld [vmem:[%s477 + $0x50] sm:$0xff]
      %v1007 = vld [vmem:[%s477 + $0x58] sm:$0xff]
      %v1008 = vld [vmem:[%s477 + $0x60] sm:$0xff]
      %v1009 = vld [vmem:[%s477 + $0x68] sm:$0xff]
      %v1010 = vld [vmem:[%s477 + $0x70] sm:$0xff]
      %v1011 = vld [vmem:[%s477 + $0x78] sm:$0xff]
      %1020 = vrot.lane.b32.xlu0 %v981, 123
      %v1021 = vpop.permute.xlu0 %1020
      %1022 = vrot.lane.b32.xlu0 %v983, 123
      %v1023 = vpop.permute.xlu0 %1022
      %1024 = vrot.lane.b32.xlu0 %v985, 123
      %v1025 = vpop.permute.xlu0 %1024
      %1026 = vrot.lane.b32.xlu0 %v987, 123
      %v1027 = vpop.permute.xlu0 %1026
      %1028 = vrot.lane.b32.xlu0 %v989, 123
      %v1029 = vpop.permute.xlu0 %1028
      %1030 = vrot.lane.b32.xlu0 %v991, 123
      %v1031 = vpop.permute.xlu0 %1030
      %1032 = vrot.lane.b32.xlu0 %v993, 123
      %v1033 = vpop.permute.xlu0 %1032
      %1034 = vrot.lane.b32.xlu0 %v995, 123
      %v1035 = vpop.permute.xlu0 %1034
      %1052 = vrot.lane.b32.xlu0 %v795, 2
      %v1053 = vpop.permute.xlu0 %1052
      %1054 = vrot.lane.b32.xlu0 %v797, 2
      %v1055 = vpop.permute.xlu0 %1054
      %1056 = vrot.lane.b32.xlu0 %v799, 2
      %v1057 = vpop.permute.xlu0 %1056
      %1058 = vrot.lane.b32.xlu0 %v801, 2
      %v1059 = vpop.permute.xlu0 %1058
      %1060 = vrot.lane.b32.xlu0 %v803, 2
      %v1061 = vpop.permute.xlu0 %1060
      %1062 = vrot.lane.b32.xlu0 %v805, 2
      %v1063 = vpop.permute.xlu0 %1062
      %1064 = vrot.lane.b32.xlu0 %v807, 2
      %v1065 = vpop.permute.xlu0 %1064
      %1066 = vrot.lane.b32.xlu0 %v809, 2
      %v1067 = vpop.permute.xlu0 %1066
      %v1076 = vsel %vm955, %v1021, %v1053
      %v1077 = vsel %vm955, %v1023, %v1055
      %v1078 = vsel %vm955, %v1025, %v1057
      %v1079 = vsel %vm955, %v1027, %v1059
      %v1080 = vsel %vm955, %v1029, %v1061
      %v1081 = vsel %vm955, %v1031, %v1063
      %v1082 = vsel %vm955, %v1033, %v1065
      %v1083 = vsel %vm955, %v1035, %v1067
      %vm1084 = vcmask 56320
      %v1085 = vsel %vm1084, %v1076, %v852
      %v1086 = vsel %vm1084, %v1077, %v855
      %v1087 = vsel %vm1084, %v1078, %v858
      %v1088 = vsel %vm1084, %v1079, %v861
      %v1089 = vsel %vm1084, %v1080, %v864
      %v1090 = vsel %vm1084, %v1081, %v867
      %v1091 = vsel %vm1084, %v1082, %v870
      %v1092 = vsel %vm1084, %v1083, %v873
      %s1093 = scalar_lea.vmem [#allocation2], 72
      %1094 = vst [vmem:[%s1093 + $0x18] sm:$0xff] %v996
      %1095 = vst [vmem:[%s1093 + $0x20] sm:$0xff] %v997
      %1096 = vst.msk [vmem:[%s1093 + $0x28] sm:$0xff] %vm490, %v1085
      %1097 = vst [vmem:[%s1093 + $0x60] sm:$0xff] %v998
      %1098 = vst [vmem:[%s1093 + $0x68] sm:$0xff] %v999
      %1099 = vst.msk [vmem:[%s1093 + $0x70] sm:$0xff] %vm490, %v1086
      %1100 = vst [vmem:[%s1093 + $0xa8] sm:$0xff] %v1000
      %1101 = vst [vmem:[%s1093 + $0xb0] sm:$0xff] %v1001
      %1102 = vst.msk [vmem:[%s1093 + $0xb8] sm:$0xff] %vm490, %v1087
      %1103 = vst [vmem:[%s1093 + $0xf0] sm:$0xff] %v1002
      %1104 = vst [vmem:[%s1093 + $0xf8] sm:$0xff] %v1003
      %1105 = vst.msk [vmem:[%s1093 + $0x100] sm:$0xff] %vm490, %v1088
      %1106 = vst [vmem:[%s1093 + $0x138] sm:$0xff] %v1004
      %1107 = vst [vmem:[%s1093 + $0x140] sm:$0xff] %v1005
      %1108 = vst.msk [vmem:[%s1093 + $0x148] sm:$0xff] %vm490, %v1089
      %1109 = vst [vmem:[%s1093 + $0x180] sm:$0xff] %v1006
      %1110 = vst [vmem:[%s1093 + $0x188] sm:$0xff] %v1007
      %1111 = vst.msk [vmem:[%s1093 + $0x190] sm:$0xff] %vm490, %v1090
      %1112 = vst [vmem:[%s1093 + $0x1c8] sm:$0xff] %v1008
      %1113 = vst [vmem:[%s1093 + $0x1d0] sm:$0xff] %v1009
      %1114 = vst.msk [vmem:[%s1093 + $0x1d8] sm:$0xff] %vm490, %v1091
      %1115 = vst [vmem:[%s1093 + $0x210] sm:$0xff] %v1010
      %1116 = vst [vmem:[%s1093 + $0x218] sm:$0xff] %v1011
      %1117 = vst.msk [vmem:[%s1093 + $0x220] sm:$0xff] %vm490, %v1092
      %v1118 = vld [vmem:[#allocation2] sm:$0x80]
      %v1119 = vld [vmem:[#allocation2 + $0x8] sm:$0x80]
      %v1120 = vld [vmem:[#allocation2 + $0x10] sm:$0x80]
      %v1121 = vld [vmem:[#allocation2 + $0x18] sm:$0x7f]
      %v1122 = vld [vmem:[#allocation2 + $0x20] sm:$0x7f]
      %v1123 = vld [vmem:[#allocation2 + $0x28] sm:$0x7f]
      %v1124 = vld [vmem:[#allocation2 + $0x48] sm:$0x80]
      %v1125 = vld [vmem:[#allocation2 + $0x50] sm:$0x80]
      %v1126 = vld [vmem:[#allocation2 + $0x58] sm:$0x80]
      %v1127 = vld [vmem:[#allocation2 + $0x60] sm:$0x7f]
      %v1128 = vld [vmem:[#allocation2 + $0x68] sm:$0x7f]
      %v1129 = vld [vmem:[#allocation2 + $0x70] sm:$0x7f]
      %v1130 = vld [vmem:[#allocation2 + $0x90] sm:$0x80]
      %v1131 = vld [vmem:[#allocation2 + $0x98] sm:$0x80]
      %v1132 = vld [vmem:[#allocation2 + $0xa0] sm:$0x80]
      %v1133 = vld [vmem:[#allocation2 + $0xa8] sm:$0x7f]
      %v1134 = vld [vmem:[#allocation2 + $0xb0] sm:$0x7f]
      %v1135 = vld [vmem:[#allocation2 + $0xb8] sm:$0x7f]
      %v1136 = vld [vmem:[#allocation2 + $0xd8] sm:$0x80]
      %v1137 = vld [vmem:[#allocation2 + $0xe0] sm:$0x80]
      %v1138 = vld [vmem:[#allocation2 + $0xe8] sm:$0x80]
      %v1139 = vld [vmem:[#allocation2 + $0xf0] sm:$0x7f]
      %v1140 = vld [vmem:[#allocation2 + $0xf8] sm:$0x7f]
      %v1141 = vld [vmem:[#allocation2 + $0x100] sm:$0x7f]
      %v1142 = vld [vmem:[#allocation2 + $0x120] sm:$0x80]
      %v1143 = vld [vmem:[#allocation2 + $0x128] sm:$0x80]
      %v1144 = vld [vmem:[#allocation2 + $0x130] sm:$0x80]
      %v1145 = vld [vmem:[#allocation2 + $0x138] sm:$0x7f]
      %v1146 = vld [vmem:[#allocation2 + $0x140] sm:$0x7f]
      %v1147 = vld [vmem:[#allocation2 + $0x148] sm:$0x7f]
      %v1148 = vld [vmem:[#allocation2 + $0x168] sm:$0x80]
      %v1149 = vld [vmem:[#allocation2 + $0x170] sm:$0x80]
      %v1150 = vld [vmem:[#allocation2 + $0x178] sm:$0x80]
      %v1151 = vld [vmem:[#allocation2 + $0x180] sm:$0x7f]
      %v1152 = vld [vmem:[#allocation2 + $0x188] sm:$0x7f]
      %v1153 = vld [vmem:[#allocation2 + $0x190] sm:$0x7f]
      %v1154 = vld [vmem:[#allocation2 + $0x1b0] sm:$0x80]
      %v1155 = vld [vmem:[#allocation2 + $0x1b8] sm:$0x80]
      %v1156 = vld [vmem:[#allocation2 + $0x1c0] sm:$0x80]
      %v1157 = vld [vmem:[#allocation2 + $0x1c8] sm:$0x7f]
      %v1158 = vld [vmem:[#allocation2 + $0x1d0] sm:$0x7f]
      %v1159 = vld [vmem:[#allocation2 + $0x1d8] sm:$0x7f]
      %v1160 = vld [vmem:[#allocation2 + $0x1f8] sm:$0x80]
      %v1161 = vld [vmem:[#allocation2 + $0x200] sm:$0x80]
      %v1162 = vld [vmem:[#allocation2 + $0x208] sm:$0x80]
      %v1163 = vld [vmem:[#allocation2 + $0x210] sm:$0x7f]
      %v1164 = vld [vmem:[#allocation2 + $0x218] sm:$0x7f]
      %v1165 = vld [vmem:[#allocation2 + $0x220] sm:$0x7f]
      %v1166 = vld [vmem:[#allocation2 + $0x18] sm:$0xff]
      %v1167 = vld [vmem:[#allocation2 + $0x20] sm:$0xff]
      %v1168 = vld [vmem:[#allocation2 + $0x28] sm:$0xff]
      %v1169 = vld [vmem:[#allocation2 + $0x60] sm:$0xff]
      %v1170 = vld [vmem:[#allocation2 + $0x68] sm:$0xff]
      %v1171 = vld [vmem:[#allocation2 + $0x70] sm:$0xff]
      %v1172 = vld [vmem:[#allocation2 + $0xa8] sm:$0xff]
      %v1173 = vld [vmem:[#allocation2 + $0xb0] sm:$0xff]
      %v1174 = vld [vmem:[#allocation2 + $0xb8] sm:$0xff]
      %v1175 = vld [vmem:[#allocation2 + $0xf0] sm:$0xff]
      %v1176 = vld [vmem:[#allocation2 + $0xf8] sm:$0xff]
      %v1177 = vld [vmem:[#allocation2 + $0x100] sm:$0xff]
      %v1178 = vld [vmem:[#allocation2 + $0x138] sm:$0xff]
      %v1179 = vld [vmem:[#allocation2 + $0x140] sm:$0xff]
      %v1180 = vld [vmem:[#allocation2 + $0x148] sm:$0xff]
      %v1181 = vld [vmem:[#allocation2 + $0x180] sm:$0xff]
      %v1182 = vld [vmem:[#allocation2 + $0x188] sm:$0xff]
      %v1183 = vld [vmem:[#allocation2 + $0x190] sm:$0xff]
      %v1184 = vld [vmem:[#allocation2 + $0x1c8] sm:$0xff]
      %v1185 = vld [vmem:[#allocation2 + $0x1d0] sm:$0xff]
      %v1186 = vld [vmem:[#allocation2 + $0x1d8] sm:$0xff]
      %v1187 = vld [vmem:[#allocation2 + $0x210] sm:$0xff]
      %v1188 = vld [vmem:[#allocation2 + $0x218] sm:$0xff]
      %v1189 = vld [vmem:[#allocation2 + $0x220] sm:$0xff]
      %v1190 = vld [vmem:[#allocation2 + $0x18] sm:$0xfe]
      %v1191 = vld [vmem:[#allocation2 + $0x20] sm:$0xfe]
      %v1192 = vld [vmem:[#allocation2 + $0x28] sm:$0xfe]
      %v1193 = vld [vmem:[#allocation2 + $0x30] sm:$0x1]
      %v1194 = vld [vmem:[#allocation2 + $0x38] sm:$0x1]
      %v1195 = vld [vmem:[#allocation2 + $0x40] sm:$0x1]
      %v1196 = vld [vmem:[#allocation2 + $0x60] sm:$0xfe]
      %v1197 = vld [vmem:[#allocation2 + $0x68] sm:$0xfe]
      %v1198 = vld [vmem:[#allocation2 + $0x70] sm:$0xfe]
      %v1199 = vld [vmem:[#allocation2 + $0x78] sm:$0x1]
      %v1200 = vld [vmem:[#allocation2 + $0x80] sm:$0x1]
      %v1201 = vld [vmem:[#allocation2 + $0x88] sm:$0x1]
      %v1202 = vld [vmem:[#allocation2 + $0xa8] sm:$0xfe]
      %v1203 = vld [vmem:[#allocation2 + $0xb0] sm:$0xfe]
      %v1204 = vld [vmem:[#allocation2 + $0xb8] sm:$0xfe]
      %v1205 = vld [vmem:[#allocation2 + $0xc0] sm:$0x1]
      %v1206 = vld [vmem:[#allocation2 + $0xc8] sm:$0x1]
      %v1207 = vld [vmem:[#allocation2 + $0xd0] sm:$0x1]
      %v1208 = vld [vmem:[#allocation2 + $0xf0] sm:$0xfe]
      %v1209 = vld [vmem:[#allocation2 + $0xf8] sm:$0xfe]
      %v1210 = vld [vmem:[#allocation2 + $0x100] sm:$0xfe]
      %v1211 = vld [vmem:[#allocation2 + $0x108] sm:$0x1]
      %v1212 = vld [vmem:[#allocation2 + $0x110] sm:$0x1]
      %v1213 = vld [vmem:[#allocation2 + $0x118] sm:$0x1]
      %v1214 = vld [vmem:[#allocation2 + $0x138] sm:$0xfe]
      %v1215 = vld [vmem:[#allocation2 + $0x140] sm:$0xfe]
      %v1216 = vld [vmem:[#allocation2 + $0x148] sm:$0xfe]
      %v1217 = vld [vmem:[#allocation2 + $0x150] sm:$0x1]
      %v1218 = vld [vmem:[#allocation2 + $0x158] sm:$0x1]
      %v1219 = vld [vmem:[#allocation2 + $0x160] sm:$0x1]
      %v1220 = vld [vmem:[#allocation2 + $0x180] sm:$0xfe]
      %v1221 = vld [vmem:[#allocation2 + $0x188] sm:$0xfe]
      %v1222 = vld [vmem:[#allocation2 + $0x190] sm:$0xfe]
      %v1223 = vld [vmem:[#allocation2 + $0x198] sm:$0x1]
      %v1224 = vld [vmem:[#allocation2 + $0x1a0] sm:$0x1]
      %v1225 = vld [vmem:[#allocation2 + $0x1a8] sm:$0x1]
      %v1226 = vld [vmem:[#allocation2 + $0x1c8] sm:$0xfe]
      %v1227 = vld [vmem:[#allocation2 + $0x1d0] sm:$0xfe]
      %v1228 = vld [vmem:[#allocation2 + $0x1d8] sm:$0xfe]
      %v1229 = vld [vmem:[#allocation2 + $0x1e0] sm:$0x1]
      %v1230 = vld [vmem:[#allocation2 + $0x1e8] sm:$0x1]
      %v1231 = vld [vmem:[#allocation2 + $0x1f0] sm:$0x1]
      %v1232 = vld [vmem:[#allocation2 + $0x210] sm:$0xfe]
      %v1233 = vld [vmem:[#allocation2 + $0x218] sm:$0xfe]
      %v1234 = vld [vmem:[#allocation2 + $0x220] sm:$0xfe]
      %v1235 = vld [vmem:[#allocation2 + $0x228] sm:$0x1]
      %v1236 = vld [vmem:[#allocation2 + $0x230] sm:$0x1]
      %v1237 = vld [vmem:[#allocation2 + $0x238] sm:$0x1]
      %v1238 = vld [vmem:[%s1093] sm:$0x80]
      %v1239 = vld [vmem:[%s1093 + $0x8] sm:$0x80]
      %v1240 = vld [vmem:[%s1093 + $0x10] sm:$0x80]
      %v1241 = vld [vmem:[%s1093 + $0x18] sm:$0x7f]
      %v1242 = vld [vmem:[%s1093 + $0x20] sm:$0x7f]
      %v1243 = vld [vmem:[%s1093 + $0x28] sm:$0x7f]
      %v1244 = vld [vmem:[%s1093 + $0x48] sm:$0x80]
      %v1245 = vld [vmem:[%s1093 + $0x50] sm:$0x80]
      %v1246 = vld [vmem:[%s1093 + $0x58] sm:$0x80]
      %v1247 = vld [vmem:[%s1093 + $0x60] sm:$0x7f]
      %v1248 = vld [vmem:[%s1093 + $0x68] sm:$0x7f]
      %v1249 = vld [vmem:[%s1093 + $0x70] sm:$0x7f]
      %v1250 = vld [vmem:[%s1093 + $0x90] sm:$0x80]
      %v1251 = vld [vmem:[%s1093 + $0x98] sm:$0x80]
      %v1252 = vld [vmem:[%s1093 + $0xa0] sm:$0x80]
      %v1253 = vld [vmem:[%s1093 + $0xa8] sm:$0x7f]
      %v1254 = vld [vmem:[%s1093 + $0xb0] sm:$0x7f]
      %v1255 = vld [vmem:[%s1093 + $0xb8] sm:$0x7f]
      %v1256 = vld [vmem:[%s1093 + $0xd8] sm:$0x80]
      %v1257 = vld [vmem:[%s1093 + $0xe0] sm:$0x80]
      %v1258 = vld [vmem:[%s1093 + $0xe8] sm:$0x80]
      %v1259 = vld [vmem:[%s1093 + $0xf0] sm:$0x7f]
      %v1260 = vld [vmem:[%s1093 + $0xf8] sm:$0x7f]
      %v1261 = vld [vmem:[%s1093 + $0x100] sm:$0x7f]
      %v1262 = vld [vmem:[%s1093 + $0x120] sm:$0x80]
      %v1263 = vld [vmem:[%s1093 + $0x128] sm:$0x80]
      %v1264 = vld [vmem:[%s1093 + $0x130] sm:$0x80]
      %v1265 = vld [vmem:[%s1093 + $0x138] sm:$0x7f]
      %v1266 = vld [vmem:[%s1093 + $0x140] sm:$0x7f]
      %v1267 = vld [vmem:[%s1093 + $0x148] sm:$0x7f]
      %v1268 = vld [vmem:[%s1093 + $0x168] sm:$0x80]
      %v1269 = vld [vmem:[%s1093 + $0x170] sm:$0x80]
      %v1270 = vld [vmem:[%s1093 + $0x178] sm:$0x80]
      %v1271 = vld [vmem:[%s1093 + $0x180] sm:$0x7f]
      %v1272 = vld [vmem:[%s1093 + $0x188] sm:$0x7f]
      %v1273 = vld [vmem:[%s1093 + $0x190] sm:$0x7f]
      %v1274 = vld [vmem:[%s1093 + $0x1b0] sm:$0x80]
      %v1275 = vld [vmem:[%s1093 + $0x1b8] sm:$0x80]
      %v1276 = vld [vmem:[%s1093 + $0x1c0] sm:$0x80]
      %v1277 = vld [vmem:[%s1093 + $0x1c8] sm:$0x7f]
      %v1278 = vld [vmem:[%s1093 + $0x1d0] sm:$0x7f]
      %v1279 = vld [vmem:[%s1093 + $0x1d8] sm:$0x7f]
      %v1280 = vld [vmem:[%s1093 + $0x1f8] sm:$0x80]
      %v1281 = vld [vmem:[%s1093 + $0x200] sm:$0x80]
      %v1282 = vld [vmem:[%s1093 + $0x208] sm:$0x80]
      %v1283 = vld [vmem:[%s1093 + $0x210] sm:$0x7f]
      %v1284 = vld [vmem:[%s1093 + $0x218] sm:$0x7f]
      %v1285 = vld [vmem:[%s1093 + $0x220] sm:$0x7f]
      %v1286 = vld [vmem:[%s1093 + $0x18] sm:$0xff]
      %v1287 = vld [vmem:[%s1093 + $0x20] sm:$0xff]
      %v1288 = vld [vmem:[%s1093 + $0x28] sm:$0xff]
      %v1289 = vld [vmem:[%s1093 + $0x60] sm:$0xff]
      %v1290 = vld [vmem:[%s1093 + $0x68] sm:$0xff]
      %v1291 = vld [vmem:[%s1093 + $0x70] sm:$0xff]
      %v1292 = vld [vmem:[%s1093 + $0xa8] sm:$0xff]
      %v1293 = vld [vmem:[%s1093 + $0xb0] sm:$0xff]
      %v1294 = vld [vmem:[%s1093 + $0xb8] sm:$0xff]
      %v1295 = vld [vmem:[%s1093 + $0xf0] sm:$0xff]
      %v1296 = vld [vmem:[%s1093 + $0xf8] sm:$0xff]
      %v1297 = vld [vmem:[%s1093 + $0x100] sm:$0xff]
      %v1298 = vld [vmem:[%s1093 + $0x138] sm:$0xff]
      %v1299 = vld [vmem:[%s1093 + $0x140] sm:$0xff]
      %v1300 = vld [vmem:[%s1093 + $0x148] sm:$0xff]
      %v1301 = vld [vmem:[%s1093 + $0x180] sm:$0xff]
      %v1302 = vld [vmem:[%s1093 + $0x188] sm:$0xff]
      %v1303 = vld [vmem:[%s1093 + $0x190] sm:$0xff]
      %v1304 = vld [vmem:[%s1093 + $0x1c8] sm:$0xff]
      %v1305 = vld [vmem:[%s1093 + $0x1d0] sm:$0xff]
      %v1306 = vld [vmem:[%s1093 + $0x1d8] sm:$0xff]
      %v1307 = vld [vmem:[%s1093 + $0x210] sm:$0xff]
      %v1308 = vld [vmem:[%s1093 + $0x218] sm:$0xff]
      %v1309 = vld [vmem:[%s1093 + $0x220] sm:$0xff]
      %v1310 = vld [vmem:[%s1093 + $0x18] sm:$0xfe]
      %v1311 = vld [vmem:[%s1093 + $0x20] sm:$0xfe]
      %v1312 = vld [vmem:[%s1093 + $0x28] sm:$0xfe]
      %v1313 = vld [vmem:[%s1093 + $0x30] sm:$0x1]
      %v1314 = vld [vmem:[%s1093 + $0x38] sm:$0x1]
      %v1315 = vld [vmem:[%s1093 + $0x40] sm:$0x1]
      %v1316 = vld [vmem:[%s1093 + $0x60] sm:$0xfe]
      %v1317 = vld [vmem:[%s1093 + $0x68] sm:$0xfe]
      %v1318 = vld [vmem:[%s1093 + $0x70] sm:$0xfe]
      %v1319 = vld [vmem:[%s1093 + $0x78] sm:$0x1]
      %v1320 = vld [vmem:[%s1093 + $0x80] sm:$0x1]
      %v1321 = vld [vmem:[%s1093 + $0x88] sm:$0x1]
      %v1322 = vld [vmem:[%s1093 + $0xa8] sm:$0xfe]
      %v1323 = vld [vmem:[%s1093 + $0xb0] sm:$0xfe]
      %v1324 = vld [vmem:[%s1093 + $0xb8] sm:$0xfe]
      %v1325 = vld [vmem:[%s1093 + $0xc0] sm:$0x1]
      %v1326 = vld [vmem:[%s1093 + $0xc8] sm:$0x1]
      %v1327 = vld [vmem:[%s1093 + $0xd0] sm:$0x1]
      %v1328 = vld [vmem:[%s1093 + $0xf0] sm:$0xfe]
      %v1329 = vld [vmem:[%s1093 + $0xf8] sm:$0xfe]
      %v1330 = vld [vmem:[%s1093 + $0x100] sm:$0xfe]
      %v1331 = vld [vmem:[%s1093 + $0x108] sm:$0x1]
      %v1332 = vld [vmem:[%s1093 + $0x110] sm:$0x1]
      %v1333 = vld [vmem:[%s1093 + $0x118] sm:$0x1]
      %v1334 = vld [vmem:[%s1093 + $0x138] sm:$0xfe]
      %v1335 = vld [vmem:[%s1093 + $0x140] sm:$0xfe]
      %v1336 = vld [vmem:[%s1093 + $0x148] sm:$0xfe]
      %v1337 = vld [vmem:[%s1093 + $0x150] sm:$0x1]
      %v1338 = vld [vmem:[%s1093 + $0x158] sm:$0x1]
      %v1339 = vld [vmem:[%s1093 + $0x160] sm:$0x1]
      %v1340 = vld [vmem:[%s1093 + $0x180] sm:$0xfe]
      %v1341 = vld [vmem:[%s1093 + $0x188] sm:$0xfe]
      %v1342 = vld [vmem:[%s1093 + $0x190] sm:$0xfe]
      %v1343 = vld [vmem:[%s1093 + $0x198] sm:$0x1]
      %v1344 = vld [vmem:[%s1093 + $0x1a0] sm:$0x1]
      %v1345 = vld [vmem:[%s1093 + $0x1a8] sm:$0x1]
      %v1346 = vld [vmem:[%s1093 + $0x1c8] sm:$0xfe]
      %v1347 = vld [vmem:[%s1093 + $0x1d0] sm:$0xfe]
      %v1348 = vld [vmem:[%s1093 + $0x1d8] sm:$0xfe]
      %v1349 = vld [vmem:[%s1093 + $0x1e0] sm:$0x1]
      %v1350 = vld [vmem:[%s1093 + $0x1e8] sm:$0x1]
      %v1351 = vld [vmem:[%s1093 + $0x1f0] sm:$0x1]
      %v1352 = vld [vmem:[%s1093 + $0x210] sm:$0xfe]
      %v1353 = vld [vmem:[%s1093 + $0x218] sm:$0xfe]
      %v1354 = vld [vmem:[%s1093 + $0x220] sm:$0xfe]
      %v1355 = vld [vmem:[%s1093 + $0x228] sm:$0x1]
      %v1356 = vld [vmem:[%s1093 + $0x230] sm:$0x1]
      %v1357 = vld [vmem:[%s1093 + $0x238] sm:$0x1]
      %s1358 = scalar_lea.vmem [#allocation2], 144
      %v1359 = vld [vmem:[%s1358] sm:$0x80]
      %v1360 = vld [vmem:[%s1358 + $0x8] sm:$0x80]
      %v1361 = vld [vmem:[%s1358 + $0x10] sm:$0x80]
      %v1362 = vld [vmem:[%s1358 + $0x18] sm:$0x7f]
      %v1363 = vld [vmem:[%s1358 + $0x20] sm:$0x7f]
      %v1364 = vld [vmem:[%s1358 + $0x28] sm:$0x7f]
      %v1365 = vld [vmem:[%s1358 + $0x48] sm:$0x80]
      %v1366 = vld [vmem:[%s1358 + $0x50] sm:$0x80]
      %v1367 = vld [vmem:[%s1358 + $0x58] sm:$0x80]
      %v1368 = vld [vmem:[%s1358 + $0x60] sm:$0x7f]
      %v1369 = vld [vmem:[%s1358 + $0x68] sm:$0x7f]
      %v1370 = vld [vmem:[%s1358 + $0x70] sm:$0x7f]
      %v1371 = vld [vmem:[%s1358 + $0x90] sm:$0x80]
      %v1372 = vld [vmem:[%s1358 + $0x98] sm:$0x80]
      %v1373 = vld [vmem:[%s1358 + $0xa0] sm:$0x80]
      %v1374 = vld [vmem:[%s1358 + $0xa8] sm:$0x7f]
      %v1375 = vld [vmem:[%s1358 + $0xb0] sm:$0x7f]
      %v1376 = vld [vmem:[%s1358 + $0xb8] sm:$0x7f]
      %v1377 = vld [vmem:[%s1358 + $0xd8] sm:$0x80]
      %v1378 = vld [vmem:[%s1358 + $0xe0] sm:$0x80]
      %v1379 = vld [vmem:[%s1358 + $0xe8] sm:$0x80]
      %v1380 = vld [vmem:[%s1358 + $0xf0] sm:$0x7f]
      %v1381 = vld [vmem:[%s1358 + $0xf8] sm:$0x7f]
      %v1382 = vld [vmem:[%s1358 + $0x100] sm:$0x7f]
      %v1383 = vld [vmem:[%s1358 + $0x120] sm:$0x80]
      %v1384 = vld [vmem:[%s1358 + $0x128] sm:$0x80]
      %v1385 = vld [vmem:[%s1358 + $0x130] sm:$0x80]
      %v1386 = vld [vmem:[%s1358 + $0x138] sm:$0x7f]
      %v1387 = vld [vmem:[%s1358 + $0x140] sm:$0x7f]
      %v1388 = vld [vmem:[%s1358 + $0x148] sm:$0x7f]
      %v1389 = vld [vmem:[%s1358 + $0x168] sm:$0x80]
      %v1390 = vld [vmem:[%s1358 + $0x170] sm:$0x80]
      %v1391 = vld [vmem:[%s1358 + $0x178] sm:$0x80]
      %v1392 = vld [vmem:[%s1358 + $0x180] sm:$0x7f]
      %v1393 = vld [vmem:[%s1358 + $0x188] sm:$0x7f]
      %v1394 = vld [vmem:[%s1358 + $0x190] sm:$0x7f]
      %v1395 = vld [vmem:[%s1358 + $0x1b0] sm:$0x80]
      %v1396 = vld [vmem:[%s1358 + $0x1b8] sm:$0x80]
      %v1397 = vld [vmem:[%s1358 + $0x1c0] sm:$0x80]
      %v1398 = vld [vmem:[%s1358 + $0x1c8] sm:$0x7f]
      %v1399 = vld [vmem:[%s1358 + $0x1d0] sm:$0x7f]
      %v1400 = vld [vmem:[%s1358 + $0x1d8] sm:$0x7f]
      %v1401 = vld [vmem:[%s1358 + $0x1f8] sm:$0x80]
      %v1402 = vld [vmem:[%s1358 + $0x200] sm:$0x80]
      %v1403 = vld [vmem:[%s1358 + $0x208] sm:$0x80]
      %v1404 = vld [vmem:[%s1358 + $0x210] sm:$0x7f]
      %v1405 = vld [vmem:[%s1358 + $0x218] sm:$0x7f]
      %v1406 = vld [vmem:[%s1358 + $0x220] sm:$0x7f]
      %v1407 = vld [vmem:[%s1358 + $0x18] sm:$0xff]
      %v1408 = vld [vmem:[%s1358 + $0x20] sm:$0xff]
      %v1409 = vld [vmem:[%s1358 + $0x28] sm:$0xff]
      %v1410 = vld [vmem:[%s1358 + $0x60] sm:$0xff]
      %v1411 = vld [vmem:[%s1358 + $0x68] sm:$0xff]
      %v1412 = vld [vmem:[%s1358 + $0x70] sm:$0xff]
      %v1413 = vld [vmem:[%s1358 + $0xa8] sm:$0xff]
      %v1414 = vld [vmem:[%s1358 + $0xb0] sm:$0xff]
      %v1415 = vld [vmem:[%s1358 + $0xb8] sm:$0xff]
      %v1416 = vld [vmem:[%s1358 + $0xf0] sm:$0xff]
      %v1417 = vld [vmem:[%s1358 + $0xf8] sm:$0xff]
      %v1418 = vld [vmem:[%s1358 + $0x100] sm:$0xff]
      %v1419 = vld [vmem:[%s1358 + $0x138] sm:$0xff]
      %v1420 = vld [vmem:[%s1358 + $0x140] sm:$0xff]
      %v1421 = vld [vmem:[%s1358 + $0x148] sm:$0xff]
      %v1422 = vld [vmem:[%s1358 + $0x180] sm:$0xff]
      %v1423 = vld [vmem:[%s1358 + $0x188] sm:$0xff]
      %v1424 = vld [vmem:[%s1358 + $0x190] sm:$0xff]
      %v1425 = vld [vmem:[%s1358 + $0x1c8] sm:$0xff]
      %v1426 = vld [vmem:[%s1358 + $0x1d0] sm:$0xff]
      %v1427 = vld [vmem:[%s1358 + $0x1d8] sm:$0xff]
      %v1428 = vld [vmem:[%s1358 + $0x210] sm:$0xff]
      %v1429 = vld [vmem:[%s1358 + $0x218] sm:$0xff]
      %v1430 = vld [vmem:[%s1358 + $0x220] sm:$0xff]
      %v1431 = vld [vmem:[%s1358 + $0x18] sm:$0xfe]
      %v1432 = vld [vmem:[%s1358 + $0x20] sm:$0xfe]
      %v1433 = vld [vmem:[%s1358 + $0x28] sm:$0xfe]
      %v1434 = vld [vmem:[%s1358 + $0x30] sm:$0x1]
      %v1435 = vld [vmem:[%s1358 + $0x38] sm:$0x1]
      %v1436 = vld [vmem:[%s1358 + $0x40] sm:$0x1]
      %v1437 = vld [vmem:[%s1358 + $0x60] sm:$0xfe]
      %v1438 = vld [vmem:[%s1358 + $0x68] sm:$0xfe]
      %v1439 = vld [vmem:[%s1358 + $0x70] sm:$0xfe]
      %v1440 = vld [vmem:[%s1358 + $0x78] sm:$0x1]
      %v1441 = vld [vmem:[%s1358 + $0x80] sm:$0x1]
      %v1442 = vld [vmem:[%s1358 + $0x88] sm:$0x1]
      %v1443 = vld [vmem:[%s1358 + $0xa8] sm:$0xfe]
      %v1444 = vld [vmem:[%s1358 + $0xb0] sm:$0xfe]
      %v1445 = vld [vmem:[%s1358 + $0xb8] sm:$0xfe]
      %v1446 = vld [vmem:[%s1358 + $0xc0] sm:$0x1]
      %v1447 = vld [vmem:[%s1358 + $0xc8] sm:$0x1]
      %v1448 = vld [vmem:[%s1358 + $0xd0] sm:$0x1]
      %v1449 = vld [vmem:[%s1358 + $0xf0] sm:$0xfe]
      %v1450 = vld [vmem:[%s1358 + $0xf8] sm:$0xfe]
      %v1451 = vld [vmem:[%s1358 + $0x100] sm:$0xfe]
      %v1452 = vld [vmem:[%s1358 + $0x108] sm:$0x1]
      %v1453 = vld [vmem:[%s1358 + $0x110] sm:$0x1]
      %v1454 = vld [vmem:[%s1358 + $0x118] sm:$0x1]
      %v1455 = vld [vmem:[%s1358 + $0x138] sm:$0xfe]
      %v1456 = vld [vmem:[%s1358 + $0x140] sm:$0xfe]
      %v1457 = vld [vmem:[%s1358 + $0x148] sm:$0xfe]
      %v1458 = vld [vmem:[%s1358 + $0x150] sm:$0x1]
      %v1459 = vld [vmem:[%s1358 + $0x158] sm:$0x1]
      %v1460 = vld [vmem:[%s1358 + $0x160] sm:$0x1]
      %v1461 = vld [vmem:[%s1358 + $0x180] sm:$0xfe]
      %v1462 = vld [vmem:[%s1358 + $0x188] sm:$0xfe]
      %v1463 = vld [vmem:[%s1358 + $0x190] sm:$0xfe]
      %v1464 = vld [vmem:[%s1358 + $0x198] sm:$0x1]
      %v1465 = vld [vmem:[%s1358 + $0x1a0] sm:$0x1]
      %v1466 = vld [vmem:[%s1358 + $0x1a8] sm:$0x1]
      %v1467 = vld [vmem:[%s1358 + $0x1c8] sm:$0xfe]
      %v1468 = vld [vmem:[%s1358 + $0x1d0] sm:$0xfe]
      %v1469 = vld [vmem:[%s1358 + $0x1d8] sm:$0xfe]
      %v1470 = vld [vmem:[%s1358 + $0x1e0] sm:$0x1]
      %v1471 = vld [vmem:[%s1358 + $0x1e8] sm:$0x1]
      %v1472 = vld [vmem:[%s1358 + $0x1f0] sm:$0x1]
      %v1473 = vld [vmem:[%s1358 + $0x210] sm:$0xfe]
      %v1474 = vld [vmem:[%s1358 + $0x218] sm:$0xfe]
      %v1475 = vld [vmem:[%s1358 + $0x220] sm:$0xfe]
      %v1476 = vld [vmem:[%s1358 + $0x228] sm:$0x1]
      %v1477 = vld [vmem:[%s1358 + $0x230] sm:$0x1]
      %v1478 = vld [vmem:[%s1358 + $0x238] sm:$0x1]
      %v1503 = vrot.slane %v1166, 1
      %v1504 = vrot.slane %v1167, 1
      %v1505 = vrot.slane %v1168, 1
      %v1506 = vrot.slane %v1169, 1
      %v1507 = vrot.slane %v1170, 1
      %v1508 = vrot.slane %v1171, 1
      %v1509 = vrot.slane %v1172, 1
      %v1510 = vrot.slane %v1173, 1
      %v1511 = vrot.slane %v1174, 1
      %v1512 = vrot.slane %v1175, 1
      %v1513 = vrot.slane %v1176, 1
      %v1514 = vrot.slane %v1177, 1
      %v1515 = vrot.slane %v1178, 1
      %v1516 = vrot.slane %v1179, 1
      %v1517 = vrot.slane %v1180, 1
      %v1518 = vrot.slane %v1181, 1
      %v1519 = vrot.slane %v1182, 1
      %v1520 = vrot.slane %v1183, 1
      %v1521 = vrot.slane %v1184, 1
      %v1522 = vrot.slane %v1185, 1
      %v1523 = vrot.slane %v1186, 1
      %v1524 = vrot.slane %v1187, 1
      %v1525 = vrot.slane %v1188, 1
      %v1526 = vrot.slane %v1189, 1
      %1527 = vrot.lane.b32.xlu0 %v1503, 8
      %v1528 = vpop.permute.xlu0 %1527
      %1529 = vrot.lane.b32.xlu0 %v1504, 8
      %v1530 = vpop.permute.xlu0 %1529
      %1531 = vrot.lane.b32.xlu0 %v1505, 8
      %v1532 = vpop.permute.xlu0 %1531
      %1533 = vrot.lane.b32.xlu0 %v1506, 8
      %v1534 = vpop.permute.xlu0 %1533
      %1535 = vrot.lane.b32.xlu0 %v1507, 8
      %v1536 = vpop.permute.xlu0 %1535
      %1537 = vrot.lane.b32.xlu0 %v1508, 8
      %v1538 = vpop.permute.xlu0 %1537
      %1539 = vrot.lane.b32.xlu0 %v1509, 8
      %v1540 = vpop.permute.xlu0 %1539
      %1541 = vrot.lane.b32.xlu0 %v1510, 8
      %v1542 = vpop.permute.xlu0 %1541
      %1543 = vrot.lane.b32.xlu0 %v1511, 8
      %v1544 = vpop.permute.xlu0 %1543
      %1545 = vrot.lane.b32.xlu0 %v1512, 8
      %v1546 = vpop.permute.xlu0 %1545
      %1547 = vrot.lane.b32.xlu0 %v1513, 8
      %v1548 = vpop.permute.xlu0 %1547
      %1549 = vrot.lane.b32.xlu0 %v1514, 8
      %v1550 = vpop.permute.xlu0 %1549
      %1551 = vrot.lane.b32.xlu0 %v1515, 8
      %v1552 = vpop.permute.xlu0 %1551
      %1553 = vrot.lane.b32.xlu0 %v1516, 8
      %v1554 = vpop.permute.xlu0 %1553
      %1555 = vrot.lane.b32.xlu0 %v1517, 8
      %v1556 = vpop.permute.xlu0 %1555
      %1557 = vrot.lane.b32.xlu0 %v1518, 8
      %v1558 = vpop.permute.xlu0 %1557
      %1559 = vrot.lane.b32.xlu0 %v1519, 8
      %v1560 = vpop.permute.xlu0 %1559
      %1561 = vrot.lane.b32.xlu0 %v1520, 8
      %v1562 = vpop.permute.xlu0 %1561
      %1563 = vrot.lane.b32.xlu0 %v1521, 8
      %v1564 = vpop.permute.xlu0 %1563
      %1565 = vrot.lane.b32.xlu0 %v1522, 8
      %v1566 = vpop.permute.xlu0 %1565
      %1567 = vrot.lane.b32.xlu0 %v1523, 8
      %v1568 = vpop.permute.xlu0 %1567
      %1569 = vrot.lane.b32.xlu0 %v1524, 8
      %v1570 = vpop.permute.xlu0 %1569
      %1571 = vrot.lane.b32.xlu0 %v1525, 8
      %v1572 = vpop.permute.xlu0 %1571
      %1573 = vrot.lane.b32.xlu0 %v1526, 8
      %v1574 = vpop.permute.xlu0 %1573
      %v1575 = vsel %vm490, %v1528, %v1530
      %v1576 = vsel %vm490, %v1530, %v1532
      %v1577 = vsel %vm490, %v1534, %v1536
      %v1578 = vsel %vm490, %v1536, %v1538
      %v1579 = vsel %vm490, %v1540, %v1542
      %v1580 = vsel %vm490, %v1542, %v1544
      %v1581 = vsel %vm490, %v1546, %v1548
      %v1582 = vsel %vm490, %v1548, %v1550
      %v1583 = vsel %vm490, %v1552, %v1554
      %v1584 = vsel %vm490, %v1554, %v1556
      %v1585 = vsel %vm490, %v1558, %v1560
      %v1586 = vsel %vm490, %v1560, %v1562
      %v1587 = vsel %vm490, %v1564, %v1566
      %v1588 = vsel %vm490, %v1566, %v1568
      %v1589 = vsel %vm490, %v1570, %v1572
      %v1590 = vsel %vm490, %v1572, %v1574
      %vm1655 = vcmask 1045504
      %v1656 = vrot.slane %v1190, 2
      %v1657 = vrot.slane %v1191, 2
      %v1658 = vrot.slane %v1192, 2
      %v1659 = vrot.slane %v1193, 2
      %v1660 = vsel %vm1655, %v1656, %v1659
      %v1661 = vrot.slane %v1194, 2
      %v1662 = vsel %vm1655, %v1657, %v1661
      %v1663 = vrot.slane %v1195, 2
      %v1664 = vsel %vm1655, %v1658, %v1663
      %v1665 = vrot.slane %v1196, 2
      %v1666 = vrot.slane %v1197, 2
      %v1667 = vrot.slane %v1198, 2
      %v1668 = vrot.slane %v1199, 2
      %v1669 = vsel %vm1655, %v1665, %v1668
      %v1670 = vrot.slane %v1200, 2
      %v1671 = vsel %vm1655, %v1666, %v1670
      %v1672 = vrot.slane %v1201, 2
      %v1673 = vsel %vm1655, %v1667, %v1672
      %v1674 = vrot.slane %v1202, 2
      %v1675 = vrot.slane %v1203, 2
      %v1676 = vrot.slane %v1204, 2
      %v1677 = vrot.slane %v1205, 2
      %v1678 = vsel %vm1655, %v1674, %v1677
      %v1679 = vrot.slane %v1206, 2
      %v1680 = vsel %vm1655, %v1675, %v1679
      %v1681 = vrot.slane %v1207, 2
      %v1682 = vsel %vm1655, %v1676, %v1681
      %v1683 = vrot.slane %v1208, 2
      %v1684 = vrot.slane %v1209, 2
      %v1685 = vrot.slane %v1210, 2
      %v1686 = vrot.slane %v1211, 2
      %v1687 = vsel %vm1655, %v1683, %v1686
      %v1688 = vrot.slane %v1212, 2
      %v1689 = vsel %vm1655, %v1684, %v1688
      %v1690 = vrot.slane %v1213, 2
      %v1691 = vsel %vm1655, %v1685, %v1690
      %v1692 = vrot.slane %v1214, 2
      %v1693 = vrot.slane %v1215, 2
      %v1694 = vrot.slane %v1216, 2
      %v1695 = vrot.slane %v1217, 2
      %v1696 = vsel %vm1655, %v1692, %v1695
      %v1697 = vrot.slane %v1218, 2
      %v1698 = vsel %vm1655, %v1693, %v1697
      %v1699 = vrot.slane %v1219, 2
      %v1700 = vsel %vm1655, %v1694, %v1699
      %v1701 = vrot.slane %v1220, 2
      %v1702 = vrot.slane %v1221, 2
      %v1703 = vrot.slane %v1222, 2
      %v1704 = vrot.slane %v1223, 2
      %v1705 = vsel %vm1655, %v1701, %v1704
      %v1706 = vrot.slane %v1224, 2
      %v1707 = vsel %vm1655, %v1702, %v1706
      %v1708 = vrot.slane %v1225, 2
      %v1709 = vsel %vm1655, %v1703, %v1708
      %v1710 = vrot.slane %v1226, 2
      %v1711 = vrot.slane %v1227, 2
      %v1712 = vrot.slane %v1228, 2
      %v1713 = vrot.slane %v1229, 2
      %v1714 = vsel %vm1655, %v1710, %v1713
      %v1715 = vrot.slane %v1230, 2
      %v1716 = vsel %vm1655, %v1711, %v1715
      %v1717 = vrot.slane %v1231, 2
      %v1718 = vsel %vm1655, %v1712, %v1717
      %v1719 = vrot.slane %v1232, 2
      %v1720 = vrot.slane %v1233, 2
      %v1721 = vrot.slane %v1234, 2
      %v1722 = vrot.slane %v1235, 2
      %v1723 = vsel %vm1655, %v1719, %v1722
      %v1724 = vrot.slane %v1236, 2
      %v1725 = vsel %vm1655, %v1720, %v1724
      %v1726 = vrot.slane %v1237, 2
      %v1727 = vsel %vm1655, %v1721, %v1726
      %1728 = vrot.lane.b32.xlu0 %v1656, 16
      %v1729 = vpop.permute.xlu0 %1728
      %1730 = vrot.lane.b32.xlu0 %v1657, 16
      %v1731 = vpop.permute.xlu0 %1730
      %1732 = vrot.lane.b32.xlu0 %v1658, 16
      %v1733 = vpop.permute.xlu0 %1732
      %1734 = vrot.lane.b32.xlu0 %v1660, 16
      %v1735 = vpop.permute.xlu0 %1734
      %1736 = vrot.lane.b32.xlu0 %v1662, 16
      %v1737 = vpop.permute.xlu0 %1736
      %1738 = vrot.lane.b32.xlu0 %v1664, 16
      %v1739 = vpop.permute.xlu0 %1738
      %1740 = vrot.lane.b32.xlu0 %v1665, 16
      %v1741 = vpop.permute.xlu0 %1740
      %1742 = vrot.lane.b32.xlu0 %v1666, 16
      %v1743 = vpop.permute.xlu0 %1742
      %1744 = vrot.lane.b32.xlu0 %v1667, 16
      %v1745 = vpop.permute.xlu0 %1744
      %1746 = vrot.lane.b32.xlu0 %v1669, 16
      %v1747 = vpop.permute.xlu0 %1746
      %1748 = vrot.lane.b32.xlu0 %v1671, 16
      %v1749 = vpop.permute.xlu0 %1748
      %1750 = vrot.lane.b32.xlu0 %v1673, 16
      %v1751 = vpop.permute.xlu0 %1750
      %1752 = vrot.lane.b32.xlu0 %v1674, 16
      %v1753 = vpop.permute.xlu0 %1752
      %1754 = vrot.lane.b32.xlu0 %v1675, 16
      %v1755 = vpop.permute.xlu0 %1754
      %1756 = vrot.lane.b32.xlu0 %v1676, 16
      %v1757 = vpop.permute.xlu0 %1756
      %1758 = vrot.lane.b32.xlu0 %v1678, 16
      %v1759 = vpop.permute.xlu0 %1758
      %1760 = vrot.lane.b32.xlu0 %v1680, 16
      %v1761 = vpop.permute.xlu0 %1760
      %1762 = vrot.lane.b32.xlu0 %v1682, 16
      %v1763 = vpop.permute.xlu0 %1762
      %1764 = vrot.lane.b32.xlu0 %v1683, 16
      %v1765 = vpop.permute.xlu0 %1764
      %1766 = vrot.lane.b32.xlu0 %v1684, 16
      %v1767 = vpop.permute.xlu0 %1766
      %1768 = vrot.lane.b32.xlu0 %v1685, 16
      %v1769 = vpop.permute.xlu0 %1768
      %1770 = vrot.lane.b32.xlu0 %v1687, 16
      %v1771 = vpop.permute.xlu0 %1770
      %1772 = vrot.lane.b32.xlu0 %v1689, 16
      %v1773 = vpop.permute.xlu0 %1772
      %1774 = vrot.lane.b32.xlu0 %v1691, 16
      %v1775 = vpop.permute.xlu0 %1774
      %1776 = vrot.lane.b32.xlu0 %v1692, 16
      %v1777 = vpop.permute.xlu0 %1776
      %1778 = vrot.lane.b32.xlu0 %v1693, 16
      %v1779 = vpop.permute.xlu0 %1778
      %1780 = vrot.lane.b32.xlu0 %v1694, 16
      %v1781 = vpop.permute.xlu0 %1780
      %1782 = vrot.lane.b32.xlu0 %v1696, 16
      %v1783 = vpop.permute.xlu0 %1782
      %1784 = vrot.lane.b32.xlu0 %v1698, 16
      %v1785 = vpop.permute.xlu0 %1784
      %1786 = vrot.lane.b32.xlu0 %v1700, 16
      %v1787 = vpop.permute.xlu0 %1786
      %1788 = vrot.lane.b32.xlu0 %v1701, 16
      %v1789 = vpop.permute.xlu0 %1788
      %1790 = vrot.lane.b32.xlu0 %v1702, 16
      %v1791 = vpop.permute.xlu0 %1790
      %1792 = vrot.lane.b32.xlu0 %v1703, 16
      %v1793 = vpop.permute.xlu0 %1792
      %1794 = vrot.lane.b32.xlu0 %v1705, 16
      %v1795 = vpop.permute.xlu0 %1794
      %1796 = vrot.lane.b32.xlu0 %v1707, 16
      %v1797 = vpop.permute.xlu0 %1796
      %1798 = vrot.lane.b32.xlu0 %v1709, 16
      %v1799 = vpop.permute.xlu0 %1798
      %1800 = vrot.lane.b32.xlu0 %v1710, 16
      %v1801 = vpop.permute.xlu0 %1800
      %1802 = vrot.lane.b32.xlu0 %v1711, 16
      %v1803 = vpop.permute.xlu0 %1802
      %1804 = vrot.lane.b32.xlu0 %v1712, 16
      %v1805 = vpop.permute.xlu0 %1804
      %1806 = vrot.lane.b32.xlu0 %v1714, 16
      %v1807 = vpop.permute.xlu0 %1806
      %1808 = vrot.lane.b32.xlu0 %v1716, 16
      %v1809 = vpop.permute.xlu0 %1808
      %1810 = vrot.lane.b32.xlu0 %v1718, 16
      %v1811 = vpop.permute.xlu0 %1810
      %1812 = vrot.lane.b32.xlu0 %v1719, 16
      %v1813 = vpop.permute.xlu0 %1812
      %1814 = vrot.lane.b32.xlu0 %v1720, 16
      %v1815 = vpop.permute.xlu0 %1814
      %1816 = vrot.lane.b32.xlu0 %v1721, 16
      %v1817 = vpop.permute.xlu0 %1816
      %1818 = vrot.lane.b32.xlu0 %v1723, 16
      %v1819 = vpop.permute.xlu0 %1818
      %1820 = vrot.lane.b32.xlu0 %v1725, 16
      %v1821 = vpop.permute.xlu0 %1820
      %1822 = vrot.lane.b32.xlu0 %v1727, 16
      %v1823 = vpop.permute.xlu0 %1822
      %vm1824 = vcmask 130048
      %v1825 = vsel %vm1824, %v1729, %v1731
      %v1826 = vsel %vm1824, %v1731, %v1733
      %v1827 = vsel %vm1824, %v1735, %v1737
      %v1828 = vsel %vm1824, %v1737, %v1739
      %v1829 = vsel %vm1824, %v1741, %v1743
      %v1830 = vsel %vm1824, %v1743, %v1745
      %v1831 = vsel %vm1824, %v1747, %v1749
      %v1832 = vsel %vm1824, %v1749, %v1751
      %v1833 = vsel %vm1824, %v1753, %v1755
      %v1834 = vsel %vm1824, %v1755, %v1757
      %v1835 = vsel %vm1824, %v1759, %v1761
      %v1836 = vsel %vm1824, %v1761, %v1763
      %v1837 = vsel %vm1824, %v1765, %v1767
      %v1838 = vsel %vm1824, %v1767, %v1769
      %v1839 = vsel %vm1824, %v1771, %v1773
      %v1840 = vsel %vm1824, %v1773, %v1775
      %v1841 = vsel %vm1824, %v1777, %v1779
      %v1842 = vsel %vm1824, %v1779, %v1781
      %v1843 = vsel %vm1824, %v1783, %v1785
      %v1844 = vsel %vm1824, %v1785, %v1787
      %v1845 = vsel %vm1824, %v1789, %v1791
      %v1846 = vsel %vm1824, %v1791, %v1793
      %v1847 = vsel %vm1824, %v1795, %v1797
      %v1848 = vsel %vm1824, %v1797, %v1799
      %v1849 = vsel %vm1824, %v1801, %v1803
      %v1850 = vsel %vm1824, %v1803, %v1805
      %v1851 = vsel %vm1824, %v1807, %v1809
      %v1852 = vsel %vm1824, %v1809, %v1811
      %v1853 = vsel %vm1824, %v1813, %v1815
      %v1854 = vsel %vm1824, %v1815, %v1817
      %v1855 = vsel %vm1824, %v1819, %v1821
      %v1856 = vsel %vm1824, %v1821, %v1823
      %1937 = vrot.lane.b32.xlu0 %v1238, 24
      %v1938 = vpop.permute.xlu0 %1937
      %1939 = vrot.lane.b32.xlu0 %v1239, 24
      %v1940 = vpop.permute.xlu0 %1939
      %1941 = vrot.lane.b32.xlu0 %v1240, 24
      %v1942 = vpop.permute.xlu0 %1941
      %1943 = vrot.lane.b32.xlu0 %v1241, 24
      %v1944 = vpop.permute.xlu0 %1943
      %1945 = vrot.lane.b32.xlu0 %v1242, 24
      %v1946 = vpop.permute.xlu0 %1945
      %1947 = vrot.lane.b32.xlu0 %v1243, 24
      %v1948 = vpop.permute.xlu0 %1947
      %1949 = vrot.lane.b32.xlu0 %v1244, 24
      %v1950 = vpop.permute.xlu0 %1949
      %1951 = vrot.lane.b32.xlu0 %v1245, 24
      %v1952 = vpop.permute.xlu0 %1951
      %1953 = vrot.lane.b32.xlu0 %v1246, 24
      %v1954 = vpop.permute.xlu0 %1953
      %1955 = vrot.lane.b32.xlu0 %v1247, 24
      %v1956 = vpop.permute.xlu0 %1955
      %1957 = vrot.lane.b32.xlu0 %v1248, 24
      %v1958 = vpop.permute.xlu0 %1957
      %1959 = vrot.lane.b32.xlu0 %v1249, 24
      %v1960 = vpop.permute.xlu0 %1959
      %1961 = vrot.lane.b32.xlu0 %v1250, 24
      %v1962 = vpop.permute.xlu0 %1961
      %1963 = vrot.lane.b32.xlu0 %v1251, 24
      %v1964 = vpop.permute.xlu0 %1963
      %1965 = vrot.lane.b32.xlu0 %v1252, 24
      %v1966 = vpop.permute.xlu0 %1965
      %1967 = vrot.lane.b32.xlu0 %v1253, 24
      %v1968 = vpop.permute.xlu0 %1967
      %1969 = vrot.lane.b32.xlu0 %v1254, 24
      %v1970 = vpop.permute.xlu0 %1969
      %1971 = vrot.lane.b32.xlu0 %v1255, 24
      %v1972 = vpop.permute.xlu0 %1971
      %1973 = vrot.lane.b32.xlu0 %v1256, 24
      %v1974 = vpop.permute.xlu0 %1973
      %1975 = vrot.lane.b32.xlu0 %v1257, 24
      %v1976 = vpop.permute.xlu0 %1975
      %1977 = vrot.lane.b32.xlu0 %v1258, 24
      %v1978 = vpop.permute.xlu0 %1977
      %1979 = vrot.lane.b32.xlu0 %v1259, 24
      %v1980 = vpop.permute.xlu0 %1979
      %1981 = vrot.lane.b32.xlu0 %v1260, 24
      %v1982 = vpop.permute.xlu0 %1981
      %1983 = vrot.lane.b32.xlu0 %v1261, 24
      %v1984 = vpop.permute.xlu0 %1983
      %1985 = vrot.lane.b32.xlu0 %v1262, 24
      %v1986 = vpop.permute.xlu0 %1985
      %1987 = vrot.lane.b32.xlu0 %v1263, 24
      %v1988 = vpop.permute.xlu0 %1987
      %1989 = vrot.lane.b32.xlu0 %v1264, 24
      %v1990 = vpop.permute.xlu0 %1989
      %1991 = vrot.lane.b32.xlu0 %v1265, 24
      %v1992 = vpop.permute.xlu0 %1991
      %1993 = vrot.lane.b32.xlu0 %v1266, 24
      %v1994 = vpop.permute.xlu0 %1993
      %1995 = vrot.lane.b32.xlu0 %v1267, 24
      %v1996 = vpop.permute.xlu0 %1995
      %1997 = vrot.lane.b32.xlu0 %v1268, 24
      %v1998 = vpop.permute.xlu0 %1997
      %1999 = vrot.lane.b32.xlu0 %v1269, 24
      %v2000 = vpop.permute.xlu0 %1999
      %2001 = vrot.lane.b32.xlu0 %v1270, 24
      %v2002 = vpop.permute.xlu0 %2001
      %2003 = vrot.lane.b32.xlu0 %v1271, 24
      %v2004 = vpop.permute.xlu0 %2003
      %2005 = vrot.lane.b32.xlu0 %v1272, 24
      %v2006 = vpop.permute.xlu0 %2005
      %2007 = vrot.lane.b32.xlu0 %v1273, 24
      %v2008 = vpop.permute.xlu0 %2007
      %2009 = vrot.lane.b32.xlu0 %v1274, 24
      %v2010 = vpop.permute.xlu0 %2009
      %2011 = vrot.lane.b32.xlu0 %v1275, 24
      %v2012 = vpop.permute.xlu0 %2011
      %2013 = vrot.lane.b32.xlu0 %v1276, 24
      %v2014 = vpop.permute.xlu0 %2013
      %2015 = vrot.lane.b32.xlu0 %v1277, 24
      %v2016 = vpop.permute.xlu0 %2015
      %2017 = vrot.lane.b32.xlu0 %v1278, 24
      %v2018 = vpop.permute.xlu0 %2017
      %2019 = vrot.lane.b32.xlu0 %v1279, 24
      %v2020 = vpop.permute.xlu0 %2019
      %2021 = vrot.lane.b32.xlu0 %v1280, 24
      %v2022 = vpop.permute.xlu0 %2021
      %2023 = vrot.lane.b32.xlu0 %v1281, 24
      %v2024 = vpop.permute.xlu0 %2023
      %2025 = vrot.lane.b32.xlu0 %v1282, 24
      %v2026 = vpop.permute.xlu0 %2025
      %2027 = vrot.lane.b32.xlu0 %v1283, 24
      %v2028 = vpop.permute.xlu0 %2027
      %2029 = vrot.lane.b32.xlu0 %v1284, 24
      %v2030 = vpop.permute.xlu0 %2029
      %2031 = vrot.lane.b32.xlu0 %v1285, 24
      %v2032 = vpop.permute.xlu0 %2031
      %vm2033 = vcmask 195584
      %v2034 = vsel %vm2033, %v1938, %v1940
      %v2035 = vsel %vm2033, %v1940, %v1942
      %v2036 = vsel %vm2033, %v1944, %v1946
      %v2037 = vsel %vm2033, %v1946, %v1948
      %v2038 = vsel %vm2033, %v1950, %v1952
      %v2039 = vsel %vm2033, %v1952, %v1954
      %v2040 = vsel %vm2033, %v1956, %v1958
      %v2041 = vsel %vm2033, %v1958, %v1960
      %v2042 = vsel %vm2033, %v1962, %v1964
      %v2043 = vsel %vm2033, %v1964, %v1966
      %v2044 = vsel %vm2033, %v1968, %v1970
      %v2045 = vsel %vm2033, %v1970, %v1972
      %v2046 = vsel %vm2033, %v1974, %v1976
      %v2047 = vsel %vm2033, %v1976, %v1978
      %v2048 = vsel %vm2033, %v1980, %v1982
      %v2049 = vsel %vm2033, %v1982, %v1984
      %v2050 = vsel %vm2033, %v1986, %v1988
      %v2051 = vsel %vm2033, %v1988, %v1990
      %v2052 = vsel %vm2033, %v1992, %v1994
      %v2053 = vsel %vm2033, %v1994, %v1996
      %v2054 = vsel %vm2033, %v1998, %v2000
      %v2055 = vsel %vm2033, %v2000, %v2002
      %v2056 = vsel %vm2033, %v2004, %v2006
      %v2057 = vsel %vm2033, %v2006, %v2008
      %v2058 = vsel %vm2033, %v2010, %v2012
      %v2059 = vsel %vm2033, %v2012, %v2014
      %v2060 = vsel %vm2033, %v2016, %v2018
      %v2061 = vsel %vm2033, %v2018, %v2020
      %v2062 = vsel %vm2033, %v2022, %v2024
      %v2063 = vsel %vm2033, %v2024, %v2026
      %v2064 = vsel %vm2033, %v2028, %v2030
      %v2065 = vsel %vm2033, %v2030, %v2032
      %v2122 = vrot.slane %v1286, 1
      %v2123 = vrot.slane %v1287, 1
      %v2124 = vrot.slane %v1288, 1
      %v2125 = vrot.slane %v1289, 1
      %v2126 = vrot.slane %v1290, 1
      %v2127 = vrot.slane %v1291, 1
      %v2128 = vrot.slane %v1292, 1
      %v2129 = vrot.slane %v1293, 1
      %v2130 = vrot.slane %v1294, 1
      %v2131 = vrot.slane %v1295, 1
      %v2132 = vrot.slane %v1296, 1
      %v2133 = vrot.slane %v1297, 1
      %v2134 = vrot.slane %v1298, 1
      %v2135 = vrot.slane %v1299, 1
      %v2136 = vrot.slane %v1300, 1
      %v2137 = vrot.slane %v1301, 1
      %v2138 = vrot.slane %v1302, 1
      %v2139 = vrot.slane %v1303, 1
      %v2140 = vrot.slane %v1304, 1
      %v2141 = vrot.slane %v1305, 1
      %v2142 = vrot.slane %v1306, 1
      %v2143 = vrot.slane %v1307, 1
      %v2144 = vrot.slane %v1308, 1
      %v2145 = vrot.slane %v1309, 1
      %2146 = vrot.lane.b32.xlu0 %v2122, 32
      %v2147 = vpop.permute.xlu0 %2146
      %2148 = vrot.lane.b32.xlu0 %v2123, 32
      %v2149 = vpop.permute.xlu0 %2148
      %2150 = vrot.lane.b32.xlu0 %v2124, 32
      %v2151 = vpop.permute.xlu0 %2150
      %2152 = vrot.lane.b32.xlu0 %v2125, 32
      %v2153 = vpop.permute.xlu0 %2152
      %2154 = vrot.lane.b32.xlu0 %v2126, 32
      %v2155 = vpop.permute.xlu0 %2154
      %2156 = vrot.lane.b32.xlu0 %v2127, 32
      %v2157 = vpop.permute.xlu0 %2156
      %2158 = vrot.lane.b32.xlu0 %v2128, 32
      %v2159 = vpop.permute.xlu0 %2158
      %2160 = vrot.lane.b32.xlu0 %v2129, 32
      %v2161 = vpop.permute.xlu0 %2160
      %2162 = vrot.lane.b32.xlu0 %v2130, 32
      %v2163 = vpop.permute.xlu0 %2162
      %2164 = vrot.lane.b32.xlu0 %v2131, 32
      %v2165 = vpop.permute.xlu0 %2164
      %2166 = vrot.lane.b32.xlu0 %v2132, 32
      %v2167 = vpop.permute.xlu0 %2166
      %2168 = vrot.lane.b32.xlu0 %v2133, 32
      %v2169 = vpop.permute.xlu0 %2168
      %2170 = vrot.lane.b32.xlu0 %v2134, 32
      %v2171 = vpop.permute.xlu0 %2170
      %2172 = vrot.lane.b32.xlu0 %v2135, 32
      %v2173 = vpop.permute.xlu0 %2172
      %2174 = vrot.lane.b32.xlu0 %v2136, 32
      %v2175 = vpop.permute.xlu0 %2174
      %2176 = vrot.lane.b32.xlu0 %v2137, 32
      %v2177 = vpop.permute.xlu0 %2176
      %2178 = vrot.lane.b32.xlu0 %v2138, 32
      %v2179 = vpop.permute.xlu0 %2178
      %2180 = vrot.lane.b32.xlu0 %v2139, 32
      %v2181 = vpop.permute.xlu0 %2180
      %2182 = vrot.lane.b32.xlu0 %v2140, 32
      %v2183 = vpop.permute.xlu0 %2182
      %2184 = vrot.lane.b32.xlu0 %v2141, 32
      %v2185 = vpop.permute.xlu0 %2184
      %2186 = vrot.lane.b32.xlu0 %v2142, 32
      %v2187 = vpop.permute.xlu0 %2186
      %2188 = vrot.lane.b32.xlu0 %v2143, 32
      %v2189 = vpop.permute.xlu0 %2188
      %2190 = vrot.lane.b32.xlu0 %v2144, 32
      %v2191 = vpop.permute.xlu0 %2190
      %2192 = vrot.lane.b32.xlu0 %v2145, 32
      %v2193 = vpop.permute.xlu0 %2192
      %vm2194 = vcmask 261120
      %v2195 = vsel %vm2194, %v2147, %v2149
      %v2196 = vsel %vm2194, %v2149, %v2151
      %v2197 = vsel %vm2194, %v2153, %v2155
      %v2198 = vsel %vm2194, %v2155, %v2157
      %v2199 = vsel %vm2194, %v2159, %v2161
      %v2200 = vsel %vm2194, %v2161, %v2163
      %v2201 = vsel %vm2194, %v2165, %v2167
      %v2202 = vsel %vm2194, %v2167, %v2169
      %v2203 = vsel %vm2194, %v2171, %v2173
      %v2204 = vsel %vm2194, %v2173, %v2175
      %v2205 = vsel %vm2194, %v2177, %v2179
      %v2206 = vsel %vm2194, %v2179, %v2181
      %v2207 = vsel %vm2194, %v2183, %v2185
      %v2208 = vsel %vm2194, %v2185, %v2187
      %v2209 = vsel %vm2194, %v2189, %v2191
      %v2210 = vsel %vm2194, %v2191, %v2193
      %v2275 = vrot.slane %v1310, 2
      %v2276 = vrot.slane %v1311, 2
      %v2277 = vrot.slane %v1312, 2
      %v2278 = vrot.slane %v1313, 2
      %v2279 = vsel %vm1655, %v2275, %v2278
      %v2280 = vrot.slane %v1314, 2
      %v2281 = vsel %vm1655, %v2276, %v2280
      %v2282 = vrot.slane %v1315, 2
      %v2283 = vsel %vm1655, %v2277, %v2282
      %v2284 = vrot.slane %v1316, 2
      %v2285 = vrot.slane %v1317, 2
      %v2286 = vrot.slane %v1318, 2
      %v2287 = vrot.slane %v1319, 2
      %v2288 = vsel %vm1655, %v2284, %v2287
      %v2289 = vrot.slane %v1320, 2
      %v2290 = vsel %vm1655, %v2285, %v2289
      %v2291 = vrot.slane %v1321, 2
      %v2292 = vsel %vm1655, %v2286, %v2291
      %v2293 = vrot.slane %v1322, 2
      %v2294 = vrot.slane %v1323, 2
      %v2295 = vrot.slane %v1324, 2
      %v2296 = vrot.slane %v1325, 2
      %v2297 = vsel %vm1655, %v2293, %v2296
      %v2298 = vrot.slane %v1326, 2
      %v2299 = vsel %vm1655, %v2294, %v2298
      %v2300 = vrot.slane %v1327, 2
      %v2301 = vsel %vm1655, %v2295, %v2300
      %v2302 = vrot.slane %v1328, 2
      %v2303 = vrot.slane %v1329, 2
      %v2304 = vrot.slane %v1330, 2
      %v2305 = vrot.slane %v1331, 2
      %v2306 = vsel %vm1655, %v2302, %v2305
      %v2307 = vrot.slane %v1332, 2
      %v2308 = vsel %vm1655, %v2303, %v2307
      %v2309 = vrot.slane %v1333, 2
      %v2310 = vsel %vm1655, %v2304, %v2309
      %v2311 = vrot.slane %v1334, 2
      %v2312 = vrot.slane %v1335, 2
      %v2313 = vrot.slane %v1336, 2
      %v2314 = vrot.slane %v1337, 2
      %v2315 = vsel %vm1655, %v2311, %v2314
      %v2316 = vrot.slane %v1338, 2
      %v2317 = vsel %vm1655, %v2312, %v2316
      %v2318 = vrot.slane %v1339, 2
      %v2319 = vsel %vm1655, %v2313, %v2318
      %v2320 = vrot.slane %v1340, 2
      %v2321 = vrot.slane %v1341, 2
      %v2322 = vrot.slane %v1342, 2
      %v2323 = vrot.slane %v1343, 2
      %v2324 = vsel %vm1655, %v2320, %v2323
      %v2325 = vrot.slane %v1344, 2
      %v2326 = vsel %vm1655, %v2321, %v2325
      %v2327 = vrot.slane %v1345, 2
      %v2328 = vsel %vm1655, %v2322, %v2327
      %v2329 = vrot.slane %v1346, 2
      %v2330 = vrot.slane %v1347, 2
      %v2331 = vrot.slane %v1348, 2
      %v2332 = vrot.slane %v1349, 2
      %v2333 = vsel %vm1655, %v2329, %v2332
      %v2334 = vrot.slane %v1350, 2
      %v2335 = vsel %vm1655, %v2330, %v2334
      %v2336 = vrot.slane %v1351, 2
      %v2337 = vsel %vm1655, %v2331, %v2336
      %v2338 = vrot.slane %v1352, 2
      %v2339 = vrot.slane %v1353, 2
      %v2340 = vrot.slane %v1354, 2
      %v2341 = vrot.slane %v1355, 2
      %v2342 = vsel %vm1655, %v2338, %v2341
      %v2343 = vrot.slane %v1356, 2
      %v2344 = vsel %vm1655, %v2339, %v2343
      %v2345 = vrot.slane %v1357, 2
      %v2346 = vsel %vm1655, %v2340, %v2345
      %2347 = vrot.lane.b32.xlu0 %v2275, 40
      %v2348 = vpop.permute.xlu0 %2347
      %2349 = vrot.lane.b32.xlu0 %v2276, 40
      %v2350 = vpop.permute.xlu0 %2349
      %2351 = vrot.lane.b32.xlu0 %v2277, 40
      %v2352 = vpop.permute.xlu0 %2351
      %2353 = vrot.lane.b32.xlu0 %v2279, 40
      %v2354 = vpop.permute.xlu0 %2353
      %2355 = vrot.lane.b32.xlu0 %v2281, 40
      %v2356 = vpop.permute.xlu0 %2355
      %2357 = vrot.lane.b32.xlu0 %v2283, 40
      %v2358 = vpop.permute.xlu0 %2357
      %2359 = vrot.lane.b32.xlu0 %v2284, 40
      %v2360 = vpop.permute.xlu0 %2359
      %2361 = vrot.lane.b32.xlu0 %v2285, 40
      %v2362 = vpop.permute.xlu0 %2361
      %2363 = vrot.lane.b32.xlu0 %v2286, 40
      %v2364 = vpop.permute.xlu0 %2363
      %2365 = vrot.lane.b32.xlu0 %v2288, 40
      %v2366 = vpop.permute.xlu0 %2365
      %2367 = vrot.lane.b32.xlu0 %v2290, 40
      %v2368 = vpop.permute.xlu0 %2367
      %2369 = vrot.lane.b32.xlu0 %v2292, 40
      %v2370 = vpop.permute.xlu0 %2369
      %2371 = vrot.lane.b32.xlu0 %v2293, 40
      %v2372 = vpop.permute.xlu0 %2371
      %2373 = vrot.lane.b32.xlu0 %v2294, 40
      %v2374 = vpop.permute.xlu0 %2373
      %2375 = vrot.lane.b32.xlu0 %v2295, 40
      %v2376 = vpop.permute.xlu0 %2375
      %2377 = vrot.lane.b32.xlu0 %v2297, 40
      %v2378 = vpop.permute.xlu0 %2377
      %2379 = vrot.lane.b32.xlu0 %v2299, 40
      %v2380 = vpop.permute.xlu0 %2379
      %2381 = vrot.lane.b32.xlu0 %v2301, 40
      %v2382 = vpop.permute.xlu0 %2381
      %2383 = vrot.lane.b32.xlu0 %v2302, 40
      %v2384 = vpop.permute.xlu0 %2383
      %2385 = vrot.lane.b32.xlu0 %v2303, 40
      %v2386 = vpop.permute.xlu0 %2385
      %2387 = vrot.lane.b32.xlu0 %v2304, 40
      %v2388 = vpop.permute.xlu0 %2387
      %2389 = vrot.lane.b32.xlu0 %v2306, 40
      %v2390 = vpop.permute.xlu0 %2389
      %2391 = vrot.lane.b32.xlu0 %v2308, 40
      %v2392 = vpop.permute.xlu0 %2391
      %2393 = vrot.lane.b32.xlu0 %v2310, 40
      %v2394 = vpop.permute.xlu0 %2393
      %2395 = vrot.lane.b32.xlu0 %v2311, 40
      %v2396 = vpop.permute.xlu0 %2395
      %2397 = vrot.lane.b32.xlu0 %v2312, 40
      %v2398 = vpop.permute.xlu0 %2397
      %2399 = vrot.lane.b32.xlu0 %v2313, 40
      %v2400 = vpop.permute.xlu0 %2399
      %2401 = vrot.lane.b32.xlu0 %v2315, 40
      %v2402 = vpop.permute.xlu0 %2401
      %2403 = vrot.lane.b32.xlu0 %v2317, 40
      %v2404 = vpop.permute.xlu0 %2403
      %2405 = vrot.lane.b32.xlu0 %v2319, 40
      %v2406 = vpop.permute.xlu0 %2405
      %2407 = vrot.lane.b32.xlu0 %v2320, 40
      %v2408 = vpop.permute.xlu0 %2407
      %2409 = vrot.lane.b32.xlu0 %v2321, 40
      %v2410 = vpop.permute.xlu0 %2409
      %2411 = vrot.lane.b32.xlu0 %v2322, 40
      %v2412 = vpop.permute.xlu0 %2411
      %2413 = vrot.lane.b32.xlu0 %v2324, 40
      %v2414 = vpop.permute.xlu0 %2413
      %2415 = vrot.lane.b32.xlu0 %v2326, 40
      %v2416 = vpop.permute.xlu0 %2415
      %2417 = vrot.lane.b32.xlu0 %v2328, 40
      %v2418 = vpop.permute.xlu0 %2417
      %2419 = vrot.lane.b32.xlu0 %v2329, 40
      %v2420 = vpop.permute.xlu0 %2419
      %2421 = vrot.lane.b32.xlu0 %v2330, 40
      %v2422 = vpop.permute.xlu0 %2421
      %2423 = vrot.lane.b32.xlu0 %v2331, 40
      %v2424 = vpop.permute.xlu0 %2423
      %2425 = vrot.lane.b32.xlu0 %v2333, 40
      %v2426 = vpop.permute.xlu0 %2425
      %2427 = vrot.lane.b32.xlu0 %v2335, 40
      %v2428 = vpop.permute.xlu0 %2427
      %2429 = vrot.lane.b32.xlu0 %v2337, 40
      %v2430 = vpop.permute.xlu0 %2429
      %2431 = vrot.lane.b32.xlu0 %v2338, 40
      %v2432 = vpop.permute.xlu0 %2431
      %2433 = vrot.lane.b32.xlu0 %v2339, 40
      %v2434 = vpop.permute.xlu0 %2433
      %2435 = vrot.lane.b32.xlu0 %v2340, 40
      %v2436 = vpop.permute.xlu0 %2435
      %2437 = vrot.lane.b32.xlu0 %v2342, 40
      %v2438 = vpop.permute.xlu0 %2437
      %2439 = vrot.lane.b32.xlu0 %v2344, 40
      %v2440 = vpop.permute.xlu0 %2439
      %2441 = vrot.lane.b32.xlu0 %v2346, 40
      %v2442 = vpop.permute.xlu0 %2441
      %vm2443 = vcmask 326656
      %v2444 = vsel %vm2443, %v2348, %v2350
      %v2445 = vsel %vm2443, %v2350, %v2352
      %v2446 = vsel %vm2443, %v2354, %v2356
      %v2447 = vsel %vm2443, %v2356, %v2358
      %v2448 = vsel %vm2443, %v2360, %v2362
      %v2449 = vsel %vm2443, %v2362, %v2364
      %v2450 = vsel %vm2443, %v2366, %v2368
      %v2451 = vsel %vm2443, %v2368, %v2370
      %v2452 = vsel %vm2443, %v2372, %v2374
      %v2453 = vsel %vm2443, %v2374, %v2376
      %v2454 = vsel %vm2443, %v2378, %v2380
      %v2455 = vsel %vm2443, %v2380, %v2382
      %v2456 = vsel %vm2443, %v2384, %v2386
      %v2457 = vsel %vm2443, %v2386, %v2388
      %v2458 = vsel %vm2443, %v2390, %v2392
      %v2459 = vsel %vm2443, %v2392, %v2394
      %v2460 = vsel %vm2443, %v2396, %v2398
      %v2461 = vsel %vm2443, %v2398, %v2400
      %v2462 = vsel %vm2443, %v2402, %v2404
      %v2463 = vsel %vm2443, %v2404, %v2406
      %v2464 = vsel %vm2443, %v2408, %v2410
      %v2465 = vsel %vm2443, %v2410, %v2412
      %v2466 = vsel %vm2443, %v2414, %v2416
      %v2467 = vsel %vm2443, %v2416, %v2418
      %v2468 = vsel %vm2443, %v2420, %v2422
      %v2469 = vsel %vm2443, %v2422, %v2424
      %v2470 = vsel %vm2443, %v2426, %v2428
      %v2471 = vsel %vm2443, %v2428, %v2430
      %v2472 = vsel %vm2443, %v2432, %v2434
      %v2473 = vsel %vm2443, %v2434, %v2436
      %v2474 = vsel %vm2443, %v2438, %v2440
      %v2475 = vsel %vm2443, %v2440, %v2442
      %2556 = vrot.lane.b32.xlu0 %v1359, 48
      %v2557 = vpop.permute.xlu0 %2556
      %2558 = vrot.lane.b32.xlu0 %v1360, 48
      %v2559 = vpop.permute.xlu0 %2558
      %2560 = vrot.lane.b32.xlu0 %v1361, 48
      %v2561 = vpop.permute.xlu0 %2560
      %2562 = vrot.lane.b32.xlu0 %v1362, 48
      %v2563 = vpop.permute.xlu0 %2562
      %2564 = vrot.lane.b32.xlu0 %v1363, 48
      %v2565 = vpop.permute.xlu0 %2564
      %2566 = vrot.lane.b32.xlu0 %v1364, 48
      %v2567 = vpop.permute.xlu0 %2566
      %2568 = vrot.lane.b32.xlu0 %v1365, 48
      %v2569 = vpop.permute.xlu0 %2568
      %2570 = vrot.lane.b32.xlu0 %v1366, 48
      %v2571 = vpop.permute.xlu0 %2570
      %2572 = vrot.lane.b32.xlu0 %v1367, 48
      %v2573 = vpop.permute.xlu0 %2572
      %2574 = vrot.lane.b32.xlu0 %v1368, 48
      %v2575 = vpop.permute.xlu0 %2574
      %2576 = vrot.lane.b32.xlu0 %v1369, 48
      %v2577 = vpop.permute.xlu0 %2576
      %2578 = vrot.lane.b32.xlu0 %v1370, 48
      %v2579 = vpop.permute.xlu0 %2578
      %2580 = vrot.lane.b32.xlu0 %v1371, 48
      %v2581 = vpop.permute.xlu0 %2580
      %2582 = vrot.lane.b32.xlu0 %v1372, 48
      %v2583 = vpop.permute.xlu0 %2582
      %2584 = vrot.lane.b32.xlu0 %v1373, 48
      %v2585 = vpop.permute.xlu0 %2584
      %2586 = vrot.lane.b32.xlu0 %v1374, 48
      %v2587 = vpop.permute.xlu0 %2586
      %2588 = vrot.lane.b32.xlu0 %v1375, 48
      %v2589 = vpop.permute.xlu0 %2588
      %2590 = vrot.lane.b32.xlu0 %v1376, 48
      %v2591 = vpop.permute.xlu0 %2590
      %2592 = vrot.lane.b32.xlu0 %v1377, 48
      %v2593 = vpop.permute.xlu0 %2592
      %2594 = vrot.lane.b32.xlu0 %v1378, 48
      %v2595 = vpop.permute.xlu0 %2594
      %2596 = vrot.lane.b32.xlu0 %v1379, 48
      %v2597 = vpop.permute.xlu0 %2596
      %2598 = vrot.lane.b32.xlu0 %v1380, 48
      %v2599 = vpop.permute.xlu0 %2598
      %2600 = vrot.lane.b32.xlu0 %v1381, 48
      %v2601 = vpop.permute.xlu0 %2600
      %2602 = vrot.lane.b32.xlu0 %v1382, 48
      %v2603 = vpop.permute.xlu0 %2602
      %2604 = vrot.lane.b32.xlu0 %v1383, 48
      %v2605 = vpop.permute.xlu0 %2604
      %2606 = vrot.lane.b32.xlu0 %v1384, 48
      %v2607 = vpop.permute.xlu0 %2606
      %2608 = vrot.lane.b32.xlu0 %v1385, 48
      %v2609 = vpop.permute.xlu0 %2608
      %2610 = vrot.lane.b32.xlu0 %v1386, 48
      %v2611 = vpop.permute.xlu0 %2610
      %2612 = vrot.lane.b32.xlu0 %v1387, 48
      %v2613 = vpop.permute.xlu0 %2612
      %2614 = vrot.lane.b32.xlu0 %v1388, 48
      %v2615 = vpop.permute.xlu0 %2614
      %2616 = vrot.lane.b32.xlu0 %v1389, 48
      %v2617 = vpop.permute.xlu0 %2616
      %2618 = vrot.lane.b32.xlu0 %v1390, 48
      %v2619 = vpop.permute.xlu0 %2618
      %2620 = vrot.lane.b32.xlu0 %v1391, 48
      %v2621 = vpop.permute.xlu0 %2620
      %2622 = vrot.lane.b32.xlu0 %v1392, 48
      %v2623 = vpop.permute.xlu0 %2622
      %2624 = vrot.lane.b32.xlu0 %v1393, 48
      %v2625 = vpop.permute.xlu0 %2624
      %2626 = vrot.lane.b32.xlu0 %v1394, 48
      %v2627 = vpop.permute.xlu0 %2626
      %2628 = vrot.lane.b32.xlu0 %v1395, 48
      %v2629 = vpop.permute.xlu0 %2628
      %2630 = vrot.lane.b32.xlu0 %v1396, 48
      %v2631 = vpop.permute.xlu0 %2630
      %2632 = vrot.lane.b32.xlu0 %v1397, 48
      %v2633 = vpop.permute.xlu0 %2632
      %2634 = vrot.lane.b32.xlu0 %v1398, 48
      %v2635 = vpop.permute.xlu0 %2634
      %2636 = vrot.lane.b32.xlu0 %v1399, 48
      %v2637 = vpop.permute.xlu0 %2636
      %2638 = vrot.lane.b32.xlu0 %v1400, 48
      %v2639 = vpop.permute.xlu0 %2638
      %2640 = vrot.lane.b32.xlu0 %v1401, 48
      %v2641 = vpop.permute.xlu0 %2640
      %2642 = vrot.lane.b32.xlu0 %v1402, 48
      %v2643 = vpop.permute.xlu0 %2642
      %2644 = vrot.lane.b32.xlu0 %v1403, 48
      %v2645 = vpop.permute.xlu0 %2644
      %2646 = vrot.lane.b32.xlu0 %v1404, 48
      %v2647 = vpop.permute.xlu0 %2646
      %2648 = vrot.lane.b32.xlu0 %v1405, 48
      %v2649 = vpop.permute.xlu0 %2648
      %2650 = vrot.lane.b32.xlu0 %v1406, 48
      %v2651 = vpop.permute.xlu0 %2650
      %vm2652 = vcmask 392192
      %v2653 = vsel %vm2652, %v2557, %v2559
      %v2654 = vsel %vm2652, %v2559, %v2561
      %v2655 = vsel %vm2652, %v2563, %v2565
      %v2656 = vsel %vm2652, %v2565, %v2567
      %v2657 = vsel %vm2652, %v2569, %v2571
      %v2658 = vsel %vm2652, %v2571, %v2573
      %v2659 = vsel %vm2652, %v2575, %v2577
      %v2660 = vsel %vm2652, %v2577, %v2579
      %v2661 = vsel %vm2652, %v2581, %v2583
      %v2662 = vsel %vm2652, %v2583, %v2585
      %v2663 = vsel %vm2652, %v2587, %v2589
      %v2664 = vsel %vm2652, %v2589, %v2591
      %v2665 = vsel %vm2652, %v2593, %v2595
      %v2666 = vsel %vm2652, %v2595, %v2597
      %v2667 = vsel %vm2652, %v2599, %v2601
      %v2668 = vsel %vm2652, %v2601, %v2603
      %v2669 = vsel %vm2652, %v2605, %v2607
      %v2670 = vsel %vm2652, %v2607, %v2609
      %v2671 = vsel %vm2652, %v2611, %v2613
      %v2672 = vsel %vm2652, %v2613, %v2615
      %v2673 = vsel %vm2652, %v2617, %v2619
      %v2674 = vsel %vm2652, %v2619, %v2621
      %v2675 = vsel %vm2652, %v2623, %v2625
      %v2676 = vsel %vm2652, %v2625, %v2627
      %v2677 = vsel %vm2652, %v2629, %v2631
      %v2678 = vsel %vm2652, %v2631, %v2633
      %v2679 = vsel %vm2652, %v2635, %v2637
      %v2680 = vsel %vm2652, %v2637, %v2639
      %v2681 = vsel %vm2652, %v2641, %v2643
      %v2682 = vsel %vm2652, %v2643, %v2645
      %v2683 = vsel %vm2652, %v2647, %v2649
      %v2684 = vsel %vm2652, %v2649, %v2651
      %v2741 = vrot.slane %v1407, 1
      %v2742 = vrot.slane %v1408, 1
      %v2743 = vrot.slane %v1409, 1
      %v2744 = vrot.slane %v1410, 1
      %v2745 = vrot.slane %v1411, 1
      %v2746 = vrot.slane %v1412, 1
      %v2747 = vrot.slane %v1413, 1
      %v2748 = vrot.slane %v1414, 1
      %v2749 = vrot.slane %v1415, 1
      %v2750 = vrot.slane %v1416, 1
      %v2751 = vrot.slane %v1417, 1
      %v2752 = vrot.slane %v1418, 1
      %v2753 = vrot.slane %v1419, 1
      %v2754 = vrot.slane %v1420, 1
      %v2755 = vrot.slane %v1421, 1
      %v2756 = vrot.slane %v1422, 1
      %v2757 = vrot.slane %v1423, 1
      %v2758 = vrot.slane %v1424, 1
      %v2759 = vrot.slane %v1425, 1
      %v2760 = vrot.slane %v1426, 1
      %v2761 = vrot.slane %v1427, 1
      %v2762 = vrot.slane %v1428, 1
      %v2763 = vrot.slane %v1429, 1
      %v2764 = vrot.slane %v1430, 1
      %2765 = vrot.lane.b32.xlu0 %v2741, 56
      %v2766 = vpop.permute.xlu0 %2765
      %2767 = vrot.lane.b32.xlu0 %v2742, 56
      %v2768 = vpop.permute.xlu0 %2767
      %2769 = vrot.lane.b32.xlu0 %v2743, 56
      %v2770 = vpop.permute.xlu0 %2769
      %2771 = vrot.lane.b32.xlu0 %v2744, 56
      %v2772 = vpop.permute.xlu0 %2771
      %2773 = vrot.lane.b32.xlu0 %v2745, 56
      %v2774 = vpop.permute.xlu0 %2773
      %2775 = vrot.lane.b32.xlu0 %v2746, 56
      %v2776 = vpop.permute.xlu0 %2775
      %2777 = vrot.lane.b32.xlu0 %v2747, 56
      %v2778 = vpop.permute.xlu0 %2777
      %2779 = vrot.lane.b32.xlu0 %v2748, 56
      %v2780 = vpop.permute.xlu0 %2779
      %2781 = vrot.lane.b32.xlu0 %v2749, 56
      %v2782 = vpop.permute.xlu0 %2781
      %2783 = vrot.lane.b32.xlu0 %v2750, 56
      %v2784 = vpop.permute.xlu0 %2783
      %2785 = vrot.lane.b32.xlu0 %v2751, 56
      %v2786 = vpop.permute.xlu0 %2785
      %2787 = vrot.lane.b32.xlu0 %v2752, 56
      %v2788 = vpop.permute.xlu0 %2787
      %2789 = vrot.lane.b32.xlu0 %v2753, 56
      %v2790 = vpop.permute.xlu0 %2789
      %2791 = vrot.lane.b32.xlu0 %v2754, 56
      %v2792 = vpop.permute.xlu0 %2791
      %2793 = vrot.lane.b32.xlu0 %v2755, 56
      %v2794 = vpop.permute.xlu0 %2793
      %2795 = vrot.lane.b32.xlu0 %v2756, 56
      %v2796 = vpop.permute.xlu0 %2795
      %2797 = vrot.lane.b32.xlu0 %v2757, 56
      %v2798 = vpop.permute.xlu0 %2797
      %2799 = vrot.lane.b32.xlu0 %v2758, 56
      %v2800 = vpop.permute.xlu0 %2799
      %2801 = vrot.lane.b32.xlu0 %v2759, 56
      %v2802 = vpop.permute.xlu0 %2801
      %2803 = vrot.lane.b32.xlu0 %v2760, 56
      %v2804 = vpop.permute.xlu0 %2803
      %2805 = vrot.lane.b32.xlu0 %v2761, 56
      %v2806 = vpop.permute.xlu0 %2805
      %2807 = vrot.lane.b32.xlu0 %v2762, 56
      %v2808 = vpop.permute.xlu0 %2807
      %2809 = vrot.lane.b32.xlu0 %v2763, 56
      %v2810 = vpop.permute.xlu0 %2809
      %2811 = vrot.lane.b32.xlu0 %v2764, 56
      %v2812 = vpop.permute.xlu0 %2811
      %vm2813 = vcmask 457728
      %v2814 = vsel %vm2813, %v2766, %v2768
      %v2815 = vsel %vm2813, %v2768, %v2770
      %v2816 = vsel %vm2813, %v2772, %v2774
      %v2817 = vsel %vm2813, %v2774, %v2776
      %v2818 = vsel %vm2813, %v2778, %v2780
      %v2819 = vsel %vm2813, %v2780, %v2782
      %v2820 = vsel %vm2813, %v2784, %v2786
      %v2821 = vsel %vm2813, %v2786, %v2788
      %v2822 = vsel %vm2813, %v2790, %v2792
      %v2823 = vsel %vm2813, %v2792, %v2794
      %v2824 = vsel %vm2813, %v2796, %v2798
      %v2825 = vsel %vm2813, %v2798, %v2800
      %v2826 = vsel %vm2813, %v2802, %v2804
      %v2827 = vsel %vm2813, %v2804, %v2806
      %v2828 = vsel %vm2813, %v2808, %v2810
      %v2829 = vsel %vm2813, %v2810, %v2812
      %v2894 = vrot.slane %v1431, 2
      %v2895 = vrot.slane %v1432, 2
      %v2896 = vrot.slane %v1433, 2
      %v2897 = vrot.slane %v1434, 2
      %v2898 = vsel %vm1655, %v2894, %v2897
      %v2899 = vrot.slane %v1435, 2
      %v2900 = vsel %vm1655, %v2895, %v2899
      %v2901 = vrot.slane %v1436, 2
      %v2902 = vsel %vm1655, %v2896, %v2901
      %v2903 = vrot.slane %v1437, 2
      %v2904 = vrot.slane %v1438, 2
      %v2905 = vrot.slane %v1439, 2
      %v2906 = vrot.slane %v1440, 2
      %v2907 = vsel %vm1655, %v2903, %v2906
      %v2908 = vrot.slane %v1441, 2
      %v2909 = vsel %vm1655, %v2904, %v2908
      %v2910 = vrot.slane %v1442, 2
      %v2911 = vsel %vm1655, %v2905, %v2910
      %v2912 = vrot.slane %v1443, 2
      %v2913 = vrot.slane %v1444, 2
      %v2914 = vrot.slane %v1445, 2
      %v2915 = vrot.slane %v1446, 2
      %v2916 = vsel %vm1655, %v2912, %v2915
      %v2917 = vrot.slane %v1447, 2
      %v2918 = vsel %vm1655, %v2913, %v2917
      %v2919 = vrot.slane %v1448, 2
      %v2920 = vsel %vm1655, %v2914, %v2919
      %v2921 = vrot.slane %v1449, 2
      %v2922 = vrot.slane %v1450, 2
      %v2923 = vrot.slane %v1451, 2
      %v2924 = vrot.slane %v1452, 2
      %v2925 = vsel %vm1655, %v2921, %v2924
      %v2926 = vrot.slane %v1453, 2
      %v2927 = vsel %vm1655, %v2922, %v2926
      %v2928 = vrot.slane %v1454, 2
      %v2929 = vsel %vm1655, %v2923, %v2928
      %v2930 = vrot.slane %v1455, 2
      %v2931 = vrot.slane %v1456, 2
      %v2932 = vrot.slane %v1457, 2
      %v2933 = vrot.slane %v1458, 2
      %v2934 = vsel %vm1655, %v2930, %v2933
      %v2935 = vrot.slane %v1459, 2
      %v2936 = vsel %vm1655, %v2931, %v2935
      %v2937 = vrot.slane %v1460, 2
      %v2938 = vsel %vm1655, %v2932, %v2937
      %v2939 = vrot.slane %v1461, 2
      %v2940 = vrot.slane %v1462, 2
      %v2941 = vrot.slane %v1463, 2
      %v2942 = vrot.slane %v1464, 2
      %v2943 = vsel %vm1655, %v2939, %v2942
      %v2944 = vrot.slane %v1465, 2
      %v2945 = vsel %vm1655, %v2940, %v2944
      %v2946 = vrot.slane %v1466, 2
      %v2947 = vsel %vm1655, %v2941, %v2946
      %v2948 = vrot.slane %v1467, 2
      %v2949 = vrot.slane %v1468, 2
      %v2950 = vrot.slane %v1469, 2
      %v2951 = vrot.slane %v1470, 2
      %v2952 = vsel %vm1655, %v2948, %v2951
      %v2953 = vrot.slane %v1471, 2
      %v2954 = vsel %vm1655, %v2949, %v2953
      %v2955 = vrot.slane %v1472, 2
      %v2956 = vsel %vm1655, %v2950, %v2955
      %v2957 = vrot.slane %v1473, 2
      %v2958 = vrot.slane %v1474, 2
      %v2959 = vrot.slane %v1475, 2
      %v2960 = vrot.slane %v1476, 2
      %v2961 = vsel %vm1655, %v2957, %v2960
      %v2962 = vrot.slane %v1477, 2
      %v2963 = vsel %vm1655, %v2958, %v2962
      %v2964 = vrot.slane %v1478, 2
      %v2965 = vsel %vm1655, %v2959, %v2964
      %2966 = vrot.lane.b32.xlu0 %v2894, 64
      %v2967 = vpop.permute.xlu0 %2966
      %2968 = vrot.lane.b32.xlu0 %v2895, 64
      %v2969 = vpop.permute.xlu0 %2968
      %2970 = vrot.lane.b32.xlu0 %v2896, 64
      %v2971 = vpop.permute.xlu0 %2970
      %2972 = vrot.lane.b32.xlu0 %v2898, 64
      %v2973 = vpop.permute.xlu0 %2972
      %2974 = vrot.lane.b32.xlu0 %v2900, 64
      %v2975 = vpop.permute.xlu0 %2974
      %2976 = vrot.lane.b32.xlu0 %v2902, 64
      %v2977 = vpop.permute.xlu0 %2976
      %2978 = vrot.lane.b32.xlu0 %v2903, 64
      %v2979 = vpop.permute.xlu0 %2978
      %2980 = vrot.lane.b32.xlu0 %v2904, 64
      %v2981 = vpop.permute.xlu0 %2980
      %2982 = vrot.lane.b32.xlu0 %v2905, 64
      %v2983 = vpop.permute.xlu0 %2982
      %2984 = vrot.lane.b32.xlu0 %v2907, 64
      %v2985 = vpop.permute.xlu0 %2984
      %2986 = vrot.lane.b32.xlu0 %v2909, 64
      %v2987 = vpop.permute.xlu0 %2986
      %2988 = vrot.lane.b32.xlu0 %v2911, 64
      %v2989 = vpop.permute.xlu0 %2988
      %2990 = vrot.lane.b32.xlu0 %v2912, 64
      %v2991 = vpop.permute.xlu0 %2990
      %2992 = vrot.lane.b32.xlu0 %v2913, 64
      %v2993 = vpop.permute.xlu0 %2992
      %2994 = vrot.lane.b32.xlu0 %v2914, 64
      %v2995 = vpop.permute.xlu0 %2994
      %2996 = vrot.lane.b32.xlu0 %v2916, 64
      %v2997 = vpop.permute.xlu0 %2996
      %2998 = vrot.lane.b32.xlu0 %v2918, 64
      %v2999 = vpop.permute.xlu0 %2998
      %3000 = vrot.lane.b32.xlu0 %v2920, 64
      %v3001 = vpop.permute.xlu0 %3000
      %3002 = vrot.lane.b32.xlu0 %v2921, 64
      %v3003 = vpop.permute.xlu0 %3002
      %3004 = vrot.lane.b32.xlu0 %v2922, 64
      %v3005 = vpop.permute.xlu0 %3004
      %3006 = vrot.lane.b32.xlu0 %v2923, 64
      %v3007 = vpop.permute.xlu0 %3006
      %3008 = vrot.lane.b32.xlu0 %v2925, 64
      %v3009 = vpop.permute.xlu0 %3008
      %3010 = vrot.lane.b32.xlu0 %v2927, 64
      %v3011 = vpop.permute.xlu0 %3010
      %3012 = vrot.lane.b32.xlu0 %v2929, 64
      %v3013 = vpop.permute.xlu0 %3012
      %3014 = vrot.lane.b32.xlu0 %v2930, 64
      %v3015 = vpop.permute.xlu0 %3014
      %3016 = vrot.lane.b32.xlu0 %v2931, 64
      %v3017 = vpop.permute.xlu0 %3016
      %3018 = vrot.lane.b32.xlu0 %v2932, 64
      %v3019 = vpop.permute.xlu0 %3018
      %3020 = vrot.lane.b32.xlu0 %v2934, 64
      %v3021 = vpop.permute.xlu0 %3020
      %3022 = vrot.lane.b32.xlu0 %v2936, 64
      %v3023 = vpop.permute.xlu0 %3022
      %3024 = vrot.lane.b32.xlu0 %v2938, 64
      %v3025 = vpop.permute.xlu0 %3024
      %3026 = vrot.lane.b32.xlu0 %v2939, 64
      %v3027 = vpop.permute.xlu0 %3026
      %3028 = vrot.lane.b32.xlu0 %v2940, 64
      %v3029 = vpop.permute.xlu0 %3028
      %3030 = vrot.lane.b32.xlu0 %v2941, 64
      %v3031 = vpop.permute.xlu0 %3030
      %3032 = vrot.lane.b32.xlu0 %v2943, 64
      %v3033 = vpop.permute.xlu0 %3032
      %3034 = vrot.lane.b32.xlu0 %v2945, 64
      %v3035 = vpop.permute.xlu0 %3034
      %3036 = vrot.lane.b32.xlu0 %v2947, 64
      %v3037 = vpop.permute.xlu0 %3036
      %3038 = vrot.lane.b32.xlu0 %v2948, 64
      %v3039 = vpop.permute.xlu0 %3038
      %3040 = vrot.lane.b32.xlu0 %v2949, 64
      %v3041 = vpop.permute.xlu0 %3040
      %3042 = vrot.lane.b32.xlu0 %v2950, 64
      %v3043 = vpop.permute.xlu0 %3042
      %3044 = vrot.lane.b32.xlu0 %v2952, 64
      %v3045 = vpop.permute.xlu0 %3044
      %3046 = vrot.lane.b32.xlu0 %v2954, 64
      %v3047 = vpop.permute.xlu0 %3046
      %3048 = vrot.lane.b32.xlu0 %v2956, 64
      %v3049 = vpop.permute.xlu0 %3048
      %3050 = vrot.lane.b32.xlu0 %v2957, 64
      %v3051 = vpop.permute.xlu0 %3050
      %3052 = vrot.lane.b32.xlu0 %v2958, 64
      %v3053 = vpop.permute.xlu0 %3052
      %3054 = vrot.lane.b32.xlu0 %v2959, 64
      %v3055 = vpop.permute.xlu0 %3054
      %3056 = vrot.lane.b32.xlu0 %v2961, 64
      %v3057 = vpop.permute.xlu0 %3056
      %3058 = vrot.lane.b32.xlu0 %v2963, 64
      %v3059 = vpop.permute.xlu0 %3058
      %3060 = vrot.lane.b32.xlu0 %v2965, 64
      %v3061 = vpop.permute.xlu0 %3060
      %vm3062 = vcmask 523264
      %v3063 = vsel %vm3062, %v2967, %v2969
      %v3064 = vsel %vm3062, %v2969, %v2971
      %v3065 = vsel %vm3062, %v2973, %v2975
      %v3066 = vsel %vm3062, %v2975, %v2977
      %v3067 = vsel %vm3062, %v2979, %v2981
      %v3068 = vsel %vm3062, %v2981, %v2983
      %v3069 = vsel %vm3062, %v2985, %v2987
      %v3070 = vsel %vm3062, %v2987, %v2989
      %v3071 = vsel %vm3062, %v2991, %v2993
      %v3072 = vsel %vm3062, %v2993, %v2995
      %v3073 = vsel %vm3062, %v2997, %v2999
      %v3074 = vsel %vm3062, %v2999, %v3001
      %v3075 = vsel %vm3062, %v3003, %v3005
      %v3076 = vsel %vm3062, %v3005, %v3007
      %v3077 = vsel %vm3062, %v3009, %v3011
      %v3078 = vsel %vm3062, %v3011, %v3013
      %v3079 = vsel %vm3062, %v3015, %v3017
      %v3080 = vsel %vm3062, %v3017, %v3019
      %v3081 = vsel %vm3062, %v3021, %v3023
      %v3082 = vsel %vm3062, %v3023, %v3025
      %v3083 = vsel %vm3062, %v3027, %v3029
      %v3084 = vsel %vm3062, %v3029, %v3031
      %v3085 = vsel %vm3062, %v3033, %v3035
      %v3086 = vsel %vm3062, %v3035, %v3037
      %v3087 = vsel %vm3062, %v3039, %v3041
      %v3088 = vsel %vm3062, %v3041, %v3043
      %v3089 = vsel %vm3062, %v3045, %v3047
      %v3090 = vsel %vm3062, %v3047, %v3049
      %v3091 = vsel %vm3062, %v3051, %v3053
      %v3092 = vsel %vm3062, %v3053, %v3055
      %v3093 = vsel %vm3062, %v3057, %v3059
      %v3094 = vsel %vm3062, %v3059, %v3061
      %v3111 = vsel %vm490, %v1120, %v1528
      %v3112 = vsel %vm490, %v1123, %v1528
      %v3113 = vsel %vm490, %v1126, %v1534
      %v3114 = vsel %vm490, %v1129, %v1534
      %v3115 = vsel %vm490, %v1132, %v1540
      %v3116 = vsel %vm490, %v1135, %v1540
      %v3117 = vsel %vm490, %v1138, %v1546
      %v3118 = vsel %vm490, %v1141, %v1546
      %v3119 = vsel %vm490, %v1144, %v1552
      %v3120 = vsel %vm490, %v1147, %v1552
      %v3121 = vsel %vm490, %v1150, %v1558
      %v3122 = vsel %vm490, %v1153, %v1558
      %v3123 = vsel %vm490, %v1156, %v1564
      %v3124 = vsel %vm490, %v1159, %v1564
      %v3125 = vsel %vm490, %v1162, %v1570
      %v3126 = vsel %vm490, %v1165, %v1570
      %v3127 = vsel %vm1824, %v1576, %v1729
      %v3128 = vsel %vm1824, %v1576, %v1735
      %v3129 = vsel %vm1824, %v1578, %v1741
      %v3130 = vsel %vm1824, %v1578, %v1747
      %v3131 = vsel %vm1824, %v1580, %v1753
      %v3132 = vsel %vm1824, %v1580, %v1759
      %v3133 = vsel %vm1824, %v1582, %v1765
      %v3134 = vsel %vm1824, %v1582, %v1771
      %v3135 = vsel %vm1824, %v1584, %v1777
      %v3136 = vsel %vm1824, %v1584, %v1783
      %v3137 = vsel %vm1824, %v1586, %v1789
      %v3138 = vsel %vm1824, %v1586, %v1795
      %v3139 = vsel %vm1824, %v1588, %v1801
      %v3140 = vsel %vm1824, %v1588, %v1807
      %v3141 = vsel %vm1824, %v1590, %v1813
      %v3142 = vsel %vm1824, %v1590, %v1819
      %v3143 = vsel %vm2033, %v1826, %v1938
      %v3144 = vsel %vm2033, %v1828, %v1944
      %v3145 = vsel %vm2033, %v1830, %v1950
      %v3146 = vsel %vm2033, %v1832, %v1956
      %v3147 = vsel %vm2033, %v1834, %v1962
      %v3148 = vsel %vm2033, %v1836, %v1968
      %v3149 = vsel %vm2033, %v1838, %v1974
      %v3150 = vsel %vm2033, %v1840, %v1980
      %v3151 = vsel %vm2033, %v1842, %v1986
      %v3152 = vsel %vm2033, %v1844, %v1992
      %v3153 = vsel %vm2033, %v1846, %v1998
      %v3154 = vsel %vm2033, %v1848, %v2004
      %v3155 = vsel %vm2033, %v1850, %v2010
      %v3156 = vsel %vm2033, %v1852, %v2016
      %v3157 = vsel %vm2033, %v1854, %v2022
      %v3158 = vsel %vm2033, %v1856, %v2028
      %v3159 = vsel %vm2194, %v2035, %v2147
      %v3160 = vsel %vm2194, %v2037, %v2147
      %v3161 = vsel %vm2194, %v2039, %v2153
      %v3162 = vsel %vm2194, %v2041, %v2153
      %v3163 = vsel %vm2194, %v2043, %v2159
      %v3164 = vsel %vm2194, %v2045, %v2159
      %v3165 = vsel %vm2194, %v2047, %v2165
      %v3166 = vsel %vm2194, %v2049, %v2165
      %v3167 = vsel %vm2194, %v2051, %v2171
      %v3168 = vsel %vm2194, %v2053, %v2171
      %v3169 = vsel %vm2194, %v2055, %v2177
      %v3170 = vsel %vm2194, %v2057, %v2177
      %v3171 = vsel %vm2194, %v2059, %v2183
      %v3172 = vsel %vm2194, %v2061, %v2183
      %v3173 = vsel %vm2194, %v2063, %v2189
      %v3174 = vsel %vm2194, %v2065, %v2189
      %v3175 = vsel %vm2443, %v2196, %v2348
      %v3176 = vsel %vm2443, %v2196, %v2354
      %v3177 = vsel %vm2443, %v2198, %v2360
      %v3178 = vsel %vm2443, %v2198, %v2366
      %v3179 = vsel %vm2443, %v2200, %v2372
      %v3180 = vsel %vm2443, %v2200, %v2378
      %v3181 = vsel %vm2443, %v2202, %v2384
      %v3182 = vsel %vm2443, %v2202, %v2390
      %v3183 = vsel %vm2443, %v2204, %v2396
      %v3184 = vsel %vm2443, %v2204, %v2402
      %v3185 = vsel %vm2443, %v2206, %v2408
      %v3186 = vsel %vm2443, %v2206, %v2414
      %v3187 = vsel %vm2443, %v2208, %v2420
      %v3188 = vsel %vm2443, %v2208, %v2426
      %v3189 = vsel %vm2443, %v2210, %v2432
      %v3190 = vsel %vm2443, %v2210, %v2438
      %v3191 = vsel %vm2652, %v2445, %v2557
      %v3192 = vsel %vm2652, %v2447, %v2563
      %v3193 = vsel %vm2652, %v2449, %v2569
      %v3194 = vsel %vm2652, %v2451, %v2575
      %v3195 = vsel %vm2652, %v2453, %v2581
      %v3196 = vsel %vm2652, %v2455, %v2587
      %v3197 = vsel %vm2652, %v2457, %v2593
      %v3198 = vsel %vm2652, %v2459, %v2599
      %v3199 = vsel %vm2652, %v2461, %v2605
      %v3200 = vsel %vm2652, %v2463, %v2611
      %v3201 = vsel %vm2652, %v2465, %v2617
      %v3202 = vsel %vm2652, %v2467, %v2623
      %v3203 = vsel %vm2652, %v2469, %v2629
      %v3204 = vsel %vm2652, %v2471, %v2635
      %v3205 = vsel %vm2652, %v2473, %v2641
      %v3206 = vsel %vm2652, %v2475, %v2647
      %v3207 = vsel %vm2813, %v2654, %v2766
      %v3208 = vsel %vm2813, %v2656, %v2766
      %v3209 = vsel %vm2813, %v2658, %v2772
      %v3210 = vsel %vm2813, %v2660, %v2772
      %v3211 = vsel %vm2813, %v2662, %v2778
      %v3212 = vsel %vm2813, %v2664, %v2778
      %v3213 = vsel %vm2813, %v2666, %v2784
      %v3214 = vsel %vm2813, %v2668, %v2784
      %v3215 = vsel %vm2813, %v2670, %v2790
      %v3216 = vsel %vm2813, %v2672, %v2790
      %v3217 = vsel %vm2813, %v2674, %v2796
      %v3218 = vsel %vm2813, %v2676, %v2796
      %v3219 = vsel %vm2813, %v2678, %v2802
      %v3220 = vsel %vm2813, %v2680, %v2802
      %v3221 = vsel %vm2813, %v2682, %v2808
      %v3222 = vsel %vm2813, %v2684, %v2808
      %v3223 = vsel %vm3062, %v2815, %v2967
      %v3224 = vsel %vm3062, %v2815, %v2973
      %v3225 = vsel %vm3062, %v2817, %v2979
      %v3226 = vsel %vm3062, %v2817, %v2985
      %v3227 = vsel %vm3062, %v2819, %v2991
      %v3228 = vsel %vm3062, %v2819, %v2997
      %v3229 = vsel %vm3062, %v2821, %v3003
      %v3230 = vsel %vm3062, %v2821, %v3009
      %v3231 = vsel %vm3062, %v2823, %v3015
      %v3232 = vsel %vm3062, %v2823, %v3021
      %v3233 = vsel %vm3062, %v2825, %v3027
      %v3234 = vsel %vm3062, %v2825, %v3033
      %v3235 = vsel %vm3062, %v2827, %v3039
      %v3236 = vsel %vm3062, %v2827, %v3045
      %v3237 = vsel %vm3062, %v2829, %v3051
      %v3238 = vsel %vm3062, %v2829, %v3057
      %vm3399 = vcmask 1040384
      %v3400 = vrot.slane %v1118, 7
      %v3401 = vrot.slane %v1121, 7
      %v3402 = vsel %vm3399, %v3400, %v3401
      %v3403 = vrot.slane %v1119, 7
      %v3404 = vrot.slane %v1122, 7
      %v3405 = vsel %vm3399, %v3403, %v3404
      %v3406 = vrot.slane %v3111, 7
      %v3407 = vrot.slane %v3112, 7
      %v3408 = vsel %vm3399, %v3406, %v3407
      %v3409 = vrot.slane %v1575, 7
      %v3410 = vsel %vm3399, %v3409, %v3409
      %v3411 = vrot.slane %v3127, 7
      %v3412 = vrot.slane %v3128, 7
      %v3413 = vsel %vm3399, %v3411, %v3412
      %v3414 = vrot.slane %v1825, 7
      %v3415 = vrot.slane %v1827, 7
      %v3416 = vsel %vm3399, %v3414, %v3415
      %v3417 = vrot.slane %v3143, 7
      %v3418 = vrot.slane %v3144, 7
      %v3419 = vsel %vm3399, %v3417, %v3418
      %v3420 = vrot.slane %v2034, 7
      %v3421 = vrot.slane %v2036, 7
      %v3422 = vsel %vm3399, %v3420, %v3421
      %v3423 = vrot.slane %v3159, 7
      %v3424 = vrot.slane %v3160, 7
      %v3425 = vsel %vm3399, %v3423, %v3424
      %v3426 = vrot.slane %v2195, 7
      %v3427 = vsel %vm3399, %v3426, %v3426
      %v3428 = vrot.slane %v3175, 7
      %v3429 = vrot.slane %v3176, 7
      %v3430 = vsel %vm3399, %v3428, %v3429
      %v3431 = vrot.slane %v2444, 7
      %v3432 = vrot.slane %v2446, 7
      %v3433 = vsel %vm3399, %v3431, %v3432
      %v3434 = vrot.slane %v3191, 7
      %v3435 = vrot.slane %v3192, 7
      %v3436 = vsel %vm3399, %v3434, %v3435
      %v3437 = vrot.slane %v2653, 7
      %v3438 = vrot.slane %v2655, 7
      %v3439 = vsel %vm3399, %v3437, %v3438
      %v3440 = vrot.slane %v3207, 7
      %v3441 = vrot.slane %v3208, 7
      %v3442 = vsel %vm3399, %v3440, %v3441
      %v3443 = vrot.slane %v2814, 7
      %v3444 = vsel %vm3399, %v3443, %v3443
      %v3445 = vrot.slane %v3223, 7
      %v3446 = vrot.slane %v3224, 7
      %v3447 = vsel %vm3399, %v3445, %v3446
      %v3448 = vrot.slane %v3063, 7
      %v3449 = vrot.slane %v3065, 7
      %v3450 = vsel %vm3399, %v3448, %v3449
      %v3451 = vrot.slane %v3064, 7
      %v3452 = vrot.slane %v3066, 7
      %v3453 = vsel %vm3399, %v3451, %v3452
      %v3454 = vrot.slane %v1124, 7
      %v3455 = vrot.slane %v1127, 7
      %v3456 = vsel %vm3399, %v3454, %v3455
      %v3457 = vrot.slane %v1125, 7
      %v3458 = vrot.slane %v1128, 7
      %v3459 = vsel %vm3399, %v3457, %v3458
      %v3460 = vrot.slane %v3113, 7
      %v3461 = vrot.slane %v3114, 7
      %v3462 = vsel %vm3399, %v3460, %v3461
      %v3463 = vrot.slane %v1577, 7
      %v3464 = vsel %vm3399, %v3463, %v3463
      %v3465 = vrot.slane %v3129, 7
      %v3466 = vrot.slane %v3130, 7
      %v3467 = vsel %vm3399, %v3465, %v3466
      %v3468 = vrot.slane %v1829, 7
      %v3469 = vrot.slane %v1831, 7
      %v3470 = vsel %vm3399, %v3468, %v3469
      %v3471 = vrot.slane %v3145, 7
      %v3472 = vrot.slane %v3146, 7
      %v3473 = vsel %vm3399, %v3471, %v3472
      %v3474 = vrot.slane %v2038, 7
      %v3475 = vrot.slane %v2040, 7
      %v3476 = vsel %vm3399, %v3474, %v3475
      %v3477 = vrot.slane %v3161, 7
      %v3478 = vrot.slane %v3162, 7
      %v3479 = vsel %vm3399, %v3477, %v3478
      %v3480 = vrot.slane %v2197, 7
      %v3481 = vsel %vm3399, %v3480, %v3480
      %v3482 = vrot.slane %v3177, 7
      %v3483 = vrot.slane %v3178, 7
      %v3484 = vsel %vm3399, %v3482, %v3483
      %v3485 = vrot.slane %v2448, 7
      %v3486 = vrot.slane %v2450, 7
      %v3487 = vsel %vm3399, %v3485, %v3486
      %v3488 = vrot.slane %v3193, 7
      %v3489 = vrot.slane %v3194, 7
      %v3490 = vsel %vm3399, %v3488, %v3489
      %v3491 = vrot.slane %v2657, 7
      %v3492 = vrot.slane %v2659, 7
      %v3493 = vsel %vm3399, %v3491, %v3492
      %v3494 = vrot.slane %v3209, 7
      %v3495 = vrot.slane %v3210, 7
      %v3496 = vsel %vm3399, %v3494, %v3495
      %v3497 = vrot.slane %v2816, 7
      %v3498 = vsel %vm3399, %v3497, %v3497
      %v3499 = vrot.slane %v3225, 7
      %v3500 = vrot.slane %v3226, 7
      %v3501 = vsel %vm3399, %v3499, %v3500
      %v3502 = vrot.slane %v3067, 7
      %v3503 = vrot.slane %v3069, 7
      %v3504 = vsel %vm3399, %v3502, %v3503
      %v3505 = vrot.slane %v3068, 7
      %v3506 = vrot.slane %v3070, 7
      %v3507 = vsel %vm3399, %v3505, %v3506
      %v3508 = vrot.slane %v1130, 7
      %v3509 = vrot.slane %v1133, 7
      %v3510 = vsel %vm3399, %v3508, %v3509
      %v3511 = vrot.slane %v1131, 7
      %v3512 = vrot.slane %v1134, 7
      %v3513 = vsel %vm3399, %v3511, %v3512
      %v3514 = vrot.slane %v3115, 7
      %v3515 = vrot.slane %v3116, 7
      %v3516 = vsel %vm3399, %v3514, %v3515
      %v3517 = vrot.slane %v1579, 7
      %v3518 = vsel %vm3399, %v3517, %v3517
      %v3519 = vrot.slane %v3131, 7
      %v3520 = vrot.slane %v3132, 7
      %v3521 = vsel %vm3399, %v3519, %v3520
      %v3522 = vrot.slane %v1833, 7
      %v3523 = vrot.slane %v1835, 7
      %v3524 = vsel %vm3399, %v3522, %v3523
      %v3525 = vrot.slane %v3147, 7
      %v3526 = vrot.slane %v3148, 7
      %v3527 = vsel %vm3399, %v3525, %v3526
      %v3528 = vrot.slane %v2042, 7
      %v3529 = vrot.slane %v2044, 7
      %v3530 = vsel %vm3399, %v3528, %v3529
      %v3531 = vrot.slane %v3163, 7
      %v3532 = vrot.slane %v3164, 7
      %v3533 = vsel %vm3399, %v3531, %v3532
      %v3534 = vrot.slane %v2199, 7
      %v3535 = vsel %vm3399, %v3534, %v3534
      %v3536 = vrot.slane %v3179, 7
      %v3537 = vrot.slane %v3180, 7
      %v3538 = vsel %vm3399, %v3536, %v3537
      %v3539 = vrot.slane %v2452, 7
      %v3540 = vrot.slane %v2454, 7
      %v3541 = vsel %vm3399, %v3539, %v3540
      %v3542 = vrot.slane %v3195, 7
      %v3543 = vrot.slane %v3196, 7
      %v3544 = vsel %vm3399, %v3542, %v3543
      %v3545 = vrot.slane %v2661, 7
      %v3546 = vrot.slane %v2663, 7
      %v3547 = vsel %vm3399, %v3545, %v3546
      %v3548 = vrot.slane %v3211, 7
      %v3549 = vrot.slane %v3212, 7
      %v3550 = vsel %vm3399, %v3548, %v3549
      %v3551 = vrot.slane %v2818, 7
      %v3552 = vsel %vm3399, %v3551, %v3551
      %v3553 = vrot.slane %v3227, 7
      %v3554 = vrot.slane %v3228, 7
      %v3555 = vsel %vm3399, %v3553, %v3554
      %v3556 = vrot.slane %v3071, 7
      %v3557 = vrot.slane %v3073, 7
      %v3558 = vsel %vm3399, %v3556, %v3557
      %v3559 = vrot.slane %v3072, 7
      %v3560 = vrot.slane %v3074, 7
      %v3561 = vsel %vm3399, %v3559, %v3560
      %v3562 = vrot.slane %v1136, 7
      %v3563 = vrot.slane %v1139, 7
      %v3564 = vsel %vm3399, %v3562, %v3563
      %v3565 = vrot.slane %v1137, 7
      %v3566 = vrot.slane %v1140, 7
      %v3567 = vsel %vm3399, %v3565, %v3566
      %v3568 = vrot.slane %v3117, 7
      %v3569 = vrot.slane %v3118, 7
      %v3570 = vsel %vm3399, %v3568, %v3569
      %v3571 = vrot.slane %v1581, 7
      %v3572 = vsel %vm3399, %v3571, %v3571
      %v3573 = vrot.slane %v3133, 7
      %v3574 = vrot.slane %v3134, 7
      %v3575 = vsel %vm3399, %v3573, %v3574
      %v3576 = vrot.slane %v1837, 7
      %v3577 = vrot.slane %v1839, 7
      %v3578 = vsel %vm3399, %v3576, %v3577
      %v3579 = vrot.slane %v3149, 7
      %v3580 = vrot.slane %v3150, 7
      %v3581 = vsel %vm3399, %v3579, %v3580
      %v3582 = vrot.slane %v2046, 7
      %v3583 = vrot.slane %v2048, 7
      %v3584 = vsel %vm3399, %v3582, %v3583
      %v3585 = vrot.slane %v3165, 7
      %v3586 = vrot.slane %v3166, 7
      %v3587 = vsel %vm3399, %v3585, %v3586
      %v3588 = vrot.slane %v2201, 7
      %v3589 = vsel %vm3399, %v3588, %v3588
      %v3590 = vrot.slane %v3181, 7
      %v3591 = vrot.slane %v3182, 7
      %v3592 = vsel %vm3399, %v3590, %v3591
      %v3593 = vrot.slane %v2456, 7
      %v3594 = vrot.slane %v2458, 7
      %v3595 = vsel %vm3399, %v3593, %v3594
      %v3596 = vrot.slane %v3197, 7
      %v3597 = vrot.slane %v3198, 7
      %v3598 = vsel %vm3399, %v3596, %v3597
      %v3599 = vrot.slane %v2665, 7
      %v3600 = vrot.slane %v2667, 7
      %v3601 = vsel %vm3399, %v3599, %v3600
      %v3602 = vrot.slane %v3213, 7
      %v3603 = vrot.slane %v3214, 7
      %v3604 = vsel %vm3399, %v3602, %v3603
      %v3605 = vrot.slane %v2820, 7
      %v3606 = vsel %vm3399, %v3605, %v3605
      %v3607 = vrot.slane %v3229, 7
      %v3608 = vrot.slane %v3230, 7
      %v3609 = vsel %vm3399, %v3607, %v3608
      %v3610 = vrot.slane %v3075, 7
      %v3611 = vrot.slane %v3077, 7
      %v3612 = vsel %vm3399, %v3610, %v3611
      %v3613 = vrot.slane %v3076, 7
      %v3614 = vrot.slane %v3078, 7
      %v3615 = vsel %vm3399, %v3613, %v3614
      %v3616 = vrot.slane %v1142, 7
      %v3617 = vrot.slane %v1145, 7
      %v3618 = vsel %vm3399, %v3616, %v3617
      %v3619 = vrot.slane %v1143, 7
      %v3620 = vrot.slane %v1146, 7
      %v3621 = vsel %vm3399, %v3619, %v3620
      %v3622 = vrot.slane %v3119, 7
      %v3623 = vrot.slane %v3120, 7
      %v3624 = vsel %vm3399, %v3622, %v3623
      %v3625 = vrot.slane %v1583, 7
      %v3626 = vsel %vm3399, %v3625, %v3625
      %v3627 = vrot.slane %v3135, 7
      %v3628 = vrot.slane %v3136, 7
      %v3629 = vsel %vm3399, %v3627, %v3628
      %v3630 = vrot.slane %v1841, 7
      %v3631 = vrot.slane %v1843, 7
      %v3632 = vsel %vm3399, %v3630, %v3631
      %v3633 = vrot.slane %v3151, 7
      %v3634 = vrot.slane %v3152, 7
      %v3635 = vsel %vm3399, %v3633, %v3634
      %v3636 = vrot.slane %v2050, 7
      %v3637 = vrot.slane %v2052, 7
      %v3638 = vsel %vm3399, %v3636, %v3637
      %v3639 = vrot.slane %v3167, 7
      %v3640 = vrot.slane %v3168, 7
      %v3641 = vsel %vm3399, %v3639, %v3640
      %v3642 = vrot.slane %v2203, 7
      %v3643 = vsel %vm3399, %v3642, %v3642
      %v3644 = vrot.slane %v3183, 7
      %v3645 = vrot.slane %v3184, 7
      %v3646 = vsel %vm3399, %v3644, %v3645
      %v3647 = vrot.slane %v2460, 7
      %v3648 = vrot.slane %v2462, 7
      %v3649 = vsel %vm3399, %v3647, %v3648
      %v3650 = vrot.slane %v3199, 7
      %v3651 = vrot.slane %v3200, 7
      %v3652 = vsel %vm3399, %v3650, %v3651
      %v3653 = vrot.slane %v2669, 7
      %v3654 = vrot.slane %v2671, 7
      %v3655 = vsel %vm3399, %v3653, %v3654
      %v3656 = vrot.slane %v3215, 7
      %v3657 = vrot.slane %v3216, 7
      %v3658 = vsel %vm3399, %v3656, %v3657
      %v3659 = vrot.slane %v2822, 7
      %v3660 = vsel %vm3399, %v3659, %v3659
      %v3661 = vrot.slane %v3231, 7
      %v3662 = vrot.slane %v3232, 7
      %v3663 = vsel %vm3399, %v3661, %v3662
      %v3664 = vrot.slane %v3079, 7
      %v3665 = vrot.slane %v3081, 7
      %v3666 = vsel %vm3399, %v3664, %v3665
      %v3667 = vrot.slane %v3080, 7
      %v3668 = vrot.slane %v3082, 7
      %v3669 = vsel %vm3399, %v3667, %v3668
      %v3670 = vrot.slane %v1148, 7
      %v3671 = vrot.slane %v1151, 7
      %v3672 = vsel %vm3399, %v3670, %v3671
      %v3673 = vrot.slane %v1149, 7
      %v3674 = vrot.slane %v1152, 7
      %v3675 = vsel %vm3399, %v3673, %v3674
      %v3676 = vrot.slane %v3121, 7
      %v3677 = vrot.slane %v3122, 7
      %v3678 = vsel %vm3399, %v3676, %v3677
      %v3679 = vrot.slane %v1585, 7
      %v3680 = vsel %vm3399, %v3679, %v3679
      %v3681 = vrot.slane %v3137, 7
      %v3682 = vrot.slane %v3138, 7
      %v3683 = vsel %vm3399, %v3681, %v3682
      %v3684 = vrot.slane %v1845, 7
      %v3685 = vrot.slane %v1847, 7
      %v3686 = vsel %vm3399, %v3684, %v3685
      %v3687 = vrot.slane %v3153, 7
      %v3688 = vrot.slane %v3154, 7
      %v3689 = vsel %vm3399, %v3687, %v3688
      %v3690 = vrot.slane %v2054, 7
      %v3691 = vrot.slane %v2056, 7
      %v3692 = vsel %vm3399, %v3690, %v3691
      %v3693 = vrot.slane %v3169, 7
      %v3694 = vrot.slane %v3170, 7
      %v3695 = vsel %vm3399, %v3693, %v3694
      %v3696 = vrot.slane %v2205, 7
      %v3697 = vsel %vm3399, %v3696, %v3696
      %v3698 = vrot.slane %v3185, 7
      %v3699 = vrot.slane %v3186, 7
      %v3700 = vsel %vm3399, %v3698, %v3699
      %v3701 = vrot.slane %v2464, 7
      %v3702 = vrot.slane %v2466, 7
      %v3703 = vsel %vm3399, %v3701, %v3702
      %v3704 = vrot.slane %v3201, 7
      %v3705 = vrot.slane %v3202, 7
      %v3706 = vsel %vm3399, %v3704, %v3705
      %v3707 = vrot.slane %v2673, 7
      %v3708 = vrot.slane %v2675, 7
      %v3709 = vsel %vm3399, %v3707, %v3708
      %v3710 = vrot.slane %v3217, 7
      %v3711 = vrot.slane %v3218, 7
      %v3712 = vsel %vm3399, %v3710, %v3711
      %v3713 = vrot.slane %v2824, 7
      %v3714 = vsel %vm3399, %v3713, %v3713
      %v3715 = vrot.slane %v3233, 7
      %v3716 = vrot.slane %v3234, 7
      %v3717 = vsel %vm3399, %v3715, %v3716
      %v3718 = vrot.slane %v3083, 7
      %v3719 = vrot.slane %v3085, 7
      %v3720 = vsel %vm3399, %v3718, %v3719
      %v3721 = vrot.slane %v3084, 7
      %v3722 = vrot.slane %v3086, 7
      %v3723 = vsel %vm3399, %v3721, %v3722
      %v3724 = vrot.slane %v1154, 7
      %v3725 = vrot.slane %v1157, 7
      %v3726 = vsel %vm3399, %v3724, %v3725
      %v3727 = vrot.slane %v1155, 7
      %v3728 = vrot.slane %v1158, 7
      %v3729 = vsel %vm3399, %v3727, %v3728
      %v3730 = vrot.slane %v3123, 7
      %v3731 = vrot.slane %v3124, 7
      %v3732 = vsel %vm3399, %v3730, %v3731
      %v3733 = vrot.slane %v1587, 7
      %v3734 = vsel %vm3399, %v3733, %v3733
      %v3735 = vrot.slane %v3139, 7
      %v3736 = vrot.slane %v3140, 7
      %v3737 = vsel %vm3399, %v3735, %v3736
      %v3738 = vrot.slane %v1849, 7
      %v3739 = vrot.slane %v1851, 7
      %v3740 = vsel %vm3399, %v3738, %v3739
      %v3741 = vrot.slane %v3155, 7
      %v3742 = vrot.slane %v3156, 7
      %v3743 = vsel %vm3399, %v3741, %v3742
      %v3744 = vrot.slane %v2058, 7
      %v3745 = vrot.slane %v2060, 7
      %v3746 = vsel %vm3399, %v3744, %v3745
      %v3747 = vrot.slane %v3171, 7
      %v3748 = vrot.slane %v3172, 7
      %v3749 = vsel %vm3399, %v3747, %v3748
      %v3750 = vrot.slane %v2207, 7
      %v3751 = vsel %vm3399, %v3750, %v3750
      %v3752 = vrot.slane %v3187, 7
      %v3753 = vrot.slane %v3188, 7
      %v3754 = vsel %vm3399, %v3752, %v3753
      %v3755 = vrot.slane %v2468, 7
      %v3756 = vrot.slane %v2470, 7
      %v3757 = vsel %vm3399, %v3755, %v3756
      %v3758 = vrot.slane %v3203, 7
      %v3759 = vrot.slane %v3204, 7
      %v3760 = vsel %vm3399, %v3758, %v3759
      %v3761 = vrot.slane %v2677, 7
      %v3762 = vrot.slane %v2679, 7
      %v3763 = vsel %vm3399, %v3761, %v3762
      %v3764 = vrot.slane %v3219, 7
      %v3765 = vrot.slane %v3220, 7
      %v3766 = vsel %vm3399, %v3764, %v3765
      %v3767 = vrot.slane %v2826, 7
      %v3768 = vsel %vm3399, %v3767, %v3767
      %v3769 = vrot.slane %v3235, 7
      %v3770 = vrot.slane %v3236, 7
      %v3771 = vsel %vm3399, %v3769, %v3770
      %v3772 = vrot.slane %v3087, 7
      %v3773 = vrot.slane %v3089, 7
      %v3774 = vsel %vm3399, %v3772, %v3773
      %v3775 = vrot.slane %v3088, 7
      %v3776 = vrot.slane %v3090, 7
      %v3777 = vsel %vm3399, %v3775, %v3776
      %v3778 = vrot.slane %v1160, 7
      %v3779 = vrot.slane %v1163, 7
      %v3780 = vsel %vm3399, %v3778, %v3779
      %v3781 = vrot.slane %v1161, 7
      %v3782 = vrot.slane %v1164, 7
      %v3783 = vsel %vm3399, %v3781, %v3782
      %v3784 = vrot.slane %v3125, 7
      %v3785 = vrot.slane %v3126, 7
      %v3786 = vsel %vm3399, %v3784, %v3785
      %v3787 = vrot.slane %v1589, 7
      %v3788 = vsel %vm3399, %v3787, %v3787
      %v3789 = vrot.slane %v3141, 7
      %v3790 = vrot.slane %v3142, 7
      %v3791 = vsel %vm3399, %v3789, %v3790
      %v3792 = vrot.slane %v1853, 7
      %v3793 = vrot.slane %v1855, 7
      %v3794 = vsel %vm3399, %v3792, %v3793
      %v3795 = vrot.slane %v3157, 7
      %v3796 = vrot.slane %v3158, 7
      %v3797 = vsel %vm3399, %v3795, %v3796
      %v3798 = vrot.slane %v2062, 7
      %v3799 = vrot.slane %v2064, 7
      %v3800 = vsel %vm3399, %v3798, %v3799
      %v3801 = vrot.slane %v3173, 7
      %v3802 = vrot.slane %v3174, 7
      %v3803 = vsel %vm3399, %v3801, %v3802
      %v3804 = vrot.slane %v2209, 7
      %v3805 = vsel %vm3399, %v3804, %v3804
      %v3806 = vrot.slane %v3189, 7
      %v3807 = vrot.slane %v3190, 7
      %v3808 = vsel %vm3399, %v3806, %v3807
      %v3809 = vrot.slane %v2472, 7
      %v3810 = vrot.slane %v2474, 7
      %v3811 = vsel %vm3399, %v3809, %v3810
      %v3812 = vrot.slane %v3205, 7
      %v3813 = vrot.slane %v3206, 7
      %v3814 = vsel %vm3399, %v3812, %v3813
      %v3815 = vrot.slane %v2681, 7
      %v3816 = vrot.slane %v2683, 7
      %v3817 = vsel %vm3399, %v3815, %v3816
      %v3818 = vrot.slane %v3221, 7
      %v3819 = vrot.slane %v3222, 7
      %v3820 = vsel %vm3399, %v3818, %v3819
      %v3821 = vrot.slane %v2828, 7
      %v3822 = vsel %vm3399, %v3821, %v3821
      %v3823 = vrot.slane %v3237, 7
      %v3824 = vrot.slane %v3238, 7
      %v3825 = vsel %vm3399, %v3823, %v3824
      %v3826 = vrot.slane %v3091, 7
      %v3827 = vrot.slane %v3093, 7
      %v3828 = vsel %vm3399, %v3826, %v3827
      %v3829 = vrot.slane %v3092, 7
      %v3830 = vrot.slane %v3094, 7
      %v3831 = vsel %vm3399, %v3829, %v3830
      %v3976 = vld [vmem:[%s3] sm:$0xff]
      %v3977 = vld [vmem:[%s3 + $0x8] sm:$0xff]
      %v3978 = vld [vmem:[%s3 + $0x10] sm:$0xff]
      %v3979 = vld [vmem:[%s3 + $0x18] sm:$0xff]
      %v3980 = vld [vmem:[%s3 + $0x20] sm:$0xff]
      %v3981 = vld [vmem:[%s3 + $0x28] sm:$0xff]
      %v3982 = vld [vmem:[%s3 + $0x30] sm:$0xff]
      %v3983 = vld [vmem:[%s3 + $0x38] sm:$0xff]
      %v3984 = vld [vmem:[%s3 + $0x40] sm:$0xff]
      %v3985 = vld [vmem:[%s3 + $0x48] sm:$0xff]
      %v3986 = vld [vmem:[%s3 + $0x50] sm:$0xff]
      %v3987 = vld [vmem:[%s3 + $0x58] sm:$0xff]
      %v3988 = vld [vmem:[%s3 + $0x60] sm:$0xff]
      %v3989 = vld [vmem:[%s3 + $0x68] sm:$0xff]
      %v3990 = vld [vmem:[%s3 + $0x70] sm:$0xff]
      %v3991 = vld [vmem:[%s3 + $0x78] sm:$0xff]
      %v3992 = vld [vmem:[%s3 + $0x80] sm:$0xff]
      %v3993 = vld [vmem:[%s3 + $0x88] sm:$0xff]
      %v3994 = vld [vmem:[%s3 + $0x90] sm:$0xff]
      %v3995 = vld [vmem:[%s3 + $0x98] sm:$0xff]
      %v3996 = vld [vmem:[%s3 + $0xa0] sm:$0xff]
      %v3997 = vld [vmem:[%s3 + $0xa8] sm:$0xff]
      %v3998 = vld [vmem:[%s3 + $0xb0] sm:$0xff]
      %v3999 = vld [vmem:[%s3 + $0xb8] sm:$0xff]
      %v4000 = vld [vmem:[%s3 + $0xc0] sm:$0xff]
      %v4001 = vld [vmem:[%s3 + $0xc8] sm:$0xff]
      %v4002 = vld [vmem:[%s3 + $0xd0] sm:$0xff]
      %v4003 = vld [vmem:[%s3 + $0xd8] sm:$0xff]
      %v4004 = vld [vmem:[%s3 + $0xe0] sm:$0xff]
      %v4005 = vld [vmem:[%s3 + $0xe8] sm:$0xff]
      %v4006 = vld [vmem:[%s3 + $0xf0] sm:$0xff]
      %v4007 = vld [vmem:[%s3 + $0xf8] sm:$0xff]
      %v4008 = vld [vmem:[%s3 + $0x100] sm:$0xff]
      %v4009 = vld [vmem:[%s3 + $0x108] sm:$0xff]
      %v4010 = vld [vmem:[%s3 + $0x110] sm:$0xff]
      %v4011 = vld [vmem:[%s3 + $0x118] sm:$0xff]
      %v4012 = vld [vmem:[%s3 + $0x120] sm:$0xff]
      %v4013 = vld [vmem:[%s3 + $0x128] sm:$0xff]
      %v4014 = vld [vmem:[%s3 + $0x130] sm:$0xff]
      %v4015 = vld [vmem:[%s3 + $0x138] sm:$0xff]
      %v4016 = vld [vmem:[%s3 + $0x140] sm:$0xff]
      %v4017 = vld [vmem:[%s3 + $0x148] sm:$0xff]
      %v4018 = vld [vmem:[%s3 + $0x150] sm:$0xff]
      %v4019 = vld [vmem:[%s3 + $0x158] sm:$0xff]
      %v4020 = vld [vmem:[%s3 + $0x160] sm:$0xff]
      %v4021 = vld [vmem:[%s3 + $0x168] sm:$0xff]
      %v4022 = vld [vmem:[%s3 + $0x170] sm:$0xff]
      %v4023 = vld [vmem:[%s3 + $0x178] sm:$0xff]
      %v4024 = vld [vmem:[%s3 + $0x180] sm:$0xff]
      %v4025 = vld [vmem:[%s3 + $0x188] sm:$0xff]
      %v4026 = vld [vmem:[%s3 + $0x190] sm:$0xff]
      %v4027 = vld [vmem:[%s3 + $0x198] sm:$0xff]
      %v4028 = vld [vmem:[%s3 + $0x1a0] sm:$0xff]
      %v4029 = vld [vmem:[%s3 + $0x1a8] sm:$0xff]
      %v4030 = vld [vmem:[%s3 + $0x1b0] sm:$0xff]
      %v4031 = vld [vmem:[%s3 + $0x1b8] sm:$0xff]
      %v4032 = vld [vmem:[%s3 + $0x1c0] sm:$0xff]
      %v4033 = vld [vmem:[%s3 + $0x1c8] sm:$0xff]
      %v4034 = vld [vmem:[%s3 + $0x1d0] sm:$0xff]
      %v4035 = vld [vmem:[%s3 + $0x1d8] sm:$0xff]
      %v4036 = vld [vmem:[%s3 + $0x1e0] sm:$0xff]
      %v4037 = vld [vmem:[%s3 + $0x1e8] sm:$0xff]
      %v4038 = vld [vmem:[%s3 + $0x1f0] sm:$0xff]
      %v4039 = vld [vmem:[%s3 + $0x1f8] sm:$0xff]
      %v4040 = vld [vmem:[%s3 + $0x200] sm:$0xff]
      %v4041 = vld [vmem:[%s3 + $0x208] sm:$0xff]
      %v4042 = vld [vmem:[%s3 + $0x210] sm:$0xff]
      %v4043 = vld [vmem:[%s3 + $0x218] sm:$0xff]
      %v4044 = vld [vmem:[%s3 + $0x220] sm:$0xff]
      %v4045 = vld [vmem:[%s3 + $0x228] sm:$0xff]
      %v4046 = vld [vmem:[%s3 + $0x230] sm:$0xff]
      %v4047 = vld [vmem:[%s3 + $0x238] sm:$0xff]
      %v4048 = vld [vmem:[%s3 + $0x240] sm:$0xff]
      %v4049 = vld [vmem:[%s3 + $0x248] sm:$0xff]
      %v4050 = vld [vmem:[%s3 + $0x250] sm:$0xff]
      %v4051 = vld [vmem:[%s3 + $0x258] sm:$0xff]
      %v4052 = vld [vmem:[%s3 + $0x260] sm:$0xff]
      %v4053 = vld [vmem:[%s3 + $0x268] sm:$0xff]
      %v4054 = vld [vmem:[%s3 + $0x270] sm:$0xff]
      %v4055 = vld [vmem:[%s3 + $0x278] sm:$0xff]
      %v4056 = vld [vmem:[%s3 + $0x280] sm:$0xff]
      %v4057 = vld [vmem:[%s3 + $0x288] sm:$0xff]
      %v4058 = vld [vmem:[%s3 + $0x290] sm:$0xff]
      %v4059 = vld [vmem:[%s3 + $0x298] sm:$0xff]
      %v4060 = vld [vmem:[%s3 + $0x2a0] sm:$0xff]
      %v4061 = vld [vmem:[%s3 + $0x2a8] sm:$0xff]
      %v4062 = vld [vmem:[%s3 + $0x2b0] sm:$0xff]
      %v4063 = vld [vmem:[%s3 + $0x2b8] sm:$0xff]
      %v4064 = vld [vmem:[%s3 + $0x2c0] sm:$0xff]
      %v4065 = vld [vmem:[%s3 + $0x2c8] sm:$0xff]
      %v4066 = vld [vmem:[%s3 + $0x2d0] sm:$0xff]
      %v4067 = vld [vmem:[%s3 + $0x2d8] sm:$0xff]
      %v4068 = vld [vmem:[%s3 + $0x2e0] sm:$0xff]
      %v4069 = vld [vmem:[%s3 + $0x2e8] sm:$0xff]
      %v4070 = vld [vmem:[%s3 + $0x2f0] sm:$0xff]
      %v4071 = vld [vmem:[%s3 + $0x2f8] sm:$0xff]
      %v4072 = vld [vmem:[%s3 + $0x300] sm:$0xff]
      %v4073 = vld [vmem:[%s3 + $0x308] sm:$0xff]
      %v4074 = vld [vmem:[%s3 + $0x310] sm:$0xff]
      %v4075 = vld [vmem:[%s3 + $0x318] sm:$0xff]
      %v4076 = vld [vmem:[%s3 + $0x320] sm:$0xff]
      %v4077 = vld [vmem:[%s3 + $0x328] sm:$0xff]
      %v4078 = vld [vmem:[%s3 + $0x330] sm:$0xff]
      %v4079 = vld [vmem:[%s3 + $0x338] sm:$0xff]
      %v4080 = vld [vmem:[%s3 + $0x340] sm:$0xff]
      %v4081 = vld [vmem:[%s3 + $0x348] sm:$0xff]
      %v4082 = vld [vmem:[%s3 + $0x350] sm:$0xff]
      %v4083 = vld [vmem:[%s3 + $0x358] sm:$0xff]
      %v4084 = vld [vmem:[%s3 + $0x360] sm:$0xff]
      %v4085 = vld [vmem:[%s3 + $0x368] sm:$0xff]
      %v4086 = vld [vmem:[%s3 + $0x370] sm:$0xff]
      %v4087 = vld [vmem:[%s3 + $0x378] sm:$0xff]
      %v4088 = vld [vmem:[%s3 + $0x380] sm:$0xff]
      %v4089 = vld [vmem:[%s3 + $0x388] sm:$0xff]
      %v4090 = vld [vmem:[%s3 + $0x390] sm:$0xff]
      %v4091 = vld [vmem:[%s3 + $0x398] sm:$0xff]
      %v4092 = vld [vmem:[%s3 + $0x3a0] sm:$0xff]
      %v4093 = vld [vmem:[%s3 + $0x3a8] sm:$0xff]
      %v4094 = vld [vmem:[%s3 + $0x3b0] sm:$0xff]
      %v4095 = vld [vmem:[%s3 + $0x3b8] sm:$0xff]
      %v4096 = vld [vmem:[%s3 + $0x3c0] sm:$0xff]
      %v4097 = vld [vmem:[%s3 + $0x3c8] sm:$0xff]
      %v4098 = vld [vmem:[%s3 + $0x3d0] sm:$0xff]
      %v4099 = vld [vmem:[%s3 + $0x3d8] sm:$0xff]
      %v4100 = vld [vmem:[%s3 + $0x3e0] sm:$0xff]
      %v4101 = vld [vmem:[%s3 + $0x3e8] sm:$0xff]
      %v4102 = vld [vmem:[%s3 + $0x3f0] sm:$0xff]
      %v4103 = vld [vmem:[%s3 + $0x3f8] sm:$0xff]
      %v4104 = vld [vmem:[%s3 + $0x400] sm:$0xff]
      %v4105 = vld [vmem:[%s3 + $0x408] sm:$0xff]
      %v4106 = vld [vmem:[%s3 + $0x410] sm:$0xff]
      %v4107 = vld [vmem:[%s3 + $0x418] sm:$0xff]
      %v4108 = vld [vmem:[%s3 + $0x420] sm:$0xff]
      %v4109 = vld [vmem:[%s3 + $0x428] sm:$0xff]
      %v4110 = vld [vmem:[%s3 + $0x430] sm:$0xff]
      %v4111 = vld [vmem:[%s3 + $0x438] sm:$0xff]
      %v4112 = vld [vmem:[%s3 + $0x440] sm:$0xff]
      %v4113 = vld [vmem:[%s3 + $0x448] sm:$0xff]
      %v4114 = vld [vmem:[%s3 + $0x450] sm:$0xff]
      %v4115 = vld [vmem:[%s3 + $0x458] sm:$0xff]
      %v4116 = vld [vmem:[%s3 + $0x460] sm:$0xff]
      %v4117 = vld [vmem:[%s3 + $0x468] sm:$0xff]
      %v4118 = vld [vmem:[%s3 + $0x470] sm:$0xff]
      %v4119 = vld [vmem:[%s3 + $0x478] sm:$0xff]
      %v4120 = vld [vmem:[%s3 + $0x480] sm:$0xff]
      %v4121 = vld [vmem:[%s3 + $0x488] sm:$0xff]
      %v4122 = vld [vmem:[%s3 + $0x490] sm:$0xff]
      %v4123 = vld [vmem:[%s3 + $0x498] sm:$0xff]
      %v4124 = vld [vmem:[%s3 + $0x4a0] sm:$0xff]
      %v4125 = vld [vmem:[%s3 + $0x4a8] sm:$0xff]
      %v4126 = vld [vmem:[%s3 + $0x4b0] sm:$0xff]
      %v4127 = vld [vmem:[%s3 + $0x4b8] sm:$0xff]
      %v4128 = vld [vmem:[%s3 + $0x4c0] sm:$0xff]
      %v4129 = vld [vmem:[%s3 + $0x4c8] sm:$0xff]
      %v4130 = vld [vmem:[%s3 + $0x4d0] sm:$0xff]
      %v4131 = vld [vmem:[%s3 + $0x4d8] sm:$0xff]
      %v4132 = vld [vmem:[%s3 + $0x4e0] sm:$0xff]
      %v4133 = vld [vmem:[%s3 + $0x4e8] sm:$0xff]
      %v4134 = vld [vmem:[%s3 + $0x4f0] sm:$0xff]
      %v4135 = vld [vmem:[%s3 + $0x4f8] sm:$0xff]
      %v4136 = vld [vmem:[%s3 + $0x500] sm:$0xff]
      %v4137 = vld [vmem:[%s3 + $0x508] sm:$0xff]
      %v4138 = vld [vmem:[%s3 + $0x510] sm:$0xff]
      %v4139 = vld [vmem:[%s3 + $0x518] sm:$0xff]
      %v4140 = vld [vmem:[%s3 + $0x520] sm:$0xff]
      %v4141 = vld [vmem:[%s3 + $0x528] sm:$0xff]
      %v4142 = vld [vmem:[%s3 + $0x530] sm:$0xff]
      %v4143 = vld [vmem:[%s3 + $0x538] sm:$0xff]
      %v4144 = vld [vmem:[%s3 + $0x540] sm:$0xff]
      %v4145 = vld [vmem:[%s3 + $0x548] sm:$0xff]
      %v4146 = vld [vmem:[%s3 + $0x550] sm:$0xff]
      %v4147 = vld [vmem:[%s3 + $0x558] sm:$0xff]
      %v4148 = vld [vmem:[%s3 + $0x560] sm:$0xff]
      %v4149 = vld [vmem:[%s3 + $0x568] sm:$0xff]
      %v4150 = vld [vmem:[%s3 + $0x570] sm:$0xff]
      %v4151 = vld [vmem:[%s3 + $0x578] sm:$0xff]
      %v4152 = vld [vmem:[%s3 + $0x580] sm:$0xff]
      %v4153 = vld [vmem:[%s3 + $0x588] sm:$0xff]
      %v4154 = vld [vmem:[%s3 + $0x590] sm:$0xff]
      %v4155 = vld [vmem:[%s3 + $0x598] sm:$0xff]
      %v4156 = vld [vmem:[%s3 + $0x5a0] sm:$0xff]
      %v4157 = vld [vmem:[%s3 + $0x5a8] sm:$0xff]
      %v4158 = vld [vmem:[%s3 + $0x5b0] sm:$0xff]
      %v4159 = vld [vmem:[%s3 + $0x5b8] sm:$0xff]
      %v4160 = vld [vmem:[%s3 + $0x5c0] sm:$0xff]
      %v4161 = vld [vmem:[%s3 + $0x5c8] sm:$0xff]
      %v4162 = vld [vmem:[%s3 + $0x5d0] sm:$0xff]
      %v4163 = vld [vmem:[%s3 + $0x5d8] sm:$0xff]
      %v4164 = vld [vmem:[%s3 + $0x5e0] sm:$0xff]
      %v4165 = vld [vmem:[%s3 + $0x5e8] sm:$0xff]
      %v4166 = vld [vmem:[%s3 + $0x5f0] sm:$0xff]
      %v4167 = vld [vmem:[%s3 + $0x5f8] sm:$0xff]
      %v4168 = vld [vmem:[%s3 + $0x600] sm:$0xff]
      %v4169 = vld [vmem:[%s3 + $0x608] sm:$0xff]
      %v4170 = vld [vmem:[%s3 + $0x610] sm:$0xff]
      %v4171 = vld [vmem:[%s3 + $0x618] sm:$0xff]
      %v4172 = vld [vmem:[%s3 + $0x620] sm:$0xff]
      %v4173 = vld [vmem:[%s3 + $0x628] sm:$0xff]
      %v4174 = vld [vmem:[%s3 + $0x630] sm:$0xff]
      %v4175 = vld [vmem:[%s3 + $0x638] sm:$0xff]
      %v4176 = vld [vmem:[%s3 + $0x640] sm:$0xff]
      %v4177 = vld [vmem:[%s3 + $0x648] sm:$0xff]
      %v4178 = vld [vmem:[%s3 + $0x650] sm:$0xff]
      %v4179 = vld [vmem:[%s3 + $0x658] sm:$0xff]
      %v4180 = vld [vmem:[%s3 + $0x660] sm:$0xff]
      %v4181 = vld [vmem:[%s3 + $0x668] sm:$0xff]
      %v4182 = vld [vmem:[%s3 + $0x670] sm:$0xff]
      %v4183 = vld [vmem:[%s3 + $0x678] sm:$0xff]
      %v4184 = vld [vmem:[%s3 + $0x680] sm:$0xff]
      %v4185 = vld [vmem:[%s3 + $0x688] sm:$0xff]
      %v4186 = vld [vmem:[%s3 + $0x690] sm:$0xff]
      %v4187 = vld [vmem:[%s3 + $0x698] sm:$0xff]
      %v4188 = vld [vmem:[%s3 + $0x6a0] sm:$0xff]
      %v4189 = vld [vmem:[%s3 + $0x6a8] sm:$0xff]
      %v4190 = vld [vmem:[%s3 + $0x6b0] sm:$0xff]
      %v4191 = vld [vmem:[%s3 + $0x6b8] sm:$0xff]
      %v4192 = vld [vmem:[%s3 + $0x6c0] sm:$0xff]
      %v4193 = vld [vmem:[%s3 + $0x6c8] sm:$0xff]
      %v4194 = vld [vmem:[%s3 + $0x6d0] sm:$0xff]
      %v4195 = vld [vmem:[%s3 + $0x6d8] sm:$0xff]
      %v4196 = vld [vmem:[%s3 + $0x6e0] sm:$0xff]
      %v4197 = vld [vmem:[%s3 + $0x6e8] sm:$0xff]
      %v4198 = vld [vmem:[%s3 + $0x6f0] sm:$0xff]
      %v4199 = vld [vmem:[%s3 + $0x6f8] sm:$0xff]
      %v4200 = vld [vmem:[%s3 + $0x700] sm:$0xff]
      %v4201 = vld [vmem:[%s3 + $0x708] sm:$0xff]
      %v4202 = vld [vmem:[%s3 + $0x710] sm:$0xff]
      %v4203 = vld [vmem:[%s3 + $0x718] sm:$0xff]
      %v4204 = vld [vmem:[%s3 + $0x720] sm:$0xff]
      %v4205 = vld [vmem:[%s3 + $0x728] sm:$0xff]
      %v4206 = vld [vmem:[%s3 + $0x730] sm:$0xff]
      %v4207 = vld [vmem:[%s3 + $0x738] sm:$0xff]
      %v4208 = vld [vmem:[%s3 + $0x740] sm:$0xff]
      %v4209 = vld [vmem:[%s3 + $0x748] sm:$0xff]
      %v4210 = vld [vmem:[%s3 + $0x750] sm:$0xff]
      %v4211 = vld [vmem:[%s3 + $0x758] sm:$0xff]
      %v4212 = vld [vmem:[%s3 + $0x760] sm:$0xff]
      %v4213 = vld [vmem:[%s3 + $0x768] sm:$0xff]
      %v4214 = vld [vmem:[%s3 + $0x770] sm:$0xff]
      %v4215 = vld [vmem:[%s3 + $0x778] sm:$0xff]
      %v4216 = vld [vmem:[%s3 + $0x780] sm:$0xff]
      %v4217 = vld [vmem:[%s3 + $0x788] sm:$0xff]
      %v4218 = vld [vmem:[%s3 + $0x790] sm:$0xff]
      %v4219 = vld [vmem:[%s3 + $0x798] sm:$0xff]
      %v4220 = vld [vmem:[%s3 + $0x7a0] sm:$0xff]
      %v4221 = vld [vmem:[%s3 + $0x7a8] sm:$0xff]
      %v4222 = vld [vmem:[%s3 + $0x7b0] sm:$0xff]
      %v4223 = vld [vmem:[%s3 + $0x7b8] sm:$0xff]
      %v4224 = vld [vmem:[%s3 + $0x7c0] sm:$0xff]
      %v4225 = vld [vmem:[%s3 + $0x7c8] sm:$0xff]
      %v4226 = vld [vmem:[%s3 + $0x7d0] sm:$0xff]
      %v4227 = vld [vmem:[%s3 + $0x7d8] sm:$0xff]
      %v4228 = vld [vmem:[%s3 + $0x7e0] sm:$0xff]
      %v4229 = vld [vmem:[%s3 + $0x7e8] sm:$0xff]
      %v4230 = vld [vmem:[%s3 + $0x7f0] sm:$0xff]
      %v4231 = vld [vmem:[%s3 + $0x7f8] sm:$0xff]
      %v4232 = vld [vmem:[%s3 + $0x800] sm:$0xff]
      %v4233 = vld [vmem:[%s3 + $0x808] sm:$0xff]
      %v4234 = vld [vmem:[%s3 + $0x810] sm:$0xff]
      %v4235 = vld [vmem:[%s3 + $0x818] sm:$0xff]
      %v4236 = vld [vmem:[%s3 + $0x820] sm:$0xff]
      %v4237 = vld [vmem:[%s3 + $0x828] sm:$0xff]
      %v4238 = vld [vmem:[%s3 + $0x830] sm:$0xff]
      %v4239 = vld [vmem:[%s3 + $0x838] sm:$0xff]
      %v4240 = vld [vmem:[%s3 + $0x840] sm:$0xff]
      %v4241 = vld [vmem:[%s3 + $0x848] sm:$0xff]
      %v4242 = vld [vmem:[%s3 + $0x850] sm:$0xff]
      %v4243 = vld [vmem:[%s3 + $0x858] sm:$0xff]
      %v4244 = vld [vmem:[%s3 + $0x860] sm:$0xff]
      %v4245 = vld [vmem:[%s3 + $0x868] sm:$0xff]
      %v4246 = vld [vmem:[%s3 + $0x870] sm:$0xff]
      %v4247 = vld [vmem:[%s3 + $0x878] sm:$0xff]
      %v4248 = vld [vmem:[%s3 + $0x880] sm:$0xff]
      %v4249 = vld [vmem:[%s3 + $0x888] sm:$0xff]
      %v4250 = vld [vmem:[%s3 + $0x890] sm:$0xff]
      %v4251 = vld [vmem:[%s3 + $0x898] sm:$0xff]
      %v4252 = vld [vmem:[%s3 + $0x8a0] sm:$0xff]
      %v4253 = vld [vmem:[%s3 + $0x8a8] sm:$0xff]
      %v4254 = vld [vmem:[%s3 + $0x8b0] sm:$0xff]
      %v4255 = vld [vmem:[%s3 + $0x8b8] sm:$0xff]
      %v4256 = vld [vmem:[%s3 + $0x8c0] sm:$0xff]
      %v4257 = vld [vmem:[%s3 + $0x8c8] sm:$0xff]
      %v4258 = vld [vmem:[%s3 + $0x8d0] sm:$0xff]
      %v4259 = vld [vmem:[%s3 + $0x8d8] sm:$0xff]
      %v4260 = vld [vmem:[%s3 + $0x8e0] sm:$0xff]
      %v4261 = vld [vmem:[%s3 + $0x8e8] sm:$0xff]
      %v4262 = vld [vmem:[%s3 + $0x8f0] sm:$0xff]
      %v4263 = vld [vmem:[%s3 + $0x8f8] sm:$0xff]
      %v4264 = vld [vmem:[%s3 + $0x900] sm:$0xff]
      %v4265 = vld [vmem:[%s3 + $0x908] sm:$0xff]
      %v4266 = vld [vmem:[%s3 + $0x910] sm:$0xff]
      %v4267 = vld [vmem:[%s3 + $0x918] sm:$0xff]
      %v4268 = vld [vmem:[%s3 + $0x920] sm:$0xff]
      %v4269 = vld [vmem:[%s3 + $0x928] sm:$0xff]
      %v4270 = vld [vmem:[%s3 + $0x930] sm:$0xff]
      %v4271 = vld [vmem:[%s3 + $0x938] sm:$0xff]
      %v4272 = vld [vmem:[%s3 + $0x940] sm:$0xff]
      %v4273 = vld [vmem:[%s4] sm:$0x1]
      %v4275 = vlaneseq
      %v4276 = vshrl.u32 %v4275, 7
      %v4277 = vsub.s32 0, %v4276
      %v4278 = vrot.slane %v4273, %v4277
      %vm4280 = vcmask 588800
      %v4281 = vsel %vm4280, %v3453, 0
      %v4283 = vsel %vm4280, %v3507, 0
      %v4285 = vsel %vm4280, %v3561, 0
      %v4287 = vsel %vm4280, %v3615, 0
      %v4289 = vsel %vm4280, %v3669, 0
      %v4291 = vsel %vm4280, %v3723, 0
      %v4293 = vsel %vm4280, %v3777, 0
      %v4295 = vsel %vm4280, %v3831, 0
      %4297 = vmatprep.subr.mxu0 0.0
      %4298 = vmatpush1.msra.mxu0 %v3976
      %4299 = vmatprep.subr.mxu0 0.0
      %4300 = vmatpush1.msra.mxu0 %v3977
      %4301 = vmatprep.subr.mxu0 0.0
      %4302 = vmatpush1.msra.mxu0 %v3978
      %4303 = vmatprep.subr.mxu0 0.0
      %4304 = vmatpush1.msra.mxu0 %v3979
      %4305 = vmatprep.subr.mxu0 0.0
      %4306 = vmatpush1.msra.mxu0 %v3980
      %4307 = vmatprep.subr.mxu0 0.0
      %4308 = vmatpush1.msra.mxu0 %v3981
      %4309 = vmatprep.subr.mxu0 0.0
      %4310 = vmatpush1.msra.mxu0 %v3982
      %4311 = vmatprep.subr.mxu0 0.0
      %4312 = vmatpush1.msra.mxu0 %v3983
      %4313 = vmatprep.subr.mxu0 0.0
      %4314 = vmatpush1.msra.mxu0 %v3984
      %4315 = vmatprep.subr.mxu0 0.0
      %4316 = vmatpush1.msra.mxu0 %v3985
      %4317 = vmatprep.subr.mxu0 0.0
      %4318 = vmatpush1.msra.mxu0 %v3986
      %4319 = vmatprep.subr.mxu0 0.0
      %4320 = vmatpush1.msra.mxu0 %v3987
      %4321 = vmatprep.subr.mxu0 0.0
      %4322 = vmatpush1.msra.mxu0 %v3988
      %4323 = vmatprep.subr.mxu0 0.0
      %4324 = vmatpush1.msra.mxu0 %v3989
      %4325 = vmatprep.subr.mxu0 0.0
      %4326 = vmatpush1.msra.mxu0 %v3990
      %4327 = vmatprep.subr.mxu0 0.0
      %4328 = vmatpush1.msra.mxu0 %v3991
      %4329 = vmatprep.subr.mxu0 0.0
      %4330 = vmatpush1.msra.mxu0 %v3992
      %4331 = vmatprep.subr.mxu0 0.0
      %4332 = vmatpush1.msra.mxu0 %v3993
      %4333 = vmatprep.subr.mxu0 0.0
      %4334 = vmatpush1.msra.mxu0 %v3994
      %4335 = vmatprep.subr.mxu0 0.0
      %4336 = vmatpush1.msra.mxu0 %v3995
      %4337 = vmatprep.subr.mxu0 0.0
      %4338 = vmatpush1.msra.mxu0 %v3996
      %4339 = vmatprep.subr.mxu0 0.0
      %4340 = vmatpush1.msra.mxu0 %v3997
      %4341 = vmatprep.subr.mxu0 0.0
      %4342 = vmatpush1.msra.mxu0 %v3998
      %4343 = vmatprep.subr.mxu0 0.0
      %4344 = vmatpush1.msra.mxu0 %v3999
      %4345 = vmatprep.subr.mxu0 0.0
      %4346 = vmatpush1.msra.mxu0 %v4000
      %4347 = vmatprep.subr.mxu0 0.0
      %4348 = vmatpush1.msra.mxu0 %v4001
      %4349 = vmatprep.subr.mxu0 0.0
      %4350 = vmatpush1.msra.mxu0 %v4002
      %4351 = vmatprep.subr.mxu0 0.0
      %4352 = vmatpush1.msra.mxu0 %v4003
      %4353 = vmatprep.subr.mxu0 0.0
      %4354 = vmatpush1.msra.mxu0 %v4004
      %4355 = vmatprep.subr.mxu0 0.0
      %4356 = vmatpush1.msra.mxu0 %v4005
      %4357 = vmatprep.subr.mxu0 0.0
      %4358 = vmatpush1.msra.mxu0 %v4006
      %4359 = vmatprep.subr.mxu0 0.0
      %4360 = vmatpush1.msra.mxu0 %v4007
      %4361 = vmatprep.mubr.f32.mxu0 %v3405
      %4362 = vmatmul.mubr.f32.gmra.mrb[0].mxu0 %v3402
      %v4363 = vpop.f32.mrb[0].mxu0
      %v4364 = vadd.f32 %v4278, %v4363
      %v4365 = vpop.f32.mrb[0].mxu0
      %4366 = vmatprep.mubr.f32.mxu0 %v3459
      %4367 = vmatmul.mubr.f32.gmra.mrb[0].mxu0 %v3456
      %v4368 = vpop.f32.mrb[0].mxu0
      %v4369 = vadd.f32 %v4278, %v4368
      %v4370 = vpop.f32.mrb[0].mxu0
      %4371 = vmatprep.mubr.f32.mxu0 %v3513
      %4372 = vmatmul.mubr.f32.gmra.mrb[0].mxu0 %v3510
      %v4373 = vpop.f32.mrb[0].mxu0
      %v4374 = vadd.f32 %v4278, %v4373
      %v4375 = vpop.f32.mrb[0].mxu0
      %4376 = vmatprep.mubr.f32.mxu0 %v3567
      %4377 = vmatmul.mubr.f32.gmra.mrb[0].mxu0 %v3564
      %v4378 = vpop.f32.mrb[0].mxu0
      %v4379 = vadd.f32 %v4278, %v4378
      %v4380 = vpop.f32.mrb[0].mxu0
      %4381 = vmatprep.mubr.f32.mxu0 %v3621
      %4382 = vmatmul.mubr.f32.gmra.mrb[0].mxu0 %v3618
      %v4383 = vpop.f32.mrb[0].mxu0
      %v4384 = vadd.f32 %v4278, %v4383
      %v4385 = vpop.f32.mrb[0].mxu0
      %4386 = vmatprep.mubr.f32.mxu0 %v3675
      %4387 = vmatmul.mubr.f32.gmra.mrb[0].mxu0 %v3672
      %v4388 = vpop.f32.mrb[0].mxu0
      %v4389 = vadd.f32 %v4278, %v4388
      %v4390 = vpop.f32.mrb[0].mxu0
      %4391 = vmatprep.mubr.f32.mxu0 %v3729
      %4392 = vmatmul.mubr.f32.gmra.mrb[0].mxu0 %v3726
      %v4393 = vpop.f32.mrb[0].mxu0
      %v4394 = vadd.f32 %v4278, %v4393
      %v4395 = vpop.f32.mrb[0].mxu0
      %4396 = vmatprep.mubr.f32.mxu0 %v3783
      %4397 = vmatmul.mubr.f32.gmra.mrb[0].mxu0 %v3780
      %v4398 = vpop.f32.mrb[0].mxu0
      %v4399 = vadd.f32 %v4278, %v4398
      %v4400 = vpop.f32.mrb[0].mxu0
      %4401 = vdwg.mxu0
      %4402 = vmatprep.subr.mxu0 0.0
      %4403 = vmatpush1.msra.mxu0 %v4008
      %4404 = vmatprep.subr.mxu0 0.0
      %4405 = vmatpush1.msra.mxu0 %v4009
      %4406 = vmatprep.subr.mxu0 0.0
      %4407 = vmatpush1.msra.mxu0 %v4010
      %4408 = vmatprep.subr.mxu0 0.0
      %4409 = vmatpush1.msra.mxu0 %v4011
      %4410 = vmatprep.subr.mxu0 0.0
      %4411 = vmatpush1.msra.mxu0 %v4012
      %4412 = vmatprep.subr.mxu0 0.0
      %4413 = vmatpush1.msra.mxu0 %v4013
      %4414 = vmatprep.subr.mxu0 0.0
      %4415 = vmatpush1.msra.mxu0 %v4014
      %4416 = vmatprep.subr.mxu0 0.0
      %4417 = vmatpush1.msra.mxu0 %v4015
      %4418 = vmatprep.subr.mxu0 0.0
      %4419 = vmatpush1.msra.mxu0 %v4016
      %4420 = vmatprep.subr.mxu0 0.0
      %4421 = vmatpush1.msra.mxu0 %v4017
      %4422 = vmatprep.subr.mxu0 0.0
      %4423 = vmatpush1.msra.mxu0 %v4018
      %4424 = vmatprep.subr.mxu0 0.0
      %4425 = vmatpush1.msra.mxu0 %v4019
      %4426 = vmatprep.subr.mxu0 0.0
      %4427 = vmatpush1.msra.mxu0 %v4020
      %4428 = vmatprep.subr.mxu0 0.0
      %4429 = vmatpush1.msra.mxu0 %v4021
      %4430 = vmatprep.subr.mxu0 0.0
      %4431 = vmatpush1.msra.mxu0 %v4022
      %4432 = vmatprep.subr.mxu0 0.0
      %4433 = vmatpush1.msra.mxu0 %v4023
      %4434 = vmatprep.subr.mxu0 0.0
      %4435 = vmatpush1.msra.mxu0 %v4024
      %4436 = vmatprep.subr.mxu0 0.0
      %4437 = vmatpush1.msra.mxu0 %v4025
      %4438 = vmatprep.subr.mxu0 0.0
      %4439 = vmatpush1.msra.mxu0 %v4026
      %4440 = vmatprep.subr.mxu0 0.0
      %4441 = vmatpush1.msra.mxu0 %v4027
      %4442 = vmatprep.subr.mxu0 0.0
      %4443 = vmatpush1.msra.mxu0 %v4028
      %4444 = vmatprep.subr.mxu0 0.0
      %4445 = vmatpush1.msra.mxu0 %v4029
      %4446 = vmatprep.subr.mxu0 0.0
      %4447 = vmatpush1.msra.mxu0 %v4030
      %4448 = vmatprep.subr.mxu0 0.0
      %4449 = vmatpush1.msra.mxu0 %v4031
      %4450 = vmatprep.subr.mxu0 0.0
      %4451 = vmatpush1.msra.mxu0 %v4032
      %4452 = vmatprep.subr.mxu0 0.0
      %4453 = vmatpush1.msra.mxu0 %v4033
      %4454 = vmatprep.subr.mxu0 0.0
      %4455 = vmatpush1.msra.mxu0 %v4034
      %4456 = vmatprep.subr.mxu0 0.0
      %4457 = vmatpush1.msra.mxu0 %v4035
      %4458 = vmatprep.subr.mxu0 0.0
      %4459 = vmatpush1.msra.mxu0 %v4036
      %4460 = vmatprep.subr.mxu0 0.0
      %4461 = vmatpush1.msra.mxu0 %v4037
      %4462 = vmatprep.subr.mxu0 0.0
      %4463 = vmatpush1.msra.mxu0 %v4038
      %4464 = vmatprep.subr.mxu0 0.0
      %4465 = vmatpush1.msra.mxu0 %v4039
      %4466 = vmatprep.mubr.f32.mxu0 %v3410
      %4467 = vmatmul.mubr.f32.gmra.mrb[0].mxu0 %v3408
      %v4468 = vpop.f32.mrb[0].mxu0
      %v4469 = vadd.f32 %v4364, %v4468
      %v4470 = vpop.f32.mrb[0].mxu0
      %4471 = vmatprep.mubr.f32.mxu0 %v3464
      %4472 = vmatmul.mubr.f32.gmra.mrb[0].mxu0 %v3462
      %v4473 = vpop.f32.mrb[0].mxu0
      %v4474 = vadd.f32 %v4369, %v4473
      %v4475 = vpop.f32.mrb[0].mxu0
      %4476 = vmatprep.mubr.f32.mxu0 %v3518
      %4477 = vmatmul.mubr.f32.gmra.mrb[0].mxu0 %v3516
      %v4478 = vpop.f32.mrb[0].mxu0
      %v4479 = vadd.f32 %v4374, %v4478
      %v4480 = vpop.f32.mrb[0].mxu0
      %4481 = vmatprep.mubr.f32.mxu0 %v3572
      %4482 = vmatmul.mubr.f32.gmra.mrb[0].mxu0 %v3570
      %v4483 = vpop.f32.mrb[0].mxu0
      %v4484 = vadd.f32 %v4379, %v4483
      %v4485 = vpop.f32.mrb[0].mxu0
      %4486 = vmatprep.mubr.f32.mxu0 %v3626
      %4487 = vmatmul.mubr.f32.gmra.mrb[0].mxu0 %v3624
      %v4488 = vpop.f32.mrb[0].mxu0
      %v4489 = vadd.f32 %v4384, %v4488
      %v4490 = vpop.f32.mrb[0].mxu0
      %4491 = vmatprep.mubr.f32.mxu0 %v3680
      %4492 = vmatmul.mubr.f32.gmra.mrb[0].mxu0 %v3678
      %v4493 = vpop.f32.mrb[0].mxu0
      %v4494 = vadd.f32 %v4389, %v4493
      %v4495 = vpop.f32.mrb[0].mxu0
      %4496 = vmatprep.mubr.f32.mxu0 %v3734
      %4497 = vmatmul.mubr.f32.gmra.mrb[0].mxu0 %v3732
      %v4498 = vpop.f32.mrb[0].mxu0
      %v4499 = vadd.f32 %v4394, %v4498
      %v4500 = vpop.f32.mrb[0].mxu0
      %4501 = vmatprep.mubr.f32.mxu0 %v3788
      %4502 = vmatmul.mubr.f32.gmra.mrb[0].mxu0 %v3786
      %v4503 = vpop.f32.mrb[0].mxu0
      %v4504 = vadd.f32 %v4399, %v4503
      %v4505 = vpop.f32.mrb[0].mxu0
      %4506 = vdwg.mxu0
      %4507 = vmatprep.subr.mxu0 0.0
      %4508 = vmatpush1.msra.mxu0 %v4040
      %4509 = vmatprep.subr.mxu0 0.0
      %4510 = vmatpush1.msra.mxu0 %v4041
      %4511 = vmatprep.subr.mxu0 0.0
      %4512 = vmatpush1.msra.mxu0 %v4042
      %4513 = vmatprep.subr.mxu0 0.0
      %4514 = vmatpush1.msra.mxu0 %v4043
      %4515 = vmatprep.subr.mxu0 0.0
      %4516 = vmatpush1.msra.mxu0 %v4044
      %4517 = vmatprep.subr.mxu0 0.0
      %4518 = vmatpush1.msra.mxu0 %v4045
      %4519 = vmatprep.subr.mxu0 0.0
      %4520 = vmatpush1.msra.mxu0 %v4046
      %4521 = vmatprep.subr.mxu0 0.0
      %4522 = vmatpush1.msra.mxu0 %v4047
      %4523 = vmatprep.subr.mxu0 0.0
      %4524 = vmatpush1.msra.mxu0 %v4048
      %4525 = vmatprep.subr.mxu0 0.0
      %4526 = vmatpush1.msra.mxu0 %v4049
      %4527 = vmatprep.subr.mxu0 0.0
      %4528 = vmatpush1.msra.mxu0 %v4050
      %4529 = vmatprep.subr.mxu0 0.0
      %4530 = vmatpush1.msra.mxu0 %v4051
      %4531 = vmatprep.subr.mxu0 0.0
      %4532 = vmatpush1.msra.mxu0 %v4052
      %4533 = vmatprep.subr.mxu0 0.0
      %4534 = vmatpush1.msra.mxu0 %v4053
      %4535 = vmatprep.subr.mxu0 0.0
      %4536 = vmatpush1.msra.mxu0 %v4054
      %4537 = vmatprep.subr.mxu0 0.0
      %4538 = vmatpush1.msra.mxu0 %v4055
      %4539 = vmatprep.subr.mxu0 0.0
      %4540 = vmatpush1.msra.mxu0 %v4056
      %4541 = vmatprep.subr.mxu0 0.0
      %4542 = vmatpush1.msra.mxu0 %v4057
      %4543 = vmatprep.subr.mxu0 0.0
      %4544 = vmatpush1.msra.mxu0 %v4058
      %4545 = vmatprep.subr.mxu0 0.0
      %4546 = vmatpush1.msra.mxu0 %v4059
      %4547 = vmatprep.subr.mxu0 0.0
      %4548 = vmatpush1.msra.mxu0 %v4060
      %4549 = vmatprep.subr.mxu0 0.0
      %4550 = vmatpush1.msra.mxu0 %v4061
      %4551 = vmatprep.subr.mxu0 0.0
      %4552 = vmatpush1.msra.mxu0 %v4062
      %4553 = vmatprep.subr.mxu0 0.0
      %4554 = vmatpush1.msra.mxu0 %v4063
      %4555 = vmatprep.subr.mxu0 0.0
      %4556 = vmatpush1.msra.mxu0 %v4064
      %4557 = vmatprep.subr.mxu0 0.0
      %4558 = vmatpush1.msra.mxu0 %v4065
      %4559 = vmatprep.subr.mxu0 0.0
      %4560 = vmatpush1.msra.mxu0 %v4066
      %4561 = vmatprep.subr.mxu0 0.0
      %4562 = vmatpush1.msra.mxu0 %v4067
      %4563 = vmatprep.subr.mxu0 0.0
      %4564 = vmatpush1.msra.mxu0 %v4068
      %4565 = vmatprep.subr.mxu0 0.0
      %4566 = vmatpush1.msra.mxu0 %v4069
      %4567 = vmatprep.subr.mxu0 0.0
      %4568 = vmatpush1.msra.mxu0 %v4070
      %4569 = vmatprep.subr.mxu0 0.0
      %4570 = vmatpush1.msra.mxu0 %v4071
      %4571 = vmatprep.mubr.f32.mxu0 %v3416
      %4572 = vmatmul.mubr.f32.gmra.mrb[0].mxu0 %v3413
      %v4573 = vpop.f32.mrb[0].mxu0
      %v4574 = vadd.f32 %v4469, %v4573
      %v4575 = vpop.f32.mrb[0].mxu0
      %4576 = vmatprep.mubr.f32.mxu0 %v3470
      %4577 = vmatmul.mubr.f32.gmra.mrb[0].mxu0 %v3467
      %v4578 = vpop.f32.mrb[0].mxu0
      %v4579 = vadd.f32 %v4474, %v4578
      %v4580 = vpop.f32.mrb[0].mxu0
      %4581 = vmatprep.mubr.f32.mxu0 %v3524
      %4582 = vmatmul.mubr.f32.gmra.mrb[0].mxu0 %v3521
      %v4583 = vpop.f32.mrb[0].mxu0
      %v4584 = vadd.f32 %v4479, %v4583
      %v4585 = vpop.f32.mrb[0].mxu0
      %4586 = vmatprep.mubr.f32.mxu0 %v3578
      %4587 = vmatmul.mubr.f32.gmra.mrb[0].mxu0 %v3575
      %v4588 = vpop.f32.mrb[0].mxu0
      %v4589 = vadd.f32 %v4484, %v4588
      %v4590 = vpop.f32.mrb[0].mxu0
      %4591 = vmatprep.mubr.f32.mxu0 %v3632
      %4592 = vmatmul.mubr.f32.gmra.mrb[0].mxu0 %v3629
      %v4593 = vpop.f32.mrb[0].mxu0
      %v4594 = vadd.f32 %v4489, %v4593
      %v4595 = vpop.f32.mrb[0].mxu0
      %4596 = vmatprep.mubr.f32.mxu0 %v3686
      %4597 = vmatmul.mubr.f32.gmra.mrb[0].mxu0 %v3683
      %v4598 = vpop.f32.mrb[0].mxu0
      %v4599 = vadd.f32 %v4494, %v4598
      %v4600 = vpop.f32.mrb[0].mxu0
      %4601 = vmatprep.mubr.f32.mxu0 %v3740
      %4602 = vmatmul.mubr.f32.gmra.mrb[0].mxu0 %v3737
      %v4603 = vpop.f32.mrb[0].mxu0
      %v4604 = vadd.f32 %v4499, %v4603
      %v4605 = vpop.f32.mrb[0].mxu0
      %4606 = vmatprep.mubr.f32.mxu0 %v3794
      %4607 = vmatmul.mubr.f32.gmra.mrb[0].mxu0 %v3791
      %v4608 = vpop.f32.mrb[0].mxu0
      %v4609 = vadd.f32 %v4504, %v4608
      %v4610 = vpop.f32.mrb[0].mxu0
      %4611 = vdwg.mxu0
      %4612 = vmatprep.subr.mxu0 0.0
      %4613 = vmatpush1.msra.mxu0 %v4072
      %4614 = vmatprep.subr.mxu0 0.0
      %4615 = vmatpush1.msra.mxu0 %v4073
      %4616 = vmatprep.subr.mxu0 0.0
      %4617 = vmatpush1.msra.mxu0 %v4074
      %4618 = vmatprep.subr.mxu0 0.0
      %4619 = vmatpush1.msra.mxu0 %v4075
      %4620 = vmatprep.subr.mxu0 0.0
      %4621 = vmatpush1.msra.mxu0 %v4076
      %4622 = vmatprep.subr.mxu0 0.0
      %4623 = vmatpush1.msra.mxu0 %v4077
      %4624 = vmatprep.subr.mxu0 0.0
      %4625 = vmatpush1.msra.mxu0 %v4078
      %4626 = vmatprep.subr.mxu0 0.0
      %4627 = vmatpush1.msra.mxu0 %v4079
      %4628 = vmatprep.subr.mxu0 0.0
      %4629 = vmatpush1.msra.mxu0 %v4080
      %4630 = vmatprep.subr.mxu0 0.0
      %4631 = vmatpush1.msra.mxu0 %v4081
      %4632 = vmatprep.subr.mxu0 0.0
      %4633 = vmatpush1.msra.mxu0 %v4082
      %4634 = vmatprep.subr.mxu0 0.0
      %4635 = vmatpush1.msra.mxu0 %v4083
      %4636 = vmatprep.subr.mxu0 0.0
      %4637 = vmatpush1.msra.mxu0 %v4084
      %4638 = vmatprep.subr.mxu0 0.0
      %4639 = vmatpush1.msra.mxu0 %v4085
      %4640 = vmatprep.subr.mxu0 0.0
      %4641 = vmatpush1.msra.mxu0 %v4086
      %4642 = vmatprep.subr.mxu0 0.0
      %4643 = vmatpush1.msra.mxu0 %v4087
      %4644 = vmatprep.subr.mxu0 0.0
      %4645 = vmatpush1.msra.mxu0 %v4088
      %4646 = vmatprep.subr.mxu0 0.0
      %4647 = vmatpush1.msra.mxu0 %v4089
      %4648 = vmatprep.subr.mxu0 0.0
      %4649 = vmatpush1.msra.mxu0 %v4090
      %4650 = vmatprep.subr.mxu0 0.0
      %4651 = vmatpush1.msra.mxu0 %v4091
      %4652 = vmatprep.subr.mxu0 0.0
      %4653 = vmatpush1.msra.mxu0 %v4092
      %4654 = vmatprep.subr.mxu0 0.0
      %4655 = vmatpush1.msra.mxu0 %v4093
      %4656 = vmatprep.subr.mxu0 0.0
      %4657 = vmatpush1.msra.mxu0 %v4094
      %4658 = vmatprep.subr.mxu0 0.0
      %4659 = vmatpush1.msra.mxu0 %v4095
      %4660 = vmatprep.subr.mxu0 0.0
      %4661 = vmatpush1.msra.mxu0 %v4096
      %4662 = vmatprep.subr.mxu0 0.0
      %4663 = vmatpush1.msra.mxu0 %v4097
      %4664 = vmatprep.subr.mxu0 0.0
      %4665 = vmatpush1.msra.mxu0 %v4098
      %4666 = vmatprep.subr.mxu0 0.0
      %4667 = vmatpush1.msra.mxu0 %v4099
      %4668 = vmatprep.subr.mxu0 0.0
      %4669 = vmatpush1.msra.mxu0 %v4100
      %4670 = vmatprep.subr.mxu0 0.0
      %4671 = vmatpush1.msra.mxu0 %v4101
      %4672 = vmatprep.subr.mxu0 0.0
      %4673 = vmatpush1.msra.mxu0 %v4102
      %4674 = vmatprep.subr.mxu0 0.0
      %4675 = vmatpush1.msra.mxu0 %v4103
      %4676 = vmatprep.mubr.f32.mxu0 %v3422
      %4677 = vmatmul.mubr.f32.gmra.mrb[0].mxu0 %v3419
      %v4678 = vpop.f32.mrb[0].mxu0
      %v4679 = vadd.f32 %v4574, %v4678
      %v4680 = vpop.f32.mrb[0].mxu0
      %4681 = vmatprep.mubr.f32.mxu0 %v3476
      %4682 = vmatmul.mubr.f32.gmra.mrb[0].mxu0 %v3473
      %v4683 = vpop.f32.mrb[0].mxu0
      %v4684 = vadd.f32 %v4579, %v4683
      %v4685 = vpop.f32.mrb[0].mxu0
      %4686 = vmatprep.mubr.f32.mxu0 %v3530
      %4687 = vmatmul.mubr.f32.gmra.mrb[0].mxu0 %v3527
      %v4688 = vpop.f32.mrb[0].mxu0
      %v4689 = vadd.f32 %v4584, %v4688
      %v4690 = vpop.f32.mrb[0].mxu0
      %4691 = vmatprep.mubr.f32.mxu0 %v3584
      %4692 = vmatmul.mubr.f32.gmra.mrb[0].mxu0 %v3581
      %v4693 = vpop.f32.mrb[0].mxu0
      %v4694 = vadd.f32 %v4589, %v4693
      %v4695 = vpop.f32.mrb[0].mxu0
      %4696 = vmatprep.mubr.f32.mxu0 %v3638
      %4697 = vmatmul.mubr.f32.gmra.mrb[0].mxu0 %v3635
      %v4698 = vpop.f32.mrb[0].mxu0
      %v4699 = vadd.f32 %v4594, %v4698
      %v4700 = vpop.f32.mrb[0].mxu0
      %4701 = vmatprep.mubr.f32.mxu0 %v3692
      %4702 = vmatmul.mubr.f32.gmra.mrb[0].mxu0 %v3689
      %v4703 = vpop.f32.mrb[0].mxu0
      %v4704 = vadd.f32 %v4599, %v4703
      %v4705 = vpop.f32.mrb[0].mxu0
      %4706 = vmatprep.mubr.f32.mxu0 %v3746
      %4707 = vmatmul.mubr.f32.gmra.mrb[0].mxu0 %v3743
      %v4708 = vpop.f32.mrb[0].mxu0
      %v4709 = vadd.f32 %v4604, %v4708
      %v4710 = vpop.f32.mrb[0].mxu0
      %4711 = vmatprep.mubr.f32.mxu0 %v3800
      %4712 = vmatmul.mubr.f32.gmra.mrb[0].mxu0 %v3797
      %v4713 = vpop.f32.mrb[0].mxu0
      %v4714 = vadd.f32 %v4609, %v4713
      %v4715 = vpop.f32.mrb[0].mxu0
      %4716 = vdwg.mxu0
      %4717 = vmatprep.subr.mxu0 0.0
      %4718 = vmatpush1.msra.mxu0 %v4104
      %4719 = vmatprep.subr.mxu0 0.0
      %4720 = vmatpush1.msra.mxu0 %v4105
      %4721 = vmatprep.subr.mxu0 0.0
      %4722 = vmatpush1.msra.mxu0 %v4106
      %4723 = vmatprep.subr.mxu0 0.0
      %4724 = vmatpush1.msra.mxu0 %v4107
      %4725 = vmatprep.subr.mxu0 0.0
      %4726 = vmatpush1.msra.mxu0 %v4108
      %4727 = vmatprep.subr.mxu0 0.0
      %4728 = vmatpush1.msra.mxu0 %v4109
      %4729 = vmatprep.subr.mxu0 0.0
      %4730 = vmatpush1.msra.mxu0 %v4110
      %4731 = vmatprep.subr.mxu0 0.0
      %4732 = vmatpush1.msra.mxu0 %v4111
      %4733 = vmatprep.subr.mxu0 0.0
      %4734 = vmatpush1.msra.mxu0 %v4112
      %4735 = vmatprep.subr.mxu0 0.0
      %4736 = vmatpush1.msra.mxu0 %v4113
      %4737 = vmatprep.subr.mxu0 0.0
      %4738 = vmatpush1.msra.mxu0 %v4114
      %4739 = vmatprep.subr.mxu0 0.0
      %4740 = vmatpush1.msra.mxu0 %v4115
      %4741 = vmatprep.subr.mxu0 0.0
      %4742 = vmatpush1.msra.mxu0 %v4116
      %4743 = vmatprep.subr.mxu0 0.0
      %4744 = vmatpush1.msra.mxu0 %v4117
      %4745 = vmatprep.subr.mxu0 0.0
      %4746 = vmatpush1.msra.mxu0 %v4118
      %4747 = vmatprep.subr.mxu0 0.0
      %4748 = vmatpush1.msra.mxu0 %v4119
      %4749 = vmatprep.subr.mxu0 0.0
      %4750 = vmatpush1.msra.mxu0 %v4120
      %4751 = vmatprep.subr.mxu0 0.0
      %4752 = vmatpush1.msra.mxu0 %v4121
      %4753 = vmatprep.subr.mxu0 0.0
      %4754 = vmatpush1.msra.mxu0 %v4122
      %4755 = vmatprep.subr.mxu0 0.0
      %4756 = vmatpush1.msra.mxu0 %v4123
      %4757 = vmatprep.subr.mxu0 0.0
      %4758 = vmatpush1.msra.mxu0 %v4124
      %4759 = vmatprep.subr.mxu0 0.0
      %4760 = vmatpush1.msra.mxu0 %v4125
      %4761 = vmatprep.subr.mxu0 0.0
      %4762 = vmatpush1.msra.mxu0 %v4126
      %4763 = vmatprep.subr.mxu0 0.0
      %4764 = vmatpush1.msra.mxu0 %v4127
      %4765 = vmatprep.subr.mxu0 0.0
      %4766 = vmatpush1.msra.mxu0 %v4128
      %4767 = vmatprep.subr.mxu0 0.0
      %4768 = vmatpush1.msra.mxu0 %v4129
      %4769 = vmatprep.subr.mxu0 0.0
      %4770 = vmatpush1.msra.mxu0 %v4130
      %4771 = vmatprep.subr.mxu0 0.0
      %4772 = vmatpush1.msra.mxu0 %v4131
      %4773 = vmatprep.subr.mxu0 0.0
      %4774 = vmatpush1.msra.mxu0 %v4132
      %4775 = vmatprep.subr.mxu0 0.0
      %4776 = vmatpush1.msra.mxu0 %v4133
      %4777 = vmatprep.subr.mxu0 0.0
      %4778 = vmatpush1.msra.mxu0 %v4134
      %4779 = vmatprep.subr.mxu0 0.0
      %4780 = vmatpush1.msra.mxu0 %v4135
      %4781 = vmatprep.mubr.f32.mxu0 %v3427
      %4782 = vmatmul.mubr.f32.gmra.mrb[0].mxu0 %v3425
      %v4783 = vpop.f32.mrb[0].mxu0
      %v4784 = vadd.f32 %v4679, %v4783
      %v4785 = vpop.f32.mrb[0].mxu0
      %4786 = vmatprep.mubr.f32.mxu0 %v3481
      %4787 = vmatmul.mubr.f32.gmra.mrb[0].mxu0 %v3479
      %v4788 = vpop.f32.mrb[0].mxu0
      %v4789 = vadd.f32 %v4684, %v4788
      %v4790 = vpop.f32.mrb[0].mxu0
      %4791 = vmatprep.mubr.f32.mxu0 %v3535
      %4792 = vmatmul.mubr.f32.gmra.mrb[0].mxu0 %v3533
      %v4793 = vpop.f32.mrb[0].mxu0
      %v4794 = vadd.f32 %v4689, %v4793
      %v4795 = vpop.f32.mrb[0].mxu0
      %4796 = vmatprep.mubr.f32.mxu0 %v3589
      %4797 = vmatmul.mubr.f32.gmra.mrb[0].mxu0 %v3587
      %v4798 = vpop.f32.mrb[0].mxu0
      %v4799 = vadd.f32 %v4694, %v4798
      %v4800 = vpop.f32.mrb[0].mxu0
      %4801 = vmatprep.mubr.f32.mxu0 %v3643
      %4802 = vmatmul.mubr.f32.gmra.mrb[0].mxu0 %v3641
      %v4803 = vpop.f32.mrb[0].mxu0
      %v4804 = vadd.f32 %v4699, %v4803
      %v4805 = vpop.f32.mrb[0].mxu0
      %4806 = vmatprep.mubr.f32.mxu0 %v3697
      %4807 = vmatmul.mubr.f32.gmra.mrb[0].mxu0 %v3695
      %v4808 = vpop.f32.mrb[0].mxu0
      %v4809 = vadd.f32 %v4704, %v4808
      %v4810 = vpop.f32.mrb[0].mxu0
      %4811 = vmatprep.mubr.f32.mxu0 %v3751
      %4812 = vmatmul.mubr.f32.gmra.mrb[0].mxu0 %v3749
      %v4813 = vpop.f32.mrb[0].mxu0
      %v4814 = vadd.f32 %v4709, %v4813
      %v4815 = vpop.f32.mrb[0].mxu0
      %4816 = vmatprep.mubr.f32.mxu0 %v3805
      %4817 = vmatmul.mubr.f32.gmra.mrb[0].mxu0 %v3803
      %v4818 = vpop.f32.mrb[0].mxu0
      %v4819 = vadd.f32 %v4714, %v4818
      %v4820 = vpop.f32.mrb[0].mxu0
      %4821 = vdwg.mxu0
      %4822 = vmatprep.subr.mxu0 0.0
      %4823 = vmatpush1.msra.mxu0 %v4136
      %4824 = vmatprep.subr.mxu0 0.0
      %4825 = vmatpush1.msra.mxu0 %v4137
      %4826 = vmatprep.subr.mxu0 0.0
      %4827 = vmatpush1.msra.mxu0 %v4138
      %4828 = vmatprep.subr.mxu0 0.0
      %4829 = vmatpush1.msra.mxu0 %v4139
      %4830 = vmatprep.subr.mxu0 0.0
      %4831 = vmatpush1.msra.mxu0 %v4140
      %4832 = vmatprep.subr.mxu0 0.0
      %4833 = vmatpush1.msra.mxu0 %v4141
      %4834 = vmatprep.subr.mxu0 0.0
      %4835 = vmatpush1.msra.mxu0 %v4142
      %4836 = vmatprep.subr.mxu0 0.0
      %4837 = vmatpush1.msra.mxu0 %v4143
      %4838 = vmatprep.subr.mxu0 0.0
      %4839 = vmatpush1.msra.mxu0 %v4144
      %4840 = vmatprep.subr.mxu0 0.0
      %4841 = vmatpush1.msra.mxu0 %v4145
      %4842 = vmatprep.subr.mxu0 0.0
      %4843 = vmatpush1.msra.mxu0 %v4146
      %4844 = vmatprep.subr.mxu0 0.0
      %4845 = vmatpush1.msra.mxu0 %v4147
      %4846 = vmatprep.subr.mxu0 0.0
      %4847 = vmatpush1.msra.mxu0 %v4148
      %4848 = vmatprep.subr.mxu0 0.0
      %4849 = vmatpush1.msra.mxu0 %v4149
      %4850 = vmatprep.subr.mxu0 0.0
      %4851 = vmatpush1.msra.mxu0 %v4150
      %4852 = vmatprep.subr.mxu0 0.0
      %4853 = vmatpush1.msra.mxu0 %v4151
      %4854 = vmatprep.subr.mxu0 0.0
      %4855 = vmatpush1.msra.mxu0 %v4152
      %4856 = vmatprep.subr.mxu0 0.0
      %4857 = vmatpush1.msra.mxu0 %v4153
      %4858 = vmatprep.subr.mxu0 0.0
      %4859 = vmatpush1.msra.mxu0 %v4154
      %4860 = vmatprep.subr.mxu0 0.0
      %4861 = vmatpush1.msra.mxu0 %v4155
      %4862 = vmatprep.subr.mxu0 0.0
      %4863 = vmatpush1.msra.mxu0 %v4156
      %4864 = vmatprep.subr.mxu0 0.0
      %4865 = vmatpush1.msra.mxu0 %v4157
      %4866 = vmatprep.subr.mxu0 0.0
      %4867 = vmatpush1.msra.mxu0 %v4158
      %4868 = vmatprep.subr.mxu0 0.0
      %4869 = vmatpush1.msra.mxu0 %v4159
      %4870 = vmatprep.subr.mxu0 0.0
      %4871 = vmatpush1.msra.mxu0 %v4160
      %4872 = vmatprep.subr.mxu0 0.0
      %4873 = vmatpush1.msra.mxu0 %v4161
      %4874 = vmatprep.subr.mxu0 0.0
      %4875 = vmatpush1.msra.mxu0 %v4162
      %4876 = vmatprep.subr.mxu0 0.0
      %4877 = vmatpush1.msra.mxu0 %v4163
      %4878 = vmatprep.subr.mxu0 0.0
      %4879 = vmatpush1.msra.mxu0 %v4164
      %4880 = vmatprep.subr.mxu0 0.0
      %4881 = vmatpush1.msra.mxu0 %v4165
      %4882 = vmatprep.subr.mxu0 0.0
      %4883 = vmatpush1.msra.mxu0 %v4166
      %4884 = vmatprep.subr.mxu0 0.0
      %4885 = vmatpush1.msra.mxu0 %v4167
      %4886 = vmatprep.mubr.f32.mxu0 %v3433
      %4887 = vmatmul.mubr.f32.gmra.mrb[0].mxu0 %v3430
      %v4888 = vpop.f32.mrb[0].mxu0
      %v4889 = vadd.f32 %v4784, %v4888
      %v4890 = vpop.f32.mrb[0].mxu0
      %4891 = vmatprep.mubr.f32.mxu0 %v3487
      %4892 = vmatmul.mubr.f32.gmra.mrb[0].mxu0 %v3484
      %v4893 = vpop.f32.mrb[0].mxu0
      %v4894 = vadd.f32 %v4789, %v4893
      %v4895 = vpop.f32.mrb[0].mxu0
      %4896 = vmatprep.mubr.f32.mxu0 %v3541
      %4897 = vmatmul.mubr.f32.gmra.mrb[0].mxu0 %v3538
      %v4898 = vpop.f32.mrb[0].mxu0
      %v4899 = vadd.f32 %v4794, %v4898
      %v4900 = vpop.f32.mrb[0].mxu0
      %4901 = vmatprep.mubr.f32.mxu0 %v3595
      %4902 = vmatmul.mubr.f32.gmra.mrb[0].mxu0 %v3592
      %v4903 = vpop.f32.mrb[0].mxu0
      %v4904 = vadd.f32 %v4799, %v4903
      %v4905 = vpop.f32.mrb[0].mxu0
      %4906 = vmatprep.mubr.f32.mxu0 %v3649
      %4907 = vmatmul.mubr.f32.gmra.mrb[0].mxu0 %v3646
      %v4908 = vpop.f32.mrb[0].mxu0
      %v4909 = vadd.f32 %v4804, %v4908
      %v4910 = vpop.f32.mrb[0].mxu0
      %4911 = vmatprep.mubr.f32.mxu0 %v3703
      %4912 = vmatmul.mubr.f32.gmra.mrb[0].mxu0 %v3700
      %v4913 = vpop.f32.mrb[0].mxu0
      %v4914 = vadd.f32 %v4809, %v4913
      %v4915 = vpop.f32.mrb[0].mxu0
      %4916 = vmatprep.mubr.f32.mxu0 %v3757
      %4917 = vmatmul.mubr.f32.gmra.mrb[0].mxu0 %v3754
      %v4918 = vpop.f32.mrb[0].mxu0
      %v4919 = vadd.f32 %v4814, %v4918
      %v4920 = vpop.f32.mrb[0].mxu0
      %4921 = vmatprep.mubr.f32.mxu0 %v3811
      %4922 = vmatmul.mubr.f32.gmra.mrb[0].mxu0 %v3808
      %v4923 = vpop.f32.mrb[0].mxu0
      %v4924 = vadd.f32 %v4819, %v4923
      %v4925 = vpop.f32.mrb[0].mxu0
      %4926 = vdwg.mxu0
      %4927 = vmatprep.subr.mxu0 0.0
      %4928 = vmatpush1.msra.mxu0 %v4168
      %4929 = vmatprep.subr.mxu0 0.0
      %4930 = vmatpush1.msra.mxu0 %v4169
      %4931 = vmatprep.subr.mxu0 0.0
      %4932 = vmatpush1.msra.mxu0 %v4170
      %4933 = vmatprep.subr.mxu0 0.0
      %4934 = vmatpush1.msra.mxu0 %v4171
      %4935 = vmatprep.subr.mxu0 0.0
      %4936 = vmatpush1.msra.mxu0 %v4172
      %4937 = vmatprep.subr.mxu0 0.0
      %4938 = vmatpush1.msra.mxu0 %v4173
      %4939 = vmatprep.subr.mxu0 0.0
      %4940 = vmatpush1.msra.mxu0 %v4174
      %4941 = vmatprep.subr.mxu0 0.0
      %4942 = vmatpush1.msra.mxu0 %v4175
      %4943 = vmatprep.subr.mxu0 0.0
      %4944 = vmatpush1.msra.mxu0 %v4176
      %4945 = vmatprep.subr.mxu0 0.0
      %4946 = vmatpush1.msra.mxu0 %v4177
      %4947 = vmatprep.subr.mxu0 0.0
      %4948 = vmatpush1.msra.mxu0 %v4178
      %4949 = vmatprep.subr.mxu0 0.0
      %4950 = vmatpush1.msra.mxu0 %v4179
      %4951 = vmatprep.subr.mxu0 0.0
      %4952 = vmatpush1.msra.mxu0 %v4180
      %4953 = vmatprep.subr.mxu0 0.0
      %4954 = vmatpush1.msra.mxu0 %v4181
      %4955 = vmatprep.subr.mxu0 0.0
      %4956 = vmatpush1.msra.mxu0 %v4182
      %4957 = vmatprep.subr.mxu0 0.0
      %4958 = vmatpush1.msra.mxu0 %v4183
      %4959 = vmatprep.subr.mxu0 0.0
      %4960 = vmatpush1.msra.mxu0 %v4184
      %4961 = vmatprep.subr.mxu0 0.0
      %4962 = vmatpush1.msra.mxu0 %v4185
      %4963 = vmatprep.subr.mxu0 0.0
      %4964 = vmatpush1.msra.mxu0 %v4186
      %4965 = vmatprep.subr.mxu0 0.0
      %4966 = vmatpush1.msra.mxu0 %v4187
      %4967 = vmatprep.subr.mxu0 0.0
      %4968 = vmatpush1.msra.mxu0 %v4188
      %4969 = vmatprep.subr.mxu0 0.0
      %4970 = vmatpush1.msra.mxu0 %v4189
      %4971 = vmatprep.subr.mxu0 0.0
      %4972 = vmatpush1.msra.mxu0 %v4190
      %4973 = vmatprep.subr.mxu0 0.0
      %4974 = vmatpush1.msra.mxu0 %v4191
      %4975 = vmatprep.subr.mxu0 0.0
      %4976 = vmatpush1.msra.mxu0 %v4192
      %4977 = vmatprep.subr.mxu0 0.0
      %4978 = vmatpush1.msra.mxu0 %v4193
      %4979 = vmatprep.subr.mxu0 0.0
      %4980 = vmatpush1.msra.mxu0 %v4194
      %4981 = vmatprep.subr.mxu0 0.0
      %4982 = vmatpush1.msra.mxu0 %v4195
      %4983 = vmatprep.subr.mxu0 0.0
      %4984 = vmatpush1.msra.mxu0 %v4196
      %4985 = vmatprep.subr.mxu0 0.0
      %4986 = vmatpush1.msra.mxu0 %v4197
      %4987 = vmatprep.subr.mxu0 0.0
      %4988 = vmatpush1.msra.mxu0 %v4198
      %4989 = vmatprep.subr.mxu0 0.0
      %4990 = vmatpush1.msra.mxu0 %v4199
      %4991 = vmatprep.mubr.f32.mxu0 %v3439
      %4992 = vmatmul.mubr.f32.gmra.mrb[0].mxu0 %v3436
      %v4993 = vpop.f32.mrb[0].mxu0
      %v4994 = vadd.f32 %v4889, %v4993
      %v4995 = vpop.f32.mrb[0].mxu0
      %4996 = vmatprep.mubr.f32.mxu0 %v3493
      %4997 = vmatmul.mubr.f32.gmra.mrb[0].mxu0 %v3490
      %v4998 = vpop.f32.mrb[0].mxu0
      %v4999 = vadd.f32 %v4894, %v4998
      %v5000 = vpop.f32.mrb[0].mxu0
      %5001 = vmatprep.mubr.f32.mxu0 %v3547
      %5002 = vmatmul.mubr.f32.gmra.mrb[0].mxu0 %v3544
      %v5003 = vpop.f32.mrb[0].mxu0
      %v5004 = vadd.f32 %v4899, %v5003
      %v5005 = vpop.f32.mrb[0].mxu0
      %5006 = vmatprep.mubr.f32.mxu0 %v3601
      %5007 = vmatmul.mubr.f32.gmra.mrb[0].mxu0 %v3598
      %v5008 = vpop.f32.mrb[0].mxu0
      %v5009 = vadd.f32 %v4904, %v5008
      %v5010 = vpop.f32.mrb[0].mxu0
      %5011 = vmatprep.mubr.f32.mxu0 %v3655
      %5012 = vmatmul.mubr.f32.gmra.mrb[0].mxu0 %v3652
      %v5013 = vpop.f32.mrb[0].mxu0
      %v5014 = vadd.f32 %v4909, %v5013
      %v5015 = vpop.f32.mrb[0].mxu0
      %5016 = vmatprep.mubr.f32.mxu0 %v3709
      %5017 = vmatmul.mubr.f32.gmra.mrb[0].mxu0 %v3706
      %v5018 = vpop.f32.mrb[0].mxu0
      %v5019 = vadd.f32 %v4914, %v5018
      %v5020 = vpop.f32.mrb[0].mxu0
      %5021 = vmatprep.mubr.f32.mxu0 %v3763
      %5022 = vmatmul.mubr.f32.gmra.mrb[0].mxu0 %v3760
      %v5023 = vpop.f32.mrb[0].mxu0
      %v5024 = vadd.f32 %v4919, %v5023
      %v5025 = vpop.f32.mrb[0].mxu0
      %5026 = vmatprep.mubr.f32.mxu0 %v3817
      %5027 = vmatmul.mubr.f32.gmra.mrb[0].mxu0 %v3814
      %v5028 = vpop.f32.mrb[0].mxu0
      %v5029 = vadd.f32 %v4924, %v5028
      %v5030 = vpop.f32.mrb[0].mxu0
      %5031 = vdwg.mxu0
      %5032 = vmatprep.subr.mxu0 0.0
      %5033 = vmatpush1.msra.mxu0 %v4200
      %5034 = vmatprep.subr.mxu0 0.0
      %5035 = vmatpush1.msra.mxu0 %v4201
      %5036 = vmatprep.subr.mxu0 0.0
      %5037 = vmatpush1.msra.mxu0 %v4202
      %5038 = vmatprep.subr.mxu0 0.0
      %5039 = vmatpush1.msra.mxu0 %v4203
      %5040 = vmatprep.subr.mxu0 0.0
      %5041 = vmatpush1.msra.mxu0 %v4204
      %5042 = vmatprep.subr.mxu0 0.0
      %5043 = vmatpush1.msra.mxu0 %v4205
      %5044 = vmatprep.subr.mxu0 0.0
      %5045 = vmatpush1.msra.mxu0 %v4206
      %5046 = vmatprep.subr.mxu0 0.0
      %5047 = vmatpush1.msra.mxu0 %v4207
      %5048 = vmatprep.subr.mxu0 0.0
      %5049 = vmatpush1.msra.mxu0 %v4208
      %5050 = vmatprep.subr.mxu0 0.0
      %5051 = vmatpush1.msra.mxu0 %v4209
      %5052 = vmatprep.subr.mxu0 0.0
      %5053 = vmatpush1.msra.mxu0 %v4210
      %5054 = vmatprep.subr.mxu0 0.0
      %5055 = vmatpush1.msra.mxu0 %v4211
      %5056 = vmatprep.subr.mxu0 0.0
      %5057 = vmatpush1.msra.mxu0 %v4212
      %5058 = vmatprep.subr.mxu0 0.0
      %5059 = vmatpush1.msra.mxu0 %v4213
      %5060 = vmatprep.subr.mxu0 0.0
      %5061 = vmatpush1.msra.mxu0 %v4214
      %5062 = vmatprep.subr.mxu0 0.0
      %5063 = vmatpush1.msra.mxu0 %v4215
      %5064 = vmatprep.subr.mxu0 0.0
      %5065 = vmatpush1.msra.mxu0 %v4216
      %5066 = vmatprep.subr.mxu0 0.0
      %5067 = vmatpush1.msra.mxu0 %v4217
      %5068 = vmatprep.subr.mxu0 0.0
      %5069 = vmatpush1.msra.mxu0 %v4218
      %5070 = vmatprep.subr.mxu0 0.0
      %5071 = vmatpush1.msra.mxu0 %v4219
      %5072 = vmatprep.subr.mxu0 0.0
      %5073 = vmatpush1.msra.mxu0 %v4220
      %5074 = vmatprep.subr.mxu0 0.0
      %5075 = vmatpush1.msra.mxu0 %v4221
      %5076 = vmatprep.subr.mxu0 0.0
      %5077 = vmatpush1.msra.mxu0 %v4222
      %5078 = vmatprep.subr.mxu0 0.0
      %5079 = vmatpush1.msra.mxu0 %v4223
      %5080 = vmatprep.subr.mxu0 0.0
      %5081 = vmatpush1.msra.mxu0 %v4224
      %5082 = vmatprep.subr.mxu0 0.0
      %5083 = vmatpush1.msra.mxu0 %v4225
      %5084 = vmatprep.subr.mxu0 0.0
      %5085 = vmatpush1.msra.mxu0 %v4226
      %5086 = vmatprep.subr.mxu0 0.0
      %5087 = vmatpush1.msra.mxu0 %v4227
      %5088 = vmatprep.subr.mxu0 0.0
      %5089 = vmatpush1.msra.mxu0 %v4228
      %5090 = vmatprep.subr.mxu0 0.0
      %5091 = vmatpush1.msra.mxu0 %v4229
      %5092 = vmatprep.subr.mxu0 0.0
      %5093 = vmatpush1.msra.mxu0 %v4230
      %5094 = vmatprep.subr.mxu0 0.0
      %5095 = vmatpush1.msra.mxu0 %v4231
      %5096 = vmatprep.mubr.f32.mxu0 %v3444
      %5097 = vmatmul.mubr.f32.gmra.mrb[0].mxu0 %v3442
      %v5098 = vpop.f32.mrb[0].mxu0
      %v5099 = vadd.f32 %v4994, %v5098
      %v5100 = vpop.f32.mrb[0].mxu0
      %5101 = vmatprep.mubr.f32.mxu0 %v3498
      %5102 = vmatmul.mubr.f32.gmra.mrb[0].mxu0 %v3496
      %v5103 = vpop.f32.mrb[0].mxu0
      %v5104 = vadd.f32 %v4999, %v5103
      %v5105 = vpop.f32.mrb[0].mxu0
      %5106 = vmatprep.mubr.f32.mxu0 %v3552
      %5107 = vmatmul.mubr.f32.gmra.mrb[0].mxu0 %v3550
      %v5108 = vpop.f32.mrb[0].mxu0
      %v5109 = vadd.f32 %v5004, %v5108
      %v5110 = vpop.f32.mrb[0].mxu0
      %5111 = vmatprep.mubr.f32.mxu0 %v3606
      %5112 = vmatmul.mubr.f32.gmra.mrb[0].mxu0 %v3604
      %v5113 = vpop.f32.mrb[0].mxu0
      %v5114 = vadd.f32 %v5009, %v5113
      %v5115 = vpop.f32.mrb[0].mxu0
      %5116 = vmatprep.mubr.f32.mxu0 %v3660
      %5117 = vmatmul.mubr.f32.gmra.mrb[0].mxu0 %v3658
      %v5118 = vpop.f32.mrb[0].mxu0
      %v5119 = vadd.f32 %v5014, %v5118
      %v5120 = vpop.f32.mrb[0].mxu0
      %5121 = vmatprep.mubr.f32.mxu0 %v3714
      %5122 = vmatmul.mubr.f32.gmra.mrb[0].mxu0 %v3712
      %v5123 = vpop.f32.mrb[0].mxu0
      %v5124 = vadd.f32 %v5019, %v5123
      %v5125 = vpop.f32.mrb[0].mxu0
      %5126 = vmatprep.mubr.f32.mxu0 %v3768
      %5127 = vmatmul.mubr.f32.gmra.mrb[0].mxu0 %v3766
      %v5128 = vpop.f32.mrb[0].mxu0
      %v5129 = vadd.f32 %v5024, %v5128
      %v5130 = vpop.f32.mrb[0].mxu0
      %5131 = vmatprep.mubr.f32.mxu0 %v3822
      %5132 = vmatmul.mubr.f32.gmra.mrb[0].mxu0 %v3820
      %v5133 = vpop.f32.mrb[0].mxu0
      %v5134 = vadd.f32 %v5029, %v5133
      %v5135 = vpop.f32.mrb[0].mxu0
      %5136 = vdwg.mxu0
      %5137 = vmatprep.subr.mxu0 0.0
      %5138 = vmatpush1.msra.mxu0 %v4232
      %5139 = vmatprep.subr.mxu0 0.0
      %5140 = vmatpush1.msra.mxu0 %v4233
      %5141 = vmatprep.subr.mxu0 0.0
      %5142 = vmatpush1.msra.mxu0 %v4234
      %5143 = vmatprep.subr.mxu0 0.0
      %5144 = vmatpush1.msra.mxu0 %v4235
      %5145 = vmatprep.subr.mxu0 0.0
      %5146 = vmatpush1.msra.mxu0 %v4236
      %5147 = vmatprep.subr.mxu0 0.0
      %5148 = vmatpush1.msra.mxu0 %v4237
      %5149 = vmatprep.subr.mxu0 0.0
      %5150 = vmatpush1.msra.mxu0 %v4238
      %5151 = vmatprep.subr.mxu0 0.0
      %5152 = vmatpush1.msra.mxu0 %v4239
      %5153 = vmatprep.subr.mxu0 0.0
      %5154 = vmatpush1.msra.mxu0 %v4240
      %5155 = vmatprep.subr.mxu0 0.0
      %5156 = vmatpush1.msra.mxu0 %v4241
      %5157 = vmatprep.subr.mxu0 0.0
      %5158 = vmatpush1.msra.mxu0 %v4242
      %5159 = vmatprep.subr.mxu0 0.0
      %5160 = vmatpush1.msra.mxu0 %v4243
      %5161 = vmatprep.subr.mxu0 0.0
      %5162 = vmatpush1.msra.mxu0 %v4244
      %5163 = vmatprep.subr.mxu0 0.0
      %5164 = vmatpush1.msra.mxu0 %v4245
      %5165 = vmatprep.subr.mxu0 0.0
      %5166 = vmatpush1.msra.mxu0 %v4246
      %5167 = vmatprep.subr.mxu0 0.0
      %5168 = vmatpush1.msra.mxu0 %v4247
      %5169 = vmatprep.subr.mxu0 0.0
      %5170 = vmatpush1.msra.mxu0 %v4248
      %5171 = vmatprep.subr.mxu0 0.0
      %5172 = vmatpush1.msra.mxu0 %v4249
      %5173 = vmatprep.subr.mxu0 0.0
      %5174 = vmatpush1.msra.mxu0 %v4250
      %5175 = vmatprep.subr.mxu0 0.0
      %5176 = vmatpush1.msra.mxu0 %v4251
      %5177 = vmatprep.subr.mxu0 0.0
      %5178 = vmatpush1.msra.mxu0 %v4252
      %5179 = vmatprep.subr.mxu0 0.0
      %5180 = vmatpush1.msra.mxu0 %v4253
      %5181 = vmatprep.subr.mxu0 0.0
      %5182 = vmatpush1.msra.mxu0 %v4254
      %5183 = vmatprep.subr.mxu0 0.0
      %5184 = vmatpush1.msra.mxu0 %v4255
      %5185 = vmatprep.subr.mxu0 0.0
      %5186 = vmatpush1.msra.mxu0 %v4256
      %5187 = vmatprep.subr.mxu0 0.0
      %5188 = vmatpush1.msra.mxu0 %v4257
      %5189 = vmatprep.subr.mxu0 0.0
      %5190 = vmatpush1.msra.mxu0 %v4258
      %5191 = vmatprep.subr.mxu0 0.0
      %5192 = vmatpush1.msra.mxu0 %v4259
      %5193 = vmatprep.subr.mxu0 0.0
      %5194 = vmatpush1.msra.mxu0 %v4260
      %5195 = vmatprep.subr.mxu0 0.0
      %5196 = vmatpush1.msra.mxu0 %v4261
      %5197 = vmatprep.subr.mxu0 0.0
      %5198 = vmatpush1.msra.mxu0 %v4262
      %5199 = vmatprep.subr.mxu0 0.0
      %5200 = vmatpush1.msra.mxu0 %v4263
      %5201 = vmatprep.mubr.f32.mxu0 %v3450
      %5202 = vmatmul.mubr.f32.gmra.mrb[0].mxu0 %v3447
      %v5203 = vpop.f32.mrb[0].mxu0
      %v5204 = vadd.f32 %v5099, %v5203
      %v5205 = vpop.f32.mrb[0].mxu0
      %5206 = vmatprep.mubr.f32.mxu0 %v3504
      %5207 = vmatmul.mubr.f32.gmra.mrb[0].mxu0 %v3501
      %v5208 = vpop.f32.mrb[0].mxu0
      %v5209 = vadd.f32 %v5104, %v5208
      %v5210 = vpop.f32.mrb[0].mxu0
      %5211 = vmatprep.mubr.f32.mxu0 %v3558
      %5212 = vmatmul.mubr.f32.gmra.mrb[0].mxu0 %v3555
      %v5213 = vpop.f32.mrb[0].mxu0
      %v5214 = vadd.f32 %v5109, %v5213
      %v5215 = vpop.f32.mrb[0].mxu0
      %5216 = vmatprep.mubr.f32.mxu0 %v3612
      %5217 = vmatmul.mubr.f32.gmra.mrb[0].mxu0 %v3609
      %v5218 = vpop.f32.mrb[0].mxu0
      %v5219 = vadd.f32 %v5114, %v5218
      %v5220 = vpop.f32.mrb[0].mxu0
      %5221 = vmatprep.mubr.f32.mxu0 %v3666
      %5222 = vmatmul.mubr.f32.gmra.mrb[0].mxu0 %v3663
      %v5223 = vpop.f32.mrb[0].mxu0
      %v5224 = vadd.f32 %v5119, %v5223
      %v5225 = vpop.f32.mrb[0].mxu0
      %5226 = vmatprep.mubr.f32.mxu0 %v3720
      %5227 = vmatmul.mubr.f32.gmra.mrb[0].mxu0 %v3717
      %v5228 = vpop.f32.mrb[0].mxu0
      %v5229 = vadd.f32 %v5124, %v5228
      %v5230 = vpop.f32.mrb[0].mxu0
      %5231 = vmatprep.mubr.f32.mxu0 %v3774
      %5232 = vmatmul.mubr.f32.gmra.mrb[0].mxu0 %v3771
      %v5233 = vpop.f32.mrb[0].mxu0
      %v5234 = vadd.f32 %v5129, %v5233
      %v5235 = vpop.f32.mrb[0].mxu0
      %5236 = vmatprep.mubr.f32.mxu0 %v3828
      %5237 = vmatmul.mubr.f32.gmra.mrb[0].mxu0 %v3825
      %v5238 = vpop.f32.mrb[0].mxu0
      %v5239 = vadd.f32 %v5134, %v5238
      %v5240 = vpop.f32.mrb[0].mxu0
      %5241 = vdwg.mxu0
      %5242 = vmatprep.subr.mxu0 0.0
      %5243 = vmatpush1.msra.mxu0 %v4264
      %5244 = vmatprep.subr.mxu0 0.0
      %5245 = vmatpush1.msra.mxu0 %v4265
      %5246 = vmatprep.subr.mxu0 0.0
      %5247 = vmatpush1.msra.mxu0 %v4266
      %5248 = vmatprep.subr.mxu0 0.0
      %5249 = vmatpush1.msra.mxu0 %v4267
      %5250 = vmatprep.subr.mxu0 0.0
      %5251 = vmatpush1.msra.mxu0 %v4268
      %5252 = vmatprep.subr.mxu0 0.0
      %5253 = vmatpush1.msra.mxu0 %v4269
      %5254 = vmatprep.subr.mxu0 0.0
      %5255 = vmatpush1.msra.mxu0 %v4270
      %5256 = vmatprep.subr.mxu0 0.0
      %5257 = vmatpush1.msra.mxu0 %v4271
      %5258 = vmatprep.subr.mxu0 0.0
      %5259 = vmatpush1.msra.mxu0 %v4272
      %5260 = vmatprep.subr.mxu0 0.0
      %5261 = vmatpush1.msra.mxu0 0.0
      %5262 = vmatprep.subr.mxu0 0.0
      %5263 = vmatpush1.msra.mxu0 0.0
      %5264 = vmatprep.subr.mxu0 0.0
      %5265 = vmatpush1.msra.mxu0 0.0
      %5266 = vmatprep.subr.mxu0 0.0
      %5267 = vmatpush1.msra.mxu0 0.0
      %5268 = vmatprep.subr.mxu0 0.0
      %5269 = vmatpush1.msra.mxu0 0.0
      %5270 = vmatprep.subr.mxu0 0.0
      %5271 = vmatpush1.msra.mxu0 0.0
      %5272 = vmatprep.subr.mxu0 0.0
      %5273 = vmatpush1.msra.mxu0 0.0
      %5274 = vmatprep.subr.mxu0 0.0
      %5275 = vmatpush1.msra.mxu0 0.0
      %5276 = vmatprep.subr.mxu0 0.0
      %5277 = vmatpush1.msra.mxu0 0.0
      %5278 = vmatprep.subr.mxu0 0.0
      %5279 = vmatpush1.msra.mxu0 0.0
      %5280 = vmatprep.subr.mxu0 0.0
      %5281 = vmatpush1.msra.mxu0 0.0
      %5282 = vmatprep.subr.mxu0 0.0
      %5283 = vmatpush1.msra.mxu0 0.0
      %5284 = vmatprep.subr.mxu0 0.0
      %5285 = vmatpush1.msra.mxu0 0.0
      %5286 = vmatprep.subr.mxu0 0.0
      %5287 = vmatpush1.msra.mxu0 0.0
      %5288 = vmatprep.subr.mxu0 0.0
      %5289 = vmatpush1.msra.mxu0 0.0
      %5290 = vmatprep.subr.mxu0 0.0
      %5291 = vmatpush1.msra.mxu0 0.0
      %5292 = vmatprep.subr.mxu0 0.0
      %5293 = vmatpush1.msra.mxu0 0.0
      %5294 = vmatprep.subr.mxu0 0.0
      %5295 = vmatpush1.msra.mxu0 0.0
      %5296 = vmatprep.subr.mxu0 0.0
      %5297 = vmatpush1.msra.mxu0 0.0
      %5298 = vmatprep.subr.mxu0 0.0
      %5299 = vmatpush1.msra.mxu0 0.0
      %5300 = vmatprep.subr.mxu0 0.0
      %5301 = vmatpush1.msra.mxu0 0.0
      %5302 = vmatprep.subr.mxu0 0.0
      %5303 = vmatpush1.msra.mxu0 0.0
      %5304 = vmatprep.subr.mxu0 0.0
      %5305 = vmatpush1.msra.mxu0 0.0
      %5306 = vmatprep.mubr.f32.mxu0 0.0
      %5307 = vmatmul.mubr.f32.gmra.mrb[0].mxu0 %v4281
      %v5308 = vpop.f32.mrb[0].mxu0
      %v5309 = vadd.f32 %v5204, %v5308
      %v5310 = vpop.f32.mrb[0].mxu0
      %5311 = vmatprep.mubr.f32.mxu0 0.0
      %5312 = vmatmul.mubr.f32.gmra.mrb[0].mxu0 %v4283
      %v5313 = vpop.f32.mrb[0].mxu0
      %v5314 = vadd.f32 %v5209, %v5313
      %v5315 = vpop.f32.mrb[0].mxu0
      %5316 = vmatprep.mubr.f32.mxu0 0.0
      %5317 = vmatmul.mubr.f32.gmra.mrb[0].mxu0 %v4285
      %v5318 = vpop.f32.mrb[0].mxu0
      %v5319 = vadd.f32 %v5214, %v5318
      %v5320 = vpop.f32.mrb[0].mxu0
      %5321 = vmatprep.mubr.f32.mxu0 0.0
      %5322 = vmatmul.mubr.f32.gmra.mrb[0].mxu0 %v4287
      %v5323 = vpop.f32.mrb[0].mxu0
      %v5324 = vadd.f32 %v5219, %v5323
      %v5325 = vpop.f32.mrb[0].mxu0
      %5326 = vmatprep.mubr.f32.mxu0 0.0
      %5327 = vmatmul.mubr.f32.gmra.mrb[0].mxu0 %v4289
      %v5328 = vpop.f32.mrb[0].mxu0
      %v5329 = vadd.f32 %v5224, %v5328
      %v5330 = vpop.f32.mrb[0].mxu0
      %5331 = vmatprep.mubr.f32.mxu0 0.0
      %5332 = vmatmul.mubr.f32.gmra.mrb[0].mxu0 %v4291
      %v5333 = vpop.f32.mrb[0].mxu0
      %v5334 = vadd.f32 %v5229, %v5333
      %v5335 = vpop.f32.mrb[0].mxu0
      %5336 = vmatprep.mubr.f32.mxu0 0.0
      %5337 = vmatmul.mubr.f32.gmra.mrb[0].mxu0 %v4293
      %v5338 = vpop.f32.mrb[0].mxu0
      %v5339 = vadd.f32 %v5234, %v5338
      %v5340 = vpop.f32.mrb[0].mxu0
      %5341 = vmatprep.mubr.f32.mxu0 0.0
      %5342 = vmatmul.mubr.f32.gmra.mrb[0].mxu0 %v4295
      %v5343 = vpop.f32.mrb[0].mxu0
      %v5344 = vadd.f32 %v5239, %v5343
      %v5345 = vpop.f32.mrb[0].mxu0
      %5346 = vdwg.mxu0
      %v5347 = vmax.f32 %v5309, 0.0
      %v5348 = vmax.f32 %v5314, 0.0
      %v5349 = vmax.f32 %v5319, 0.0
      %v5350 = vmax.f32 %v5324, 0.0
      %v5351 = vmax.f32 %v5329, 0.0
      %v5352 = vmax.f32 %v5334, 0.0
      %v5353 = vmax.f32 %v5339, 0.0
      %v5354 = vmax.f32 %v5344, 0.0
      %5355 = vst.msk [vmem:[%s1093 + $0x18] sm:$0xff] %vm2194, %v5347
      %5356 = vst.msk [vmem:[%s1093 + $0x60] sm:$0xff] %vm2194, %v5348
      %5357 = vst.msk [vmem:[%s1093 + $0xa8] sm:$0xff] %vm2194, %v5349
      %5358 = vst.msk [vmem:[%s1093 + $0xf0] sm:$0xff] %vm2194, %v5350
      %5359 = vst.msk [vmem:[%s1093 + $0x138] sm:$0xff] %vm2194, %v5351
      %5360 = vst.msk [vmem:[%s1093 + $0x180] sm:$0xff] %vm2194, %v5352
      %5361 = vst.msk [vmem:[%s1093 + $0x1c8] sm:$0xff] %vm2194, %v5353
      %5362 = vst.msk [vmem:[%s1093 + $0x210] sm:$0xff] %vm2194, %v5354
      %v5363 = vld [vmem:[#allocation2] sm:$0x80]
      %v5364 = vld [vmem:[#allocation2 + $0x18] sm:$0x7f]
      %v5365 = vld [vmem:[#allocation2 + $0x48] sm:$0x80]
      %v5366 = vld [vmem:[#allocation2 + $0x60] sm:$0x7f]
      %v5367 = vld [vmem:[#allocation2 + $0x90] sm:$0x80]
      %v5368 = vld [vmem:[#allocation2 + $0xa8] sm:$0x7f]
      %v5369 = vld [vmem:[#allocation2 + $0xd8] sm:$0x80]
      %v5370 = vld [vmem:[#allocation2 + $0xf0] sm:$0x7f]
      %v5371 = vld [vmem:[#allocation2 + $0x120] sm:$0x80]
      %v5372 = vld [vmem:[#allocation2 + $0x138] sm:$0x7f]
      %v5373 = vld [vmem:[#allocation2 + $0x168] sm:$0x80]
      %v5374 = vld [vmem:[#allocation2 + $0x180] sm:$0x7f]
      %v5375 = vld [vmem:[#allocation2 + $0x1b0] sm:$0x80]
      %v5376 = vld [vmem:[#allocation2 + $0x1c8] sm:$0x7f]
      %v5377 = vld [vmem:[#allocation2 + $0x1f8] sm:$0x80]
      %v5378 = vld [vmem:[#allocation2 + $0x210] sm:$0x7f]
      %v5379 = vld [vmem:[#allocation2 + $0x18] sm:$0xff]
      %v5380 = vld [vmem:[#allocation2 + $0x60] sm:$0xff]
      %v5381 = vld [vmem:[#allocation2 + $0xa8] sm:$0xff]
      %v5382 = vld [vmem:[#allocation2 + $0xf0] sm:$0xff]
      %v5383 = vld [vmem:[#allocation2 + $0x138] sm:$0xff]
      %v5384 = vld [vmem:[#allocation2 + $0x180] sm:$0xff]
      %v5385 = vld [vmem:[#allocation2 + $0x1c8] sm:$0xff]
      %v5386 = vld [vmem:[#allocation2 + $0x210] sm:$0xff]
      %v5387 = vld [vmem:[#allocation2 + $0x18] sm:$0xfe]
      %v5388 = vld [vmem:[#allocation2 + $0x30] sm:$0x1]
      %v5389 = vld [vmem:[#allocation2 + $0x60] sm:$0xfe]
      %v5390 = vld [vmem:[#allocation2 + $0x78] sm:$0x1]
      %v5391 = vld [vmem:[#allocation2 + $0xa8] sm:$0xfe]
      %v5392 = vld [vmem:[#allocation2 + $0xc0] sm:$0x1]
      %v5393 = vld [vmem:[#allocation2 + $0xf0] sm:$0xfe]
      %v5394 = vld [vmem:[#allocation2 + $0x108] sm:$0x1]
      %v5395 = vld [vmem:[#allocation2 + $0x138] sm:$0xfe]
      %v5396 = vld [vmem:[#allocation2 + $0x150] sm:$0x1]
      %v5397 = vld [vmem:[#allocation2 + $0x180] sm:$0xfe]
      %v5398 = vld [vmem:[#allocation2 + $0x198] sm:$0x1]
      %v5399 = vld [vmem:[#allocation2 + $0x1c8] sm:$0xfe]
      %v5400 = vld [vmem:[#allocation2 + $0x1e0] sm:$0x1]
      %v5401 = vld [vmem:[#allocation2 + $0x210] sm:$0xfe]
      %v5402 = vld [vmem:[#allocation2 + $0x228] sm:$0x1]
      %v5403 = vld [vmem:[%s1093] sm:$0x80]
      %v5404 = vld [vmem:[%s1093 + $0x18] sm:$0x7f]
      %v5405 = vld [vmem:[%s1093 + $0x48] sm:$0x80]
      %v5406 = vld [vmem:[%s1093 + $0x60] sm:$0x7f]
      %v5407 = vld [vmem:[%s1093 + $0x90] sm:$0x80]
      %v5408 = vld [vmem:[%s1093 + $0xa8] sm:$0x7f]
      %v5409 = vld [vmem:[%s1093 + $0xd8] sm:$0x80]
      %v5410 = vld [vmem:[%s1093 + $0xf0] sm:$0x7f]
      %v5411 = vld [vmem:[%s1093 + $0x120] sm:$0x80]
      %v5412 = vld [vmem:[%s1093 + $0x138] sm:$0x7f]
      %v5413 = vld [vmem:[%s1093 + $0x168] sm:$0x80]
      %v5414 = vld [vmem:[%s1093 + $0x180] sm:$0x7f]
      %v5415 = vld [vmem:[%s1093 + $0x1b0] sm:$0x80]
      %v5416 = vld [vmem:[%s1093 + $0x1c8] sm:$0x7f]
      %v5417 = vld [vmem:[%s1093 + $0x1f8] sm:$0x80]
      %v5418 = vld [vmem:[%s1093 + $0x210] sm:$0x7f]
      %v5419 = vld [vmem:[%s1093 + $0x18] sm:$0xff]
      %v5420 = vld [vmem:[%s1093 + $0x60] sm:$0xff]
      %v5421 = vld [vmem:[%s1093 + $0xa8] sm:$0xff]
      %v5422 = vld [vmem:[%s1093 + $0xf0] sm:$0xff]
      %v5423 = vld [vmem:[%s1093 + $0x138] sm:$0xff]
      %v5424 = vld [vmem:[%s1093 + $0x180] sm:$0xff]
      %v5425 = vld [vmem:[%s1093 + $0x1c8] sm:$0xff]
      %v5426 = vld [vmem:[%s1093 + $0x210] sm:$0xff]
      %v5427 = vld [vmem:[%s1093 + $0x18] sm:$0xfe]
      %v5428 = vld [vmem:[%s1093 + $0x30] sm:$0x1]
      %v5429 = vld [vmem:[%s1093 + $0x60] sm:$0xfe]
      %v5430 = vld [vmem:[%s1093 + $0x78] sm:$0x1]
      %v5431 = vld [vmem:[%s1093 + $0xa8] sm:$0xfe]
      %v5432 = vld [vmem:[%s1093 + $0xc0] sm:$0x1]
      %v5433 = vld [vmem:[%s1093 + $0xf0] sm:$0xfe]
      %v5434 = vld [vmem:[%s1093 + $0x108] sm:$0x1]
      %v5435 = vld [vmem:[%s1093 + $0x138] sm:$0xfe]
      %v5436 = vld [vmem:[%s1093 + $0x150] sm:$0x1]
      %v5437 = vld [vmem:[%s1093 + $0x180] sm:$0xfe]
      %v5438 = vld [vmem:[%s1093 + $0x198] sm:$0x1]
      %v5439 = vld [vmem:[%s1093 + $0x1c8] sm:$0xfe]
      %v5440 = vld [vmem:[%s1093 + $0x1e0] sm:$0x1]
      %v5441 = vld [vmem:[%s1093 + $0x210] sm:$0xfe]
      %v5442 = vld [vmem:[%s1093 + $0x228] sm:$0x1]
      %v5443 = vld [vmem:[%s1358] sm:$0x80]
      %v5444 = vld [vmem:[%s1358 + $0x18] sm:$0x7f]
      %v5445 = vld [vmem:[%s1358 + $0x48] sm:$0x80]
      %v5446 = vld [vmem:[%s1358 + $0x60] sm:$0x7f]
      %v5447 = vld [vmem:[%s1358 + $0x90] sm:$0x80]
      %v5448 = vld [vmem:[%s1358 + $0xa8] sm:$0x7f]
      %v5449 = vld [vmem:[%s1358 + $0xd8] sm:$0x80]
      %v5450 = vld [vmem:[%s1358 + $0xf0] sm:$0x7f]
      %v5451 = vld [vmem:[%s1358 + $0x120] sm:$0x80]
      %v5452 = vld [vmem:[%s1358 + $0x138] sm:$0x7f]
      %v5453 = vld [vmem:[%s1358 + $0x168] sm:$0x80]
      %v5454 = vld [vmem:[%s1358 + $0x180] sm:$0x7f]
      %v5455 = vld [vmem:[%s1358 + $0x1b0] sm:$0x80]
      %v5456 = vld [vmem:[%s1358 + $0x1c8] sm:$0x7f]
      %v5457 = vld [vmem:[%s1358 + $0x1f8] sm:$0x80]
      %v5458 = vld [vmem:[%s1358 + $0x210] sm:$0x7f]
      %v5459 = vld [vmem:[%s1358 + $0x18] sm:$0xff]
      %v5460 = vld [vmem:[%s1358 + $0x60] sm:$0xff]
      %v5461 = vld [vmem:[%s1358 + $0xa8] sm:$0xff]
      %v5462 = vld [vmem:[%s1358 + $0xf0] sm:$0xff]
      %v5463 = vld [vmem:[%s1358 + $0x138] sm:$0xff]
      %v5464 = vld [vmem:[%s1358 + $0x180] sm:$0xff]
      %v5465 = vld [vmem:[%s1358 + $0x1c8] sm:$0xff]
      %v5466 = vld [vmem:[%s1358 + $0x210] sm:$0xff]
      %v5467 = vld [vmem:[%s1358 + $0x18] sm:$0xfe]
      %v5468 = vld [vmem:[%s1358 + $0x30] sm:$0x1]
      %v5469 = vld [vmem:[%s1358 + $0x60] sm:$0xfe]
      %v5470 = vld [vmem:[%s1358 + $0x78] sm:$0x1]
      %v5471 = vld [vmem:[%s1358 + $0xa8] sm:$0xfe]
      %v5472 = vld [vmem:[%s1358 + $0xc0] sm:$0x1]
      %v5473 = vld [vmem:[%s1358 + $0xf0] sm:$0xfe]
      %v5474 = vld [vmem:[%s1358 + $0x108] sm:$0x1]
      %v5475 = vld [vmem:[%s1358 + $0x138] sm:$0xfe]
      %v5476 = vld [vmem:[%s1358 + $0x150] sm:$0x1]
      %v5477 = vld [vmem:[%s1358 + $0x180] sm:$0xfe]
      %v5478 = vld [vmem:[%s1358 + $0x198] sm:$0x1]
      %v5479 = vld [vmem:[%s1358 + $0x1c8] sm:$0xfe]
      %v5480 = vld [vmem:[%s1358 + $0x1e0] sm:$0x1]
      %v5481 = vld [vmem:[%s1358 + $0x210] sm:$0xfe]
      %v5482 = vld [vmem:[%s1358 + $0x228] sm:$0x1]
      %v5491 = vrot.slane %v5379, 1
      %v5492 = vrot.slane %v5380, 1
      %v5493 = vrot.slane %v5381, 1
      %v5494 = vrot.slane %v5382, 1
      %v5495 = vrot.slane %v5383, 1
      %v5496 = vrot.slane %v5384, 1
      %v5497 = vrot.slane %v5385, 1
      %v5498 = vrot.slane %v5386, 1
      %5499 = vrot.lane.b32.xlu0 %v5491, 32
      %v5500 = vpop.permute.xlu0 %5499
      %5501 = vrot.lane.b32.xlu0 %v5492, 32
      %v5502 = vpop.permute.xlu0 %5501
      %5503 = vrot.lane.b32.xlu0 %v5493, 32
      %v5504 = vpop.permute.xlu0 %5503
      %5505 = vrot.lane.b32.xlu0 %v5494, 32
      %v5506 = vpop.permute.xlu0 %5505
      %5507 = vrot.lane.b32.xlu0 %v5495, 32
      %v5508 = vpop.permute.xlu0 %5507
      %5509 = vrot.lane.b32.xlu0 %v5496, 32
      %v5510 = vpop.permute.xlu0 %5509
      %5511 = vrot.lane.b32.xlu0 %v5497, 32
      %v5512 = vpop.permute.xlu0 %5511
      %5513 = vrot.lane.b32.xlu0 %v5498, 32
      %v5514 = vpop.permute.xlu0 %5513
      %v5539 = vrot.slane %v5387, 2
      %v5540 = vrot.slane %v5388, 2
      %v5541 = vsel %vm1655, %v5539, %v5540
      %v5542 = vrot.slane %v5389, 2
      %v5543 = vrot.slane %v5390, 2
      %v5544 = vsel %vm1655, %v5542, %v5543
      %v5545 = vrot.slane %v5391, 2
      %v5546 = vrot.slane %v5392, 2
      %v5547 = vsel %vm1655, %v5545, %v5546
      %v5548 = vrot.slane %v5393, 2
      %v5549 = vrot.slane %v5394, 2
      %v5550 = vsel %vm1655, %v5548, %v5549
      %v5551 = vrot.slane %v5395, 2
      %v5552 = vrot.slane %v5396, 2
      %v5553 = vsel %vm1655, %v5551, %v5552
      %v5554 = vrot.slane %v5397, 2
      %v5555 = vrot.slane %v5398, 2
      %v5556 = vsel %vm1655, %v5554, %v5555
      %v5557 = vrot.slane %v5399, 2
      %v5558 = vrot.slane %v5400, 2
      %v5559 = vsel %vm1655, %v5557, %v5558
      %v5560 = vrot.slane %v5401, 2
      %v5561 = vrot.slane %v5402, 2
      %v5562 = vsel %vm1655, %v5560, %v5561
      %5563 = vrot.lane.b32.xlu0 %v5539, 64
      %v5564 = vpop.permute.xlu0 %5563
      %5565 = vrot.lane.b32.xlu0 %v5541, 64
      %v5566 = vpop.permute.xlu0 %5565
      %5567 = vrot.lane.b32.xlu0 %v5542, 64
      %v5568 = vpop.permute.xlu0 %5567
      %5569 = vrot.lane.b32.xlu0 %v5544, 64
      %v5570 = vpop.permute.xlu0 %5569
      %5571 = vrot.lane.b32.xlu0 %v5545, 64
      %v5572 = vpop.permute.xlu0 %5571
      %5573 = vrot.lane.b32.xlu0 %v5547, 64
      %v5574 = vpop.permute.xlu0 %5573
      %5575 = vrot.lane.b32.xlu0 %v5548, 64
      %v5576 = vpop.permute.xlu0 %5575
      %5577 = vrot.lane.b32.xlu0 %v5550, 64
      %v5578 = vpop.permute.xlu0 %5577
      %5579 = vrot.lane.b32.xlu0 %v5551, 64
      %v5580 = vpop.permute.xlu0 %5579
      %5581 = vrot.lane.b32.xlu0 %v5553, 64
      %v5582 = vpop.permute.xlu0 %5581
      %5583 = vrot.lane.b32.xlu0 %v5554, 64
      %v5584 = vpop.permute.xlu0 %5583
      %5585 = vrot.lane.b32.xlu0 %v5556, 64
      %v5586 = vpop.permute.xlu0 %5585
      %5587 = vrot.lane.b32.xlu0 %v5557, 64
      %v5588 = vpop.permute.xlu0 %5587
      %5589 = vrot.lane.b32.xlu0 %v5559, 64
      %v5590 = vpop.permute.xlu0 %5589
      %5591 = vrot.lane.b32.xlu0 %v5560, 64
      %v5592 = vpop.permute.xlu0 %5591
      %5593 = vrot.lane.b32.xlu0 %v5562, 64
      %v5594 = vpop.permute.xlu0 %5593
      %5627 = vrot.lane.b32.xlu0 %v5403, 96
      %v5628 = vpop.permute.xlu0 %5627
      %5629 = vrot.lane.b32.xlu0 %v5404, 96
      %v5630 = vpop.permute.xlu0 %5629
      %5631 = vrot.lane.b32.xlu0 %v5405, 96
      %v5632 = vpop.permute.xlu0 %5631
      %5633 = vrot.lane.b32.xlu0 %v5406, 96
      %v5634 = vpop.permute.xlu0 %5633
      %5635 = vrot.lane.b32.xlu0 %v5407, 96
      %v5636 = vpop.permute.xlu0 %5635
      %5637 = vrot.lane.b32.xlu0 %v5408, 96
      %v5638 = vpop.permute.xlu0 %5637
      %5639 = vrot.lane.b32.xlu0 %v5409, 96
      %v5640 = vpop.permute.xlu0 %5639
      %5641 = vrot.lane.b32.xlu0 %v5410, 96
      %v5642 = vpop.permute.xlu0 %5641
      %5643 = vrot.lane.b32.xlu0 %v5411, 96
      %v5644 = vpop.permute.xlu0 %5643
      %5645 = vrot.lane.b32.xlu0 %v5412, 96
      %v5646 = vpop.permute.xlu0 %5645
      %5647 = vrot.lane.b32.xlu0 %v5413, 96
      %v5648 = vpop.permute.xlu0 %5647
      %5649 = vrot.lane.b32.xlu0 %v5414, 96
      %v5650 = vpop.permute.xlu0 %5649
      %5651 = vrot.lane.b32.xlu0 %v5415, 96
      %v5652 = vpop.permute.xlu0 %5651
      %5653 = vrot.lane.b32.xlu0 %v5416, 96
      %v5654 = vpop.permute.xlu0 %5653
      %5655 = vrot.lane.b32.xlu0 %v5417, 96
      %v5656 = vpop.permute.xlu0 %5655
      %5657 = vrot.lane.b32.xlu0 %v5418, 96
      %v5658 = vpop.permute.xlu0 %5657
      %v5683 = vrot.slane %v5419, 1
      %v5684 = vrot.slane %v5420, 1
      %v5685 = vrot.slane %v5421, 1
      %v5686 = vrot.slane %v5422, 1
      %v5687 = vrot.slane %v5423, 1
      %v5688 = vrot.slane %v5424, 1
      %v5689 = vrot.slane %v5425, 1
      %v5690 = vrot.slane %v5426, 1
      %v5715 = vrot.slane %v5427, 2
      %v5716 = vrot.slane %v5428, 2
      %v5717 = vsel %vm1655, %v5715, %v5716
      %v5718 = vrot.slane %v5429, 2
      %v5719 = vrot.slane %v5430, 2
      %v5720 = vsel %vm1655, %v5718, %v5719
      %v5721 = vrot.slane %v5431, 2
      %v5722 = vrot.slane %v5432, 2
      %v5723 = vsel %vm1655, %v5721, %v5722
      %v5724 = vrot.slane %v5433, 2
      %v5725 = vrot.slane %v5434, 2
      %v5726 = vsel %vm1655, %v5724, %v5725
      %v5727 = vrot.slane %v5435, 2
      %v5728 = vrot.slane %v5436, 2
      %v5729 = vsel %vm1655, %v5727, %v5728
      %v5730 = vrot.slane %v5437, 2
      %v5731 = vrot.slane %v5438, 2
      %v5732 = vsel %vm1655, %v5730, %v5731
      %v5733 = vrot.slane %v5439, 2
      %v5734 = vrot.slane %v5440, 2
      %v5735 = vsel %vm1655, %v5733, %v5734
      %v5736 = vrot.slane %v5441, 2
      %v5737 = vrot.slane %v5442, 2
      %v5738 = vsel %vm1655, %v5736, %v5737
      %5739 = vrot.lane.b32.xlu0 %v5715, 32
      %v5740 = vpop.permute.xlu0 %5739
      %5741 = vrot.lane.b32.xlu0 %v5717, 32
      %v5742 = vpop.permute.xlu0 %5741
      %5743 = vrot.lane.b32.xlu0 %v5718, 32
      %v5744 = vpop.permute.xlu0 %5743
      %5745 = vrot.lane.b32.xlu0 %v5720, 32
      %v5746 = vpop.permute.xlu0 %5745
      %5747 = vrot.lane.b32.xlu0 %v5721, 32
      %v5748 = vpop.permute.xlu0 %5747
      %5749 = vrot.lane.b32.xlu0 %v5723, 32
      %v5750 = vpop.permute.xlu0 %5749
      %5751 = vrot.lane.b32.xlu0 %v5724, 32
      %v5752 = vpop.permute.xlu0 %5751
      %5753 = vrot.lane.b32.xlu0 %v5726, 32
      %v5754 = vpop.permute.xlu0 %5753
      %5755 = vrot.lane.b32.xlu0 %v5727, 32
      %v5756 = vpop.permute.xlu0 %5755
      %5757 = vrot.lane.b32.xlu0 %v5729, 32
      %v5758 = vpop.permute.xlu0 %5757
      %5759 = vrot.lane.b32.xlu0 %v5730, 32
      %v5760 = vpop.permute.xlu0 %5759
      %5761 = vrot.lane.b32.xlu0 %v5732, 32
      %v5762 = vpop.permute.xlu0 %5761
      %5763 = vrot.lane.b32.xlu0 %v5733, 32
      %v5764 = vpop.permute.xlu0 %5763
      %5765 = vrot.lane.b32.xlu0 %v5735, 32
      %v5766 = vpop.permute.xlu0 %5765
      %5767 = vrot.lane.b32.xlu0 %v5736, 32
      %v5768 = vpop.permute.xlu0 %5767
      %5769 = vrot.lane.b32.xlu0 %v5738, 32
      %v5770 = vpop.permute.xlu0 %5769
      %5803 = vrot.lane.b32.xlu0 %v5443, 64
      %v5804 = vpop.permute.xlu0 %5803
      %5805 = vrot.lane.b32.xlu0 %v5444, 64
      %v5806 = vpop.permute.xlu0 %5805
      %5807 = vrot.lane.b32.xlu0 %v5445, 64
      %v5808 = vpop.permute.xlu0 %5807
      %5809 = vrot.lane.b32.xlu0 %v5446, 64
      %v5810 = vpop.permute.xlu0 %5809
      %5811 = vrot.lane.b32.xlu0 %v5447, 64
      %v5812 = vpop.permute.xlu0 %5811
      %5813 = vrot.lane.b32.xlu0 %v5448, 64
      %v5814 = vpop.permute.xlu0 %5813
      %5815 = vrot.lane.b32.xlu0 %v5449, 64
      %v5816 = vpop.permute.xlu0 %5815
      %5817 = vrot.lane.b32.xlu0 %v5450, 64
      %v5818 = vpop.permute.xlu0 %5817
      %5819 = vrot.lane.b32.xlu0 %v5451, 64
      %v5820 = vpop.permute.xlu0 %5819
      %5821 = vrot.lane.b32.xlu0 %v5452, 64
      %v5822 = vpop.permute.xlu0 %5821
      %5823 = vrot.lane.b32.xlu0 %v5453, 64
      %v5824 = vpop.permute.xlu0 %5823
      %5825 = vrot.lane.b32.xlu0 %v5454, 64
      %v5826 = vpop.permute.xlu0 %5825
      %5827 = vrot.lane.b32.xlu0 %v5455, 64
      %v5828 = vpop.permute.xlu0 %5827
      %5829 = vrot.lane.b32.xlu0 %v5456, 64
      %v5830 = vpop.permute.xlu0 %5829
      %5831 = vrot.lane.b32.xlu0 %v5457, 64
      %v5832 = vpop.permute.xlu0 %5831
      %5833 = vrot.lane.b32.xlu0 %v5458, 64
      %v5834 = vpop.permute.xlu0 %5833
      %v5859 = vrot.slane %v5459, 1
      %v5860 = vrot.slane %v5460, 1
      %v5861 = vrot.slane %v5461, 1
      %v5862 = vrot.slane %v5462, 1
      %v5863 = vrot.slane %v5463, 1
      %v5864 = vrot.slane %v5464, 1
      %v5865 = vrot.slane %v5465, 1
      %v5866 = vrot.slane %v5466, 1
      %5867 = vrot.lane.b32.xlu0 %v5859, 96
      %v5868 = vpop.permute.xlu0 %5867
      %5869 = vrot.lane.b32.xlu0 %v5860, 96
      %v5870 = vpop.permute.xlu0 %5869
      %5871 = vrot.lane.b32.xlu0 %v5861, 96
      %v5872 = vpop.permute.xlu0 %5871
      %5873 = vrot.lane.b32.xlu0 %v5862, 96
      %v5874 = vpop.permute.xlu0 %5873
      %5875 = vrot.lane.b32.xlu0 %v5863, 96
      %v5876 = vpop.permute.xlu0 %5875
      %5877 = vrot.lane.b32.xlu0 %v5864, 96
      %v5878 = vpop.permute.xlu0 %5877
      %5879 = vrot.lane.b32.xlu0 %v5865, 96
      %v5880 = vpop.permute.xlu0 %5879
      %5881 = vrot.lane.b32.xlu0 %v5866, 96
      %v5882 = vpop.permute.xlu0 %5881
      %v5907 = vrot.slane %v5467, 2
      %v5908 = vrot.slane %v5468, 2
      %v5909 = vsel %vm1655, %v5907, %v5908
      %v5910 = vrot.slane %v5469, 2
      %v5911 = vrot.slane %v5470, 2
      %v5912 = vsel %vm1655, %v5910, %v5911
      %v5913 = vrot.slane %v5471, 2
      %v5914 = vrot.slane %v5472, 2
      %v5915 = vsel %vm1655, %v5913, %v5914
      %v5916 = vrot.slane %v5473, 2
      %v5917 = vrot.slane %v5474, 2
      %v5918 = vsel %vm1655, %v5916, %v5917
      %v5919 = vrot.slane %v5475, 2
      %v5920 = vrot.slane %v5476, 2
      %v5921 = vsel %vm1655, %v5919, %v5920
      %v5922 = vrot.slane %v5477, 2
      %v5923 = vrot.slane %v5478, 2
      %v5924 = vsel %vm1655, %v5922, %v5923
      %v5925 = vrot.slane %v5479, 2
      %v5926 = vrot.slane %v5480, 2
      %v5927 = vsel %vm1655, %v5925, %v5926
      %v5928 = vrot.slane %v5481, 2
      %v5929 = vrot.slane %v5482, 2
      %v5930 = vsel %vm1655, %v5928, %v5929
      %v5931 = vsel %vm2194, %v5363, %v5500
      %v5932 = vsel %vm2194, %v5364, %v5500
      %v5933 = vsel %vm2194, %v5365, %v5502
      %v5934 = vsel %vm2194, %v5366, %v5502
      %v5935 = vsel %vm2194, %v5367, %v5504
      %v5936 = vsel %vm2194, %v5368, %v5504
      %v5937 = vsel %vm2194, %v5369, %v5506
      %v5938 = vsel %vm2194, %v5370, %v5506
      %v5939 = vsel %vm2194, %v5371, %v5508
      %v5940 = vsel %vm2194, %v5372, %v5508
      %v5941 = vsel %vm2194, %v5373, %v5510
      %v5942 = vsel %vm2194, %v5374, %v5510
      %v5943 = vsel %vm2194, %v5375, %v5512
      %v5944 = vsel %vm2194, %v5376, %v5512
      %v5945 = vsel %vm2194, %v5377, %v5514
      %v5946 = vsel %vm2194, %v5378, %v5514
      %v5947 = vsel %vm3062, %v5931, %v5564
      %v5948 = vsel %vm3062, %v5932, %v5566
      %v5949 = vsel %vm3062, %v5933, %v5568
      %v5950 = vsel %vm3062, %v5934, %v5570
      %v5951 = vsel %vm3062, %v5935, %v5572
      %v5952 = vsel %vm3062, %v5936, %v5574
      %v5953 = vsel %vm3062, %v5937, %v5576
      %v5954 = vsel %vm3062, %v5938, %v5578
      %v5955 = vsel %vm3062, %v5939, %v5580
      %v5956 = vsel %vm3062, %v5940, %v5582
      %v5957 = vsel %vm3062, %v5941, %v5584
      %v5958 = vsel %vm3062, %v5942, %v5586
      %v5959 = vsel %vm3062, %v5943, %v5588
      %v5960 = vsel %vm3062, %v5944, %v5590
      %v5961 = vsel %vm3062, %v5945, %v5592
      %v5962 = vsel %vm3062, %v5946, %v5594
      %vm5963 = vcmask 785408
      %v5964 = vsel %vm5963, %v5947, %v5628
      %v5965 = vsel %vm5963, %v5948, %v5630
      %v5966 = vsel %vm5963, %v5949, %v5632
      %v5967 = vsel %vm5963, %v5950, %v5634
      %v5968 = vsel %vm5963, %v5951, %v5636
      %v5969 = vsel %vm5963, %v5952, %v5638
      %v5970 = vsel %vm5963, %v5953, %v5640
      %v5971 = vsel %vm5963, %v5954, %v5642
      %v5972 = vsel %vm5963, %v5955, %v5644
      %v5973 = vsel %vm5963, %v5956, %v5646
      %v5974 = vsel %vm5963, %v5957, %v5648
      %v5975 = vsel %vm5963, %v5958, %v5650
      %v5976 = vsel %vm5963, %v5959, %v5652
      %v5977 = vsel %vm5963, %v5960, %v5654
      %v5978 = vsel %vm5963, %v5961, %v5656
      %v5979 = vsel %vm5963, %v5962, %v5658
      %v5980 = vsel %vm2194, %v5683, %v5740
      %v5981 = vsel %vm2194, %v5683, %v5742
      %v5982 = vsel %vm2194, %v5684, %v5744
      %v5983 = vsel %vm2194, %v5684, %v5746
      %v5984 = vsel %vm2194, %v5685, %v5748
      %v5985 = vsel %vm2194, %v5685, %v5750
      %v5986 = vsel %vm2194, %v5686, %v5752
      %v5987 = vsel %vm2194, %v5686, %v5754
      %v5988 = vsel %vm2194, %v5687, %v5756
      %v5989 = vsel %vm2194, %v5687, %v5758
      %v5990 = vsel %vm2194, %v5688, %v5760
      %v5991 = vsel %vm2194, %v5688, %v5762
      %v5992 = vsel %vm2194, %v5689, %v5764
      %v5993 = vsel %vm2194, %v5689, %v5766
      %v5994 = vsel %vm2194, %v5690, %v5768
      %v5995 = vsel %vm2194, %v5690, %v5770
      %v5996 = vsel %vm3062, %v5980, %v5804
      %v5997 = vsel %vm3062, %v5981, %v5806
      %v5998 = vsel %vm3062, %v5982, %v5808
      %v5999 = vsel %vm3062, %v5983, %v5810
      %v6000 = vsel %vm3062, %v5984, %v5812
      %v6001 = vsel %vm3062, %v5985, %v5814
      %v6002 = vsel %vm3062, %v5986, %v5816
      %v6003 = vsel %vm3062, %v5987, %v5818
      %v6004 = vsel %vm3062, %v5988, %v5820
      %v6005 = vsel %vm3062, %v5989, %v5822
      %v6006 = vsel %vm3062, %v5990, %v5824
      %v6007 = vsel %vm3062, %v5991, %v5826
      %v6008 = vsel %vm3062, %v5992, %v5828
      %v6009 = vsel %vm3062, %v5993, %v5830
      %v6010 = vsel %vm3062, %v5994, %v5832
      %v6011 = vsel %vm3062, %v5995, %v5834
      %v6012 = vsel %vm5963, %v5996, %v5868
      %v6013 = vsel %vm5963, %v5997, %v5868
      %v6014 = vsel %vm5963, %v5998, %v5870
      %v6015 = vsel %vm5963, %v5999, %v5870
      %v6016 = vsel %vm5963, %v6000, %v5872
      %v6017 = vsel %vm5963, %v6001, %v5872
      %v6018 = vsel %vm5963, %v6002, %v5874
      %v6019 = vsel %vm5963, %v6003, %v5874
      %v6020 = vsel %vm5963, %v6004, %v5876
      %v6021 = vsel %vm5963, %v6005, %v5876
      %v6022 = vsel %vm5963, %v6006, %v5878
      %v6023 = vsel %vm5963, %v6007, %v5878
      %v6024 = vsel %vm5963, %v6008, %v5880
      %v6025 = vsel %vm5963, %v6009, %v5880
      %v6026 = vsel %vm5963, %v6010, %v5882
      %v6027 = vsel %vm5963, %v6011, %v5882
      %v6060 = vrot.slane %v5964, 7
      %v6061 = vrot.slane %v5965, 7
      %v6062 = vsel %vm3399, %v6060, %v6061
      %v6063 = vrot.slane %v6012, 7
      %v6064 = vrot.slane %v6013, 7
      %v6065 = vsel %vm3399, %v6063, %v6064
      %v6066 = vrot.slane %v5907, 7
      %v6067 = vrot.slane %v5909, 7
      %v6068 = vsel %vm3399, %v6066, %v6067
      %v6069 = vrot.slane %v5966, 7
      %v6070 = vrot.slane %v5967, 7
      %v6071 = vsel %vm3399, %v6069, %v6070
      %v6072 = vrot.slane %v6014, 7
      %v6073 = vrot.slane %v6015, 7
      %v6074 = vsel %vm3399, %v6072, %v6073
      %v6075 = vrot.slane %v5910, 7
      %v6076 = vrot.slane %v5912, 7
      %v6077 = vsel %vm3399, %v6075, %v6076
      %v6078 = vrot.slane %v5968, 7
      %v6079 = vrot.slane %v5969, 7
      %v6080 = vsel %vm3399, %v6078, %v6079
      %v6081 = vrot.slane %v6016, 7
      %v6082 = vrot.slane %v6017, 7
      %v6083 = vsel %vm3399, %v6081, %v6082
      %v6084 = vrot.slane %v5913, 7
      %v6085 = vrot.slane %v5915, 7
      %v6086 = vsel %vm3399, %v6084, %v6085
      %v6087 = vrot.slane %v5970, 7
      %v6088 = vrot.slane %v5971, 7
      %v6089 = vsel %vm3399, %v6087, %v6088
      %v6090 = vrot.slane %v6018, 7
      %v6091 = vrot.slane %v6019, 7
      %v6092 = vsel %vm3399, %v6090, %v6091
      %v6093 = vrot.slane %v5916, 7
      %v6094 = vrot.slane %v5918, 7
      %v6095 = vsel %vm3399, %v6093, %v6094
      %v6096 = vrot.slane %v5972, 7
      %v6097 = vrot.slane %v5973, 7
      %v6098 = vsel %vm3399, %v6096, %v6097
      %v6099 = vrot.slane %v6020, 7
      %v6100 = vrot.slane %v6021, 7
      %v6101 = vsel %vm3399, %v6099, %v6100
      %v6102 = vrot.slane %v5919, 7
      %v6103 = vrot.slane %v5921, 7
      %v6104 = vsel %vm3399, %v6102, %v6103
      %v6105 = vrot.slane %v5974, 7
      %v6106 = vrot.slane %v5975, 7
      %v6107 = vsel %vm3399, %v6105, %v6106
      %v6108 = vrot.slane %v6022, 7
      %v6109 = vrot.slane %v6023, 7
      %v6110 = vsel %vm3399, %v6108, %v6109
      %v6111 = vrot.slane %v5922, 7
      %v6112 = vrot.slane %v5924, 7
      %v6113 = vsel %vm3399, %v6111, %v6112
      %v6114 = vrot.slane %v5976, 7
      %v6115 = vrot.slane %v5977, 7
      %v6116 = vsel %vm3399, %v6114, %v6115
      %v6117 = vrot.slane %v6024, 7
      %v6118 = vrot.slane %v6025, 7
      %v6119 = vsel %vm3399, %v6117, %v6118
      %v6120 = vrot.slane %v5925, 7
      %v6121 = vrot.slane %v5927, 7
      %v6122 = vsel %vm3399, %v6120, %v6121
      %v6123 = vrot.slane %v5978, 7
      %v6124 = vrot.slane %v5979, 7
      %v6125 = vsel %vm3399, %v6123, %v6124
      %v6126 = vrot.slane %v6026, 7
      %v6127 = vrot.slane %v6027, 7
      %v6128 = vsel %vm3399, %v6126, %v6127
      %v6129 = vrot.slane %v5928, 7
      %v6130 = vrot.slane %v5930, 7
      %v6131 = vsel %vm3399, %v6129, %v6130
      %v6148 = vld [vmem:[%s5] sm:$0xff]
      %v6149 = vld [vmem:[%s5 + $0x8] sm:$0xff]
      %v6150 = vld [vmem:[%s5 + $0x10] sm:$0xff]
      %v6151 = vld [vmem:[%s5 + $0x18] sm:$0xff]
      %v6152 = vld [vmem:[%s5 + $0x20] sm:$0xff]
      %v6153 = vld [vmem:[%s5 + $0x28] sm:$0xff]
      %v6154 = vld [vmem:[%s5 + $0x30] sm:$0xff]
      %v6155 = vld [vmem:[%s5 + $0x38] sm:$0xff]
      %v6156 = vld [vmem:[%s5 + $0x40] sm:$0xff]
      %v6157 = vld [vmem:[%s5 + $0x48] sm:$0xff]
      %v6158 = vld [vmem:[%s5 + $0x50] sm:$0xff]
      %v6159 = vld [vmem:[%s5 + $0x58] sm:$0xff]
      %v6160 = vld [vmem:[%s5 + $0x60] sm:$0xff]
      %v6161 = vld [vmem:[%s5 + $0x68] sm:$0xff]
      %v6162 = vld [vmem:[%s5 + $0x70] sm:$0xff]
      %v6163 = vld [vmem:[%s5 + $0x78] sm:$0xff]
      %v6164 = vld [vmem:[%s5 + $0x80] sm:$0xff]
      %v6165 = vld [vmem:[%s5 + $0x88] sm:$0xff]
      %v6166 = vld [vmem:[%s5 + $0x90] sm:$0xff]
      %v6167 = vld [vmem:[%s5 + $0x98] sm:$0xff]
      %v6168 = vld [vmem:[%s5 + $0xa0] sm:$0xff]
      %v6169 = vld [vmem:[%s5 + $0xa8] sm:$0xff]
      %v6170 = vld [vmem:[%s5 + $0xb0] sm:$0xff]
      %v6171 = vld [vmem:[%s5 + $0xb8] sm:$0xff]
      %v6172 = vld [vmem:[%s5 + $0xc0] sm:$0xff]
      %v6173 = vld [vmem:[%s5 + $0xc8] sm:$0xff]
      %v6174 = vld [vmem:[%s5 + $0xd0] sm:$0xff]
      %v6175 = vld [vmem:[%s5 + $0xd8] sm:$0xff]
      %v6176 = vld [vmem:[%s5 + $0xe0] sm:$0xff]
      %v6177 = vld [vmem:[%s5 + $0xe8] sm:$0xff]
      %v6178 = vld [vmem:[%s5 + $0xf0] sm:$0xff]
      %v6179 = vld [vmem:[%s5 + $0xf8] sm:$0xff]
      %v6180 = vld [vmem:[%s5 + $0x100] sm:$0xff]
      %v6181 = vld [vmem:[%s5 + $0x108] sm:$0xff]
      %v6182 = vld [vmem:[%s5 + $0x110] sm:$0xff]
      %v6183 = vld [vmem:[%s5 + $0x118] sm:$0xff]
      %v6184 = vld [vmem:[%s6] sm:$0x1]
      %v6186 = vlaneseq
      %v6187 = vshrl.u32 %v6186, 7
      %v6188 = vsub.s32 0, %v6187
      %v6189 = vrot.slane %v6184, %v6188
      %v6191 = vsel %vm2194, %v6068, 0
      %v6193 = vsel %vm2194, %v6077, 0
      %v6195 = vsel %vm2194, %v6086, 0
      %v6197 = vsel %vm2194, %v6095, 0
      %v6199 = vsel %vm2194, %v6104, 0
      %v6201 = vsel %vm2194, %v6113, 0
      %v6203 = vsel %vm2194, %v6122, 0
      %v6205 = vsel %vm2194, %v6131, 0
      %6207 = vmatprep.subr.mxu0 0.0
      %6208 = vmatpush1.msra.mxu0 %v6148
      %6209 = vmatprep.subr.mxu0 0.0
      %6210 = vmatpush1.msra.mxu0 %v6149
      %6211 = vmatprep.subr.mxu0 0.0
      %6212 = vmatpush1.msra.mxu0 %v6150
      %6213 = vmatprep.subr.mxu0 0.0
      %6214 = vmatpush1.msra.mxu0 %v6151
      %6215 = vmatprep.subr.mxu0 0.0
      %6216 = vmatpush1.msra.mxu0 %v6152
      %6217 = vmatprep.subr.mxu0 0.0
      %6218 = vmatpush1.msra.mxu0 %v6153
      %6219 = vmatprep.subr.mxu0 0.0
      %6220 = vmatpush1.msra.mxu0 %v6154
      %6221 = vmatprep.subr.mxu0 0.0
      %6222 = vmatpush1.msra.mxu0 %v6155
      %6223 = vmatprep.subr.mxu0 0.0
      %6224 = vmatpush1.msra.mxu0 %v6156
      %6225 = vmatprep.subr.mxu0 0.0
      %6226 = vmatpush1.msra.mxu0 %v6157
      %6227 = vmatprep.subr.mxu0 0.0
      %6228 = vmatpush1.msra.mxu0 %v6158
      %6229 = vmatprep.subr.mxu0 0.0
      %6230 = vmatpush1.msra.mxu0 %v6159
      %6231 = vmatprep.subr.mxu0 0.0
      %6232 = vmatpush1.msra.mxu0 %v6160
      %6233 = vmatprep.subr.mxu0 0.0
      %6234 = vmatpush1.msra.mxu0 %v6161
      %6235 = vmatprep.subr.mxu0 0.0
      %6236 = vmatpush1.msra.mxu0 %v6162
      %6237 = vmatprep.subr.mxu0 0.0
      %6238 = vmatpush1.msra.mxu0 %v6163
      %6239 = vmatprep.subr.mxu0 0.0
      %6240 = vmatpush1.msra.mxu0 %v6164
      %6241 = vmatprep.subr.mxu0 0.0
      %6242 = vmatpush1.msra.mxu0 %v6165
      %6243 = vmatprep.subr.mxu0 0.0
      %6244 = vmatpush1.msra.mxu0 %v6166
      %6245 = vmatprep.subr.mxu0 0.0
      %6246 = vmatpush1.msra.mxu0 %v6167
      %6247 = vmatprep.subr.mxu0 0.0
      %6248 = vmatpush1.msra.mxu0 %v6168
      %6249 = vmatprep.subr.mxu0 0.0
      %6250 = vmatpush1.msra.mxu0 %v6169
      %6251 = vmatprep.subr.mxu0 0.0
      %6252 = vmatpush1.msra.mxu0 %v6170
      %6253 = vmatprep.subr.mxu0 0.0
      %6254 = vmatpush1.msra.mxu0 %v6171
      %6255 = vmatprep.subr.mxu0 0.0
      %6256 = vmatpush1.msra.mxu0 %v6172
      %6257 = vmatprep.subr.mxu0 0.0
      %6258 = vmatpush1.msra.mxu0 %v6173
      %6259 = vmatprep.subr.mxu0 0.0
      %6260 = vmatpush1.msra.mxu0 %v6174
      %6261 = vmatprep.subr.mxu0 0.0
      %6262 = vmatpush1.msra.mxu0 %v6175
      %6263 = vmatprep.subr.mxu0 0.0
      %6264 = vmatpush1.msra.mxu0 %v6176
      %6265 = vmatprep.subr.mxu0 0.0
      %6266 = vmatpush1.msra.mxu0 %v6177
      %6267 = vmatprep.subr.mxu0 0.0
      %6268 = vmatpush1.msra.mxu0 %v6178
      %6269 = vmatprep.subr.mxu0 0.0
      %6270 = vmatpush1.msra.mxu0 %v6179
      %6271 = vmatprep.mubr.f32.mxu0 %v6065
      %6272 = vmatmul.mubr.f32.gmra.mrb[0].mxu0 %v6062
      %v6273 = vpop.f32.mrb[0].mxu0
      %v6274 = vadd.f32 %v6189, %v6273
      %v6275 = vpop.f32.mrb[0].mxu0
      %6276 = vmatprep.mubr.f32.mxu0 %v6074
      %6277 = vmatmul.mubr.f32.gmra.mrb[0].mxu0 %v6071
      %v6278 = vpop.f32.mrb[0].mxu0
      %v6279 = vadd.f32 %v6189, %v6278
      %v6280 = vpop.f32.mrb[0].mxu0
      %6281 = vmatprep.mubr.f32.mxu0 %v6083
      %6282 = vmatmul.mubr.f32.gmra.mrb[0].mxu0 %v6080
      %v6283 = vpop.f32.mrb[0].mxu0
      %v6284 = vadd.f32 %v6189, %v6283
      %v6285 = vpop.f32.mrb[0].mxu0
      %6286 = vmatprep.mubr.f32.mxu0 %v6092
      %6287 = vmatmul.mubr.f32.gmra.mrb[0].mxu0 %v6089
      %v6288 = vpop.f32.mrb[0].mxu0
      %v6289 = vadd.f32 %v6189, %v6288
      %v6290 = vpop.f32.mrb[0].mxu0
      %6291 = vmatprep.mubr.f32.mxu0 %v6101
      %6292 = vmatmul.mubr.f32.gmra.mrb[0].mxu0 %v6098
      %v6293 = vpop.f32.mrb[0].mxu0
      %v6294 = vadd.f32 %v6189, %v6293
      %v6295 = vpop.f32.mrb[0].mxu0
      %6296 = vmatprep.mubr.f32.mxu0 %v6110
      %6297 = vmatmul.mubr.f32.gmra.mrb[0].mxu0 %v6107
      %v6298 = vpop.f32.mrb[0].mxu0
      %v6299 = vadd.f32 %v6189, %v6298
      %v6300 = vpop.f32.mrb[0].mxu0
      %6301 = vmatprep.mubr.f32.mxu0 %v6119
      %6302 = vmatmul.mubr.f32.gmra.mrb[0].mxu0 %v6116
      %v6303 = vpop.f32.mrb[0].mxu0
      %v6304 = vadd.f32 %v6189, %v6303
      %v6305 = vpop.f32.mrb[0].mxu0
      %6306 = vmatprep.mubr.f32.mxu0 %v6128
      %6307 = vmatmul.mubr.f32.gmra.mrb[0].mxu0 %v6125
      %v6308 = vpop.f32.mrb[0].mxu0
      %v6309 = vadd.f32 %v6189, %v6308
      %v6310 = vpop.f32.mrb[0].mxu0
      %6311 = vdwg.mxu0
      %6312 = vmatprep.subr.mxu0 0.0
      %6313 = vmatpush1.msra.mxu0 %v6180
      %6314 = vmatprep.subr.mxu0 0.0
      %6315 = vmatpush1.msra.mxu0 %v6181
      %6316 = vmatprep.subr.mxu0 0.0
      %6317 = vmatpush1.msra.mxu0 %v6182
      %6318 = vmatprep.subr.mxu0 0.0
      %6319 = vmatpush1.msra.mxu0 %v6183
      %6320 = vmatprep.subr.mxu0 0.0
      %6321 = vmatpush1.msra.mxu0 0.0
      %6322 = vmatprep.subr.mxu0 0.0
      %6323 = vmatpush1.msra.mxu0 0.0
      %6324 = vmatprep.subr.mxu0 0.0
      %6325 = vmatpush1.msra.mxu0 0.0
      %6326 = vmatprep.subr.mxu0 0.0
      %6327 = vmatpush1.msra.mxu0 0.0
      %6328 = vmatprep.subr.mxu0 0.0
      %6329 = vmatpush1.msra.mxu0 0.0
      %6330 = vmatprep.subr.mxu0 0.0
      %6331 = vmatpush1.msra.mxu0 0.0
      %6332 = vmatprep.subr.mxu0 0.0
      %6333 = vmatpush1.msra.mxu0 0.0
      %6334 = vmatprep.subr.mxu0 0.0
      %6335 = vmatpush1.msra.mxu0 0.0
      %6336 = vmatprep.subr.mxu0 0.0
      %6337 = vmatpush1.msra.mxu0 0.0
      %6338 = vmatprep.subr.mxu0 0.0
      %6339 = vmatpush1.msra.mxu0 0.0
      %6340 = vmatprep.subr.mxu0 0.0
      %6341 = vmatpush1.msra.mxu0 0.0
      %6342 = vmatprep.subr.mxu0 0.0
      %6343 = vmatpush1.msra.mxu0 0.0
      %6344 = vmatprep.subr.mxu0 0.0
      %6345 = vmatpush1.msra.mxu0 0.0
      %6346 = vmatprep.subr.mxu0 0.0
      %6347 = vmatpush1.msra.mxu0 0.0
      %6348 = vmatprep.subr.mxu0 0.0
      %6349 = vmatpush1.msra.mxu0 0.0
      %6350 = vmatprep.subr.mxu0 0.0
      %6351 = vmatpush1.msra.mxu0 0.0
      %6352 = vmatprep.subr.mxu0 0.0
      %6353 = vmatpush1.msra.mxu0 0.0
      %6354 = vmatprep.subr.mxu0 0.0
      %6355 = vmatpush1.msra.mxu0 0.0
      %6356 = vmatprep.subr.mxu0 0.0
      %6357 = vmatpush1.msra.mxu0 0.0
      %6358 = vmatprep.subr.mxu0 0.0
      %6359 = vmatpush1.msra.mxu0 0.0
      %6360 = vmatprep.subr.mxu0 0.0
      %6361 = vmatpush1.msra.mxu0 0.0
      %6362 = vmatprep.subr.mxu0 0.0
      %6363 = vmatpush1.msra.mxu0 0.0
      %6364 = vmatprep.subr.mxu0 0.0
      %6365 = vmatpush1.msra.mxu0 0.0
      %6366 = vmatprep.subr.mxu0 0.0
      %6367 = vmatpush1.msra.mxu0 0.0
      %6368 = vmatprep.subr.mxu0 0.0
      %6369 = vmatpush1.msra.mxu0 0.0
      %6370 = vmatprep.subr.mxu0 0.0
      %6371 = vmatpush1.msra.mxu0 0.0
      %6372 = vmatprep.subr.mxu0 0.0
      %6373 = vmatpush1.msra.mxu0 0.0
      %6374 = vmatprep.subr.mxu0 0.0
      %6375 = vmatpush1.msra.mxu0 0.0
      %6376 = vmatprep.mubr.f32.mxu0 0.0
      %6377 = vmatmul.mubr.f32.gmra.mrb[0].mxu0 %v6191
      %v6378 = vpop.f32.mrb[0].mxu0
      %v6379 = vadd.f32 %v6274, %v6378
      %v6380 = vpop.f32.mrb[0].mxu0
      %6381 = vmatprep.mubr.f32.mxu0 0.0
      %6382 = vmatmul.mubr.f32.gmra.mrb[0].mxu0 %v6193
      %v6383 = vpop.f32.mrb[0].mxu0
      %v6384 = vadd.f32 %v6279, %v6383
      %v6385 = vpop.f32.mrb[0].mxu0
      %6386 = vmatprep.mubr.f32.mxu0 0.0
      %6387 = vmatmul.mubr.f32.gmra.mrb[0].mxu0 %v6195
      %v6388 = vpop.f32.mrb[0].mxu0
      %v6389 = vadd.f32 %v6284, %v6388
      %v6390 = vpop.f32.mrb[0].mxu0
      %6391 = vmatprep.mubr.f32.mxu0 0.0
      %6392 = vmatmul.mubr.f32.gmra.mrb[0].mxu0 %v6197
      %v6393 = vpop.f32.mrb[0].mxu0
      %v6394 = vadd.f32 %v6289, %v6393
      %v6395 = vpop.f32.mrb[0].mxu0
      %6396 = vmatprep.mubr.f32.mxu0 0.0
      %6397 = vmatmul.mubr.f32.gmra.mrb[0].mxu0 %v6199
      %v6398 = vpop.f32.mrb[0].mxu0
      %v6399 = vadd.f32 %v6294, %v6398
      %v6400 = vpop.f32.mrb[0].mxu0
      %6401 = vmatprep.mubr.f32.mxu0 0.0
      %6402 = vmatmul.mubr.f32.gmra.mrb[0].mxu0 %v6201
      %v6403 = vpop.f32.mrb[0].mxu0
      %v6404 = vadd.f32 %v6299, %v6403
      %v6405 = vpop.f32.mrb[0].mxu0
      %6406 = vmatprep.mubr.f32.mxu0 0.0
      %6407 = vmatmul.mubr.f32.gmra.mrb[0].mxu0 %v6203
      %v6408 = vpop.f32.mrb[0].mxu0
      %v6409 = vadd.f32 %v6304, %v6408
      %v6410 = vpop.f32.mrb[0].mxu0
      %6411 = vmatprep.mubr.f32.mxu0 0.0
      %6412 = vmatmul.mubr.f32.gmra.mrb[0].mxu0 %v6205
      %v6413 = vpop.f32.mrb[0].mxu0
      %v6414 = vadd.f32 %v6309, %v6413
      %v6415 = vpop.f32.mrb[0].mxu0
      %6416 = vdwg.mxu0
      %v6417 = vmax.f32 %v6379, 0.0
      %v6418 = vmax.f32 %v6384, 0.0
      %v6419 = vmax.f32 %v6389, 0.0
      %v6420 = vmax.f32 %v6394, 0.0
      %v6421 = vmax.f32 %v6399, 0.0
      %v6422 = vmax.f32 %v6404, 0.0
      %v6423 = vmax.f32 %v6409, 0.0
      %v6424 = vmax.f32 %v6414, 0.0
      %v6425 = vld [vmem:[%s7] sm:$0xff]
      %v6426 = vld [vmem:[%s7 + $0x8] sm:$0xff]
      %v6427 = vld [vmem:[%s7 + $0x10] sm:$0xff]
      %v6428 = vld [vmem:[%s7 + $0x18] sm:$0xff]
      %v6429 = vld [vmem:[%s8] sm:$0x1]
      %v6431 = vlaneseq
      %v6432 = vshrl.u32 %v6431, 7
      %v6433 = vsub.s32 0, %v6432
      %v6434 = vrot.slane %v6429, %v6433
      %v6437 = vsel %vm2194, %v6417, 0
      %v6440 = vsel %vm2194, %v6418, 0
      %v6443 = vsel %vm2194, %v6419, 0
      %v6446 = vsel %vm2194, %v6420, 0
      %v6449 = vsel %vm2194, %v6421, 0
      %v6452 = vsel %vm2194, %v6422, 0
      %v6455 = vsel %vm2194, %v6423, 0
      %v6458 = vsel %vm2194, %v6424, 0
      %6460 = vmatprep.subr.mxu0 0.0
      %6461 = vmatpush1.msra.mxu0 %v6425
      %6462 = vmatprep.subr.mxu0 0.0
      %6463 = vmatpush1.msra.mxu0 %v6426
      %6464 = vmatprep.subr.mxu0 0.0
      %6465 = vmatpush1.msra.mxu0 %v6427
      %6466 = vmatprep.subr.mxu0 0.0
      %6467 = vmatpush1.msra.mxu0 %v6428
      %6468 = vmatprep.subr.mxu0 0.0
      %6469 = vmatpush1.msra.mxu0 0.0
      %6470 = vmatprep.subr.mxu0 0.0
      %6471 = vmatpush1.msra.mxu0 0.0
      %6472 = vmatprep.subr.mxu0 0.0
      %6473 = vmatpush1.msra.mxu0 0.0
      %6474 = vmatprep.subr.mxu0 0.0
      %6475 = vmatpush1.msra.mxu0 0.0
      %6476 = vmatprep.subr.mxu0 0.0
      %6477 = vmatpush1.msra.mxu0 0.0
      %6478 = vmatprep.subr.mxu0 0.0
      %6479 = vmatpush1.msra.mxu0 0.0
      %6480 = vmatprep.subr.mxu0 0.0
      %6481 = vmatpush1.msra.mxu0 0.0
      %6482 = vmatprep.subr.mxu0 0.0
      %6483 = vmatpush1.msra.mxu0 0.0
      %6484 = vmatprep.subr.mxu0 0.0
      %6485 = vmatpush1.msra.mxu0 0.0
      %6486 = vmatprep.subr.mxu0 0.0
      %6487 = vmatpush1.msra.mxu0 0.0
      %6488 = vmatprep.subr.mxu0 0.0
      %6489 = vmatpush1.msra.mxu0 0.0
      %6490 = vmatprep.subr.mxu0 0.0
      %6491 = vmatpush1.msra.mxu0 0.0
      %6492 = vmatprep.subr.mxu0 0.0
      %6493 = vmatpush1.msra.mxu0 0.0
      %6494 = vmatprep.subr.mxu0 0.0
      %6495 = vmatpush1.msra.mxu0 0.0
      %6496 = vmatprep.subr.mxu0 0.0
      %6497 = vmatpush1.msra.mxu0 0.0
      %6498 = vmatprep.subr.mxu0 0.0
      %6499 = vmatpush1.msra.mxu0 0.0
      %6500 = vmatprep.subr.mxu0 0.0
      %6501 = vmatpush1.msra.mxu0 0.0
      %6502 = vmatprep.subr.mxu0 0.0
      %6503 = vmatpush1.msra.mxu0 0.0
      %6504 = vmatprep.subr.mxu0 0.0
      %6505 = vmatpush1.msra.mxu0 0.0
      %6506 = vmatprep.subr.mxu0 0.0
      %6507 = vmatpush1.msra.mxu0 0.0
      %6508 = vmatprep.subr.mxu0 0.0
      %6509 = vmatpush1.msra.mxu0 0.0
      %6510 = vmatprep.subr.mxu0 0.0
      %6511 = vmatpush1.msra.mxu0 0.0
      %6512 = vmatprep.subr.mxu0 0.0
      %6513 = vmatpush1.msra.mxu0 0.0
      %6514 = vmatprep.subr.mxu0 0.0
      %6515 = vmatpush1.msra.mxu0 0.0
      %6516 = vmatprep.subr.mxu0 0.0
      %6517 = vmatpush1.msra.mxu0 0.0
      %6518 = vmatprep.subr.mxu0 0.0
      %6519 = vmatpush1.msra.mxu0 0.0
      %6520 = vmatprep.subr.mxu0 0.0
      %6521 = vmatpush1.msra.mxu0 0.0
      %6522 = vmatprep.subr.mxu0 0.0
      %6523 = vmatpush1.msra.mxu0 0.0
      %6524 = vmatprep.mubr.f32.mxu0 0.0
      %6525 = vmatmul.mubr.f32.gmra.mrb[0].mxu0 %v6437
      %v6526 = vpop.f32.mrb[0].mxu0
      %v6527 = vadd.f32 %v6434, %v6526
      %v6528 = vpop.f32.mrb[0].mxu0
      %6529 = vmatprep.mubr.f32.mxu0 0.0
      %6530 = vmatmul.mubr.f32.gmra.mrb[0].mxu0 %v6440
      %v6531 = vpop.f32.mrb[0].mxu0
      %v6532 = vadd.f32 %v6434, %v6531
      %v6533 = vpop.f32.mrb[0].mxu0
      %6534 = vmatprep.mubr.f32.mxu0 0.0
      %6535 = vmatmul.mubr.f32.gmra.mrb[0].mxu0 %v6443
      %v6536 = vpop.f32.mrb[0].mxu0
      %v6537 = vadd.f32 %v6434, %v6536
      %v6538 = vpop.f32.mrb[0].mxu0
      %6539 = vmatprep.mubr.f32.mxu0 0.0
      %6540 = vmatmul.mubr.f32.gmra.mrb[0].mxu0 %v6446
      %v6541 = vpop.f32.mrb[0].mxu0
      %v6542 = vadd.f32 %v6434, %v6541
      %v6543 = vpop.f32.mrb[0].mxu0
      %6544 = vmatprep.mubr.f32.mxu0 0.0
      %6545 = vmatmul.mubr.f32.gmra.mrb[0].mxu0 %v6449
      %v6546 = vpop.f32.mrb[0].mxu0
      %v6547 = vadd.f32 %v6434, %v6546
      %v6548 = vpop.f32.mrb[0].mxu0
      %6549 = vmatprep.mubr.f32.mxu0 0.0
      %6550 = vmatmul.mubr.f32.gmra.mrb[0].mxu0 %v6452
      %v6551 = vpop.f32.mrb[0].mxu0
      %v6552 = vadd.f32 %v6434, %v6551
      %v6553 = vpop.f32.mrb[0].mxu0
      %6554 = vmatprep.mubr.f32.mxu0 0.0
      %6555 = vmatmul.mubr.f32.gmra.mrb[0].mxu0 %v6455
      %v6556 = vpop.f32.mrb[0].mxu0
      %v6557 = vadd.f32 %v6434, %v6556
      %v6558 = vpop.f32.mrb[0].mxu0
      %6559 = vmatprep.mubr.f32.mxu0 0.0
      %6560 = vmatmul.mubr.f32.gmra.mrb[0].mxu0 %v6458
      %v6561 = vpop.f32.mrb[0].mxu0
      %v6562 = vadd.f32 %v6434, %v6561
      %v6563 = vpop.f32.mrb[0].mxu0
      %6564 = vdwg.mxu0
      %6573 = vrot.lane.b32.xlu0 %v6527, 112
      %v6574 = vpop.permute.xlu0 %6573
      %6575 = vrot.lane.b32.xlu0 %v6532, 112
      %v6576 = vpop.permute.xlu0 %6575
      %6577 = vrot.lane.b32.xlu0 %v6537, 112
      %v6578 = vpop.permute.xlu0 %6577
      %6579 = vrot.lane.b32.xlu0 %v6542, 112
      %v6580 = vpop.permute.xlu0 %6579
      %6581 = vrot.lane.b32.xlu0 %v6547, 112
      %v6582 = vpop.permute.xlu0 %6581
      %6583 = vrot.lane.b32.xlu0 %v6552, 112
      %v6584 = vpop.permute.xlu0 %6583
      %6585 = vrot.lane.b32.xlu0 %v6557, 112
      %v6586 = vpop.permute.xlu0 %6585
      %6587 = vrot.lane.b32.xlu0 %v6562, 112
      %v6588 = vpop.permute.xlu0 %6587
      %v6589 = vsel %vm1824, %v6527, 0
      %v6591 = vsel %vm1824, %v6532, 0
      %v6593 = vsel %vm1824, %v6537, 0
      %v6595 = vsel %vm1824, %v6542, 0
      %v6597 = vsel %vm1824, %v6547, 0
      %v6599 = vsel %vm1824, %v6552, 0
      %v6601 = vsel %vm1824, %v6557, 0
      %v6603 = vsel %vm1824, %v6562, 0
      %v6605 = vsel %vm1824, %v6574, 0
      %v6607 = vsel %vm1824, %v6576, 0
      %v6609 = vsel %vm1824, %v6578, 0
      %v6611 = vsel %vm1824, %v6580, 0
      %v6613 = vsel %vm1824, %v6582, 0
      %v6615 = vsel %vm1824, %v6584, 0
      %v6617 = vsel %vm1824, %v6586, 0
      %v6619 = vsel %vm1824, %v6588, 0
      %6621 = vmatprep.subr.mxu0 0.0
      %6622 = vmatpush1.xpose.msra.mxu0 %v6605
      %6623 = vmatprep.subr.mxu0 0.0
      %6624 = vmatpush1.xpose.msra.mxu0 %v6607
      %6625 = vmatprep.subr.mxu0 0.0
      %6626 = vmatpush1.xpose.msra.mxu0 %v6609
      %6627 = vmatprep.subr.mxu0 0.0
      %6628 = vmatpush1.xpose.msra.mxu0 %v6611
      %6629 = vmatprep.subr.mxu0 0.0
      %6630 = vmatpush1.xpose.msra.mxu0 %v6613
      %6631 = vmatprep.subr.mxu0 0.0
      %6632 = vmatpush1.xpose.msra.mxu0 %v6615
      %6633 = vmatprep.subr.mxu0 0.0
      %6634 = vmatpush1.xpose.msra.mxu0 %v6617
      %6635 = vmatprep.subr.mxu0 0.0
      %6636 = vmatpush1.xpose.msra.mxu0 %v6619
      %6637 = vmatprep.subr.mxu0 0.0
      %6638 = vmatpush1.xpose.msra.mxu0 0.0
      %6639 = vmatprep.subr.mxu0 0.0
      %6640 = vmatpush1.xpose.msra.mxu0 0.0
      %6641 = vmatprep.subr.mxu0 0.0
      %6642 = vmatpush1.xpose.msra.mxu0 0.0
      %6643 = vmatprep.subr.mxu0 0.0
      %6644 = vmatpush1.xpose.msra.mxu0 0.0
      %6645 = vmatprep.subr.mxu0 0.0
      %6646 = vmatpush1.xpose.msra.mxu0 0.0
      %6647 = vmatprep.subr.mxu0 0.0
      %6648 = vmatpush1.xpose.msra.mxu0 0.0
      %6649 = vmatprep.subr.mxu0 0.0
      %6650 = vmatpush1.xpose.msra.mxu0 0.0
      %6651 = vmatprep.subr.mxu0 0.0
      %6652 = vmatpush1.xpose.msra.mxu0 0.0
      %6653 = vmatprep.subr.mxu0 0.0
      %6654 = vmatpush1.xpose.msra.mxu0 0.0
      %6655 = vmatprep.subr.mxu0 0.0
      %6656 = vmatpush1.xpose.msra.mxu0 0.0
      %6657 = vmatprep.subr.mxu0 0.0
      %6658 = vmatpush1.xpose.msra.mxu0 0.0
      %6659 = vmatprep.subr.mxu0 0.0
      %6660 = vmatpush1.xpose.msra.mxu0 0.0
      %6661 = vmatprep.subr.mxu0 0.0
      %6662 = vmatpush1.xpose.msra.mxu0 0.0
      %6663 = vmatprep.subr.mxu0 0.0
      %6664 = vmatpush1.xpose.msra.mxu0 0.0
      %6665 = vmatprep.subr.mxu0 0.0
      %6666 = vmatpush1.xpose.msra.mxu0 0.0
      %6667 = vmatprep.subr.mxu0 0.0
      %6668 = vmatpush1.xpose.msra.mxu0 0.0
      %6669 = vmatprep.subr.mxu0 0.0
      %6670 = vmatpush1.xpose.msra.mxu0 0.0
      %6671 = vmatprep.subr.mxu0 0.0
      %6672 = vmatpush1.xpose.msra.mxu0 0.0
      %6673 = vmatprep.subr.mxu0 0.0
      %6674 = vmatpush1.xpose.msra.mxu0 0.0
      %6675 = vmatprep.subr.mxu0 0.0
      %6676 = vmatpush1.xpose.msra.mxu0 0.0
      %6677 = vmatprep.subr.mxu0 0.0
      %6678 = vmatpush1.xpose.msra.mxu0 0.0
      %6679 = vmatprep.subr.mxu0 0.0
      %6680 = vmatpush1.xpose.msra.mxu0 0.0
      %6681 = vmatprep.subr.mxu0 0.0
      %6682 = vmatpush1.xpose.msra.mxu0 0.0
      %6683 = vmatprep.subr.mxu0 0.0
      %6684 = vmatpush1.xpose.msra.mxu0 0.0
      %6685 = vmatprep.mubr.f32.mxu0 0.0
      %6686 = vmatmul.mubr.f32.gmra.mrb[0].mxu0 %v6589
      %v6687 = vpop.f32.mrb[0].mxu0
      %v6688 = vadd.f32 0.0, %v6687
      %v6689 = vpop.f32.mrb[0].mxu0
      %6690 = vmatprep.mubr.f32.mxu0 0.0
      %6691 = vmatmul.mubr.f32.gmra.mrb[0].mxu0 %v6591
      %v6692 = vpop.f32.mrb[0].mxu0
      %v6693 = vadd.f32 0.0, %v6692
      %v6694 = vpop.f32.mrb[0].mxu0
      %6695 = vmatprep.mubr.f32.mxu0 0.0
      %6696 = vmatmul.mubr.f32.gmra.mrb[0].mxu0 %v6593
      %v6697 = vpop.f32.mrb[0].mxu0
      %v6698 = vadd.f32 0.0, %v6697
      %v6699 = vpop.f32.mrb[0].mxu0
      %6700 = vmatprep.mubr.f32.mxu0 0.0
      %6701 = vmatmul.mubr.f32.gmra.mrb[0].mxu0 %v6595
      %v6702 = vpop.f32.mrb[0].mxu0
      %v6703 = vadd.f32 0.0, %v6702
      %v6704 = vpop.f32.mrb[0].mxu0
      %6705 = vmatprep.mubr.f32.mxu0 0.0
      %6706 = vmatmul.mubr.f32.gmra.mrb[0].mxu0 %v6597
      %v6707 = vpop.f32.mrb[0].mxu0
      %v6708 = vadd.f32 0.0, %v6707
      %v6709 = vpop.f32.mrb[0].mxu0
      %6710 = vmatprep.mubr.f32.mxu0 0.0
      %6711 = vmatmul.mubr.f32.gmra.mrb[0].mxu0 %v6599
      %v6712 = vpop.f32.mrb[0].mxu0
      %v6713 = vadd.f32 0.0, %v6712
      %v6714 = vpop.f32.mrb[0].mxu0
      %6715 = vmatprep.mubr.f32.mxu0 0.0
      %6716 = vmatmul.mubr.f32.gmra.mrb[0].mxu0 %v6601
      %v6717 = vpop.f32.mrb[0].mxu0
      %v6718 = vadd.f32 0.0, %v6717
      %v6719 = vpop.f32.mrb[0].mxu0
      %6720 = vmatprep.mubr.f32.mxu0 0.0
      %6721 = vmatmul.mubr.f32.gmra.mrb[0].mxu0 %v6603
      %v6722 = vpop.f32.mrb[0].mxu0
      %v6723 = vadd.f32 0.0, %v6722
      %v6724 = vpop.f32.mrb[0].mxu0
      %6725 = vdwg.mxu0
      %v6726 = vsel %vm3062, %v6688, -inf
      %v6727 = vsel %vm3062, %v6693, -inf
      %v6728 = vsel %vm3062, %v6698, -inf
      %v6729 = vsel %vm3062, %v6703, -inf
      %v6730 = vsel %vm3062, %v6708, -inf
      %v6731 = vmax.f32 %v6726, %v6730
      %v6732 = vsel %vm3062, %v6713, -inf
      %v6733 = vmax.f32 %v6727, %v6732
      %v6734 = vsel %vm3062, %v6718, -inf
      %v6735 = vmax.f32 %v6728, %v6734
      %v6736 = vsel %vm3062, %v6723, -inf
      %v6737 = vmax.f32 %v6729, %v6736
      %v6738 = vmax.f32 %v6731, %v6733
      %v6739 = vmax.f32 %v6735, %v6737
      %v6740 = vmax.f32 %v6738, %v6739
      %v6741 = vrot.slane %v6740, 4
      %v6742 = vmax.f32 %v6740, %v6741
      %v6743 = vrot.slane %v6742, 2
      %v6744 = vmax.f32 %v6742, %v6743
      %v6745 = vrot.slane %v6744, 1
      %v6746 = vmax.f32 %v6744, %v6745
      %v6747 = vsub.f32 %v6688, %v6746
      %v6748 = vsub.f32 %v6693, %v6746
      %v6749 = vsub.f32 %v6698, %v6746
      %v6750 = vsub.f32 %v6703, %v6746
      %v6751 = vsub.f32 %v6708, %v6746
      %v6752 = vsub.f32 %v6713, %v6746
      %v6753 = vsub.f32 %v6718, %v6746
      %v6754 = vsub.f32 %v6723, %v6746
      %v6755 = vmul.f32 %v6747, 1.442695
      %v6756 = vpow.pop %v6755
      %v6757 = vmul.f32 %v6748, 1.442695
      %v6758 = vpow.pop %v6757
      %v6759 = vmul.f32 %v6749, 1.442695
      %v6760 = vpow.pop %v6759
      %v6761 = vmul.f32 %v6750, 1.442695
      %v6762 = vpow.pop %v6761
      %v6763 = vmul.f32 %v6751, 1.442695
      %v6764 = vpow.pop %v6763
      %v6765 = vmul.f32 %v6752, 1.442695
      %v6766 = vpow.pop %v6765
      %v6767 = vmul.f32 %v6753, 1.442695
      %v6768 = vpow.pop %v6767
      %v6769 = vmul.f32 %v6754, 1.442695
      %v6770 = vpow.pop %v6769
      %v6771 = vsel %vm3062, %v6756, 0.0
      %v6772 = vsel %vm3062, %v6758, 0.0
      %v6773 = vadd.f32 %v6771, %v6772
      %v6774 = vsel %vm3062, %v6760, 0.0
      %v6775 = vadd.f32 %v6773, %v6774
      %v6776 = vsel %vm3062, %v6762, 0.0
      %v6777 = vadd.f32 %v6775, %v6776
      %v6778 = vsel %vm3062, %v6764, 0.0
      %v6779 = vadd.f32 %v6777, %v6778
      %v6780 = vsel %vm3062, %v6766, 0.0
      %v6781 = vadd.f32 %v6779, %v6780
      %v6782 = vsel %vm3062, %v6768, 0.0
      %v6783 = vadd.f32 %v6781, %v6782
      %v6784 = vsel %vm3062, %v6770, 0.0
      %v6785 = vadd.f32 %v6783, %v6784
      %v6786 = vrot.slane %v6785, 4
      %v6787 = vadd.f32 %v6785, %v6786
      %v6788 = vrot.slane %v6787, 2
      %v6789 = vadd.f32 %v6787, %v6788
      %v6790 = vrot.slane %v6789, 1
      %v6791 = vadd.f32 %v6789, %v6790
      %v6792 = vrcp.pop %v6791
      %v6793 = vmul.f32 %v6756, %v6792
      %v6794 = vmul.f32 %v6758, %v6792
      %v6795 = vmul.f32 %v6760, %v6792
      %v6796 = vmul.f32 %v6762, %v6792
      %v6797 = vmul.f32 %v6764, %v6792
      %v6798 = vmul.f32 %v6766, %v6792
      %v6799 = vmul.f32 %v6768, %v6792
      %v6800 = vmul.f32 %v6770, %v6792
      %6801 = vrot.lane.b32.xlu0 %v6527, 96
      %v6802 = vpop.permute.xlu0 %6801
      %6803 = vrot.lane.b32.xlu0 %v6532, 96
      %v6804 = vpop.permute.xlu0 %6803
      %6805 = vrot.lane.b32.xlu0 %v6537, 96
      %v6806 = vpop.permute.xlu0 %6805
      %6807 = vrot.lane.b32.xlu0 %v6542, 96
      %v6808 = vpop.permute.xlu0 %6807
      %6809 = vrot.lane.b32.xlu0 %v6547, 96
      %v6810 = vpop.permute.xlu0 %6809
      %6811 = vrot.lane.b32.xlu0 %v6552, 96
      %v6812 = vpop.permute.xlu0 %6811
      %6813 = vrot.lane.b32.xlu0 %v6557, 96
      %v6814 = vpop.permute.xlu0 %6813
      %6815 = vrot.lane.b32.xlu0 %v6562, 96
      %v6816 = vpop.permute.xlu0 %6815
      %v6826 = vsel %vm3062, %v6793, 0
      %v6829 = vsel %vm3062, %v6794, 0
      %v6832 = vsel %vm3062, %v6795, 0
      %v6835 = vsel %vm3062, %v6796, 0
      %v6838 = vsel %vm3062, %v6797, 0
      %v6841 = vsel %vm3062, %v6798, 0
      %v6844 = vsel %vm3062, %v6799, 0
      %v6847 = vsel %vm3062, %v6800, 0
      %6849 = vmatprep.subr.mxu0 0.0
      %6850 = vmatpush1.msra.mxu0 %v6802
      %6851 = vmatprep.subr.mxu0 0.0
      %6852 = vmatpush1.msra.mxu0 %v6804
      %6853 = vmatprep.subr.mxu0 0.0
      %6854 = vmatpush1.msra.mxu0 %v6806
      %6855 = vmatprep.subr.mxu0 0.0
      %6856 = vmatpush1.msra.mxu0 %v6808
      %6857 = vmatprep.subr.mxu0 0.0
      %6858 = vmatpush1.msra.mxu0 %v6810
      %6859 = vmatprep.subr.mxu0 0.0
      %6860 = vmatpush1.msra.mxu0 %v6812
      %6861 = vmatprep.subr.mxu0 0.0
      %6862 = vmatpush1.msra.mxu0 %v6814
      %6863 = vmatprep.subr.mxu0 0.0
      %6864 = vmatpush1.msra.mxu0 %v6816
      %6865 = vmatprep.subr.mxu0 0.0
      %6866 = vmatpush1.msra.mxu0 0.0
      %6867 = vmatprep.subr.mxu0 0.0
      %6868 = vmatpush1.msra.mxu0 0.0
      %6869 = vmatprep.subr.mxu0 0.0
      %6870 = vmatpush1.msra.mxu0 0.0
      %6871 = vmatprep.subr.mxu0 0.0
      %6872 = vmatpush1.msra.mxu0 0.0
      %6873 = vmatprep.subr.mxu0 0.0
      %6874 = vmatpush1.msra.mxu0 0.0
      %6875 = vmatprep.subr.mxu0 0.0
      %6876 = vmatpush1.msra.mxu0 0.0
      %6877 = vmatprep.subr.mxu0 0.0
      %6878 = vmatpush1.msra.mxu0 0.0
      %6879 = vmatprep.subr.mxu0 0.0
      %6880 = vmatpush1.msra.mxu0 0.0
      %6881 = vmatprep.subr.mxu0 0.0
      %6882 = vmatpush1.msra.mxu0 0.0
      %6883 = vmatprep.subr.mxu0 0.0
      %6884 = vmatpush1.msra.mxu0 0.0
      %6885 = vmatprep.subr.mxu0 0.0
      %6886 = vmatpush1.msra.mxu0 0.0
      %6887 = vmatprep.subr.mxu0 0.0
      %6888 = vmatpush1.msra.mxu0 0.0
      %6889 = vmatprep.subr.mxu0 0.0
      %6890 = vmatpush1.msra.mxu0 0.0
      %6891 = vmatprep.subr.mxu0 0.0
      %6892 = vmatpush1.msra.mxu0 0.0
      %6893 = vmatprep.subr.mxu0 0.0
      %6894 = vmatpush1.msra.mxu0 0.0
      %6895 = vmatprep.subr.mxu0 0.0
      %6896 = vmatpush1.msra.mxu0 0.0
      %6897 = vmatprep.subr.mxu0 0.0
      %6898 = vmatpush1.msra.mxu0 0.0
      %6899 = vmatprep.subr.mxu0 0.0
      %6900 = vmatpush1.msra.mxu0 0.0
      %6901 = vmatprep.subr.mxu0 0.0
      %6902 = vmatpush1.msra.mxu0 0.0
      %6903 = vmatprep.subr.mxu0 0.0
      %6904 = vmatpush1.msra.mxu0 0.0
      %6905 = vmatprep.subr.mxu0 0.0
      %6906 = vmatpush1.msra.mxu0 0.0
      %6907 = vmatprep.subr.mxu0 0.0
      %6908 = vmatpush1.msra.mxu0 0.0
      %6909 = vmatprep.subr.mxu0 0.0
      %6910 = vmatpush1.msra.mxu0 0.0
      %6911 = vmatprep.subr.mxu0 0.0
      %6912 = vmatpush1.msra.mxu0 0.0
      %6913 = vmatprep.mubr.f32.mxu0 0.0
      %6914 = vmatmul.mubr.f32.gmra.mrb[0].mxu0 %v6826
      %v6915 = vpop.f32.mrb[0].mxu0
      %v6916 = vadd.f32 0.0, %v6915
      %v6917 = vpop.f32.mrb[0].mxu0
      %6918 = vmatprep.mubr.f32.mxu0 0.0
      %6919 = vmatmul.mubr.f32.gmra.mrb[0].mxu0 %v6829
      %v6920 = vpop.f32.mrb[0].mxu0
      %v6921 = vadd.f32 0.0, %v6920
      %v6922 = vpop.f32.mrb[0].mxu0
      %6923 = vmatprep.mubr.f32.mxu0 0.0
      %6924 = vmatmul.mubr.f32.gmra.mrb[0].mxu0 %v6832
      %v6925 = vpop.f32.mrb[0].mxu0
      %v6926 = vadd.f32 0.0, %v6925
      %v6927 = vpop.f32.mrb[0].mxu0
      %6928 = vmatprep.mubr.f32.mxu0 0.0
      %6929 = vmatmul.mubr.f32.gmra.mrb[0].mxu0 %v6835
      %v6930 = vpop.f32.mrb[0].mxu0
      %v6931 = vadd.f32 0.0, %v6930
      %v6932 = vpop.f32.mrb[0].mxu0
      %6933 = vmatprep.mubr.f32.mxu0 0.0
      %6934 = vmatmul.mubr.f32.gmra.mrb[0].mxu0 %v6838
      %v6935 = vpop.f32.mrb[0].mxu0
      %v6936 = vadd.f32 0.0, %v6935
      %v6937 = vpop.f32.mrb[0].mxu0
      %6938 = vmatprep.mubr.f32.mxu0 0.0
      %6939 = vmatmul.mubr.f32.gmra.mrb[0].mxu0 %v6841
      %v6940 = vpop.f32.mrb[0].mxu0
      %v6941 = vadd.f32 0.0, %v6940
      %v6942 = vpop.f32.mrb[0].mxu0
      %6943 = vmatprep.mubr.f32.mxu0 0.0
      %6944 = vmatmul.mubr.f32.gmra.mrb[0].mxu0 %v6844
      %v6945 = vpop.f32.mrb[0].mxu0
      %v6946 = vadd.f32 0.0, %v6945
      %v6947 = vpop.f32.mrb[0].mxu0
      %6948 = vmatprep.mubr.f32.mxu0 0.0
      %6949 = vmatmul.mubr.f32.gmra.mrb[0].mxu0 %v6847
      %v6950 = vpop.f32.mrb[0].mxu0
      %v6951 = vadd.f32 0.0, %v6950
      %v6952 = vpop.f32.mrb[0].mxu0
      %6953 = vdwg.mxu0
      %v6954 = vld [vmem:[%s9] sm:$0xff]
      %v6955 = vld [vmem:[%s9 + $0x8] sm:$0xff]
      %v6956 = vld [vmem:[%s10] sm:$0x1]
      %v6958 = vlaneseq
      %v6959 = vshrl.u32 %v6958, 7
      %v6960 = vsub.s32 0, %v6959
      %v6961 = vrot.slane %v6956, %v6960
      %v6964 = vsel %vm1824, %v6916, 0
      %v6967 = vsel %vm1824, %v6921, 0
      %v6970 = vsel %vm1824, %v6926, 0
      %v6973 = vsel %vm1824, %v6931, 0
      %v6976 = vsel %vm1824, %v6936, 0
      %v6979 = vsel %vm1824, %v6941, 0
      %v6982 = vsel %vm1824, %v6946, 0
      %v6985 = vsel %vm1824, %v6951, 0
      %6987 = vmatprep.subr.mxu0 0.0
      %6988 = vmatpush1.msra.mxu0 %v6954
      %6989 = vmatprep.subr.mxu0 0.0
      %6990 = vmatpush1.msra.mxu0 %v6955
      %6991 = vmatprep.subr.mxu0 0.0
      %6992 = vmatpush1.msra.mxu0 0.0
      %6993 = vmatprep.subr.mxu0 0.0
      %6994 = vmatpush1.msra.mxu0 0.0
      %6995 = vmatprep.subr.mxu0 0.0
      %6996 = vmatpush1.msra.mxu0 0.0
      %6997 = vmatprep.subr.mxu0 0.0
      %6998 = vmatpush1.msra.mxu0 0.0
      %6999 = vmatprep.subr.mxu0 0.0
      %7000 = vmatpush1.msra.mxu0 0.0
      %7001 = vmatprep.subr.mxu0 0.0
      %7002 = vmatpush1.msra.mxu0 0.0
      %7003 = vmatprep.subr.mxu0 0.0
      %7004 = vmatpush1.msra.mxu0 0.0
      %7005 = vmatprep.subr.mxu0 0.0
      %7006 = vmatpush1.msra.mxu0 0.0
      %7007 = vmatprep.subr.mxu0 0.0
      %7008 = vmatpush1.msra.mxu0 0.0
      %7009 = vmatprep.subr.mxu0 0.0
      %7010 = vmatpush1.msra.mxu0 0.0
      %7011 = vmatprep.subr.mxu0 0.0
      %7012 = vmatpush1.msra.mxu0 0.0
      %7013 = vmatprep.subr.mxu0 0.0
      %7014 = vmatpush1.msra.mxu0 0.0
      %7015 = vmatprep.subr.mxu0 0.0
      %7016 = vmatpush1.msra.mxu0 0.0
      %7017 = vmatprep.subr.mxu0 0.0
      %7018 = vmatpush1.msra.mxu0 0.0
      %7019 = vmatprep.subr.mxu0 0.0
      %7020 = vmatpush1.msra.mxu0 0.0
      %7021 = vmatprep.subr.mxu0 0.0
      %7022 = vmatpush1.msra.mxu0 0.0
      %7023 = vmatprep.subr.mxu0 0.0
      %7024 = vmatpush1.msra.mxu0 0.0
      %7025 = vmatprep.subr.mxu0 0.0
      %7026 = vmatpush1.msra.mxu0 0.0
      %7027 = vmatprep.subr.mxu0 0.0
      %7028 = vmatpush1.msra.mxu0 0.0
      %7029 = vmatprep.subr.mxu0 0.0
      %7030 = vmatpush1.msra.mxu0 0.0
      %7031 = vmatprep.subr.mxu0 0.0
      %7032 = vmatpush1.msra.mxu0 0.0
      %7033 = vmatprep.subr.mxu0 0.0
      %7034 = vmatpush1.msra.mxu0 0.0
      %7035 = vmatprep.subr.mxu0 0.0
      %7036 = vmatpush1.msra.mxu0 0.0
      %7037 = vmatprep.subr.mxu0 0.0
      %7038 = vmatpush1.msra.mxu0 0.0
      %7039 = vmatprep.subr.mxu0 0.0
      %7040 = vmatpush1.msra.mxu0 0.0
      %7041 = vmatprep.subr.mxu0 0.0
      %7042 = vmatpush1.msra.mxu0 0.0
      %7043 = vmatprep.subr.mxu0 0.0
      %7044 = vmatpush1.msra.mxu0 0.0
      %7045 = vmatprep.subr.mxu0 0.0
      %7046 = vmatpush1.msra.mxu0 0.0
      %7047 = vmatprep.subr.mxu0 0.0
      %7048 = vmatpush1.msra.mxu0 0.0
      %7049 = vmatprep.subr.mxu0 0.0
      %7050 = vmatpush1.msra.mxu0 0.0
      %7051 = vmatprep.mubr.f32.mxu0 0.0
      %7052 = vmatmul.mubr.f32.gmra.mrb[0].mxu0 %v6964
      %v7053 = vpop.f32.mrb[0].mxu0
      %v7054 = vadd.f32 %v6961, %v7053
      %v7055 = vpop.f32.mrb[0].mxu0
      %7056 = vmatprep.mubr.f32.mxu0 0.0
      %7057 = vmatmul.mubr.f32.gmra.mrb[0].mxu0 %v6967
      %v7058 = vpop.f32.mrb[0].mxu0
      %v7059 = vadd.f32 %v6961, %v7058
      %v7060 = vpop.f32.mrb[0].mxu0
      %7061 = vmatprep.mubr.f32.mxu0 0.0
      %7062 = vmatmul.mubr.f32.gmra.mrb[0].mxu0 %v6970
      %v7063 = vpop.f32.mrb[0].mxu0
      %v7064 = vadd.f32 %v6961, %v7063
      %v7065 = vpop.f32.mrb[0].mxu0
      %7066 = vmatprep.mubr.f32.mxu0 0.0
      %7067 = vmatmul.mubr.f32.gmra.mrb[0].mxu0 %v6973
      %v7068 = vpop.f32.mrb[0].mxu0
      %v7069 = vadd.f32 %v6961, %v7068
      %v7070 = vpop.f32.mrb[0].mxu0
      %7071 = vmatprep.mubr.f32.mxu0 0.0
      %7072 = vmatmul.mubr.f32.gmra.mrb[0].mxu0 %v6976
      %v7073 = vpop.f32.mrb[0].mxu0
      %v7074 = vadd.f32 %v6961, %v7073
      %v7075 = vpop.f32.mrb[0].mxu0
      %7076 = vmatprep.mubr.f32.mxu0 0.0
      %7077 = vmatmul.mubr.f32.gmra.mrb[0].mxu0 %v6979
      %v7078 = vpop.f32.mrb[0].mxu0
      %v7079 = vadd.f32 %v6961, %v7078
      %v7080 = vpop.f32.mrb[0].mxu0
      %7081 = vmatprep.mubr.f32.mxu0 0.0
      %7082 = vmatmul.mubr.f32.gmra.mrb[0].mxu0 %v6982
      %v7083 = vpop.f32.mrb[0].mxu0
      %v7084 = vadd.f32 %v6961, %v7083
      %v7085 = vpop.f32.mrb[0].mxu0
      %7086 = vmatprep.mubr.f32.mxu0 0.0
      %7087 = vmatmul.mubr.f32.gmra.mrb[0].mxu0 %v6985
      %v7088 = vpop.f32.mrb[0].mxu0
      %v7089 = vadd.f32 %v6961, %v7088
      %v7090 = vpop.f32.mrb[0].mxu0
      %7091 = vdwg.mxu0
      %v7092 = vadd.f32 %v7054, %v6417
      %v7093 = vadd.f32 %v7059, %v6418
      %v7094 = vadd.f32 %v7064, %v6419
      %v7095 = vadd.f32 %v7069, %v6420
      %v7096 = vadd.f32 %v7074, %v6421
      %v7097 = vadd.f32 %v7079, %v6422
      %v7098 = vadd.f32 %v7084, %v6423
      %v7099 = vadd.f32 %v7089, %v6424
      %7100 = vst.msk [vmem:[%s1093 + $0x18] sm:$0xff] %vm2194, %v7092
      %7101 = vst.msk [vmem:[%s1093 + $0x60] sm:$0xff] %vm2194, %v7093
      %7102 = vst.msk [vmem:[%s1093 + $0xa8] sm:$0xff] %vm2194, %v7094
      %7103 = vst.msk [vmem:[%s1093 + $0xf0] sm:$0xff] %vm2194, %v7095
      %7104 = vst.msk [vmem:[%s1093 + $0x138] sm:$0xff] %vm2194, %v7096
      %7105 = vst.msk [vmem:[%s1093 + $0x180] sm:$0xff] %vm2194, %v7097
      %7106 = vst.msk [vmem:[%s1093 + $0x1c8] sm:$0xff] %vm2194, %v7098
      %7107 = vst.msk [vmem:[%s1093 + $0x210] sm:$0xff] %vm2194, %v7099
      %v7108 = vld [vmem:[#allocation2] sm:$0x80]
      %v7109 = vld [vmem:[#allocation2 + $0x18] sm:$0x7f]
      %v7110 = vld [vmem:[#allocation2 + $0x48] sm:$0x80]
      %v7111 = vld [vmem:[#allocation2 + $0x60] sm:$0x7f]
      %v7112 = vld [vmem:[#allocation2 + $0x90] sm:$0x80]
      %v7113 = vld [vmem:[#allocation2 + $0xa8] sm:$0x7f]
      %v7114 = vld [vmem:[#allocation2 + $0xd8] sm:$0x80]
      %v7115 = vld [vmem:[#allocation2 + $0xf0] sm:$0x7f]
      %v7116 = vld [vmem:[#allocation2 + $0x120] sm:$0x80]
      %v7117 = vld [vmem:[#allocation2 + $0x138] sm:$0x7f]
      %v7118 = vld [vmem:[#allocation2 + $0x168] sm:$0x80]
      %v7119 = vld [vmem:[#allocation2 + $0x180] sm:$0x7f]
      %v7120 = vld [vmem:[#allocation2 + $0x1b0] sm:$0x80]
      %v7121 = vld [vmem:[#allocation2 + $0x1c8] sm:$0x7f]
      %v7122 = vld [vmem:[#allocation2 + $0x1f8] sm:$0x80]
      %v7123 = vld [vmem:[#allocation2 + $0x210] sm:$0x7f]
      %v7124 = vld [vmem:[#allocation2 + $0x18] sm:$0xff]
      %v7125 = vld [vmem:[#allocation2 + $0x60] sm:$0xff]
      %v7126 = vld [vmem:[#allocation2 + $0xa8] sm:$0xff]
      %v7127 = vld [vmem:[#allocation2 + $0xf0] sm:$0xff]
      %v7128 = vld [vmem:[#allocation2 + $0x138] sm:$0xff]
      %v7129 = vld [vmem:[#allocation2 + $0x180] sm:$0xff]
      %v7130 = vld [vmem:[#allocation2 + $0x1c8] sm:$0xff]
      %v7131 = vld [vmem:[#allocation2 + $0x210] sm:$0xff]
      %v7132 = vld [vmem:[#allocation2 + $0x18] sm:$0xfe]
      %v7133 = vld [vmem:[#allocation2 + $0x30] sm:$0x1]
      %v7134 = vld [vmem:[#allocation2 + $0x60] sm:$0xfe]
      %v7135 = vld [vmem:[#allocation2 + $0x78] sm:$0x1]
      %v7136 = vld [vmem:[#allocation2 + $0xa8] sm:$0xfe]
      %v7137 = vld [vmem:[#allocation2 + $0xc0] sm:$0x1]
      %v7138 = vld [vmem:[#allocation2 + $0xf0] sm:$0xfe]
      %v7139 = vld [vmem:[#allocation2 + $0x108] sm:$0x1]
      %v7140 = vld [vmem:[#allocation2 + $0x138] sm:$0xfe]
      %v7141 = vld [vmem:[#allocation2 + $0x150] sm:$0x1]
      %v7142 = vld [vmem:[#allocation2 + $0x180] sm:$0xfe]
      %v7143 = vld [vmem:[#allocation2 + $0x198] sm:$0x1]
      %v7144 = vld [vmem:[#allocation2 + $0x1c8] sm:$0xfe]
      %v7145 = vld [vmem:[#allocation2 + $0x1e0] sm:$0x1]
      %v7146 = vld [vmem:[#allocation2 + $0x210] sm:$0xfe]
      %v7147 = vld [vmem:[#allocation2 + $0x228] sm:$0x1]
      %v7148 = vld [vmem:[%s1093] sm:$0x80]
      %v7149 = vld [vmem:[%s1093 + $0x18] sm:$0x7f]
      %v7150 = vld [vmem:[%s1093 + $0x48] sm:$0x80]
      %v7151 = vld [vmem:[%s1093 + $0x60] sm:$0x7f]
      %v7152 = vld [vmem:[%s1093 + $0x90] sm:$0x80]
      %v7153 = vld [vmem:[%s1093 + $0xa8] sm:$0x7f]
      %v7154 = vld [vmem:[%s1093 + $0xd8] sm:$0x80]
      %v7155 = vld [vmem:[%s1093 + $0xf0] sm:$0x7f]
      %v7156 = vld [vmem:[%s1093 + $0x120] sm:$0x80]
      %v7157 = vld [vmem:[%s1093 + $0x138] sm:$0x7f]
      %v7158 = vld [vmem:[%s1093 + $0x168] sm:$0x80]
      %v7159 = vld [vmem:[%s1093 + $0x180] sm:$0x7f]
      %v7160 = vld [vmem:[%s1093 + $0x1b0] sm:$0x80]
      %v7161 = vld [vmem:[%s1093 + $0x1c8] sm:$0x7f]
      %v7162 = vld [vmem:[%s1093 + $0x1f8] sm:$0x80]
      %v7163 = vld [vmem:[%s1093 + $0x210] sm:$0x7f]
      %v7164 = vld [vmem:[%s1093 + $0x18] sm:$0xff]
      %v7165 = vld [vmem:[%s1093 + $0x60] sm:$0xff]
      %v7166 = vld [vmem:[%s1093 + $0xa8] sm:$0xff]
      %v7167 = vld [vmem:[%s1093 + $0xf0] sm:$0xff]
      %v7168 = vld [vmem:[%s1093 + $0x138] sm:$0xff]
      %v7169 = vld [vmem:[%s1093 + $0x180] sm:$0xff]
      %v7170 = vld [vmem:[%s1093 + $0x1c8] sm:$0xff]
      %v7171 = vld [vmem:[%s1093 + $0x210] sm:$0xff]
      %v7172 = vld [vmem:[%s1093 + $0x18] sm:$0xfe]
      %v7173 = vld [vmem:[%s1093 + $0x30] sm:$0x1]
      %v7174 = vld [vmem:[%s1093 + $0x60] sm:$0xfe]
      %v7175 = vld [vmem:[%s1093 + $0x78] sm:$0x1]
      %v7176 = vld [vmem:[%s1093 + $0xa8] sm:$0xfe]
      %v7177 = vld [vmem:[%s1093 + $0xc0] sm:$0x1]
      %v7178 = vld [vmem:[%s1093 + $0xf0] sm:$0xfe]
      %v7179 = vld [vmem:[%s1093 + $0x108] sm:$0x1]
      %v7180 = vld [vmem:[%s1093 + $0x138] sm:$0xfe]
      %v7181 = vld [vmem:[%s1093 + $0x150] sm:$0x1]
      %v7182 = vld [vmem:[%s1093 + $0x180] sm:$0xfe]
      %v7183 = vld [vmem:[%s1093 + $0x198] sm:$0x1]
      %v7184 = vld [vmem:[%s1093 + $0x1c8] sm:$0xfe]
      %v7185 = vld [vmem:[%s1093 + $0x1e0] sm:$0x1]
      %v7186 = vld [vmem:[%s1093 + $0x210] sm:$0xfe]
      %v7187 = vld [vmem:[%s1093 + $0x228] sm:$0x1]
      %v7188 = vld [vmem:[%s1358] sm:$0x80]
      %v7189 = vld [vmem:[%s1358 + $0x18] sm:$0x7f]
      %v7190 = vld [vmem:[%s1358 + $0x48] sm:$0x80]
      %v7191 = vld [vmem:[%s1358 + $0x60] sm:$0x7f]
      %v7192 = vld [vmem:[%s1358 + $0x90] sm:$0x80]
      %v7193 = vld [vmem:[%s1358 + $0xa8] sm:$0x7f]
      %v7194 = vld [vmem:[%s1358 + $0xd8] sm:$0x80]
      %v7195 = vld [vmem:[%s1358 + $0xf0] sm:$0x7f]
      %v7196 = vld [vmem:[%s1358 + $0x120] sm:$0x80]
      %v7197 = vld [vmem:[%s1358 + $0x138] sm:$0x7f]
      %v7198 = vld [vmem:[%s1358 + $0x168] sm:$0x80]
      %v7199 = vld [vmem:[%s1358 + $0x180] sm:$0x7f]
      %v7200 = vld [vmem:[%s1358 + $0x1b0] sm:$0x80]
      %v7201 = vld [vmem:[%s1358 + $0x1c8] sm:$0x7f]
      %v7202 = vld [vmem:[%s1358 + $0x1f8] sm:$0x80]
      %v7203 = vld [vmem:[%s1358 + $0x210] sm:$0x7f]
      %v7204 = vld [vmem:[%s1358 + $0x18] sm:$0xff]
      %v7205 = vld [vmem:[%s1358 + $0x60] sm:$0xff]
      %v7206 = vld [vmem:[%s1358 + $0xa8] sm:$0xff]
      %v7207 = vld [vmem:[%s1358 + $0xf0] sm:$0xff]
      %v7208 = vld [vmem:[%s1358 + $0x138] sm:$0xff]
      %v7209 = vld [vmem:[%s1358 + $0x180] sm:$0xff]
      %v7210 = vld [vmem:[%s1358 + $0x1c8] sm:$0xff]
      %v7211 = vld [vmem:[%s1358 + $0x210] sm:$0xff]
      %v7212 = vld [vmem:[%s1358 + $0x18] sm:$0xfe]
      %v7213 = vld [vmem:[%s1358 + $0x30] sm:$0x1]
      %v7214 = vld [vmem:[%s1358 + $0x60] sm:$0xfe]
      %v7215 = vld [vmem:[%s1358 + $0x78] sm:$0x1]
      %v7216 = vld [vmem:[%s1358 + $0xa8] sm:$0xfe]
      %v7217 = vld [vmem:[%s1358 + $0xc0] sm:$0x1]
      %v7218 = vld [vmem:[%s1358 + $0xf0] sm:$0xfe]
      %v7219 = vld [vmem:[%s1358 + $0x108] sm:$0x1]
      %v7220 = vld [vmem:[%s1358 + $0x138] sm:$0xfe]
      %v7221 = vld [vmem:[%s1358 + $0x150] sm:$0x1]
      %v7222 = vld [vmem:[%s1358 + $0x180] sm:$0xfe]
      %v7223 = vld [vmem:[%s1358 + $0x198] sm:$0x1]
      %v7224 = vld [vmem:[%s1358 + $0x1c8] sm:$0xfe]
      %v7225 = vld [vmem:[%s1358 + $0x1e0] sm:$0x1]
      %v7226 = vld [vmem:[%s1358 + $0x210] sm:$0xfe]
      %v7227 = vld [vmem:[%s1358 + $0x228] sm:$0x1]
      %v7236 = vrot.slane %v7124, 1
      %v7237 = vrot.slane %v7125, 1
      %v7238 = vrot.slane %v7126, 1
      %v7239 = vrot.slane %v7127, 1
      %v7240 = vrot.slane %v7128, 1
      %v7241 = vrot.slane %v7129, 1
      %v7242 = vrot.slane %v7130, 1
      %v7243 = vrot.slane %v7131, 1
      %7244 = vrot.lane.b32.xlu0 %v7236, 32
      %v7245 = vpop.permute.xlu0 %7244
      %7246 = vrot.lane.b32.xlu0 %v7237, 32
      %v7247 = vpop.permute.xlu0 %7246
      %7248 = vrot.lane.b32.xlu0 %v7238, 32
      %v7249 = vpop.permute.xlu0 %7248
      %7250 = vrot.lane.b32.xlu0 %v7239, 32
      %v7251 = vpop.permute.xlu0 %7250
      %7252 = vrot.lane.b32.xlu0 %v7240, 32
      %v7253 = vpop.permute.xlu0 %7252
      %7254 = vrot.lane.b32.xlu0 %v7241, 32
      %v7255 = vpop.permute.xlu0 %7254
      %7256 = vrot.lane.b32.xlu0 %v7242, 32
      %v7257 = vpop.permute.xlu0 %7256
      %7258 = vrot.lane.b32.xlu0 %v7243, 32
      %v7259 = vpop.permute.xlu0 %7258
      %v7284 = vrot.slane %v7132, 2
      %v7285 = vrot.slane %v7133, 2
      %v7286 = vsel %vm1655, %v7284, %v7285
      %v7287 = vrot.slane %v7134, 2
      %v7288 = vrot.slane %v7135, 2
      %v7289 = vsel %vm1655, %v7287, %v7288
      %v7290 = vrot.slane %v7136, 2
      %v7291 = vrot.slane %v7137, 2
      %v7292 = vsel %vm1655, %v7290, %v7291
      %v7293 = vrot.slane %v7138, 2
      %v7294 = vrot.slane %v7139, 2
      %v7295 = vsel %vm1655, %v7293, %v7294
      %v7296 = vrot.slane %v7140, 2
      %v7297 = vrot.slane %v7141, 2
      %v7298 = vsel %vm1655, %v7296, %v7297
      %v7299 = vrot.slane %v7142, 2
      %v7300 = vrot.slane %v7143, 2
      %v7301 = vsel %vm1655, %v7299, %v7300
      %v7302 = vrot.slane %v7144, 2
      %v7303 = vrot.slane %v7145, 2
      %v7304 = vsel %vm1655, %v7302, %v7303
      %v7305 = vrot.slane %v7146, 2
      %v7306 = vrot.slane %v7147, 2
      %v7307 = vsel %vm1655, %v7305, %v7306
      %7308 = vrot.lane.b32.xlu0 %v7284, 64
      %v7309 = vpop.permute.xlu0 %7308
      %7310 = vrot.lane.b32.xlu0 %v7286, 64
      %v7311 = vpop.permute.xlu0 %7310
      %7312 = vrot.lane.b32.xlu0 %v7287, 64
      %v7313 = vpop.permute.xlu0 %7312
      %7314 = vrot.lane.b32.xlu0 %v7289, 64
      %v7315 = vpop.permute.xlu0 %7314
      %7316 = vrot.lane.b32.xlu0 %v7290, 64
      %v7317 = vpop.permute.xlu0 %7316
      %7318 = vrot.lane.b32.xlu0 %v7292, 64
      %v7319 = vpop.permute.xlu0 %7318
      %7320 = vrot.lane.b32.xlu0 %v7293, 64
      %v7321 = vpop.permute.xlu0 %7320
      %7322 = vrot.lane.b32.xlu0 %v7295, 64
      %v7323 = vpop.permute.xlu0 %7322
      %7324 = vrot.lane.b32.xlu0 %v7296, 64
      %v7325 = vpop.permute.xlu0 %7324
      %7326 = vrot.lane.b32.xlu0 %v7298, 64
      %v7327 = vpop.permute.xlu0 %7326
      %7328 = vrot.lane.b32.xlu0 %v7299, 64
      %v7329 = vpop.permute.xlu0 %7328
      %7330 = vrot.lane.b32.xlu0 %v7301, 64
      %v7331 = vpop.permute.xlu0 %7330
      %7332 = vrot.lane.b32.xlu0 %v7302, 64
      %v7333 = vpop.permute.xlu0 %7332
      %7334 = vrot.lane.b32.xlu0 %v7304, 64
      %v7335 = vpop.permute.xlu0 %7334
      %7336 = vrot.lane.b32.xlu0 %v7305, 64
      %v7337 = vpop.permute.xlu0 %7336
      %7338 = vrot.lane.b32.xlu0 %v7307, 64
      %v7339 = vpop.permute.xlu0 %7338
      %7372 = vrot.lane.b32.xlu0 %v7148, 96
      %v7373 = vpop.permute.xlu0 %7372
      %7374 = vrot.lane.b32.xlu0 %v7149, 96
      %v7375 = vpop.permute.xlu0 %7374
      %7376 = vrot.lane.b32.xlu0 %v7150, 96
      %v7377 = vpop.permute.xlu0 %7376
      %7378 = vrot.lane.b32.xlu0 %v7151, 96
      %v7379 = vpop.permute.xlu0 %7378
      %7380 = vrot.lane.b32.xlu0 %v7152, 96
      %v7381 = vpop.permute.xlu0 %7380
      %7382 = vrot.lane.b32.xlu0 %v7153, 96
      %v7383 = vpop.permute.xlu0 %7382
      %7384 = vrot.lane.b32.xlu0 %v7154, 96
      %v7385 = vpop.permute.xlu0 %7384
      %7386 = vrot.lane.b32.xlu0 %v7155, 96
      %v7387 = vpop.permute.xlu0 %7386
      %7388 = vrot.lane.b32.xlu0 %v7156, 96
      %v7389 = vpop.permute.xlu0 %7388
      %7390 = vrot.lane.b32.xlu0 %v7157, 96
      %v7391 = vpop.permute.xlu0 %7390
      %7392 = vrot.lane.b32.xlu0 %v7158, 96
      %v7393 = vpop.permute.xlu0 %7392
      %7394 = vrot.lane.b32.xlu0 %v7159, 96
      %v7395 = vpop.permute.xlu0 %7394
      %7396 = vrot.lane.b32.xlu0 %v7160, 96
      %v7397 = vpop.permute.xlu0 %7396
      %7398 = vrot.lane.b32.xlu0 %v7161, 96
      %v7399 = vpop.permute.xlu0 %7398
      %7400 = vrot.lane.b32.xlu0 %v7162, 96
      %v7401 = vpop.permute.xlu0 %7400
      %7402 = vrot.lane.b32.xlu0 %v7163, 96
      %v7403 = vpop.permute.xlu0 %7402
      %v7428 = vrot.slane %v7164, 1
      %v7429 = vrot.slane %v7165, 1
      %v7430 = vrot.slane %v7166, 1
      %v7431 = vrot.slane %v7167, 1
      %v7432 = vrot.slane %v7168, 1
      %v7433 = vrot.slane %v7169, 1
      %v7434 = vrot.slane %v7170, 1
      %v7435 = vrot.slane %v7171, 1
      %v7460 = vrot.slane %v7172, 2
      %v7461 = vrot.slane %v7173, 2
      %v7462 = vsel %vm1655, %v7460, %v7461
      %v7463 = vrot.slane %v7174, 2
      %v7464 = vrot.slane %v7175, 2
      %v7465 = vsel %vm1655, %v7463, %v7464
      %v7466 = vrot.slane %v7176, 2
      %v7467 = vrot.slane %v7177, 2
      %v7468 = vsel %vm1655, %v7466, %v7467
      %v7469 = vrot.slane %v7178, 2
      %v7470 = vrot.slane %v7179, 2
      %v7471 = vsel %vm1655, %v7469, %v7470
      %v7472 = vrot.slane %v7180, 2
      %v7473 = vrot.slane %v7181, 2
      %v7474 = vsel %vm1655, %v7472, %v7473
      %v7475 = vrot.slane %v7182, 2
      %v7476 = vrot.slane %v7183, 2
      %v7477 = vsel %vm1655, %v7475, %v7476
      %v7478 = vrot.slane %v7184, 2
      %v7479 = vrot.slane %v7185, 2
      %v7480 = vsel %vm1655, %v7478, %v7479
      %v7481 = vrot.slane %v7186, 2
      %v7482 = vrot.slane %v7187, 2
      %v7483 = vsel %vm1655, %v7481, %v7482
      %7484 = vrot.lane.b32.xlu0 %v7460, 32
      %v7485 = vpop.permute.xlu0 %7484
      %7486 = vrot.lane.b32.xlu0 %v7462, 32
      %v7487 = vpop.permute.xlu0 %7486
      %7488 = vrot.lane.b32.xlu0 %v7463, 32
      %v7489 = vpop.permute.xlu0 %7488
      %7490 = vrot.lane.b32.xlu0 %v7465, 32
      %v7491 = vpop.permute.xlu0 %7490
      %7492 = vrot.lane.b32.xlu0 %v7466, 32
      %v7493 = vpop.permute.xlu0 %7492
      %7494 = vrot.lane.b32.xlu0 %v7468, 32
      %v7495 = vpop.permute.xlu0 %7494
      %7496 = vrot.lane.b32.xlu0 %v7469, 32
      %v7497 = vpop.permute.xlu0 %7496
      %7498 = vrot.lane.b32.xlu0 %v7471, 32
      %v7499 = vpop.permute.xlu0 %7498
      %7500 = vrot.lane.b32.xlu0 %v7472, 32
      %v7501 = vpop.permute.xlu0 %7500
      %7502 = vrot.lane.b32.xlu0 %v7474, 32
      %v7503 = vpop.permute.xlu0 %7502
      %7504 = vrot.lane.b32.xlu0 %v7475, 32
      %v7505 = vpop.permute.xlu0 %7504
      %7506 = vrot.lane.b32.xlu0 %v7477, 32
      %v7507 = vpop.permute.xlu0 %7506
      %7508 = vrot.lane.b32.xlu0 %v7478, 32
      %v7509 = vpop.permute.xlu0 %7508
      %7510 = vrot.lane.b32.xlu0 %v7480, 32
      %v7511 = vpop.permute.xlu0 %7510
      %7512 = vrot.lane.b32.xlu0 %v7481, 32
      %v7513 = vpop.permute.xlu0 %7512
      %7514 = vrot.lane.b32.xlu0 %v7483, 32
      %v7515 = vpop.permute.xlu0 %7514
      %7548 = vrot.lane.b32.xlu0 %v7188, 64
      %v7549 = vpop.permute.xlu0 %7548
      %7550 = vrot.lane.b32.xlu0 %v7189, 64
      %v7551 = vpop.permute.xlu0 %7550
      %7552 = vrot.lane.b32.xlu0 %v7190, 64
      %v7553 = vpop.permute.xlu0 %7552
      %7554 = vrot.lane.b32.xlu0 %v7191, 64
      %v7555 = vpop.permute.xlu0 %7554
      %7556 = vrot.lane.b32.xlu0 %v7192, 64
      %v7557 = vpop.permute.xlu0 %7556
      %7558 = vrot.lane.b32.xlu0 %v7193, 64
      %v7559 = vpop.permute.xlu0 %7558
      %7560 = vrot.lane.b32.xlu0 %v7194, 64
      %v7561 = vpop.permute.xlu0 %7560
      %7562 = vrot.lane.b32.xlu0 %v7195, 64
      %v7563 = vpop.permute.xlu0 %7562
      %7564 = vrot.lane.b32.xlu0 %v7196, 64
      %v7565 = vpop.permute.xlu0 %7564
      %7566 = vrot.lane.b32.xlu0 %v7197, 64
      %v7567 = vpop.permute.xlu0 %7566
      %7568 = vrot.lane.b32.xlu0 %v7198, 64
      %v7569 = vpop.permute.xlu0 %7568
      %7570 = vrot.lane.b32.xlu0 %v7199, 64
      %v7571 = vpop.permute.xlu0 %7570
      %7572 = vrot.lane.b32.xlu0 %v7200, 64
      %v7573 = vpop.permute.xlu0 %7572
      %7574 = vrot.lane.b32.xlu0 %v7201, 64
      %v7575 = vpop.permute.xlu0 %7574
      %7576 = vrot.lane.b32.xlu0 %v7202, 64
      %v7577 = vpop.permute.xlu0 %7576
      %7578 = vrot.lane.b32.xlu0 %v7203, 64
      %v7579 = vpop.permute.xlu0 %7578
      %v7604 = vrot.slane %v7204, 1
      %v7605 = vrot.slane %v7205, 1
      %v7606 = vrot.slane %v7206, 1
      %v7607 = vrot.slane %v7207, 1
      %v7608 = vrot.slane %v7208, 1
      %v7609 = vrot.slane %v7209, 1
      %v7610 = vrot.slane %v7210, 1
      %v7611 = vrot.slane %v7211, 1
      %7612 = vrot.lane.b32.xlu0 %v7604, 96
      %v7613 = vpop.permute.xlu0 %7612
      %7614 = vrot.lane.b32.xlu0 %v7605, 96
      %v7615 = vpop.permute.xlu0 %7614
      %7616 = vrot.lane.b32.xlu0 %v7606, 96
      %v7617 = vpop.permute.xlu0 %7616
      %7618 = vrot.lane.b32.xlu0 %v7607, 96
      %v7619 = vpop.permute.xlu0 %7618
      %7620 = vrot.lane.b32.xlu0 %v7608, 96
      %v7621 = vpop.permute.xlu0 %7620
      %7622 = vrot.lane.b32.xlu0 %v7609, 96
      %v7623 = vpop.permute.xlu0 %7622
      %7624 = vrot.lane.b32.xlu0 %v7610, 96
      %v7625 = vpop.permute.xlu0 %7624
      %7626 = vrot.lane.b32.xlu0 %v7611, 96
      %v7627 = vpop.permute.xlu0 %7626
      %v7652 = vrot.slane %v7212, 2
      %v7653 = vrot.slane %v7213, 2
      %v7654 = vsel %vm1655, %v7652, %v7653
      %v7655 = vrot.slane %v7214, 2
      %v7656 = vrot.slane %v7215, 2
      %v7657 = vsel %vm1655, %v7655, %v7656
      %v7658 = vrot.slane %v7216, 2
      %v7659 = vrot.slane %v7217, 2
      %v7660 = vsel %vm1655, %v7658, %v7659
      %v7661 = vrot.slane %v7218, 2
      %v7662 = vrot.slane %v7219, 2
      %v7663 = vsel %vm1655, %v7661, %v7662
      %v7664 = vrot.slane %v7220, 2
      %v7665 = vrot.slane %v7221, 2
      %v7666 = vsel %vm1655, %v7664, %v7665
      %v7667 = vrot.slane %v7222, 2
      %v7668 = vrot.slane %v7223, 2
      %v7669 = vsel %vm1655, %v7667, %v7668
      %v7670 = vrot.slane %v7224, 2
      %v7671 = vrot.slane %v7225, 2
      %v7672 = vsel %vm1655, %v7670, %v7671
      %v7673 = vrot.slane %v7226, 2
      %v7674 = vrot.slane %v7227, 2
      %v7675 = vsel %vm1655, %v7673, %v7674
      %v7676 = vsel %vm2194, %v7108, %v7245
      %v7677 = vsel %vm2194, %v7109, %v7245
      %v7678 = vsel %vm2194, %v7110, %v7247
      %v7679 = vsel %vm2194, %v7111, %v7247
      %v7680 = vsel %vm2194, %v7112, %v7249
      %v7681 = vsel %vm2194, %v7113, %v7249
      %v7682 = vsel %vm2194, %v7114, %v7251
      %v7683 = vsel %vm2194, %v7115, %v7251
      %v7684 = vsel %vm2194, %v7116, %v7253
      %v7685 = vsel %vm2194, %v7117, %v7253
      %v7686 = vsel %vm2194, %v7118, %v7255
      %v7687 = vsel %vm2194, %v7119, %v7255
      %v7688 = vsel %vm2194, %v7120, %v7257
      %v7689 = vsel %vm2194, %v7121, %v7257
      %v7690 = vsel %vm2194, %v7122, %v7259
      %v7691 = vsel %vm2194, %v7123, %v7259
      %v7692 = vsel %vm3062, %v7676, %v7309
      %v7693 = vsel %vm3062, %v7677, %v7311
      %v7694 = vsel %vm3062, %v7678, %v7313
      %v7695 = vsel %vm3062, %v7679, %v7315
      %v7696 = vsel %vm3062, %v7680, %v7317
      %v7697 = vsel %vm3062, %v7681, %v7319
      %v7698 = vsel %vm3062, %v7682, %v7321
      %v7699 = vsel %vm3062, %v7683, %v7323
      %v7700 = vsel %vm3062, %v7684, %v7325
      %v7701 = vsel %vm3062, %v7685, %v7327
      %v7702 = vsel %vm3062, %v7686, %v7329
      %v7703 = vsel %vm3062, %v7687, %v7331
      %v7704 = vsel %vm3062, %v7688, %v7333
      %v7705 = vsel %vm3062, %v7689, %v7335
      %v7706 = vsel %vm3062, %v7690, %v7337
      %v7707 = vsel %vm3062, %v7691, %v7339
      %v7708 = vsel %vm5963, %v7692, %v7373
      %v7709 = vsel %vm5963, %v7693, %v7375
      %v7710 = vsel %vm5963, %v7694, %v7377
      %v7711 = vsel %vm5963, %v7695, %v7379
      %v7712 = vsel %vm5963, %v7696, %v7381
      %v7713 = vsel %vm5963, %v7697, %v7383
      %v7714 = vsel %vm5963, %v7698, %v7385
      %v7715 = vsel %vm5963, %v7699, %v7387
      %v7716 = vsel %vm5963, %v7700, %v7389
      %v7717 = vsel %vm5963, %v7701, %v7391
      %v7718 = vsel %vm5963, %v7702, %v7393
      %v7719 = vsel %vm5963, %v7703, %v7395
      %v7720 = vsel %vm5963, %v7704, %v7397
      %v7721 = vsel %vm5963, %v7705, %v7399
      %v7722 = vsel %vm5963, %v7706, %v7401
      %v7723 = vsel %vm5963, %v7707, %v7403
      %v7724 = vsel %vm2194, %v7428, %v7485
      %v7725 = vsel %vm2194, %v7428, %v7487
      %v7726 = vsel %vm2194, %v7429, %v7489
      %v7727 = vsel %vm2194, %v7429, %v7491
      %v7728 = vsel %vm2194, %v7430, %v7493
      %v7729 = vsel %vm2194, %v7430, %v7495
      %v7730 = vsel %vm2194, %v7431, %v7497
      %v7731 = vsel %vm2194, %v7431, %v7499
      %v7732 = vsel %vm2194, %v7432, %v7501
      %v7733 = vsel %vm2194, %v7432, %v7503
      %v7734 = vsel %vm2194, %v7433, %v7505
      %v7735 = vsel %vm2194, %v7433, %v7507
      %v7736 = vsel %vm2194, %v7434, %v7509
      %v7737 = vsel %vm2194, %v7434, %v7511
      %v7738 = vsel %vm2194, %v7435, %v7513
      %v7739 = vsel %vm2194, %v7435, %v7515
      %v7740 = vsel %vm3062, %v7724, %v7549
      %v7741 = vsel %vm3062, %v7725, %v7551
      %v7742 = vsel %vm3062, %v7726, %v7553
      %v7743 = vsel %vm3062, %v7727, %v7555
      %v7744 = vsel %vm3062, %v7728, %v7557
      %v7745 = vsel %vm3062, %v7729, %v7559
      %v7746 = vsel %vm3062, %v7730, %v7561
      %v7747 = vsel %vm3062, %v7731, %v7563
      %v7748 = vsel %vm3062, %v7732, %v7565
      %v7749 = vsel %vm3062, %v7733, %v7567
      %v7750 = vsel %vm3062, %v7734, %v7569
      %v7751 = vsel %vm3062, %v7735, %v7571
      %v7752 = vsel %vm3062, %v7736, %v7573
      %v7753 = vsel %vm3062, %v7737, %v7575
      %v7754 = vsel %vm3062, %v7738, %v7577
      %v7755 = vsel %vm3062, %v7739, %v7579
      %v7756 = vsel %vm5963, %v7740, %v7613
      %v7757 = vsel %vm5963, %v7741, %v7613
      %v7758 = vsel %vm5963, %v7742, %v7615
      %v7759 = vsel %vm5963, %v7743, %v7615
      %v7760 = vsel %vm5963, %v7744, %v7617
      %v7761 = vsel %vm5963, %v7745, %v7617
      %v7762 = vsel %vm5963, %v7746, %v7619
      %v7763 = vsel %vm5963, %v7747, %v7619
      %v7764 = vsel %vm5963, %v7748, %v7621
      %v7765 = vsel %vm5963, %v7749, %v7621
      %v7766 = vsel %vm5963, %v7750, %v7623
      %v7767 = vsel %vm5963, %v7751, %v7623
      %v7768 = vsel %vm5963, %v7752, %v7625
      %v7769 = vsel %vm5963, %v7753, %v7625
      %v7770 = vsel %vm5963, %v7754, %v7627
      %v7771 = vsel %vm5963, %v7755, %v7627
      %v7804 = vrot.slane %v7708, 7
      %v7805 = vrot.slane %v7709, 7
      %v7806 = vsel %vm3399, %v7804, %v7805
      %v7807 = vrot.slane %v7756, 7
      %v7808 = vrot.slane %v7757, 7
      %v7809 = vsel %vm3399, %v7807, %v7808
      %v7810 = vrot.slane %v7652, 7
      %v7811 = vrot.slane %v7654, 7
      %v7812 = vsel %vm3399, %v7810, %v7811
      %v7813 = vrot.slane %v7710, 7
      %v7814 = vrot.slane %v7711, 7
      %v7815 = vsel %vm3399, %v7813, %v7814
      %v7816 = vrot.slane %v7758, 7
      %v7817 = vrot.slane %v7759, 7
      %v7818 = vsel %vm3399, %v7816, %v7817
      %v7819 = vrot.slane %v7655, 7
      %v7820 = vrot.slane %v7657, 7
      %v7821 = vsel %vm3399, %v7819, %v7820
      %v7822 = vrot.slane %v7712, 7
      %v7823 = vrot.slane %v7713, 7
      %v7824 = vsel %vm3399, %v7822, %v7823
      %v7825 = vrot.slane %v7760, 7
      %v7826 = vrot.slane %v7761, 7
      %v7827 = vsel %vm3399, %v7825, %v7826
      %v7828 = vrot.slane %v7658, 7
      %v7829 = vrot.slane %v7660, 7
      %v7830 = vsel %vm3399, %v7828, %v7829
      %v7831 = vrot.slane %v7714, 7
      %v7832 = vrot.slane %v7715, 7
      %v7833 = vsel %vm3399, %v7831, %v7832
      %v7834 = vrot.slane %v7762, 7
      %v7835 = vrot.slane %v7763, 7
      %v7836 = vsel %vm3399, %v7834, %v7835
      %v7837 = vrot.slane %v7661, 7
      %v7838 = vrot.slane %v7663, 7
      %v7839 = vsel %vm3399, %v7837, %v7838
      %v7840 = vrot.slane %v7716, 7
      %v7841 = vrot.slane %v7717, 7
      %v7842 = vsel %vm3399, %v7840, %v7841
      %v7843 = vrot.slane %v7764, 7
      %v7844 = vrot.slane %v7765, 7
      %v7845 = vsel %vm3399, %v7843, %v7844
      %v7846 = vrot.slane %v7664, 7
      %v7847 = vrot.slane %v7666, 7
      %v7848 = vsel %vm3399, %v7846, %v7847
      %v7849 = vrot.slane %v7718, 7
      %v7850 = vrot.slane %v7719, 7
      %v7851 = vsel %vm3399, %v7849, %v7850
      %v7852 = vrot.slane %v7766, 7
      %v7853 = vrot.slane %v7767, 7
      %v7854 = vsel %vm3399, %v7852, %v7853
      %v7855 = vrot.slane %v7667, 7
      %v7856 = vrot.slane %v7669, 7
      %v7857 = vsel %vm3399, %v7855, %v7856
      %v7858 = vrot.slane %v7720, 7
      %v7859 = vrot.slane %v7721, 7
      %v7860 = vsel %vm3399, %v7858, %v7859
      %v7861 = vrot.slane %v7768, 7
      %v7862 = vrot.slane %v7769, 7
      %v7863 = vsel %vm3399, %v7861, %v7862
      %v7864 = vrot.slane %v7670, 7
      %v7865 = vrot.slane %v7672, 7
      %v7866 = vsel %vm3399, %v7864, %v7865
      %v7867 = vrot.slane %v7722, 7
      %v7868 = vrot.slane %v7723, 7
      %v7869 = vsel %vm3399, %v7867, %v7868
      %v7870 = vrot.slane %v7770, 7
      %v7871 = vrot.slane %v7771, 7
      %v7872 = vsel %vm3399, %v7870, %v7871
      %v7873 = vrot.slane %v7673, 7
      %v7874 = vrot.slane %v7675, 7
      %v7875 = vsel %vm3399, %v7873, %v7874
      %s7892 = scalar_lea.vmem %s5, 288
      %v7893 = vld [vmem:[%s7892] sm:$0xff]
      %v7894 = vld [vmem:[%s7892 + $0x8] sm:$0xff]
      %v7895 = vld [vmem:[%s7892 + $0x10] sm:$0xff]
      %v7896 = vld [vmem:[%s7892 + $0x18] sm:$0xff]
      %v7897 = vld [vmem:[%s7892 + $0x20] sm:$0xff]
      %v7898 = vld [vmem:[%s7892 + $0x28] sm:$0xff]
      %v7899 = vld [vmem:[%s7892 + $0x30] sm:$0xff]
      %v7900 = vld [vmem:[%s7892 + $0x38] sm:$0xff]
      %v7901 = vld [vmem:[%s7892 + $0x40] sm:$0xff]
      %v7902 = vld [vmem:[%s7892 + $0x48] sm:$0xff]
      %v7903 = vld [vmem:[%s7892 + $0x50] sm:$0xff]
      %v7904 = vld [vmem:[%s7892 + $0x58] sm:$0xff]
      %v7905 = vld [vmem:[%s7892 + $0x60] sm:$0xff]
      %v7906 = vld [vmem:[%s7892 + $0x68] sm:$0xff]
      %v7907 = vld [vmem:[%s7892 + $0x70] sm:$0xff]
      %v7908 = vld [vmem:[%s7892 + $0x78] sm:$0xff]
      %v7909 = vld [vmem:[%s7892 + $0x80] sm:$0xff]
      %v7910 = vld [vmem:[%s7892 + $0x88] sm:$0xff]
      %v7911 = vld [vmem:[%s7892 + $0x90] sm:$0xff]
      %v7912 = vld [vmem:[%s7892 + $0x98] sm:$0xff]
      %v7913 = vld [vmem:[%s7892 + $0xa0] sm:$0xff]
      %v7914 = vld [vmem:[%s7892 + $0xa8] sm:$0xff]
      %v7915 = vld [vmem:[%s7892 + $0xb0] sm:$0xff]
      %v7916 = vld [vmem:[%s7892 + $0xb8] sm:$0xff]
      %v7917 = vld [vmem:[%s7892 + $0xc0] sm:$0xff]
      %v7918 = vld [vmem:[%s7892 + $0xc8] sm:$0xff]
      %v7919 = vld [vmem:[%s7892 + $0xd0] sm:$0xff]
      %v7920 = vld [vmem:[%s7892 + $0xd8] sm:$0xff]
      %v7921 = vld [vmem:[%s7892 + $0xe0] sm:$0xff]
      %v7922 = vld [vmem:[%s7892 + $0xe8] sm:$0xff]
      %v7923 = vld [vmem:[%s7892 + $0xf0] sm:$0xff]
      %v7924 = vld [vmem:[%s7892 + $0xf8] sm:$0xff]
      %v7925 = vld [vmem:[%s7892 + $0x100] sm:$0xff]
      %v7926 = vld [vmem:[%s7892 + $0x108] sm:$0xff]
      %v7927 = vld [vmem:[%s7892 + $0x110] sm:$0xff]
      %v7928 = vld [vmem:[%s7892 + $0x118] sm:$0xff]
      %s7929 = scalar_lea.vmem %s6, 1
      %v7930 = vld [vmem:[%s7929] sm:$0x1]
      %v7932 = vlaneseq
      %v7933 = vshrl.u32 %v7932, 7
      %v7934 = vsub.s32 0, %v7933
      %v7935 = vrot.slane %v7930, %v7934
      %v7937 = vsel %vm2194, %v7812, 0
      %v7939 = vsel %vm2194, %v7821, 0
      %v7941 = vsel %vm2194, %v7830, 0
      %v7943 = vsel %vm2194, %v7839, 0
      %v7945 = vsel %vm2194, %v7848, 0
      %v7947 = vsel %vm2194, %v7857, 0
      %v7949 = vsel %vm2194, %v7866, 0
      %v7951 = vsel %vm2194, %v7875, 0
      %7953 = vmatprep.subr.mxu0 0.0
      %7954 = vmatpush1.msra.mxu0 %v7893
      %7955 = vmatprep.subr.mxu0 0.0
      %7956 = vmatpush1.msra.mxu0 %v7894
      %7957 = vmatprep.subr.mxu0 0.0
      %7958 = vmatpush1.msra.mxu0 %v7895
      %7959 = vmatprep.subr.mxu0 0.0
      %7960 = vmatpush1.msra.mxu0 %v7896
      %7961 = vmatprep.subr.mxu0 0.0
      %7962 = vmatpush1.msra.mxu0 %v7897
      %7963 = vmatprep.subr.mxu0 0.0
      %7964 = vmatpush1.msra.mxu0 %v7898
      %7965 = vmatprep.subr.mxu0 0.0
      %7966 = vmatpush1.msra.mxu0 %v7899
      %7967 = vmatprep.subr.mxu0 0.0
      %7968 = vmatpush1.msra.mxu0 %v7900
      %7969 = vmatprep.subr.mxu0 0.0
      %7970 = vmatpush1.msra.mxu0 %v7901
      %7971 = vmatprep.subr.mxu0 0.0
      %7972 = vmatpush1.msra.mxu0 %v7902
      %7973 = vmatprep.subr.mxu0 0.0
      %7974 = vmatpush1.msra.mxu0 %v7903
      %7975 = vmatprep.subr.mxu0 0.0
      %7976 = vmatpush1.msra.mxu0 %v7904
      %7977 = vmatprep.subr.mxu0 0.0
      %7978 = vmatpush1.msra.mxu0 %v7905
      %7979 = vmatprep.subr.mxu0 0.0
      %7980 = vmatpush1.msra.mxu0 %v7906
      %7981 = vmatprep.subr.mxu0 0.0
      %7982 = vmatpush1.msra.mxu0 %v7907
      %7983 = vmatprep.subr.mxu0 0.0
      %7984 = vmatpush1.msra.mxu0 %v7908
      %7985 = vmatprep.subr.mxu0 0.0
      %7986 = vmatpush1.msra.mxu0 %v7909
      %7987 = vmatprep.subr.mxu0 0.0
      %7988 = vmatpush1.msra.mxu0 %v7910
      %7989 = vmatprep.subr.mxu0 0.0
      %7990 = vmatpush1.msra.mxu0 %v7911
      %7991 = vmatprep.subr.mxu0 0.0
      %7992 = vmatpush1.msra.mxu0 %v7912
      %7993 = vmatprep.subr.mxu0 0.0
      %7994 = vmatpush1.msra.mxu0 %v7913
      %7995 = vmatprep.subr.mxu0 0.0
      %7996 = vmatpush1.msra.mxu0 %v7914
      %7997 = vmatprep.subr.mxu0 0.0
      %7998 = vmatpush1.msra.mxu0 %v7915
      %7999 = vmatprep.subr.mxu0 0.0
      %8000 = vmatpush1.msra.mxu0 %v7916
      %8001 = vmatprep.subr.mxu0 0.0
      %8002 = vmatpush1.msra.mxu0 %v7917
      %8003 = vmatprep.subr.mxu0 0.0
      %8004 = vmatpush1.msra.mxu0 %v7918
      %8005 = vmatprep.subr.mxu0 0.0
      %8006 = vmatpush1.msra.mxu0 %v7919
      %8007 = vmatprep.subr.mxu0 0.0
      %8008 = vmatpush1.msra.mxu0 %v7920
      %8009 = vmatprep.subr.mxu0 0.0
      %8010 = vmatpush1.msra.mxu0 %v7921
      %8011 = vmatprep.subr.mxu0 0.0
      %8012 = vmatpush1.msra.mxu0 %v7922
      %8013 = vmatprep.subr.mxu0 0.0
      %8014 = vmatpush1.msra.mxu0 %v7923
      %8015 = vmatprep.subr.mxu0 0.0
      %8016 = vmatpush1.msra.mxu0 %v7924
      %8017 = vmatprep.mubr.f32.mxu0 %v7809
      %8018 = vmatmul.mubr.f32.gmra.mrb[0].mxu0 %v7806
      %v8019 = vpop.f32.mrb[0].mxu0
      %v8020 = vadd.f32 %v7935, %v8019
      %v8021 = vpop.f32.mrb[0].mxu0
      %8022 = vmatprep.mubr.f32.mxu0 %v7818
      %8023 = vmatmul.mubr.f32.gmra.mrb[0].mxu0 %v7815
      %v8024 = vpop.f32.mrb[0].mxu0
      %v8025 = vadd.f32 %v7935, %v8024
      %v8026 = vpop.f32.mrb[0].mxu0
      %8027 = vmatprep.mubr.f32.mxu0 %v7827
      %8028 = vmatmul.mubr.f32.gmra.mrb[0].mxu0 %v7824
      %v8029 = vpop.f32.mrb[0].mxu0
      %v8030 = vadd.f32 %v7935, %v8029
      %v8031 = vpop.f32.mrb[0].mxu0
      %8032 = vmatprep.mubr.f32.mxu0 %v7836
      %8033 = vmatmul.mubr.f32.gmra.mrb[0].mxu0 %v7833
      %v8034 = vpop.f32.mrb[0].mxu0
      %v8035 = vadd.f32 %v7935, %v8034
      %v8036 = vpop.f32.mrb[0].mxu0
      %8037 = vmatprep.mubr.f32.mxu0 %v7845
      %8038 = vmatmul.mubr.f32.gmra.mrb[0].mxu0 %v7842
      %v8039 = vpop.f32.mrb[0].mxu0
      %v8040 = vadd.f32 %v7935, %v8039
      %v8041 = vpop.f32.mrb[0].mxu0
      %8042 = vmatprep.mubr.f32.mxu0 %v7854
      %8043 = vmatmul.mubr.f32.gmra.mrb[0].mxu0 %v7851
      %v8044 = vpop.f32.mrb[0].mxu0
      %v8045 = vadd.f32 %v7935, %v8044
      %v8046 = vpop.f32.mrb[0].mxu0
      %8047 = vmatprep.mubr.f32.mxu0 %v7863
      %8048 = vmatmul.mubr.f32.gmra.mrb[0].mxu0 %v7860
      %v8049 = vpop.f32.mrb[0].mxu0
      %v8050 = vadd.f32 %v7935, %v8049
      %v8051 = vpop.f32.mrb[0].mxu0
      %8052 = vmatprep.mubr.f32.mxu0 %v7872
      %8053 = vmatmul.mubr.f32.gmra.mrb[0].mxu0 %v7869
      %v8054 = vpop.f32.mrb[0].mxu0
      %v8055 = vadd.f32 %v7935, %v8054
      %v8056 = vpop.f32.mrb[0].mxu0
      %8057 = vdwg.mxu0
      %8058 = vmatprep.subr.mxu0 0.0
      %8059 = vmatpush1.msra.mxu0 %v7925
      %8060 = vmatprep.subr.mxu0 0.0
      %8061 = vmatpush1.msra.mxu0 %v7926
      %8062 = vmatprep.subr.mxu0 0.0
      %8063 = vmatpush1.msra.mxu0 %v7927
      %8064 = vmatprep.subr.mxu0 0.0
      %8065 = vmatpush1.msra.mxu0 %v7928
      %8066 = vmatprep.subr.mxu0 0.0
      %8067 = vmatpush1.msra.mxu0 0.0
      %8068 = vmatprep.subr.mxu0 0.0
      %8069 = vmatpush1.msra.mxu0 0.0
      %8070 = vmatprep.subr.mxu0 0.0
      %8071 = vmatpush1.msra.mxu0 0.0
      %8072 = vmatprep.subr.mxu0 0.0
      %8073 = vmatpush1.msra.mxu0 0.0
      %8074 = vmatprep.subr.mxu0 0.0
      %8075 = vmatpush1.msra.mxu0 0.0
      %8076 = vmatprep.subr.mxu0 0.0
      %8077 = vmatpush1.msra.mxu0 0.0
      %8078 = vmatprep.subr.mxu0 0.0
      %8079 = vmatpush1.msra.mxu0 0.0
      %8080 = vmatprep.subr.mxu0 0.0
      %8081 = vmatpush1.msra.mxu0 0.0
      %8082 = vmatprep.subr.mxu0 0.0
      %8083 = vmatpush1.msra.mxu0 0.0
      %8084 = vmatprep.subr.mxu0 0.0
      %8085 = vmatpush1.msra.mxu0 0.0
      %8086 = vmatprep.subr.mxu0 0.0
      %8087 = vmatpush1.msra.mxu0 0.0
      %8088 = vmatprep.subr.mxu0 0.0
      %8089 = vmatpush1.msra.mxu0 0.0
      %8090 = vmatprep.subr.mxu0 0.0
      %8091 = vmatpush1.msra.mxu0 0.0
      %8092 = vmatprep.subr.mxu0 0.0
      %8093 = vmatpush1.msra.mxu0 0.0
      %8094 = vmatprep.subr.mxu0 0.0
      %8095 = vmatpush1.msra.mxu0 0.0
      %8096 = vmatprep.subr.mxu0 0.0
      %8097 = vmatpush1.msra.mxu0 0.0
      %8098 = vmatprep.subr.mxu0 0.0
      %8099 = vmatpush1.msra.mxu0 0.0
      %8100 = vmatprep.subr.mxu0 0.0
      %8101 = vmatpush1.msra.mxu0 0.0
      %8102 = vmatprep.subr.mxu0 0.0
      %8103 = vmatpush1.msra.mxu0 0.0
      %8104 = vmatprep.subr.mxu0 0.0
      %8105 = vmatpush1.msra.mxu0 0.0
      %8106 = vmatprep.subr.mxu0 0.0
      %8107 = vmatpush1.msra.mxu0 0.0
      %8108 = vmatprep.subr.mxu0 0.0
      %8109 = vmatpush1.msra.mxu0 0.0
      %8110 = vmatprep.subr.mxu0 0.0
      %8111 = vmatpush1.msra.mxu0 0.0
      %8112 = vmatprep.subr.mxu0 0.0
      %8113 = vmatpush1.msra.mxu0 0.0
      %8114 = vmatprep.subr.mxu0 0.0
      %8115 = vmatpush1.msra.mxu0 0.0
      %8116 = vmatprep.subr.mxu0 0.0
      %8117 = vmatpush1.msra.mxu0 0.0
      %8118 = vmatprep.subr.mxu0 0.0
      %8119 = vmatpush1.msra.mxu0 0.0
      %8120 = vmatprep.subr.mxu0 0.0
      %8121 = vmatpush1.msra.mxu0 0.0
      %8122 = vmatprep.mubr.f32.mxu0 0.0
      %8123 = vmatmul.mubr.f32.gmra.mrb[0].mxu0 %v7937
      %v8124 = vpop.f32.mrb[0].mxu0
      %v8125 = vadd.f32 %v8020, %v8124
      %v8126 = vpop.f32.mrb[0].mxu0
      %8127 = vmatprep.mubr.f32.mxu0 0.0
      %8128 = vmatmul.mubr.f32.gmra.mrb[0].mxu0 %v7939
      %v8129 = vpop.f32.mrb[0].mxu0
      %v8130 = vadd.f32 %v8025, %v8129
      %v8131 = vpop.f32.mrb[0].mxu0
      %8132 = vmatprep.mubr.f32.mxu0 0.0
      %8133 = vmatmul.mubr.f32.gmra.mrb[0].mxu0 %v7941
      %v8134 = vpop.f32.mrb[0].mxu0
      %v8135 = vadd.f32 %v8030, %v8134
      %v8136 = vpop.f32.mrb[0].mxu0
      %8137 = vmatprep.mubr.f32.mxu0 0.0
      %8138 = vmatmul.mubr.f32.gmra.mrb[0].mxu0 %v7943
      %v8139 = vpop.f32.mrb[0].mxu0
      %v8140 = vadd.f32 %v8035, %v8139
      %v8141 = vpop.f32.mrb[0].mxu0
      %8142 = vmatprep.mubr.f32.mxu0 0.0
      %8143 = vmatmul.mubr.f32.gmra.mrb[0].mxu0 %v7945
      %v8144 = vpop.f32.mrb[0].mxu0
      %v8145 = vadd.f32 %v8040, %v8144
      %v8146 = vpop.f32.mrb[0].mxu0
      %8147 = vmatprep.mubr.f32.mxu0 0.0
      %8148 = vmatmul.mubr.f32.gmra.mrb[0].mxu0 %v7947
      %v8149 = vpop.f32.mrb[0].mxu0
      %v8150 = vadd.f32 %v8045, %v8149
      %v8151 = vpop.f32.mrb[0].mxu0
      %8152 = vmatprep.mubr.f32.mxu0 0.0
      %8153 = vmatmul.mubr.f32.gmra.mrb[0].mxu0 %v7949
      %v8154 = vpop.f32.mrb[0].mxu0
      %v8155 = vadd.f32 %v8050, %v8154
      %v8156 = vpop.f32.mrb[0].mxu0
      %8157 = vmatprep.mubr.f32.mxu0 0.0
      %8158 = vmatmul.mubr.f32.gmra.mrb[0].mxu0 %v7951
      %v8159 = vpop.f32.mrb[0].mxu0
      %v8160 = vadd.f32 %v8055, %v8159
      %v8161 = vpop.f32.mrb[0].mxu0
      %8162 = vdwg.mxu0
      %v8163 = vmax.f32 %v8125, 0.0
      %v8164 = vmax.f32 %v8130, 0.0
      %v8165 = vmax.f32 %v8135, 0.0
      %v8166 = vmax.f32 %v8140, 0.0
      %v8167 = vmax.f32 %v8145, 0.0
      %v8168 = vmax.f32 %v8150, 0.0
      %v8169 = vmax.f32 %v8155, 0.0
      %v8170 = vmax.f32 %v8160, 0.0
      %8171 = vst.msk [vmem:[%s1093 + $0x18] sm:$0xff] %vm2194, %v8163
      %8172 = vst.msk [vmem:[%s1093 + $0x60] sm:$0xff] %vm2194, %v8164
      %8173 = vst.msk [vmem:[%s1093 + $0xa8] sm:$0xff] %vm2194, %v8165
      %8174 = vst.msk [vmem:[%s1093 + $0xf0] sm:$0xff] %vm2194, %v8166
      %8175 = vst.msk [vmem:[%s1093 + $0x138] sm:$0xff] %vm2194, %v8167
      %8176 = vst.msk [vmem:[%s1093 + $0x180] sm:$0xff] %vm2194, %v8168
      %8177 = vst.msk [vmem:[%s1093 + $0x1c8] sm:$0xff] %vm2194, %v8169
      %8178 = vst.msk [vmem:[%s1093 + $0x210] sm:$0xff] %vm2194, %v8170
      %v8179 = vld [vmem:[#allocation2] sm:$0x80]
      %v8180 = vld [vmem:[#allocation2 + $0x18] sm:$0x7f]
      %v8181 = vld [vmem:[#allocation2 + $0x48] sm:$0x80]
      %v8182 = vld [vmem:[#allocation2 + $0x60] sm:$0x7f]
      %v8183 = vld [vmem:[#allocation2 + $0x90] sm:$0x80]
      %v8184 = vld [vmem:[#allocation2 + $0xa8] sm:$0x7f]
      %v8185 = vld [vmem:[#allocation2 + $0xd8] sm:$0x80]
      %v8186 = vld [vmem:[#allocation2 + $0xf0] sm:$0x7f]
      %v8187 = vld [vmem:[#allocation2 + $0x120] sm:$0x80]
      %v8188 = vld [vmem:[#allocation2 + $0x138] sm:$0x7f]
      %v8189 = vld [vmem:[#allocation2 + $0x168] sm:$0x80]
      %v8190 = vld [vmem:[#allocation2 + $0x180] sm:$0x7f]
      %v8191 = vld [vmem:[#allocation2 + $0x1b0] sm:$0x80]
      %v8192 = vld [vmem:[#allocation2 + $0x1c8] sm:$0x7f]
      %v8193 = vld [vmem:[#allocation2 + $0x1f8] sm:$0x80]
      %v8194 = vld [vmem:[#allocation2 + $0x210] sm:$0x7f]
      %v8195 = vld [vmem:[#allocation2 + $0x18] sm:$0xff]
      %v8196 = vld [vmem:[#allocation2 + $0x60] sm:$0xff]
      %v8197 = vld [vmem:[#allocation2 + $0xa8] sm:$0xff]
      %v8198 = vld [vmem:[#allocation2 + $0xf0] sm:$0xff]
      %v8199 = vld [vmem:[#allocation2 + $0x138] sm:$0xff]
      %v8200 = vld [vmem:[#allocation2 + $0x180] sm:$0xff]
      %v8201 = vld [vmem:[#allocation2 + $0x1c8] sm:$0xff]
      %v8202 = vld [vmem:[#allocation2 + $0x210] sm:$0xff]
      %v8203 = vld [vmem:[#allocation2 + $0x18] sm:$0xfe]
      %v8204 = vld [vmem:[#allocation2 + $0x30] sm:$0x1]
      %v8205 = vld [vmem:[#allocation2 + $0x60] sm:$0xfe]
      %v8206 = vld [vmem:[#allocation2 + $0x78] sm:$0x1]
      %v8207 = vld [vmem:[#allocation2 + $0xa8] sm:$0xfe]
      %v8208 = vld [vmem:[#allocation2 + $0xc0] sm:$0x1]
      %v8209 = vld [vmem:[#allocation2 + $0xf0] sm:$0xfe]
      %v8210 = vld [vmem:[#allocation2 + $0x108] sm:$0x1]
      %v8211 = vld [vmem:[#allocation2 + $0x138] sm:$0xfe]
      %v8212 = vld [vmem:[#allocation2 + $0x150] sm:$0x1]
      %v8213 = vld [vmem:[#allocation2 + $0x180] sm:$0xfe]
      %v8214 = vld [vmem:[#allocation2 + $0x198] sm:$0x1]
      %v8215 = vld [vmem:[#allocation2 + $0x1c8] sm:$0xfe]
      %v8216 = vld [vmem:[#allocation2 + $0x1e0] sm:$0x1]
      %v8217 = vld [vmem:[#allocation2 + $0x210] sm:$0xfe]
      %v8218 = vld [vmem:[#allocation2 + $0x228] sm:$0x1]
      %v8219 = vld [vmem:[%s1093] sm:$0x80]
      %v8220 = vld [vmem:[%s1093 + $0x18] sm:$0x7f]
      %v8221 = vld [vmem:[%s1093 + $0x48] sm:$0x80]
      %v8222 = vld [vmem:[%s1093 + $0x60] sm:$0x7f]
      %v8223 = vld [vmem:[%s1093 + $0x90] sm:$0x80]
      %v8224 = vld [vmem:[%s1093 + $0xa8] sm:$0x7f]
      %v8225 = vld [vmem:[%s1093 + $0xd8] sm:$0x80]
      %v8226 = vld [vmem:[%s1093 + $0xf0] sm:$0x7f]
      %v8227 = vld [vmem:[%s1093 + $0x120] sm:$0x80]
      %v8228 = vld [vmem:[%s1093 + $0x138] sm:$0x7f]
      %v8229 = vld [vmem:[%s1093 + $0x168] sm:$0x80]
      %v8230 = vld [vmem:[%s1093 + $0x180] sm:$0x7f]
      %v8231 = vld [vmem:[%s1093 + $0x1b0] sm:$0x80]
      %v8232 = vld [vmem:[%s1093 + $0x1c8] sm:$0x7f]
      %v8233 = vld [vmem:[%s1093 + $0x1f8] sm:$0x80]
      %v8234 = vld [vmem:[%s1093 + $0x210] sm:$0x7f]
      %v8235 = vld [vmem:[%s1093 + $0x18] sm:$0xff]
      %v8236 = vld [vmem:[%s1093 + $0x60] sm:$0xff]
      %v8237 = vld [vmem:[%s1093 + $0xa8] sm:$0xff]
      %v8238 = vld [vmem:[%s1093 + $0xf0] sm:$0xff]
      %v8239 = vld [vmem:[%s1093 + $0x138] sm:$0xff]
      %v8240 = vld [vmem:[%s1093 + $0x180] sm:$0xff]
      %v8241 = vld [vmem:[%s1093 + $0x1c8] sm:$0xff]
      %v8242 = vld [vmem:[%s1093 + $0x210] sm:$0xff]
      %v8243 = vld [vmem:[%s1093 + $0x18] sm:$0xfe]
      %v8244 = vld [vmem:[%s1093 + $0x30] sm:$0x1]
      %v8245 = vld [vmem:[%s1093 + $0x60] sm:$0xfe]
      %v8246 = vld [vmem:[%s1093 + $0x78] sm:$0x1]
      %v8247 = vld [vmem:[%s1093 + $0xa8] sm:$0xfe]
      %v8248 = vld [vmem:[%s1093 + $0xc0] sm:$0x1]
      %v8249 = vld [vmem:[%s1093 + $0xf0] sm:$0xfe]
      %v8250 = vld [vmem:[%s1093 + $0x108] sm:$0x1]
      %v8251 = vld [vmem:[%s1093 + $0x138] sm:$0xfe]
      %v8252 = vld [vmem:[%s1093 + $0x150] sm:$0x1]
      %v8253 = vld [vmem:[%s1093 + $0x180] sm:$0xfe]
      %v8254 = vld [vmem:[%s1093 + $0x198] sm:$0x1]
      %v8255 = vld [vmem:[%s1093 + $0x1c8] sm:$0xfe]
      %v8256 = vld [vmem:[%s1093 + $0x1e0] sm:$0x1]
      %v8257 = vld [vmem:[%s1093 + $0x210] sm:$0xfe]
      %v8258 = vld [vmem:[%s1093 + $0x228] sm:$0x1]
      %v8259 = vld [vmem:[%s1358] sm:$0x80]
      %v8260 = vld [vmem:[%s1358 + $0x18] sm:$0x7f]
      %v8261 = vld [vmem:[%s1358 + $0x48] sm:$0x80]
      %v8262 = vld [vmem:[%s1358 + $0x60] sm:$0x7f]
      %v8263 = vld [vmem:[%s1358 + $0x90] sm:$0x80]
      %v8264 = vld [vmem:[%s1358 + $0xa8] sm:$0x7f]
      %v8265 = vld [vmem:[%s1358 + $0xd8] sm:$0x80]
      %v8266 = vld [vmem:[%s1358 + $0xf0] sm:$0x7f]
      %v8267 = vld [vmem:[%s1358 + $0x120] sm:$0x80]
      %v8268 = vld [vmem:[%s1358 + $0x138] sm:$0x7f]
      %v8269 = vld [vmem:[%s1358 + $0x168] sm:$0x80]
      %v8270 = vld [vmem:[%s1358 + $0x180] sm:$0x7f]
      %v8271 = vld [vmem:[%s1358 + $0x1b0] sm:$0x80]
      %v8272 = vld [vmem:[%s1358 + $0x1c8] sm:$0x7f]
      %v8273 = vld [vmem:[%s1358 + $0x1f8] sm:$0x80]
      %v8274 = vld [vmem:[%s1358 + $0x210] sm:$0x7f]
      %v8275 = vld [vmem:[%s1358 + $0x18] sm:$0xff]
      %v8276 = vld [vmem:[%s1358 + $0x60] sm:$0xff]
      %v8277 = vld [vmem:[%s1358 + $0xa8] sm:$0xff]
      %v8278 = vld [vmem:[%s1358 + $0xf0] sm:$0xff]
      %v8279 = vld [vmem:[%s1358 + $0x138] sm:$0xff]
      %v8280 = vld [vmem:[%s1358 + $0x180] sm:$0xff]
      %v8281 = vld [vmem:[%s1358 + $0x1c8] sm:$0xff]
      %v8282 = vld [vmem:[%s1358 + $0x210] sm:$0xff]
      %v8283 = vld [vmem:[%s1358 + $0x18] sm:$0xfe]
      %v8284 = vld [vmem:[%s1358 + $0x30] sm:$0x1]
      %v8285 = vld [vmem:[%s1358 + $0x60] sm:$0xfe]
      %v8286 = vld [vmem:[%s1358 + $0x78] sm:$0x1]
      %v8287 = vld [vmem:[%s1358 + $0xa8] sm:$0xfe]
      %v8288 = vld [vmem:[%s1358 + $0xc0] sm:$0x1]
      %v8289 = vld [vmem:[%s1358 + $0xf0] sm:$0xfe]
      %v8290 = vld [vmem:[%s1358 + $0x108] sm:$0x1]
      %v8291 = vld [vmem:[%s1358 + $0x138] sm:$0xfe]
      %v8292 = vld [vmem:[%s1358 + $0x150] sm:$0x1]
      %v8293 = vld [vmem:[%s1358 + $0x180] sm:$0xfe]
      %v8294 = vld [vmem:[%s1358 + $0x198] sm:$0x1]
      %v8295 = vld [vmem:[%s1358 + $0x1c8] sm:$0xfe]
      %v8296 = vld [vmem:[%s1358 + $0x1e0] sm:$0x1]
      %v8297 = vld [vmem:[%s1358 + $0x210] sm:$0xfe]
      %v8298 = vld [vmem:[%s1358 + $0x228] sm:$0x1]
      %v8307 = vrot.slane %v8195, 1
      %v8308 = vrot.slane %v8196, 1
      %v8309 = vrot.slane %v8197, 1
      %v8310 = vrot.slane %v8198, 1
      %v8311 = vrot.slane %v8199, 1
      %v8312 = vrot.slane %v8200, 1
      %v8313 = vrot.slane %v8201, 1
      %v8314 = vrot.slane %v8202, 1
      %8315 = vrot.lane.b32.xlu0 %v8307, 32
      %v8316 = vpop.permute.xlu0 %8315
      %8317 = vrot.lane.b32.xlu0 %v8308, 32
      %v8318 = vpop.permute.xlu0 %8317
      %8319 = vrot.lane.b32.xlu0 %v8309, 32
      %v8320 = vpop.permute.xlu0 %8319
      %8321 = vrot.lane.b32.xlu0 %v8310, 32
      %v8322 = vpop.permute.xlu0 %8321
      %8323 = vrot.lane.b32.xlu0 %v8311, 32
      %v8324 = vpop.permute.xlu0 %8323
      %8325 = vrot.lane.b32.xlu0 %v8312, 32
      %v8326 = vpop.permute.xlu0 %8325
      %8327 = vrot.lane.b32.xlu0 %v8313, 32
      %v8328 = vpop.permute.xlu0 %8327
      %8329 = vrot.lane.b32.xlu0 %v8314, 32
      %v8330 = vpop.permute.xlu0 %8329
      %v8355 = vrot.slane %v8203, 2
      %v8356 = vrot.slane %v8204, 2
      %v8357 = vsel %vm1655, %v8355, %v8356
      %v8358 = vrot.slane %v8205, 2
      %v8359 = vrot.slane %v8206, 2
      %v8360 = vsel %vm1655, %v8358, %v8359
      %v8361 = vrot.slane %v8207, 2
      %v8362 = vrot.slane %v8208, 2
      %v8363 = vsel %vm1655, %v8361, %v8362
      %v8364 = vrot.slane %v8209, 2
      %v8365 = vrot.slane %v8210, 2
      %v8366 = vsel %vm1655, %v8364, %v8365
      %v8367 = vrot.slane %v8211, 2
      %v8368 = vrot.slane %v8212, 2
      %v8369 = vsel %vm1655, %v8367, %v8368
      %v8370 = vrot.slane %v8213, 2
      %v8371 = vrot.slane %v8214, 2
      %v8372 = vsel %vm1655, %v8370, %v8371
      %v8373 = vrot.slane %v8215, 2
      %v8374 = vrot.slane %v8216, 2
      %v8375 = vsel %vm1655, %v8373, %v8374
      %v8376 = vrot.slane %v8217, 2
      %v8377 = vrot.slane %v8218, 2
      %v8378 = vsel %vm1655, %v8376, %v8377
      %8379 = vrot.lane.b32.xlu0 %v8355, 64
      %v8380 = vpop.permute.xlu0 %8379
      %8381 = vrot.lane.b32.xlu0 %v8357, 64
      %v8382 = vpop.permute.xlu0 %8381
      %8383 = vrot.lane.b32.xlu0 %v8358, 64
      %v8384 = vpop.permute.xlu0 %8383
      %8385 = vrot.lane.b32.xlu0 %v8360, 64
      %v8386 = vpop.permute.xlu0 %8385
      %8387 = vrot.lane.b32.xlu0 %v8361, 64
      %v8388 = vpop.permute.xlu0 %8387
      %8389 = vrot.lane.b32.xlu0 %v8363, 64
      %v8390 = vpop.permute.xlu0 %8389
      %8391 = vrot.lane.b32.xlu0 %v8364, 64
      %v8392 = vpop.permute.xlu0 %8391
      %8393 = vrot.lane.b32.xlu0 %v8366, 64
      %v8394 = vpop.permute.xlu0 %8393
      %8395 = vrot.lane.b32.xlu0 %v8367, 64
      %v8396 = vpop.permute.xlu0 %8395
      %8397 = vrot.lane.b32.xlu0 %v8369, 64
      %v8398 = vpop.permute.xlu0 %8397
      %8399 = vrot.lane.b32.xlu0 %v8370, 64
      %v8400 = vpop.permute.xlu0 %8399
      %8401 = vrot.lane.b32.xlu0 %v8372, 64
      %v8402 = vpop.permute.xlu0 %8401
      %8403 = vrot.lane.b32.xlu0 %v8373, 64
      %v8404 = vpop.permute.xlu0 %8403
      %8405 = vrot.lane.b32.xlu0 %v8375, 64
      %v8406 = vpop.permute.xlu0 %8405
      %8407 = vrot.lane.b32.xlu0 %v8376, 64
      %v8408 = vpop.permute.xlu0 %8407
      %8409 = vrot.lane.b32.xlu0 %v8378, 64
      %v8410 = vpop.permute.xlu0 %8409
      %8443 = vrot.lane.b32.xlu0 %v8219, 96
      %v8444 = vpop.permute.xlu0 %8443
      %8445 = vrot.lane.b32.xlu0 %v8220, 96
      %v8446 = vpop.permute.xlu0 %8445
      %8447 = vrot.lane.b32.xlu0 %v8221, 96
      %v8448 = vpop.permute.xlu0 %8447
      %8449 = vrot.lane.b32.xlu0 %v8222, 96
      %v8450 = vpop.permute.xlu0 %8449
      %8451 = vrot.lane.b32.xlu0 %v8223, 96
      %v8452 = vpop.permute.xlu0 %8451
      %8453 = vrot.lane.b32.xlu0 %v8224, 96
      %v8454 = vpop.permute.xlu0 %8453
      %8455 = vrot.lane.b32.xlu0 %v8225, 96
      %v8456 = vpop.permute.xlu0 %8455
      %8457 = vrot.lane.b32.xlu0 %v8226, 96
      %v8458 = vpop.permute.xlu0 %8457
      %8459 = vrot.lane.b32.xlu0 %v8227, 96
      %v8460 = vpop.permute.xlu0 %8459
      %8461 = vrot.lane.b32.xlu0 %v8228, 96
      %v8462 = vpop.permute.xlu0 %8461
      %8463 = vrot.lane.b32.xlu0 %v8229, 96
      %v8464 = vpop.permute.xlu0 %8463
      %8465 = vrot.lane.b32.xlu0 %v8230, 96
      %v8466 = vpop.permute.xlu0 %8465
      %8467 = vrot.lane.b32.xlu0 %v8231, 96
      %v8468 = vpop.permute.xlu0 %8467
      %8469 = vrot.lane.b32.xlu0 %v8232, 96
      %v8470 = vpop.permute.xlu0 %8469
      %8471 = vrot.lane.b32.xlu0 %v8233, 96
      %v8472 = vpop.permute.xlu0 %8471
      %8473 = vrot.lane.b32.xlu0 %v8234, 96
      %v8474 = vpop.permute.xlu0 %8473
      %v8499 = vrot.slane %v8235, 1
      %v8500 = vrot.slane %v8236, 1
      %v8501 = vrot.slane %v8237, 1
      %v8502 = vrot.slane %v8238, 1
      %v8503 = vrot.slane %v8239, 1
      %v8504 = vrot.slane %v8240, 1
      %v8505 = vrot.slane %v8241, 1
      %v8506 = vrot.slane %v8242, 1
      %v8531 = vrot.slane %v8243, 2
      %v8532 = vrot.slane %v8244, 2
      %v8533 = vsel %vm1655, %v8531, %v8532
      %v8534 = vrot.slane %v8245, 2
      %v8535 = vrot.slane %v8246, 2
      %v8536 = vsel %vm1655, %v8534, %v8535
      %v8537 = vrot.slane %v8247, 2
      %v8538 = vrot.slane %v8248, 2
      %v8539 = vsel %vm1655, %v8537, %v8538
      %v8540 = vrot.slane %v8249, 2
      %v8541 = vrot.slane %v8250, 2
      %v8542 = vsel %vm1655, %v8540, %v8541
      %v8543 = vrot.slane %v8251, 2
      %v8544 = vrot.slane %v8252, 2
      %v8545 = vsel %vm1655, %v8543, %v8544
      %v8546 = vrot.slane %v8253, 2
      %v8547 = vrot.slane %v8254, 2
      %v8548 = vsel %vm1655, %v8546, %v8547
      %v8549 = vrot.slane %v8255, 2
      %v8550 = vrot.slane %v8256, 2
      %v8551 = vsel %vm1655, %v8549, %v8550
      %v8552 = vrot.slane %v8257, 2
      %v8553 = vrot.slane %v8258, 2
      %v8554 = vsel %vm1655, %v8552, %v8553
      %8555 = vrot.lane.b32.xlu0 %v8531, 32
      %v8556 = vpop.permute.xlu0 %8555
      %8557 = vrot.lane.b32.xlu0 %v8533, 32
      %v8558 = vpop.permute.xlu0 %8557
      %8559 = vrot.lane.b32.xlu0 %v8534, 32
      %v8560 = vpop.permute.xlu0 %8559
      %8561 = vrot.lane.b32.xlu0 %v8536, 32
      %v8562 = vpop.permute.xlu0 %8561
      %8563 = vrot.lane.b32.xlu0 %v8537, 32
      %v8564 = vpop.permute.xlu0 %8563
      %8565 = vrot.lane.b32.xlu0 %v8539, 32
      %v8566 = vpop.permute.xlu0 %8565
      %8567 = vrot.lane.b32.xlu0 %v8540, 32
      %v8568 = vpop.permute.xlu0 %8567
      %8569 = vrot.lane.b32.xlu0 %v8542, 32
      %v8570 = vpop.permute.xlu0 %8569
      %8571 = vrot.lane.b32.xlu0 %v8543, 32
      %v8572 = vpop.permute.xlu0 %8571
      %8573 = vrot.lane.b32.xlu0 %v8545, 32
      %v8574 = vpop.permute.xlu0 %8573
      %8575 = vrot.lane.b32.xlu0 %v8546, 32
      %v8576 = vpop.permute.xlu0 %8575
      %8577 = vrot.lane.b32.xlu0 %v8548, 32
      %v8578 = vpop.permute.xlu0 %8577
      %8579 = vrot.lane.b32.xlu0 %v8549, 32
      %v8580 = vpop.permute.xlu0 %8579
      %8581 = vrot.lane.b32.xlu0 %v8551, 32
      %v8582 = vpop.permute.xlu0 %8581
      %8583 = vrot.lane.b32.xlu0 %v8552, 32
      %v8584 = vpop.permute.xlu0 %8583
      %8585 = vrot.lane.b32.xlu0 %v8554, 32
      %v8586 = vpop.permute.xlu0 %8585
      %8619 = vrot.lane.b32.xlu0 %v8259, 64
      %v8620 = vpop.permute.xlu0 %8619
      %8621 = vrot.lane.b32.xlu0 %v8260, 64
      %v8622 = vpop.permute.xlu0 %8621
      %8623 = vrot.lane.b32.xlu0 %v8261, 64
      %v8624 = vpop.permute.xlu0 %8623
      %8625 = vrot.lane.b32.xlu0 %v8262, 64
      %v8626 = vpop.permute.xlu0 %8625
      %8627 = vrot.lane.b32.xlu0 %v8263, 64
      %v8628 = vpop.permute.xlu0 %8627
      %8629 = vrot.lane.b32.xlu0 %v8264, 64
      %v8630 = vpop.permute.xlu0 %8629
      %8631 = vrot.lane.b32.xlu0 %v8265, 64
      %v8632 = vpop.permute.xlu0 %8631
      %8633 = vrot.lane.b32.xlu0 %v8266, 64
      %v8634 = vpop.permute.xlu0 %8633
      %8635 = vrot.lane.b32.xlu0 %v8267, 64
      %v8636 = vpop.permute.xlu0 %8635
      %8637 = vrot.lane.b32.xlu0 %v8268, 64
      %v8638 = vpop.permute.xlu0 %8637
      %8639 = vrot.lane.b32.xlu0 %v8269, 64
      %v8640 = vpop.permute.xlu0 %8639
      %8641 = vrot.lane.b32.xlu0 %v8270, 64
      %v8642 = vpop.permute.xlu0 %8641
      %8643 = vrot.lane.b32.xlu0 %v8271, 64
      %v8644 = vpop.permute.xlu0 %8643
      %8645 = vrot.lane.b32.xlu0 %v8272, 64
      %v8646 = vpop.permute.xlu0 %8645
      %8647 = vrot.lane.b32.xlu0 %v8273, 64
      %v8648 = vpop.permute.xlu0 %8647
      %8649 = vrot.lane.b32.xlu0 %v8274, 64
      %v8650 = vpop.permute.xlu0 %8649
      %v8675 = vrot.slane %v8275, 1
      %v8676 = vrot.slane %v8276, 1
      %v8677 = vrot.slane %v8277, 1
      %v8678 = vrot.slane %v8278, 1
      %v8679 = vrot.slane %v8279, 1
      %v8680 = vrot.slane %v8280, 1
      %v8681 = vrot.slane %v8281, 1
      %v8682 = vrot.slane %v8282, 1
      %8683 = vrot.lane.b32.xlu0 %v8675, 96
      %v8684 = vpop.permute.xlu0 %8683
      %8685 = vrot.lane.b32.xlu0 %v8676, 96
      %v8686 = vpop.permute.xlu0 %8685
      %8687 = vrot.lane.b32.xlu0 %v8677, 96
      %v8688 = vpop.permute.xlu0 %8687
      %8689 = vrot.lane.b32.xlu0 %v8678, 96
      %v8690 = vpop.permute.xlu0 %8689
      %8691 = vrot.lane.b32.xlu0 %v8679, 96
      %v8692 = vpop.permute.xlu0 %8691
      %8693 = vrot.lane.b32.xlu0 %v8680, 96
      %v8694 = vpop.permute.xlu0 %8693
      %8695 = vrot.lane.b32.xlu0 %v8681, 96
      %v8696 = vpop.permute.xlu0 %8695
      %8697 = vrot.lane.b32.xlu0 %v8682, 96
      %v8698 = vpop.permute.xlu0 %8697
      %v8723 = vrot.slane %v8283, 2
      %v8724 = vrot.slane %v8284, 2
      %v8725 = vsel %vm1655, %v8723, %v8724
      %v8726 = vrot.slane %v8285, 2
      %v8727 = vrot.slane %v8286, 2
      %v8728 = vsel %vm1655, %v8726, %v8727
      %v8729 = vrot.slane %v8287, 2
      %v8730 = vrot.slane %v8288, 2
      %v8731 = vsel %vm1655, %v8729, %v8730
      %v8732 = vrot.slane %v8289, 2
      %v8733 = vrot.slane %v8290, 2
      %v8734 = vsel %vm1655, %v8732, %v8733
      %v8735 = vrot.slane %v8291, 2
      %v8736 = vrot.slane %v8292, 2
      %v8737 = vsel %vm1655, %v8735, %v8736
      %v8738 = vrot.slane %v8293, 2
      %v8739 = vrot.slane %v8294, 2
      %v8740 = vsel %vm1655, %v8738, %v8739
      %v8741 = vrot.slane %v8295, 2
      %v8742 = vrot.slane %v8296, 2
      %v8743 = vsel %vm1655, %v8741, %v8742
      %v8744 = vrot.slane %v8297, 2
      %v8745 = vrot.slane %v8298, 2
      %v8746 = vsel %vm1655, %v8744, %v8745
      %v8747 = vsel %vm2194, %v8179, %v8316
      %v8748 = vsel %vm2194, %v8180, %v8316
      %v8749 = vsel %vm2194, %v8181, %v8318
      %v8750 = vsel %vm2194, %v8182, %v8318
      %v8751 = vsel %vm2194, %v8183, %v8320
      %v8752 = vsel %vm2194, %v8184, %v8320
      %v8753 = vsel %vm2194, %v8185, %v8322
      %v8754 = vsel %vm2194, %v8186, %v8322
      %v8755 = vsel %vm2194, %v8187, %v8324
      %v8756 = vsel %vm2194, %v8188, %v8324
      %v8757 = vsel %vm2194, %v8189, %v8326
      %v8758 = vsel %vm2194, %v8190, %v8326
      %v8759 = vsel %vm2194, %v8191, %v8328
      %v8760 = vsel %vm2194, %v8192, %v8328
      %v8761 = vsel %vm2194, %v8193, %v8330
      %v8762 = vsel %vm2194, %v8194, %v8330
      %v8763 = vsel %vm3062, %v8747, %v8380
      %v8764 = vsel %vm3062, %v8748, %v8382
      %v8765 = vsel %vm3062, %v8749, %v8384
      %v8766 = vsel %vm3062, %v8750, %v8386
      %v8767 = vsel %vm3062, %v8751, %v8388
      %v8768 = vsel %vm3062, %v8752, %v8390
      %v8769 = vsel %vm3062, %v8753, %v8392
      %v8770 = vsel %vm3062, %v8754, %v8394
      %v8771 = vsel %vm3062, %v8755, %v8396
      %v8772 = vsel %vm3062, %v8756, %v8398
      %v8773 = vsel %vm3062, %v8757, %v8400
      %v8774 = vsel %vm3062, %v8758, %v8402
      %v8775 = vsel %vm3062, %v8759, %v8404
      %v8776 = vsel %vm3062, %v8760, %v8406
      %v8777 = vsel %vm3062, %v8761, %v8408
      %v8778 = vsel %vm3062, %v8762, %v8410
      %v8779 = vsel %vm5963, %v8763, %v8444
      %v8780 = vsel %vm5963, %v8764, %v8446
      %v8781 = vsel %vm5963, %v8765, %v8448
      %v8782 = vsel %vm5963, %v8766, %v8450
      %v8783 = vsel %vm5963, %v8767, %v8452
      %v8784 = vsel %vm5963, %v8768, %v8454
      %v8785 = vsel %vm5963, %v8769, %v8456
      %v8786 = vsel %vm5963, %v8770, %v8458
      %v8787 = vsel %vm5963, %v8771, %v8460
      %v8788 = vsel %vm5963, %v8772, %v8462
      %v8789 = vsel %vm5963, %v8773, %v8464
      %v8790 = vsel %vm5963, %v8774, %v8466
      %v8791 = vsel %vm5963, %v8775, %v8468
      %v8792 = vsel %vm5963, %v8776, %v8470
      %v8793 = vsel %vm5963, %v8777, %v8472
      %v8794 = vsel %vm5963, %v8778, %v8474
      %v8795 = vsel %vm2194, %v8499, %v8556
      %v8796 = vsel %vm2194, %v8499, %v8558
      %v8797 = vsel %vm2194, %v8500, %v8560
      %v8798 = vsel %vm2194, %v8500, %v8562
      %v8799 = vsel %vm2194, %v8501, %v8564
      %v8800 = vsel %vm2194, %v8501, %v8566
      %v8801 = vsel %vm2194, %v8502, %v8568
      %v8802 = vsel %vm2194, %v8502, %v8570
      %v8803 = vsel %vm2194, %v8503, %v8572
      %v8804 = vsel %vm2194, %v8503, %v8574
      %v8805 = vsel %vm2194, %v8504, %v8576
      %v8806 = vsel %vm2194, %v8504, %v8578
      %v8807 = vsel %vm2194, %v8505, %v8580
      %v8808 = vsel %vm2194, %v8505, %v8582
      %v8809 = vsel %vm2194, %v8506, %v8584
      %v8810 = vsel %vm2194, %v8506, %v8586
      %v8811 = vsel %vm3062, %v8795, %v8620
      %v8812 = vsel %vm3062, %v8796, %v8622
      %v8813 = vsel %vm3062, %v8797, %v8624
      %v8814 = vsel %vm3062, %v8798, %v8626
      %v8815 = vsel %vm3062, %v8799, %v8628
      %v8816 = vsel %vm3062, %v8800, %v8630
      %v8817 = vsel %vm3062, %v8801, %v8632
      %v8818 = vsel %vm3062, %v8802, %v8634
      %v8819 = vsel %vm3062, %v8803, %v8636
      %v8820 = vsel %vm3062, %v8804, %v8638
      %v8821 = vsel %vm3062, %v8805, %v8640
      %v8822 = vsel %vm3062, %v8806, %v8642
      %v8823 = vsel %vm3062, %v8807, %v8644
      %v8824 = vsel %vm3062, %v8808, %v8646
      %v8825 = vsel %vm3062, %v8809, %v8648
      %v8826 = vsel %vm3062, %v8810, %v8650
      %v8827 = vsel %vm5963, %v8811, %v8684
      %v8828 = vsel %vm5963, %v8812, %v8684
      %v8829 = vsel %vm5963, %v8813, %v8686
      %v8830 = vsel %vm5963, %v8814, %v8686
      %v8831 = vsel %vm5963, %v8815, %v8688
      %v8832 = vsel %vm5963, %v8816, %v8688
      %v8833 = vsel %vm5963, %v8817, %v8690
      %v8834 = vsel %vm5963, %v8818, %v8690
      %v8835 = vsel %vm5963, %v8819, %v8692
      %v8836 = vsel %vm5963, %v8820, %v8692
      %v8837 = vsel %vm5963, %v8821, %v8694
      %v8838 = vsel %vm5963, %v8822, %v8694
      %v8839 = vsel %vm5963, %v8823, %v8696
      %v8840 = vsel %vm5963, %v8824, %v8696
      %v8841 = vsel %vm5963, %v8825, %v8698
      %v8842 = vsel %vm5963, %v8826, %v8698
      %v8875 = vrot.slane %v8779, 7
      %v8876 = vrot.slane %v8780, 7
      %v8877 = vsel %vm3399, %v8875, %v8876
      %v8878 = vrot.slane %v8827, 7
      %v8879 = vrot.slane %v8828, 7
      %v8880 = vsel %vm3399, %v8878, %v8879
      %v8881 = vrot.slane %v8723, 7
      %v8882 = vrot.slane %v8725, 7
      %v8883 = vsel %vm3399, %v8881, %v8882
      %v8884 = vrot.slane %v8781, 7
      %v8885 = vrot.slane %v8782, 7
      %v8886 = vsel %vm3399, %v8884, %v8885
      %v8887 = vrot.slane %v8829, 7
      %v8888 = vrot.slane %v8830, 7
      %v8889 = vsel %vm3399, %v8887, %v8888
      %v8890 = vrot.slane %v8726, 7
      %v8891 = vrot.slane %v8728, 7
      %v8892 = vsel %vm3399, %v8890, %v8891
      %v8893 = vrot.slane %v8783, 7
      %v8894 = vrot.slane %v8784, 7
      %v8895 = vsel %vm3399, %v8893, %v8894
      %v8896 = vrot.slane %v8831, 7
      %v8897 = vrot.slane %v8832, 7
      %v8898 = vsel %vm3399, %v8896, %v8897
      %v8899 = vrot.slane %v8729, 7
      %v8900 = vrot.slane %v8731, 7
      %v8901 = vsel %vm3399, %v8899, %v8900
      %v8902 = vrot.slane %v8785, 7
      %v8903 = vrot.slane %v8786, 7
      %v8904 = vsel %vm3399, %v8902, %v8903
      %v8905 = vrot.slane %v8833, 7
      %v8906 = vrot.slane %v8834, 7
      %v8907 = vsel %vm3399, %v8905, %v8906
      %v8908 = vrot.slane %v8732, 7
      %v8909 = vrot.slane %v8734, 7
      %v8910 = vsel %vm3399, %v8908, %v8909
      %v8911 = vrot.slane %v8787, 7
      %v8912 = vrot.slane %v8788, 7
      %v8913 = vsel %vm3399, %v8911, %v8912
      %v8914 = vrot.slane %v8835, 7
      %v8915 = vrot.slane %v8836, 7
      %v8916 = vsel %vm3399, %v8914, %v8915
      %v8917 = vrot.slane %v8735, 7
      %v8918 = vrot.slane %v8737, 7
      %v8919 = vsel %vm3399, %v8917, %v8918
      %v8920 = vrot.slane %v8789, 7
      %v8921 = vrot.slane %v8790, 7
      %v8922 = vsel %vm3399, %v8920, %v8921
      %v8923 = vrot.slane %v8837, 7
      %v8924 = vrot.slane %v8838, 7
      %v8925 = vsel %vm3399, %v8923, %v8924
      %v8926 = vrot.slane %v8738, 7
      %v8927 = vrot.slane %v8740, 7
      %v8928 = vsel %vm3399, %v8926, %v8927
      %v8929 = vrot.slane %v8791, 7
      %v8930 = vrot.slane %v8792, 7
      %v8931 = vsel %vm3399, %v8929, %v8930
      %v8932 = vrot.slane %v8839, 7
      %v8933 = vrot.slane %v8840, 7
      %v8934 = vsel %vm3399, %v8932, %v8933
      %v8935 = vrot.slane %v8741, 7
      %v8936 = vrot.slane %v8743, 7
      %v8937 = vsel %vm3399, %v8935, %v8936
      %v8938 = vrot.slane %v8793, 7
      %v8939 = vrot.slane %v8794, 7
      %v8940 = vsel %vm3399, %v8938, %v8939
      %v8941 = vrot.slane %v8841, 7
      %v8942 = vrot.slane %v8842, 7
      %v8943 = vsel %vm3399, %v8941, %v8942
      %v8944 = vrot.slane %v8744, 7
      %v8945 = vrot.slane %v8746, 7
      %v8946 = vsel %vm3399, %v8944, %v8945
      %s8963 = scalar_lea.vmem %s5, 576
      %v8964 = vld [vmem:[%s8963] sm:$0xff]
      %v8965 = vld [vmem:[%s8963 + $0x8] sm:$0xff]
      %v8966 = vld [vmem:[%s8963 + $0x10] sm:$0xff]
      %v8967 = vld [vmem:[%s8963 + $0x18] sm:$0xff]
      %v8968 = vld [vmem:[%s8963 + $0x20] sm:$0xff]
      %v8969 = vld [vmem:[%s8963 + $0x28] sm:$0xff]
      %v8970 = vld [vmem:[%s8963 + $0x30] sm:$0xff]
      %v8971 = vld [vmem:[%s8963 + $0x38] sm:$0xff]
      %v8972 = vld [vmem:[%s8963 + $0x40] sm:$0xff]
      %v8973 = vld [vmem:[%s8963 + $0x48] sm:$0xff]
      %v8974 = vld [vmem:[%s8963 + $0x50] sm:$0xff]
      %v8975 = vld [vmem:[%s8963 + $0x58] sm:$0xff]
      %v8976 = vld [vmem:[%s8963 + $0x60] sm:$0xff]
      %v8977 = vld [vmem:[%s8963 + $0x68] sm:$0xff]
      %v8978 = vld [vmem:[%s8963 + $0x70] sm:$0xff]
      %v8979 = vld [vmem:[%s8963 + $0x78] sm:$0xff]
      %v8980 = vld [vmem:[%s8963 + $0x80] sm:$0xff]
      %v8981 = vld [vmem:[%s8963 + $0x88] sm:$0xff]
      %v8982 = vld [vmem:[%s8963 + $0x90] sm:$0xff]
      %v8983 = vld [vmem:[%s8963 + $0x98] sm:$0xff]
      %v8984 = vld [vmem:[%s8963 + $0xa0] sm:$0xff]
      %v8985 = vld [vmem:[%s8963 + $0xa8] sm:$0xff]
      %v8986 = vld [vmem:[%s8963 + $0xb0] sm:$0xff]
      %v8987 = vld [vmem:[%s8963 + $0xb8] sm:$0xff]
      %v8988 = vld [vmem:[%s8963 + $0xc0] sm:$0xff]
      %v8989 = vld [vmem:[%s8963 + $0xc8] sm:$0xff]
      %v8990 = vld [vmem:[%s8963 + $0xd0] sm:$0xff]
      %v8991 = vld [vmem:[%s8963 + $0xd8] sm:$0xff]
      %v8992 = vld [vmem:[%s8963 + $0xe0] sm:$0xff]
      %v8993 = vld [vmem:[%s8963 + $0xe8] sm:$0xff]
      %v8994 = vld [vmem:[%s8963 + $0xf0] sm:$0xff]
      %v8995 = vld [vmem:[%s8963 + $0xf8] sm:$0xff]
      %v8996 = vld [vmem:[%s8963 + $0x100] sm:$0xff]
      %v8997 = vld [vmem:[%s8963 + $0x108] sm:$0xff]
      %v8998 = vld [vmem:[%s8963 + $0x110] sm:$0xff]
      %v8999 = vld [vmem:[%s8963 + $0x118] sm:$0xff]
      %s9000 = scalar_lea.vmem %s6, 2
      %v9001 = vld [vmem:[%s9000] sm:$0x1]
      %v9003 = vlaneseq
      %v9004 = vshrl.u32 %v9003, 7
      %v9005 = vsub.s32 0, %v9004
      %v9006 = vrot.slane %v9001, %v9005
      %v9008 = vsel %vm2194, %v8883, 0
      %v9010 = vsel %vm2194, %v8892, 0
      %v9012 = vsel %vm2194, %v8901, 0
      %v9014 = vsel %vm2194, %v8910, 0
      %v9016 = vsel %vm2194, %v8919, 0
      %v9018 = vsel %vm2194, %v8928, 0
      %v9020 = vsel %vm2194, %v8937, 0
      %v9022 = vsel %vm2194, %v8946, 0
      %9024 = vmatprep.subr.mxu0 0.0
      %9025 = vmatpush1.msra.mxu0 %v8964
      %9026 = vmatprep.subr.mxu0 0.0
      %9027 = vmatpush1.msra.mxu0 %v8965
      %9028 = vmatprep.subr.mxu0 0.0
      %9029 = vmatpush1.msra.mxu0 %v8966
      %9030 = vmatprep.subr.mxu0 0.0
      %9031 = vmatpush1.msra.mxu0 %v8967
      %9032 = vmatprep.subr.mxu0 0.0
      %9033 = vmatpush1.msra.mxu0 %v8968
      %9034 = vmatprep.subr.mxu0 0.0
      %9035 = vmatpush1.msra.mxu0 %v8969
      %9036 = vmatprep.subr.mxu0 0.0
      %9037 = vmatpush1.msra.mxu0 %v8970
      %9038 = vmatprep.subr.mxu0 0.0
      %9039 = vmatpush1.msra.mxu0 %v8971
      %9040 = vmatprep.subr.mxu0 0.0
      %9041 = vmatpush1.msra.mxu0 %v8972
      %9042 = vmatprep.subr.mxu0 0.0
      %9043 = vmatpush1.msra.mxu0 %v8973
      %9044 = vmatprep.subr.mxu0 0.0
      %9045 = vmatpush1.msra.mxu0 %v8974
      %9046 = vmatprep.subr.mxu0 0.0
      %9047 = vmatpush1.msra.mxu0 %v8975
      %9048 = vmatprep.subr.mxu0 0.0
      %9049 = vmatpush1.msra.mxu0 %v8976
      %9050 = vmatprep.subr.mxu0 0.0
      %9051 = vmatpush1.msra.mxu0 %v8977
      %9052 = vmatprep.subr.mxu0 0.0
      %9053 = vmatpush1.msra.mxu0 %v8978
      %9054 = vmatprep.subr.mxu0 0.0
      %9055 = vmatpush1.msra.mxu0 %v8979
      %9056 = vmatprep.subr.mxu0 0.0
      %9057 = vmatpush1.msra.mxu0 %v8980
      %9058 = vmatprep.subr.mxu0 0.0
      %9059 = vmatpush1.msra.mxu0 %v8981
      %9060 = vmatprep.subr.mxu0 0.0
      %9061 = vmatpush1.msra.mxu0 %v8982
      %9062 = vmatprep.subr.mxu0 0.0
      %9063 = vmatpush1.msra.mxu0 %v8983
      %9064 = vmatprep.subr.mxu0 0.0
      %9065 = vmatpush1.msra.mxu0 %v8984
      %9066 = vmatprep.subr.mxu0 0.0
      %9067 = vmatpush1.msra.mxu0 %v8985
      %9068 = vmatprep.subr.mxu0 0.0
      %9069 = vmatpush1.msra.mxu0 %v8986
      %9070 = vmatprep.subr.mxu0 0.0
      %9071 = vmatpush1.msra.mxu0 %v8987
      %9072 = vmatprep.subr.mxu0 0.0
      %9073 = vmatpush1.msra.mxu0 %v8988
      %9074 = vmatprep.subr.mxu0 0.0
      %9075 = vmatpush1.msra.mxu0 %v8989
      %9076 = vmatprep.subr.mxu0 0.0
      %9077 = vmatpush1.msra.mxu0 %v8990
      %9078 = vmatprep.subr.mxu0 0.0
      %9079 = vmatpush1.msra.mxu0 %v8991
      %9080 = vmatprep.subr.mxu0 0.0
      %9081 = vmatpush1.msra.mxu0 %v8992
      %9082 = vmatprep.subr.mxu0 0.0
      %9083 = vmatpush1.msra.mxu0 %v8993
      %9084 = vmatprep.subr.mxu0 0.0
      %9085 = vmatpush1.msra.mxu0 %v8994
      %9086 = vmatprep.subr.mxu0 0.0
      %9087 = vmatpush1.msra.mxu0 %v8995
      %9088 = vmatprep.mubr.f32.mxu0 %v8880
      %9089 = vmatmul.mubr.f32.gmra.mrb[0].mxu0 %v8877
      %v9090 = vpop.f32.mrb[0].mxu0
      %v9091 = vadd.f32 %v9006, %v9090
      %v9092 = vpop.f32.mrb[0].mxu0
      %9093 = vmatprep.mubr.f32.mxu0 %v8889
      %9094 = vmatmul.mubr.f32.gmra.mrb[0].mxu0 %v8886
      %v9095 = vpop.f32.mrb[0].mxu0
      %v9096 = vadd.f32 %v9006, %v9095
      %v9097 = vpop.f32.mrb[0].mxu0
      %9098 = vmatprep.mubr.f32.mxu0 %v8898
      %9099 = vmatmul.mubr.f32.gmra.mrb[0].mxu0 %v8895
      %v9100 = vpop.f32.mrb[0].mxu0
      %v9101 = vadd.f32 %v9006, %v9100
      %v9102 = vpop.f32.mrb[0].mxu0
      %9103 = vmatprep.mubr.f32.mxu0 %v8907
      %9104 = vmatmul.mubr.f32.gmra.mrb[0].mxu0 %v8904
      %v9105 = vpop.f32.mrb[0].mxu0
      %v9106 = vadd.f32 %v9006, %v9105
      %v9107 = vpop.f32.mrb[0].mxu0
      %9108 = vmatprep.mubr.f32.mxu0 %v8916
      %9109 = vmatmul.mubr.f32.gmra.mrb[0].mxu0 %v8913
      %v9110 = vpop.f32.mrb[0].mxu0
      %v9111 = vadd.f32 %v9006, %v9110
      %v9112 = vpop.f32.mrb[0].mxu0
      %9113 = vmatprep.mubr.f32.mxu0 %v8925
      %9114 = vmatmul.mubr.f32.gmra.mrb[0].mxu0 %v8922
      %v9115 = vpop.f32.mrb[0].mxu0
      %v9116 = vadd.f32 %v9006, %v9115
      %v9117 = vpop.f32.mrb[0].mxu0
      %9118 = vmatprep.mubr.f32.mxu0 %v8934
      %9119 = vmatmul.mubr.f32.gmra.mrb[0].mxu0 %v8931
      %v9120 = vpop.f32.mrb[0].mxu0
      %v9121 = vadd.f32 %v9006, %v9120
      %v9122 = vpop.f32.mrb[0].mxu0
      %9123 = vmatprep.mubr.f32.mxu0 %v8943
      %9124 = vmatmul.mubr.f32.gmra.mrb[0].mxu0 %v8940
      %v9125 = vpop.f32.mrb[0].mxu0
      %v9126 = vadd.f32 %v9006, %v9125
      %v9127 = vpop.f32.mrb[0].mxu0
      %9128 = vdwg.mxu0
      %9129 = vmatprep.subr.mxu0 0.0
      %9130 = vmatpush1.msra.mxu0 %v8996
      %9131 = vmatprep.subr.mxu0 0.0
      %9132 = vmatpush1.msra.mxu0 %v8997
      %9133 = vmatprep.subr.mxu0 0.0
      %9134 = vmatpush1.msra.mxu0 %v8998
      %9135 = vmatprep.subr.mxu0 0.0
      %9136 = vmatpush1.msra.mxu0 %v8999
      %9137 = vmatprep.subr.mxu0 0.0
      %9138 = vmatpush1.msra.mxu0 0.0
      %9139 = vmatprep.subr.mxu0 0.0
      %9140 = vmatpush1.msra.mxu0 0.0
      %9141 = vmatprep.subr.mxu0 0.0
      %9142 = vmatpush1.msra.mxu0 0.0
      %9143 = vmatprep.subr.mxu0 0.0
      %9144 = vmatpush1.msra.mxu0 0.0
      %9145 = vmatprep.subr.mxu0 0.0
      %9146 = vmatpush1.msra.mxu0 0.0
      %9147 = vmatprep.subr.mxu0 0.0
      %9148 = vmatpush1.msra.mxu0 0.0
      %9149 = vmatprep.subr.mxu0 0.0
      %9150 = vmatpush1.msra.mxu0 0.0
      %9151 = vmatprep.subr.mxu0 0.0
      %9152 = vmatpush1.msra.mxu0 0.0
      %9153 = vmatprep.subr.mxu0 0.0
      %9154 = vmatpush1.msra.mxu0 0.0
      %9155 = vmatprep.subr.mxu0 0.0
      %9156 = vmatpush1.msra.mxu0 0.0
      %9157 = vmatprep.subr.mxu0 0.0
      %9158 = vmatpush1.msra.mxu0 0.0
      %9159 = vmatprep.subr.mxu0 0.0
      %9160 = vmatpush1.msra.mxu0 0.0
      %9161 = vmatprep.subr.mxu0 0.0
      %9162 = vmatpush1.msra.mxu0 0.0
      %9163 = vmatprep.subr.mxu0 0.0
      %9164 = vmatpush1.msra.mxu0 0.0
      %9165 = vmatprep.subr.mxu0 0.0
      %9166 = vmatpush1.msra.mxu0 0.0
      %9167 = vmatprep.subr.mxu0 0.0
      %9168 = vmatpush1.msra.mxu0 0.0
      %9169 = vmatprep.subr.mxu0 0.0
      %9170 = vmatpush1.msra.mxu0 0.0
      %9171 = vmatprep.subr.mxu0 0.0
      %9172 = vmatpush1.msra.mxu0 0.0
      %9173 = vmatprep.subr.mxu0 0.0
      %9174 = vmatpush1.msra.mxu0 0.0
      %9175 = vmatprep.subr.mxu0 0.0
      %9176 = vmatpush1.msra.mxu0 0.0
      %9177 = vmatprep.subr.mxu0 0.0
      %9178 = vmatpush1.msra.mxu0 0.0
      %9179 = vmatprep.subr.mxu0 0.0
      %9180 = vmatpush1.msra.mxu0 0.0
      %9181 = vmatprep.subr.mxu0 0.0
      %9182 = vmatpush1.msra.mxu0 0.0
      %9183 = vmatprep.subr.mxu0 0.0
      %9184 = vmatpush1.msra.mxu0 0.0
      %9185 = vmatprep.subr.mxu0 0.0
      %9186 = vmatpush1.msra.mxu0 0.0
      %9187 = vmatprep.subr.mxu0 0.0
      %9188 = vmatpush1.msra.mxu0 0.0
      %9189 = vmatprep.subr.mxu0 0.0
      %9190 = vmatpush1.msra.mxu0 0.0
      %9191 = vmatprep.subr.mxu0 0.0
      %9192 = vmatpush1.msra.mxu0 0.0
      %9193 = vmatprep.mubr.f32.mxu0 0.0
      %9194 = vmatmul.mubr.f32.gmra.mrb[0].mxu0 %v9008
      %v9195 = vpop.f32.mrb[0].mxu0
      %v9196 = vadd.f32 %v9091, %v9195
      %v9197 = vpop.f32.mrb[0].mxu0
      %9198 = vmatprep.mubr.f32.mxu0 0.0
      %9199 = vmatmul.mubr.f32.gmra.mrb[0].mxu0 %v9010
      %v9200 = vpop.f32.mrb[0].mxu0
      %v9201 = vadd.f32 %v9096, %v9200
      %v9202 = vpop.f32.mrb[0].mxu0
      %9203 = vmatprep.mubr.f32.mxu0 0.0
      %9204 = vmatmul.mubr.f32.gmra.mrb[0].mxu0 %v9012
      %v9205 = vpop.f32.mrb[0].mxu0
      %v9206 = vadd.f32 %v9101, %v9205
      %v9207 = vpop.f32.mrb[0].mxu0
      %9208 = vmatprep.mubr.f32.mxu0 0.0
      %9209 = vmatmul.mubr.f32.gmra.mrb[0].mxu0 %v9014
      %v9210 = vpop.f32.mrb[0].mxu0
      %v9211 = vadd.f32 %v9106, %v9210
      %v9212 = vpop.f32.mrb[0].mxu0
      %9213 = vmatprep.mubr.f32.mxu0 0.0
      %9214 = vmatmul.mubr.f32.gmra.mrb[0].mxu0 %v9016
      %v9215 = vpop.f32.mrb[0].mxu0
      %v9216 = vadd.f32 %v9111, %v9215
      %v9217 = vpop.f32.mrb[0].mxu0
      %9218 = vmatprep.mubr.f32.mxu0 0.0
      %9219 = vmatmul.mubr.f32.gmra.mrb[0].mxu0 %v9018
      %v9220 = vpop.f32.mrb[0].mxu0
      %v9221 = vadd.f32 %v9116, %v9220
      %v9222 = vpop.f32.mrb[0].mxu0
      %9223 = vmatprep.mubr.f32.mxu0 0.0
      %9224 = vmatmul.mubr.f32.gmra.mrb[0].mxu0 %v9020
      %v9225 = vpop.f32.mrb[0].mxu0
      %v9226 = vadd.f32 %v9121, %v9225
      %v9227 = vpop.f32.mrb[0].mxu0
      %9228 = vmatprep.mubr.f32.mxu0 0.0
      %9229 = vmatmul.mubr.f32.gmra.mrb[0].mxu0 %v9022
      %v9230 = vpop.f32.mrb[0].mxu0
      %v9231 = vadd.f32 %v9126, %v9230
      %v9232 = vpop.f32.mrb[0].mxu0
      %9233 = vdwg.mxu0
      %v9234 = vmax.f32 %v9196, 0.0
      %v9235 = vmax.f32 %v9201, 0.0
      %v9236 = vmax.f32 %v9206, 0.0
      %v9237 = vmax.f32 %v9211, 0.0
      %v9238 = vmax.f32 %v9216, 0.0
      %v9239 = vmax.f32 %v9221, 0.0
      %v9240 = vmax.f32 %v9226, 0.0
      %v9241 = vmax.f32 %v9231, 0.0
      %9242 = vst.msk [vmem:[%s1093 + $0x18] sm:$0xff] %vm2194, %v9234
      %9243 = vst.msk [vmem:[%s1093 + $0x60] sm:$0xff] %vm2194, %v9235
      %9244 = vst.msk [vmem:[%s1093 + $0xa8] sm:$0xff] %vm2194, %v9236
      %9245 = vst.msk [vmem:[%s1093 + $0xf0] sm:$0xff] %vm2194, %v9237
      %9246 = vst.msk [vmem:[%s1093 + $0x138] sm:$0xff] %vm2194, %v9238
      %9247 = vst.msk [vmem:[%s1093 + $0x180] sm:$0xff] %vm2194, %v9239
      %9248 = vst.msk [vmem:[%s1093 + $0x1c8] sm:$0xff] %vm2194, %v9240
      %9249 = vst.msk [vmem:[%s1093 + $0x210] sm:$0xff] %vm2194, %v9241
      %v9250 = vld [vmem:[#allocation2] sm:$0x80]
      %v9251 = vld [vmem:[#allocation2 + $0x18] sm:$0x7f]
      %v9252 = vld [vmem:[#allocation2 + $0x48] sm:$0x80]
      %v9253 = vld [vmem:[#allocation2 + $0x60] sm:$0x7f]
      %v9254 = vld [vmem:[#allocation2 + $0x90] sm:$0x80]
      %v9255 = vld [vmem:[#allocation2 + $0xa8] sm:$0x7f]
      %v9256 = vld [vmem:[#allocation2 + $0xd8] sm:$0x80]
      %v9257 = vld [vmem:[#allocation2 + $0xf0] sm:$0x7f]
      %v9258 = vld [vmem:[#allocation2 + $0x120] sm:$0x80]
      %v9259 = vld [vmem:[#allocation2 + $0x138] sm:$0x7f]
      %v9260 = vld [vmem:[#allocation2 + $0x168] sm:$0x80]
      %v9261 = vld [vmem:[#allocation2 + $0x180] sm:$0x7f]
      %v9262 = vld [vmem:[#allocation2 + $0x1b0] sm:$0x80]
      %v9263 = vld [vmem:[#allocation2 + $0x1c8] sm:$0x7f]
      %v9264 = vld [vmem:[#allocation2 + $0x1f8] sm:$0x80]
      %v9265 = vld [vmem:[#allocation2 + $0x210] sm:$0x7f]
      %v9266 = vld [vmem:[#allocation2 + $0x18] sm:$0xff]
      %v9267 = vld [vmem:[#allocation2 + $0x60] sm:$0xff]
      %v9268 = vld [vmem:[#allocation2 + $0xa8] sm:$0xff]
      %v9269 = vld [vmem:[#allocation2 + $0xf0] sm:$0xff]
      %v9270 = vld [vmem:[#allocation2 + $0x138] sm:$0xff]
      %v9271 = vld [vmem:[#allocation2 + $0x180] sm:$0xff]
      %v9272 = vld [vmem:[#allocation2 + $0x1c8] sm:$0xff]
      %v9273 = vld [vmem:[#allocation2 + $0x210] sm:$0xff]
      %v9274 = vld [vmem:[%s1093] sm:$0x80]
      %v9275 = vld [vmem:[%s1093 + $0x18] sm:$0x7f]
      %v9276 = vld [vmem:[%s1093 + $0x48] sm:$0x80]
      %v9277 = vld [vmem:[%s1093 + $0x60] sm:$0x7f]
      %v9278 = vld [vmem:[%s1093 + $0x90] sm:$0x80]
      %v9279 = vld [vmem:[%s1093 + $0xa8] sm:$0x7f]
      %v9280 = vld [vmem:[%s1093 + $0xd8] sm:$0x80]
      %v9281 = vld [vmem:[%s1093 + $0xf0] sm:$0x7f]
      %v9282 = vld [vmem:[%s1093 + $0x120] sm:$0x80]
      %v9283 = vld [vmem:[%s1093 + $0x138] sm:$0x7f]
      %v9284 = vld [vmem:[%s1093 + $0x168] sm:$0x80]
      %v9285 = vld [vmem:[%s1093 + $0x180] sm:$0x7f]
      %v9286 = vld [vmem:[%s1093 + $0x1b0] sm:$0x80]
      %v9287 = vld [vmem:[%s1093 + $0x1c8] sm:$0x7f]
      %v9288 = vld [vmem:[%s1093 + $0x1f8] sm:$0x80]
      %v9289 = vld [vmem:[%s1093 + $0x210] sm:$0x7f]
      %v9290 = vld [vmem:[%s1093 + $0x18] sm:$0xff]
      %v9291 = vld [vmem:[%s1093 + $0x60] sm:$0xff]
      %v9292 = vld [vmem:[%s1093 + $0xa8] sm:$0xff]
      %v9293 = vld [vmem:[%s1093 + $0xf0] sm:$0xff]
      %v9294 = vld [vmem:[%s1093 + $0x138] sm:$0xff]
      %v9295 = vld [vmem:[%s1093 + $0x180] sm:$0xff]
      %v9296 = vld [vmem:[%s1093 + $0x1c8] sm:$0xff]
      %v9297 = vld [vmem:[%s1093 + $0x210] sm:$0xff]
      %v9306 = vrot.slane %v9266, 1
      %v9307 = vrot.slane %v9267, 1
      %v9308 = vrot.slane %v9268, 1
      %v9309 = vrot.slane %v9269, 1
      %v9310 = vrot.slane %v9270, 1
      %v9311 = vrot.slane %v9271, 1
      %v9312 = vrot.slane %v9272, 1
      %v9313 = vrot.slane %v9273, 1
      %9314 = vrot.lane.b32.xlu0 %v9306, 32
      %v9315 = vpop.permute.xlu0 %9314
      %9316 = vrot.lane.b32.xlu0 %v9307, 32
      %v9317 = vpop.permute.xlu0 %9316
      %9318 = vrot.lane.b32.xlu0 %v9308, 32
      %v9319 = vpop.permute.xlu0 %9318
      %9320 = vrot.lane.b32.xlu0 %v9309, 32
      %v9321 = vpop.permute.xlu0 %9320
      %9322 = vrot.lane.b32.xlu0 %v9310, 32
      %v9323 = vpop.permute.xlu0 %9322
      %9324 = vrot.lane.b32.xlu0 %v9311, 32
      %v9325 = vpop.permute.xlu0 %9324
      %9326 = vrot.lane.b32.xlu0 %v9312, 32
      %v9327 = vpop.permute.xlu0 %9326
      %9328 = vrot.lane.b32.xlu0 %v9313, 32
      %v9329 = vpop.permute.xlu0 %9328
      %9354 = vrot.lane.b32.xlu0 %v9274, 64
      %v9355 = vpop.permute.xlu0 %9354
      %9356 = vrot.lane.b32.xlu0 %v9275, 64
      %v9357 = vpop.permute.xlu0 %9356
      %9358 = vrot.lane.b32.xlu0 %v9276, 64
      %v9359 = vpop.permute.xlu0 %9358
      %9360 = vrot.lane.b32.xlu0 %v9277, 64
      %v9361 = vpop.permute.xlu0 %9360
      %9362 = vrot.lane.b32.xlu0 %v9278, 64
      %v9363 = vpop.permute.xlu0 %9362
      %9364 = vrot.lane.b32.xlu0 %v9279, 64
      %v9365 = vpop.permute.xlu0 %9364
      %9366 = vrot.lane.b32.xlu0 %v9280, 64
      %v9367 = vpop.permute.xlu0 %9366
      %9368 = vrot.lane.b32.xlu0 %v9281, 64
      %v9369 = vpop.permute.xlu0 %9368
      %9370 = vrot.lane.b32.xlu0 %v9282, 64
      %v9371 = vpop.permute.xlu0 %9370
      %9372 = vrot.lane.b32.xlu0 %v9283, 64
      %v9373 = vpop.permute.xlu0 %9372
      %9374 = vrot.lane.b32.xlu0 %v9284, 64
      %v9375 = vpop.permute.xlu0 %9374
      %9376 = vrot.lane.b32.xlu0 %v9285, 64
      %v9377 = vpop.permute.xlu0 %9376
      %9378 = vrot.lane.b32.xlu0 %v9286, 64
      %v9379 = vpop.permute.xlu0 %9378
      %9380 = vrot.lane.b32.xlu0 %v9287, 64
      %v9381 = vpop.permute.xlu0 %9380
      %9382 = vrot.lane.b32.xlu0 %v9288, 64
      %v9383 = vpop.permute.xlu0 %9382
      %9384 = vrot.lane.b32.xlu0 %v9289, 64
      %v9385 = vpop.permute.xlu0 %9384
      %v9410 = vrot.slane %v9290, 1
      %v9411 = vrot.slane %v9291, 1
      %v9412 = vrot.slane %v9292, 1
      %v9413 = vrot.slane %v9293, 1
      %v9414 = vrot.slane %v9294, 1
      %v9415 = vrot.slane %v9295, 1
      %v9416 = vrot.slane %v9296, 1
      %v9417 = vrot.slane %v9297, 1
      %9418 = vrot.lane.b32.xlu0 %v9410, 96
      %v9419 = vpop.permute.xlu0 %9418
      %9420 = vrot.lane.b32.xlu0 %v9411, 96
      %v9421 = vpop.permute.xlu0 %9420
      %9422 = vrot.lane.b32.xlu0 %v9412, 96
      %v9423 = vpop.permute.xlu0 %9422
      %9424 = vrot.lane.b32.xlu0 %v9413, 96
      %v9425 = vpop.permute.xlu0 %9424
      %9426 = vrot.lane.b32.xlu0 %v9414, 96
      %v9427 = vpop.permute.xlu0 %9426
      %9428 = vrot.lane.b32.xlu0 %v9415, 96
      %v9429 = vpop.permute.xlu0 %9428
      %9430 = vrot.lane.b32.xlu0 %v9416, 96
      %v9431 = vpop.permute.xlu0 %9430
      %9432 = vrot.lane.b32.xlu0 %v9417, 96
      %v9433 = vpop.permute.xlu0 %9432
      %v9442 = vsel %vm2194, %v9250, %v9315
      %v9443 = vsel %vm2194, %v9251, %v9315
      %v9444 = vsel %vm2194, %v9252, %v9317
      %v9445 = vsel %vm2194, %v9253, %v9317
      %v9446 = vsel %vm2194, %v9254, %v9319
      %v9447 = vsel %vm2194, %v9255, %v9319
      %v9448 = vsel %vm2194, %v9256, %v9321
      %v9449 = vsel %vm2194, %v9257, %v9321
      %v9450 = vsel %vm2194, %v9258, %v9323
      %v9451 = vsel %vm2194, %v9259, %v9323
      %v9452 = vsel %vm2194, %v9260, %v9325
      %v9453 = vsel %vm2194, %v9261, %v9325
      %v9454 = vsel %vm2194, %v9262, %v9327
      %v9455 = vsel %vm2194, %v9263, %v9327
      %v9456 = vsel %vm2194, %v9264, %v9329
      %v9457 = vsel %vm2194, %v9265, %v9329
      %v9458 = vsel %vm3062, %v9442, %v9355
      %v9459 = vsel %vm3062, %v9443, %v9357
      %v9460 = vsel %vm3062, %v9444, %v9359
      %v9461 = vsel %vm3062, %v9445, %v9361
      %v9462 = vsel %vm3062, %v9446, %v9363
      %v9463 = vsel %vm3062, %v9447, %v9365
      %v9464 = vsel %vm3062, %v9448, %v9367
      %v9465 = vsel %vm3062, %v9449, %v9369
      %v9466 = vsel %vm3062, %v9450, %v9371
      %v9467 = vsel %vm3062, %v9451, %v9373
      %v9468 = vsel %vm3062, %v9452, %v9375
      %v9469 = vsel %vm3062, %v9453, %v9377
      %v9470 = vsel %vm3062, %v9454, %v9379
      %v9471 = vsel %vm3062, %v9455, %v9381
      %v9472 = vsel %vm3062, %v9456, %v9383
      %v9473 = vsel %vm3062, %v9457, %v9385
      %v9474 = vsel %vm5963, %v9458, %v9419
      %v9475 = vsel %vm5963, %v9459, %v9419
      %v9476 = vsel %vm5963, %v9460, %v9421
      %v9477 = vsel %vm5963, %v9461, %v9421
      %v9478 = vsel %vm5963, %v9462, %v9423
      %v9479 = vsel %vm5963, %v9463, %v9423
      %v9480 = vsel %vm5963, %v9464, %v9425
      %v9481 = vsel %vm5963, %v9465, %v9425
      %v9482 = vsel %vm5963, %v9466, %v9427
      %v9483 = vsel %vm5963, %v9467, %v9427
      %v9484 = vsel %vm5963, %v9468, %v9429
      %v9485 = vsel %vm5963, %v9469, %v9429
      %v9486 = vsel %vm5963, %v9470, %v9431
      %v9487 = vsel %vm5963, %v9471, %v9431
      %v9488 = vsel %vm5963, %v9472, %v9433
      %v9489 = vsel %vm5963, %v9473, %v9433
      %v9506 = vrot.slane %v9474, 7
      %v9507 = vrot.slane %v9475, 7
      %v9508 = vsel %vm3399, %v9506, %v9507
      %v9509 = vrot.slane %v9476, 7
      %v9510 = vrot.slane %v9477, 7
      %v9511 = vsel %vm3399, %v9509, %v9510
      %v9512 = vrot.slane %v9478, 7
      %v9513 = vrot.slane %v9479, 7
      %v9514 = vsel %vm3399, %v9512, %v9513
      %v9515 = vrot.slane %v9480, 7
      %v9516 = vrot.slane %v9481, 7
      %v9517 = vsel %vm3399, %v9515, %v9516
      %v9518 = vrot.slane %v9482, 7
      %v9519 = vrot.slane %v9483, 7
      %v9520 = vsel %vm3399, %v9518, %v9519
      %v9521 = vrot.slane %v9484, 7
      %v9522 = vrot.slane %v9485, 7
      %v9523 = vsel %vm3399, %v9521, %v9522
      %v9524 = vrot.slane %v9486, 7
      %v9525 = vrot.slane %v9487, 7
      %v9526 = vsel %vm3399, %v9524, %v9525
      %v9527 = vrot.slane %v9488, 7
      %v9528 = vrot.slane %v9489, 7
      %v9529 = vsel %vm3399, %v9527, %v9528
      %v9538 = vld [vmem:[%s11] sm:$0xff]
      %v9539 = vld [vmem:[%s11 + $0x8] sm:$0xff]
      %v9540 = vld [vmem:[%s11 + $0x10] sm:$0xff]
      %v9541 = vld [vmem:[%s11 + $0x18] sm:$0xff]
      %v9542 = vld [vmem:[%s11 + $0x20] sm:$0xff]
      %v9543 = vld [vmem:[%s11 + $0x28] sm:$0xff]
      %v9544 = vld [vmem:[%s11 + $0x30] sm:$0xff]
      %v9545 = vld [vmem:[%s11 + $0x38] sm:$0xff]
      %v9546 = vld [vmem:[%s11 + $0x40] sm:$0xff]
      %v9547 = vld [vmem:[%s11 + $0x48] sm:$0xff]
      %v9548 = vld [vmem:[%s11 + $0x50] sm:$0xff]
      %v9549 = vld [vmem:[%s11 + $0x58] sm:$0xff]
      %v9550 = vld [vmem:[%s11 + $0x60] sm:$0xff]
      %v9551 = vld [vmem:[%s11 + $0x68] sm:$0xff]
      %v9552 = vld [vmem:[%s11 + $0x70] sm:$0xff]
      %v9553 = vld [vmem:[%s11 + $0x78] sm:$0xff]
      %v9554 = vld [vmem:[%s12] sm:$0x1]
      %v9556 = vlaneseq
      %v9557 = vshrl.u32 %v9556, 7
      %v9558 = vsub.s32 0, %v9557
      %v9559 = vrot.slane %v9554, %v9558
      %9561 = vmatprep.subr.mxu0 0.0
      %9562 = vmatpush1.msra.mxu0 %v9538
      %9563 = vmatprep.subr.mxu0 0.0
      %9564 = vmatpush1.msra.mxu0 %v9539
      %9565 = vmatprep.subr.mxu0 0.0
      %9566 = vmatpush1.msra.mxu0 %v9540
      %9567 = vmatprep.subr.mxu0 0.0
      %9568 = vmatpush1.msra.mxu0 %v9541
      %9569 = vmatprep.subr.mxu0 0.0
      %9570 = vmatpush1.msra.mxu0 %v9542
      %9571 = vmatprep.subr.mxu0 0.0
      %9572 = vmatpush1.msra.mxu0 %v9543
      %9573 = vmatprep.subr.mxu0 0.0
      %9574 = vmatpush1.msra.mxu0 %v9544
      %9575 = vmatprep.subr.mxu0 0.0
      %9576 = vmatpush1.msra.mxu0 %v9545
      %9577 = vmatprep.subr.mxu0 0.0
      %9578 = vmatpush1.msra.mxu0 %v9546
      %9579 = vmatprep.subr.mxu0 0.0
      %9580 = vmatpush1.msra.mxu0 %v9547
      %9581 = vmatprep.subr.mxu0 0.0
      %9582 = vmatpush1.msra.mxu0 %v9548
      %9583 = vmatprep.subr.mxu0 0.0
      %9584 = vmatpush1.msra.mxu0 %v9549
      %9585 = vmatprep.subr.mxu0 0.0
      %9586 = vmatpush1.msra.mxu0 %v9550
      %9587 = vmatprep.subr.mxu0 0.0
      %9588 = vmatpush1.msra.mxu0 %v9551
      %9589 = vmatprep.subr.mxu0 0.0
      %9590 = vmatpush1.msra.mxu0 %v9552
      %9591 = vmatprep.subr.mxu0 0.0
      %9592 = vmatpush1.msra.mxu0 %v9553
      %9593 = vmatprep.subr.mxu0 0.0
      %9594 = vmatpush1.msra.mxu0 0.0
      %9595 = vmatprep.subr.mxu0 0.0
      %9596 = vmatpush1.msra.mxu0 0.0
      %9597 = vmatprep.subr.mxu0 0.0
      %9598 = vmatpush1.msra.mxu0 0.0
      %9599 = vmatprep.subr.mxu0 0.0
      %9600 = vmatpush1.msra.mxu0 0.0
      %9601 = vmatprep.subr.mxu0 0.0
      %9602 = vmatpush1.msra.mxu0 0.0
      %9603 = vmatprep.subr.mxu0 0.0
      %9604 = vmatpush1.msra.mxu0 0.0
      %9605 = vmatprep.subr.mxu0 0.0
      %9606 = vmatpush1.msra.mxu0 0.0
      %9607 = vmatprep.subr.mxu0 0.0
      %9608 = vmatpush1.msra.mxu0 0.0
      %9609 = vmatprep.subr.mxu0 0.0
      %9610 = vmatpush1.msra.mxu0 0.0
      %9611 = vmatprep.subr.mxu0 0.0
      %9612 = vmatpush1.msra.mxu0 0.0
      %9613 = vmatprep.subr.mxu0 0.0
      %9614 = vmatpush1.msra.mxu0 0.0
      %9615 = vmatprep.subr.mxu0 0.0
      %9616 = vmatpush1.msra.mxu0 0.0
      %9617 = vmatprep.subr.mxu0 0.0
      %9618 = vmatpush1.msra.mxu0 0.0
      %9619 = vmatprep.subr.mxu0 0.0
      %9620 = vmatpush1.msra.mxu0 0.0
      %9621 = vmatprep.subr.mxu0 0.0
      %9622 = vmatpush1.msra.mxu0 0.0
      %9623 = vmatprep.subr.mxu0 0.0
      %9624 = vmatpush1.msra.mxu0 0.0
      %9625 = vmatprep.mubr.f32.mxu0 0.0
      %9626 = vmatmul.mubr.f32.gmra.mrb[0].mxu0 %v9508
      %v9627 = vpop.f32.mrb[0].mxu0
      %v9628 = vadd.f32 %v9559, %v9627
      %v9629 = vpop.f32.mrb[0].mxu0
      %9630 = vmatprep.mubr.f32.mxu0 0.0
      %9631 = vmatmul.mubr.f32.gmra.mrb[0].mxu0 %v9511
      %v9632 = vpop.f32.mrb[0].mxu0
      %v9633 = vadd.f32 %v9559, %v9632
      %v9634 = vpop.f32.mrb[0].mxu0
      %9635 = vmatprep.mubr.f32.mxu0 0.0
      %9636 = vmatmul.mubr.f32.gmra.mrb[0].mxu0 %v9514
      %v9637 = vpop.f32.mrb[0].mxu0
      %v9638 = vadd.f32 %v9559, %v9637
      %v9639 = vpop.f32.mrb[0].mxu0
      %9640 = vmatprep.mubr.f32.mxu0 0.0
      %9641 = vmatmul.mubr.f32.gmra.mrb[0].mxu0 %v9517
      %v9642 = vpop.f32.mrb[0].mxu0
      %v9643 = vadd.f32 %v9559, %v9642
      %v9644 = vpop.f32.mrb[0].mxu0
      %9645 = vmatprep.mubr.f32.mxu0 0.0
      %9646 = vmatmul.mubr.f32.gmra.mrb[0].mxu0 %v9520
      %v9647 = vpop.f32.mrb[0].mxu0
      %v9648 = vadd.f32 %v9559, %v9647
      %v9649 = vpop.f32.mrb[0].mxu0
      %9650 = vmatprep.mubr.f32.mxu0 0.0
      %9651 = vmatmul.mubr.f32.gmra.mrb[0].mxu0 %v9523
      %v9652 = vpop.f32.mrb[0].mxu0
      %v9653 = vadd.f32 %v9559, %v9652
      %v9654 = vpop.f32.mrb[0].mxu0
      %9655 = vmatprep.mubr.f32.mxu0 0.0
      %9656 = vmatmul.mubr.f32.gmra.mrb[0].mxu0 %v9526
      %v9657 = vpop.f32.mrb[0].mxu0
      %v9658 = vadd.f32 %v9559, %v9657
      %v9659 = vpop.f32.mrb[0].mxu0
      %9660 = vmatprep.mubr.f32.mxu0 0.0
      %9661 = vmatmul.mubr.f32.gmra.mrb[0].mxu0 %v9529
      %v9662 = vpop.f32.mrb[0].mxu0
      %v9663 = vadd.f32 %v9559, %v9662
      %v9664 = vpop.f32.mrb[0].mxu0
      %9665 = vdwg.mxu0
      %v9666 = vld [vmem:[#allocation2 + $0x18] sm:$0xfe]
      %v9667 = vld [vmem:[#allocation2 + $0x30] sm:$0x1]
      %v9668 = vld [vmem:[#allocation2 + $0x60] sm:$0xfe]
      %v9669 = vld [vmem:[#allocation2 + $0x78] sm:$0x1]
      %v9670 = vld [vmem:[#allocation2 + $0xa8] sm:$0xfe]
      %v9671 = vld [vmem:[#allocation2 + $0xc0] sm:$0x1]
      %v9672 = vld [vmem:[#allocation2 + $0xf0] sm:$0xfe]
      %v9673 = vld [vmem:[#allocation2 + $0x108] sm:$0x1]
      %v9674 = vld [vmem:[#allocation2 + $0x138] sm:$0xfe]
      %v9675 = vld [vmem:[#allocation2 + $0x150] sm:$0x1]
      %v9676 = vld [vmem:[#allocation2 + $0x180] sm:$0xfe]
      %v9677 = vld [vmem:[#allocation2 + $0x198] sm:$0x1]
      %v9678 = vld [vmem:[#allocation2 + $0x1c8] sm:$0xfe]
      %v9679 = vld [vmem:[#allocation2 + $0x1e0] sm:$0x1]
      %v9680 = vld [vmem:[#allocation2 + $0x210] sm:$0xfe]
      %v9681 = vld [vmem:[#allocation2 + $0x228] sm:$0x1]
      %v9682 = vld [vmem:[%s1093 + $0x18] sm:$0xfe]
      %v9683 = vld [vmem:[%s1093 + $0x30] sm:$0x1]
      %v9684 = vld [vmem:[%s1093 + $0x60] sm:$0xfe]
      %v9685 = vld [vmem:[%s1093 + $0x78] sm:$0x1]
      %v9686 = vld [vmem:[%s1093 + $0xa8] sm:$0xfe]
      %v9687 = vld [vmem:[%s1093 + $0xc0] sm:$0x1]
      %v9688 = vld [vmem:[%s1093 + $0xf0] sm:$0xfe]
      %v9689 = vld [vmem:[%s1093 + $0x108] sm:$0x1]
      %v9690 = vld [vmem:[%s1093 + $0x138] sm:$0xfe]
      %v9691 = vld [vmem:[%s1093 + $0x150] sm:$0x1]
      %v9692 = vld [vmem:[%s1093 + $0x180] sm:$0xfe]
      %v9693 = vld [vmem:[%s1093 + $0x198] sm:$0x1]
      %v9694 = vld [vmem:[%s1093 + $0x1c8] sm:$0xfe]
      %v9695 = vld [vmem:[%s1093 + $0x1e0] sm:$0x1]
      %v9696 = vld [vmem:[%s1093 + $0x210] sm:$0xfe]
      %v9697 = vld [vmem:[%s1093 + $0x228] sm:$0x1]
      %vm9714 = vcmask 1046528
      %v9715 = vrot.slane %v9666, 1
      %v9716 = vrot.slane %v9667, 1
      %v9717 = vsel %vm9714, %v9715, %v9716
      %v9718 = vrot.slane %v9668, 1
      %v9719 = vrot.slane %v9669, 1
      %v9720 = vsel %vm9714, %v9718, %v9719
      %v9721 = vrot.slane %v9670, 1
      %v9722 = vrot.slane %v9671, 1
      %v9723 = vsel %vm9714, %v9721, %v9722
      %v9724 = vrot.slane %v9672, 1
      %v9725 = vrot.slane %v9673, 1
      %v9726 = vsel %vm9714, %v9724, %v9725
      %v9727 = vrot.slane %v9674, 1
      %v9728 = vrot.slane %v9675, 1
      %v9729 = vsel %vm9714, %v9727, %v9728
      %v9730 = vrot.slane %v9676, 1
      %v9731 = vrot.slane %v9677, 1
      %v9732 = vsel %vm9714, %v9730, %v9731
      %v9733 = vrot.slane %v9678, 1
      %v9734 = vrot.slane %v9679, 1
      %v9735 = vsel %vm9714, %v9733, %v9734
      %v9736 = vrot.slane %v9680, 1
      %v9737 = vrot.slane %v9681, 1
      %v9738 = vsel %vm9714, %v9736, %v9737
      %9739 = vrot.lane.b32.xlu0 %v9717, 32
      %v9740 = vpop.permute.xlu0 %9739
      %9741 = vrot.lane.b32.xlu0 %v9720, 32
      %v9742 = vpop.permute.xlu0 %9741
      %9743 = vrot.lane.b32.xlu0 %v9723, 32
      %v9744 = vpop.permute.xlu0 %9743
      %9745 = vrot.lane.b32.xlu0 %v9726, 32
      %v9746 = vpop.permute.xlu0 %9745
      %9747 = vrot.lane.b32.xlu0 %v9729, 32
      %v9748 = vpop.permute.xlu0 %9747
      %9749 = vrot.lane.b32.xlu0 %v9732, 32
      %v9750 = vpop.permute.xlu0 %9749
      %9751 = vrot.lane.b32.xlu0 %v9735, 32
      %v9752 = vpop.permute.xlu0 %9751
      %9753 = vrot.lane.b32.xlu0 %v9738, 32
      %v9754 = vpop.permute.xlu0 %9753
      %9763 = vrot.lane.b32.xlu0 %v9290, 64
      %v9764 = vpop.permute.xlu0 %9763
      %9765 = vrot.lane.b32.xlu0 %v9291, 64
      %v9766 = vpop.permute.xlu0 %9765
      %9767 = vrot.lane.b32.xlu0 %v9292, 64
      %v9768 = vpop.permute.xlu0 %9767
      %9769 = vrot.lane.b32.xlu0 %v9293, 64
      %v9770 = vpop.permute.xlu0 %9769
      %9771 = vrot.lane.b32.xlu0 %v9294, 64
      %v9772 = vpop.permute.xlu0 %9771
      %9773 = vrot.lane.b32.xlu0 %v9295, 64
      %v9774 = vpop.permute.xlu0 %9773
      %9775 = vrot.lane.b32.xlu0 %v9296, 64
      %v9776 = vpop.permute.xlu0 %9775
      %9777 = vrot.lane.b32.xlu0 %v9297, 64
      %v9778 = vpop.permute.xlu0 %9777
      %v9803 = vrot.slane %v9682, 1
      %v9804 = vrot.slane %v9683, 1
      %v9805 = vsel %vm9714, %v9803, %v9804
      %v9806 = vrot.slane %v9684, 1
      %v9807 = vrot.slane %v9685, 1
      %v9808 = vsel %vm9714, %v9806, %v9807
      %v9809 = vrot.slane %v9686, 1
      %v9810 = vrot.slane %v9687, 1
      %v9811 = vsel %vm9714, %v9809, %v9810
      %v9812 = vrot.slane %v9688, 1
      %v9813 = vrot.slane %v9689, 1
      %v9814 = vsel %vm9714, %v9812, %v9813
      %v9815 = vrot.slane %v9690, 1
      %v9816 = vrot.slane %v9691, 1
      %v9817 = vsel %vm9714, %v9815, %v9816
      %v9818 = vrot.slane %v9692, 1
      %v9819 = vrot.slane %v9693, 1
      %v9820 = vsel %vm9714, %v9818, %v9819
      %v9821 = vrot.slane %v9694, 1
      %v9822 = vrot.slane %v9695, 1
      %v9823 = vsel %vm9714, %v9821, %v9822
      %v9824 = vrot.slane %v9696, 1
      %v9825 = vrot.slane %v9697, 1
      %v9826 = vsel %vm9714, %v9824, %v9825
      %9827 = vrot.lane.b32.xlu0 %v9805, 96
      %v9828 = vpop.permute.xlu0 %9827
      %9829 = vrot.lane.b32.xlu0 %v9808, 96
      %v9830 = vpop.permute.xlu0 %9829
      %9831 = vrot.lane.b32.xlu0 %v9811, 96
      %v9832 = vpop.permute.xlu0 %9831
      %9833 = vrot.lane.b32.xlu0 %v9814, 96
      %v9834 = vpop.permute.xlu0 %9833
      %9835 = vrot.lane.b32.xlu0 %v9817, 96
      %v9836 = vpop.permute.xlu0 %9835
      %9837 = vrot.lane.b32.xlu0 %v9820, 96
      %v9838 = vpop.permute.xlu0 %9837
      %9839 = vrot.lane.b32.xlu0 %v9823, 96
      %v9840 = vpop.permute.xlu0 %9839
      %9841 = vrot.lane.b32.xlu0 %v9826, 96
      %v9842 = vpop.permute.xlu0 %9841
      %v9851 = vsel %vm2194, %v9266, %v9740
      %v9852 = vsel %vm2194, %v9267, %v9742
      %v9853 = vsel %vm2194, %v9268, %v9744
      %v9854 = vsel %vm2194, %v9269, %v9746
      %v9855 = vsel %vm2194, %v9270, %v9748
      %v9856 = vsel %vm2194, %v9271, %v9750
      %v9857 = vsel %vm2194, %v9272, %v9752
      %v9858 = vsel %vm2194, %v9273, %v9754
      %v9859 = vsel %vm3062, %v9851, %v9764
      %v9860 = vsel %vm3062, %v9852, %v9766
      %v9861 = vsel %vm3062, %v9853, %v9768
      %v9862 = vsel %vm3062, %v9854, %v9770
      %v9863 = vsel %vm3062, %v9855, %v9772
      %v9864 = vsel %vm3062, %v9856, %v9774
      %v9865 = vsel %vm3062, %v9857, %v9776
      %v9866 = vsel %vm3062, %v9858, %v9778
      %v9867 = vsel %vm5963, %v9859, %v9828
      %v9868 = vsel %vm5963, %v9860, %v9830
      %v9869 = vsel %vm5963, %v9861, %v9832
      %v9870 = vsel %vm5963, %v9862, %v9834
      %v9871 = vsel %vm5963, %v9863, %v9836
      %v9872 = vsel %vm5963, %v9864, %v9838
      %v9873 = vsel %vm5963, %v9865, %v9840
      %v9874 = vsel %vm5963, %v9866, %v9842
      %s9875 = scalar_lea.vmem %s11, 128
      %v9876 = vld [vmem:[%s9875] sm:$0xff]
      %v9877 = vld [vmem:[%s9875 + $0x8] sm:$0xff]
      %v9878 = vld [vmem:[%s9875 + $0x10] sm:$0xff]
      %v9879 = vld [vmem:[%s9875 + $0x18] sm:$0xff]
      %v9880 = vld [vmem:[%s9875 + $0x20] sm:$0xff]
      %v9881 = vld [vmem:[%s9875 + $0x28] sm:$0xff]
      %v9882 = vld [vmem:[%s9875 + $0x30] sm:$0xff]
      %v9883 = vld [vmem:[%s9875 + $0x38] sm:$0xff]
      %v9884 = vld [vmem:[%s9875 + $0x40] sm:$0xff]
      %v9885 = vld [vmem:[%s9875 + $0x48] sm:$0xff]
      %v9886 = vld [vmem:[%s9875 + $0x50] sm:$0xff]
      %v9887 = vld [vmem:[%s9875 + $0x58] sm:$0xff]
      %v9888 = vld [vmem:[%s9875 + $0x60] sm:$0xff]
      %v9889 = vld [vmem:[%s9875 + $0x68] sm:$0xff]
      %v9890 = vld [vmem:[%s9875 + $0x70] sm:$0xff]
      %v9891 = vld [vmem:[%s9875 + $0x78] sm:$0xff]
      %9892 = vmatprep.subr.mxu0 0.0
      %9893 = vmatpush1.msra.mxu0 %v9876
      %9894 = vmatprep.subr.mxu0 0.0
      %9895 = vmatpush1.msra.mxu0 %v9877
      %9896 = vmatprep.subr.mxu0 0.0
      %9897 = vmatpush1.msra.mxu0 %v9878
      %9898 = vmatprep.subr.mxu0 0.0
      %9899 = vmatpush1.msra.mxu0 %v9879
      %9900 = vmatprep.subr.mxu0 0.0
      %9901 = vmatpush1.msra.mxu0 %v9880
      %9902 = vmatprep.subr.mxu0 0.0
      %9903 = vmatpush1.msra.mxu0 %v9881
      %9904 = vmatprep.subr.mxu0 0.0
      %9905 = vmatpush1.msra.mxu0 %v9882
      %9906 = vmatprep.subr.mxu0 0.0
      %9907 = vmatpush1.msra.mxu0 %v9883
      %9908 = vmatprep.subr.mxu0 0.0
      %9909 = vmatpush1.msra.mxu0 %v9884
      %9910 = vmatprep.subr.mxu0 0.0
      %9911 = vmatpush1.msra.mxu0 %v9885
      %9912 = vmatprep.subr.mxu0 0.0
      %9913 = vmatpush1.msra.mxu0 %v9886
      %9914 = vmatprep.subr.mxu0 0.0
      %9915 = vmatpush1.msra.mxu0 %v9887
      %9916 = vmatprep.subr.mxu0 0.0
      %9917 = vmatpush1.msra.mxu0 %v9888
      %9918 = vmatprep.subr.mxu0 0.0
      %9919 = vmatpush1.msra.mxu0 %v9889
      %9920 = vmatprep.subr.mxu0 0.0
      %9921 = vmatpush1.msra.mxu0 %v9890
      %9922 = vmatprep.subr.mxu0 0.0
      %9923 = vmatpush1.msra.mxu0 %v9891
      %9924 = vmatprep.subr.mxu0 0.0
      %9925 = vmatpush1.msra.mxu0 0.0
      %9926 = vmatprep.subr.mxu0 0.0
      %9927 = vmatpush1.msra.mxu0 0.0
      %9928 = vmatprep.subr.mxu0 0.0
      %9929 = vmatpush1.msra.mxu0 0.0
      %9930 = vmatprep.subr.mxu0 0.0
      %9931 = vmatpush1.msra.mxu0 0.0
      %9932 = vmatprep.subr.mxu0 0.0
      %9933 = vmatpush1.msra.mxu0 0.0
      %9934 = vmatprep.subr.mxu0 0.0
      %9935 = vmatpush1.msra.mxu0 0.0
      %9936 = vmatprep.subr.mxu0 0.0
      %9937 = vmatpush1.msra.mxu0 0.0
      %9938 = vmatprep.subr.mxu0 0.0
      %9939 = vmatpush1.msra.mxu0 0.0
      %9940 = vmatprep.subr.mxu0 0.0
      %9941 = vmatpush1.msra.mxu0 0.0
      %9942 = vmatprep.subr.mxu0 0.0
      %9943 = vmatpush1.msra.mxu0 0.0
      %9944 = vmatprep.subr.mxu0 0.0
      %9945 = vmatpush1.msra.mxu0 0.0
      %9946 = vmatprep.subr.mxu0 0.0
      %9947 = vmatpush1.msra.mxu0 0.0
      %9948 = vmatprep.subr.mxu0 0.0
      %9949 = vmatpush1.msra.mxu0 0.0
      %9950 = vmatprep.subr.mxu0 0.0
      %9951 = vmatpush1.msra.mxu0 0.0
      %9952 = vmatprep.subr.mxu0 0.0
      %9953 = vmatpush1.msra.mxu0 0.0
      %9954 = vmatprep.subr.mxu0 0.0
      %9955 = vmatpush1.msra.mxu0 0.0
      %9956 = vmatprep.mubr.f32.mxu0 0.0
      %9957 = vmatmul.mubr.f32.gmra.mrb[0].mxu0 %v9867
      %v9958 = vpop.f32.mrb[0].mxu0
      %v9959 = vadd.f32 %v9559, %v9958
      %v9960 = vpop.f32.mrb[0].mxu0
      %9961 = vmatprep.mubr.f32.mxu0 0.0
      %9962 = vmatmul.mubr.f32.gmra.mrb[0].mxu0 %v9868
      %v9963 = vpop.f32.mrb[0].mxu0
      %v9964 = vadd.f32 %v9559, %v9963
      %v9965 = vpop.f32.mrb[0].mxu0
      %9966 = vmatprep.mubr.f32.mxu0 0.0
      %9967 = vmatmul.mubr.f32.gmra.mrb[0].mxu0 %v9869
      %v9968 = vpop.f32.mrb[0].mxu0
      %v9969 = vadd.f32 %v9559, %v9968
      %v9970 = vpop.f32.mrb[0].mxu0
      %9971 = vmatprep.mubr.f32.mxu0 0.0
      %9972 = vmatmul.mubr.f32.gmra.mrb[0].mxu0 %v9870
      %v9973 = vpop.f32.mrb[0].mxu0
      %v9974 = vadd.f32 %v9559, %v9973
      %v9975 = vpop.f32.mrb[0].mxu0
      %9976 = vmatprep.mubr.f32.mxu0 0.0
      %9977 = vmatmul.mubr.f32.gmra.mrb[0].mxu0 %v9871
      %v9978 = vpop.f32.mrb[0].mxu0
      %v9979 = vadd.f32 %v9559, %v9978
      %v9980 = vpop.f32.mrb[0].mxu0
      %9981 = vmatprep.mubr.f32.mxu0 0.0
      %9982 = vmatmul.mubr.f32.gmra.mrb[0].mxu0 %v9872
      %v9983 = vpop.f32.mrb[0].mxu0
      %v9984 = vadd.f32 %v9559, %v9983
      %v9985 = vpop.f32.mrb[0].mxu0
      %9986 = vmatprep.mubr.f32.mxu0 0.0
      %9987 = vmatmul.mubr.f32.gmra.mrb[0].mxu0 %v9873
      %v9988 = vpop.f32.mrb[0].mxu0
      %v9989 = vadd.f32 %v9559, %v9988
      %v9990 = vpop.f32.mrb[0].mxu0
      %9991 = vmatprep.mubr.f32.mxu0 0.0
      %9992 = vmatmul.mubr.f32.gmra.mrb[0].mxu0 %v9874
      %v9993 = vpop.f32.mrb[0].mxu0
      %v9994 = vadd.f32 %v9559, %v9993
      %v9995 = vpop.f32.mrb[0].mxu0
      %9996 = vdwg.mxu0
      %v9997 = vld [vmem:[%s1358] sm:$0x80]
      %v9998 = vld [vmem:[%s1358 + $0x18] sm:$0x7f]
      %v9999 = vld [vmem:[%s1358 + $0x48] sm:$0x80]
      %v10000 = vld [vmem:[%s1358 + $0x60] sm:$0x7f]
      %v10001 = vld [vmem:[%s1358 + $0x90] sm:$0x80]
      %v10002 = vld [vmem:[%s1358 + $0xa8] sm:$0x7f]
      %v10003 = vld [vmem:[%s1358 + $0xd8] sm:$0x80]
      %v10004 = vld [vmem:[%s1358 + $0xf0] sm:$0x7f]
      %v10005 = vld [vmem:[%s1358 + $0x120] sm:$0x80]
      %v10006 = vld [vmem:[%s1358 + $0x138] sm:$0x7f]
      %v10007 = vld [vmem:[%s1358 + $0x168] sm:$0x80]
      %v10008 = vld [vmem:[%s1358 + $0x180] sm:$0x7f]
      %v10009 = vld [vmem:[%s1358 + $0x1b0] sm:$0x80]
      %v10010 = vld [vmem:[%s1358 + $0x1c8] sm:$0x7f]
      %v10011 = vld [vmem:[%s1358 + $0x1f8] sm:$0x80]
      %v10012 = vld [vmem:[%s1358 + $0x210] sm:$0x7f]
      %v10013 = vld [vmem:[%s1358 + $0x18] sm:$0xff]
      %v10014 = vld [vmem:[%s1358 + $0x60] sm:$0xff]
      %v10015 = vld [vmem:[%s1358 + $0xa8] sm:$0xff]
      %v10016 = vld [vmem:[%s1358 + $0xf0] sm:$0xff]
      %v10017 = vld [vmem:[%s1358 + $0x138] sm:$0xff]
      %v10018 = vld [vmem:[%s1358 + $0x180] sm:$0xff]
      %v10019 = vld [vmem:[%s1358 + $0x1c8] sm:$0xff]
      %v10020 = vld [vmem:[%s1358 + $0x210] sm:$0xff]
      %10021 = vrot.lane.b32.xlu0 %v9410, 32
      %v10022 = vpop.permute.xlu0 %10021
      %10023 = vrot.lane.b32.xlu0 %v9411, 32
      %v10024 = vpop.permute.xlu0 %10023
      %10025 = vrot.lane.b32.xlu0 %v9412, 32
      %v10026 = vpop.permute.xlu0 %10025
      %10027 = vrot.lane.b32.xlu0 %v9413, 32
      %v10028 = vpop.permute.xlu0 %10027
      %10029 = vrot.lane.b32.xlu0 %v9414, 32
      %v10030 = vpop.permute.xlu0 %10029
      %10031 = vrot.lane.b32.xlu0 %v9415, 32
      %v10032 = vpop.permute.xlu0 %10031
      %10033 = vrot.lane.b32.xlu0 %v9416, 32
      %v10034 = vpop.permute.xlu0 %10033
      %10035 = vrot.lane.b32.xlu0 %v9417, 32
      %v10036 = vpop.permute.xlu0 %10035
      %10061 = vrot.lane.b32.xlu0 %v9997, 64
      %v10062 = vpop.permute.xlu0 %10061
      %10063 = vrot.lane.b32.xlu0 %v9998, 64
      %v10064 = vpop.permute.xlu0 %10063
      %10065 = vrot.lane.b32.xlu0 %v9999, 64
      %v10066 = vpop.permute.xlu0 %10065
      %10067 = vrot.lane.b32.xlu0 %v10000, 64
      %v10068 = vpop.permute.xlu0 %10067
      %10069 = vrot.lane.b32.xlu0 %v10001, 64
      %v10070 = vpop.permute.xlu0 %10069
      %10071 = vrot.lane.b32.xlu0 %v10002, 64
      %v10072 = vpop.permute.xlu0 %10071
      %10073 = vrot.lane.b32.xlu0 %v10003, 64
      %v10074 = vpop.permute.xlu0 %10073
      %10075 = vrot.lane.b32.xlu0 %v10004, 64
      %v10076 = vpop.permute.xlu0 %10075
      %10077 = vrot.lane.b32.xlu0 %v10005, 64
      %v10078 = vpop.permute.xlu0 %10077
      %10079 = vrot.lane.b32.xlu0 %v10006, 64
      %v10080 = vpop.permute.xlu0 %10079
      %10081 = vrot.lane.b32.xlu0 %v10007, 64
      %v10082 = vpop.permute.xlu0 %10081
      %10083 = vrot.lane.b32.xlu0 %v10008, 64
      %v10084 = vpop.permute.xlu0 %10083
      %10085 = vrot.lane.b32.xlu0 %v10009, 64
      %v10086 = vpop.permute.xlu0 %10085
      %10087 = vrot.lane.b32.xlu0 %v10010, 64
      %v10088 = vpop.permute.xlu0 %10087
      %10089 = vrot.lane.b32.xlu0 %v10011, 64
      %v10090 = vpop.permute.xlu0 %10089
      %10091 = vrot.lane.b32.xlu0 %v10012, 64
      %v10092 = vpop.permute.xlu0 %10091
      %v10117 = vrot.slane %v10013, 1
      %v10118 = vrot.slane %v10014, 1
      %v10119 = vrot.slane %v10015, 1
      %v10120 = vrot.slane %v10016, 1
      %v10121 = vrot.slane %v10017, 1
      %v10122 = vrot.slane %v10018, 1
      %v10123 = vrot.slane %v10019, 1
      %v10124 = vrot.slane %v10020, 1
      %10125 = vrot.lane.b32.xlu0 %v10117, 96
      %v10126 = vpop.permute.xlu0 %10125
      %10127 = vrot.lane.b32.xlu0 %v10118, 96
      %v10128 = vpop.permute.xlu0 %10127
      %10129 = vrot.lane.b32.xlu0 %v10119, 96
      %v10130 = vpop.permute.xlu0 %10129
      %10131 = vrot.lane.b32.xlu0 %v10120, 96
      %v10132 = vpop.permute.xlu0 %10131
      %10133 = vrot.lane.b32.xlu0 %v10121, 96
      %v10134 = vpop.permute.xlu0 %10133
      %10135 = vrot.lane.b32.xlu0 %v10122, 96
      %v10136 = vpop.permute.xlu0 %10135
      %10137 = vrot.lane.b32.xlu0 %v10123, 96
      %v10138 = vpop.permute.xlu0 %10137
      %10139 = vrot.lane.b32.xlu0 %v10124, 96
      %v10140 = vpop.permute.xlu0 %10139
      %v10149 = vsel %vm2194, %v9274, %v10022
      %v10150 = vsel %vm2194, %v9275, %v10022
      %v10151 = vsel %vm2194, %v9276, %v10024
      %v10152 = vsel %vm2194, %v9277, %v10024
      %v10153 = vsel %vm2194, %v9278, %v10026
      %v10154 = vsel %vm2194, %v9279, %v10026
      %v10155 = vsel %vm2194, %v9280, %v10028
      %v10156 = vsel %vm2194, %v9281, %v10028
      %v10157 = vsel %vm2194, %v9282, %v10030
      %v10158 = vsel %vm2194, %v9283, %v10030
      %v10159 = vsel %vm2194, %v9284, %v10032
      %v10160 = vsel %vm2194, %v9285, %v10032
      %v10161 = vsel %vm2194, %v9286, %v10034
      %v10162 = vsel %vm2194, %v9287, %v10034
      %v10163 = vsel %vm2194, %v9288, %v10036
      %v10164 = vsel %vm2194, %v9289, %v10036
      %v10165 = vsel %vm3062, %v10149, %v10062
      %v10166 = vsel %vm3062, %v10150, %v10064
      %v10167 = vsel %vm3062, %v10151, %v10066
      %v10168 = vsel %vm3062, %v10152, %v10068
      %v10169 = vsel %vm3062, %v10153, %v10070
      %v10170 = vsel %vm3062, %v10154, %v10072
      %v10171 = vsel %vm3062, %v10155, %v10074
      %v10172 = vsel %vm3062, %v10156, %v10076
      %v10173 = vsel %vm3062, %v10157, %v10078
      %v10174 = vsel %vm3062, %v10158, %v10080
      %v10175 = vsel %vm3062, %v10159, %v10082
      %v10176 = vsel %vm3062, %v10160, %v10084
      %v10177 = vsel %vm3062, %v10161, %v10086
      %v10178 = vsel %vm3062, %v10162, %v10088
      %v10179 = vsel %vm3062, %v10163, %v10090
      %v10180 = vsel %vm3062, %v10164, %v10092
      %v10181 = vsel %vm5963, %v10165, %v10126
      %v10182 = vsel %vm5963, %v10166, %v10126
      %v10183 = vsel %vm5963, %v10167, %v10128
      %v10184 = vsel %vm5963, %v10168, %v10128
      %v10185 = vsel %vm5963, %v10169, %v10130
      %v10186 = vsel %vm5963, %v10170, %v10130
      %v10187 = vsel %vm5963, %v10171, %v10132
      %v10188 = vsel %vm5963, %v10172, %v10132
      %v10189 = vsel %vm5963, %v10173, %v10134
      %v10190 = vsel %vm5963, %v10174, %v10134
      %v10191 = vsel %vm5963, %v10175, %v10136
      %v10192 = vsel %vm5963, %v10176, %v10136
      %v10193 = vsel %vm5963, %v10177, %v10138
      %v10194 = vsel %vm5963, %v10178, %v10138
      %v10195 = vsel %vm5963, %v10179, %v10140
      %v10196 = vsel %vm5963, %v10180, %v10140
      %v10213 = vrot.slane %v10181, 7
      %v10214 = vrot.slane %v10182, 7
      %v10215 = vsel %vm3399, %v10213, %v10214
      %v10216 = vrot.slane %v10183, 7
      %v10217 = vrot.slane %v10184, 7
      %v10218 = vsel %vm3399, %v10216, %v10217
      %v10219 = vrot.slane %v10185, 7
      %v10220 = vrot.slane %v10186, 7
      %v10221 = vsel %vm3399, %v10219, %v10220
      %v10222 = vrot.slane %v10187, 7
      %v10223 = vrot.slane %v10188, 7
      %v10224 = vsel %vm3399, %v10222, %v10223
      %v10225 = vrot.slane %v10189, 7
      %v10226 = vrot.slane %v10190, 7
      %v10227 = vsel %vm3399, %v10225, %v10226
      %v10228 = vrot.slane %v10191, 7
      %v10229 = vrot.slane %v10192, 7
      %v10230 = vsel %vm3399, %v10228, %v10229
      %v10231 = vrot.slane %v10193, 7
      %v10232 = vrot.slane %v10194, 7
      %v10233 = vsel %vm3399, %v10231, %v10232
      %v10234 = vrot.slane %v10195, 7
      %v10235 = vrot.slane %v10196, 7
      %v10236 = vsel %vm3399, %v10234, %v10235
      %s10245 = scalar_lea.vmem %s11, 256
      %v10246 = vld [vmem:[%s10245] sm:$0xff]
      %v10247 = vld [vmem:[%s10245 + $0x8] sm:$0xff]
      %v10248 = vld [vmem:[%s10245 + $0x10] sm:$0xff]
      %v10249 = vld [vmem:[%s10245 + $0x18] sm:$0xff]
      %v10250 = vld [vmem:[%s10245 + $0x20] sm:$0xff]
      %v10251 = vld [vmem:[%s10245 + $0x28] sm:$0xff]
      %v10252 = vld [vmem:[%s10245 + $0x30] sm:$0xff]
      %v10253 = vld [vmem:[%s10245 + $0x38] sm:$0xff]
      %v10254 = vld [vmem:[%s10245 + $0x40] sm:$0xff]
      %v10255 = vld [vmem:[%s10245 + $0x48] sm:$0xff]
      %v10256 = vld [vmem:[%s10245 + $0x50] sm:$0xff]
      %v10257 = vld [vmem:[%s10245 + $0x58] sm:$0xff]
      %v10258 = vld [vmem:[%s10245 + $0x60] sm:$0xff]
      %v10259 = vld [vmem:[%s10245 + $0x68] sm:$0xff]
      %v10260 = vld [vmem:[%s10245 + $0x70] sm:$0xff]
      %v10261 = vld [vmem:[%s10245 + $0x78] sm:$0xff]
      %10262 = vmatprep.subr.mxu0 0.0
      %10263 = vmatpush1.msra.mxu0 %v10246
      %10264 = vmatprep.subr.mxu0 0.0
      %10265 = vmatpush1.msra.mxu0 %v10247
      %10266 = vmatprep.subr.mxu0 0.0
      %10267 = vmatpush1.msra.mxu0 %v10248
      %10268 = vmatprep.subr.mxu0 0.0
      %10269 = vmatpush1.msra.mxu0 %v10249
      %10270 = vmatprep.subr.mxu0 0.0
      %10271 = vmatpush1.msra.mxu0 %v10250
      %10272 = vmatprep.subr.mxu0 0.0
      %10273 = vmatpush1.msra.mxu0 %v10251
      %10274 = vmatprep.subr.mxu0 0.0
      %10275 = vmatpush1.msra.mxu0 %v10252
      %10276 = vmatprep.subr.mxu0 0.0
      %10277 = vmatpush1.msra.mxu0 %v10253
      %10278 = vmatprep.subr.mxu0 0.0
      %10279 = vmatpush1.msra.mxu0 %v10254
      %10280 = vmatprep.subr.mxu0 0.0
      %10281 = vmatpush1.msra.mxu0 %v10255
      %10282 = vmatprep.subr.mxu0 0.0
      %10283 = vmatpush1.msra.mxu0 %v10256
      %10284 = vmatprep.subr.mxu0 0.0
      %10285 = vmatpush1.msra.mxu0 %v10257
      %10286 = vmatprep.subr.mxu0 0.0
      %10287 = vmatpush1.msra.mxu0 %v10258
      %10288 = vmatprep.subr.mxu0 0.0
      %10289 = vmatpush1.msra.mxu0 %v10259
      %10290 = vmatprep.subr.mxu0 0.0
      %10291 = vmatpush1.msra.mxu0 %v10260
      %10292 = vmatprep.subr.mxu0 0.0
      %10293 = vmatpush1.msra.mxu0 %v10261
      %10294 = vmatprep.subr.mxu0 0.0
      %10295 = vmatpush1.msra.mxu0 0.0
      %10296 = vmatprep.subr.mxu0 0.0
      %10297 = vmatpush1.msra.mxu0 0.0
      %10298 = vmatprep.subr.mxu0 0.0
      %10299 = vmatpush1.msra.mxu0 0.0
      %10300 = vmatprep.subr.mxu0 0.0
      %10301 = vmatpush1.msra.mxu0 0.0
      %10302 = vmatprep.subr.mxu0 0.0
      %10303 = vmatpush1.msra.mxu0 0.0
      %10304 = vmatprep.subr.mxu0 0.0
      %10305 = vmatpush1.msra.mxu0 0.0
      %10306 = vmatprep.subr.mxu0 0.0
      %10307 = vmatpush1.msra.mxu0 0.0
      %10308 = vmatprep.subr.mxu0 0.0
      %10309 = vmatpush1.msra.mxu0 0.0
      %10310 = vmatprep.subr.mxu0 0.0
      %10311 = vmatpush1.msra.mxu0 0.0
      %10312 = vmatprep.subr.mxu0 0.0
      %10313 = vmatpush1.msra.mxu0 0.0
      %10314 = vmatprep.subr.mxu0 0.0
      %10315 = vmatpush1.msra.mxu0 0.0
      %10316 = vmatprep.subr.mxu0 0.0
      %10317 = vmatpush1.msra.mxu0 0.0
      %10318 = vmatprep.subr.mxu0 0.0
      %10319 = vmatpush1.msra.mxu0 0.0
      %10320 = vmatprep.subr.mxu0 0.0
      %10321 = vmatpush1.msra.mxu0 0.0
      %10322 = vmatprep.subr.mxu0 0.0
      %10323 = vmatpush1.msra.mxu0 0.0
      %10324 = vmatprep.subr.mxu0 0.0
      %10325 = vmatpush1.msra.mxu0 0.0
      %10326 = vmatprep.mubr.f32.mxu0 0.0
      %10327 = vmatmul.mubr.f32.gmra.mrb[0].mxu0 %v10215
      %v10328 = vpop.f32.mrb[0].mxu0
      %v10329 = vadd.f32 %v9559, %v10328
      %v10330 = vpop.f32.mrb[0].mxu0
      %10331 = vmatprep.mubr.f32.mxu0 0.0
      %10332 = vmatmul.mubr.f32.gmra.mrb[0].mxu0 %v10218
      %v10333 = vpop.f32.mrb[0].mxu0
      %v10334 = vadd.f32 %v9559, %v10333
      %v10335 = vpop.f32.mrb[0].mxu0
      %10336 = vmatprep.mubr.f32.mxu0 0.0
      %10337 = vmatmul.mubr.f32.gmra.mrb[0].mxu0 %v10221
      %v10338 = vpop.f32.mrb[0].mxu0
      %v10339 = vadd.f32 %v9559, %v10338
      %v10340 = vpop.f32.mrb[0].mxu0
      %10341 = vmatprep.mubr.f32.mxu0 0.0
      %10342 = vmatmul.mubr.f32.gmra.mrb[0].mxu0 %v10224
      %v10343 = vpop.f32.mrb[0].mxu0
      %v10344 = vadd.f32 %v9559, %v10343
      %v10345 = vpop.f32.mrb[0].mxu0
      %10346 = vmatprep.mubr.f32.mxu0 0.0
      %10347 = vmatmul.mubr.f32.gmra.mrb[0].mxu0 %v10227
      %v10348 = vpop.f32.mrb[0].mxu0
      %v10349 = vadd.f32 %v9559, %v10348
      %v10350 = vpop.f32.mrb[0].mxu0
      %10351 = vmatprep.mubr.f32.mxu0 0.0
      %10352 = vmatmul.mubr.f32.gmra.mrb[0].mxu0 %v10230
      %v10353 = vpop.f32.mrb[0].mxu0
      %v10354 = vadd.f32 %v9559, %v10353
      %v10355 = vpop.f32.mrb[0].mxu0
      %10356 = vmatprep.mubr.f32.mxu0 0.0
      %10357 = vmatmul.mubr.f32.gmra.mrb[0].mxu0 %v10233
      %v10358 = vpop.f32.mrb[0].mxu0
      %v10359 = vadd.f32 %v9559, %v10358
      %v10360 = vpop.f32.mrb[0].mxu0
      %10361 = vmatprep.mubr.f32.mxu0 0.0
      %10362 = vmatmul.mubr.f32.gmra.mrb[0].mxu0 %v10236
      %v10363 = vpop.f32.mrb[0].mxu0
      %v10364 = vadd.f32 %v9559, %v10363
      %v10365 = vpop.f32.mrb[0].mxu0
      %10366 = vdwg.mxu0
      %v10367 = vld [vmem:[%s1358 + $0x18] sm:$0xfe]
      %v10368 = vld [vmem:[%s1358 + $0x30] sm:$0x1]
      %v10369 = vld [vmem:[%s1358 + $0x60] sm:$0xfe]
      %v10370 = vld [vmem:[%s1358 + $0x78] sm:$0x1]
      %v10371 = vld [vmem:[%s1358 + $0xa8] sm:$0xfe]
      %v10372 = vld [vmem:[%s1358 + $0xc0] sm:$0x1]
      %v10373 = vld [vmem:[%s1358 + $0xf0] sm:$0xfe]
      %v10374 = vld [vmem:[%s1358 + $0x108] sm:$0x1]
      %v10375 = vld [vmem:[%s1358 + $0x138] sm:$0xfe]
      %v10376 = vld [vmem:[%s1358 + $0x150] sm:$0x1]
      %v10377 = vld [vmem:[%s1358 + $0x180] sm:$0xfe]
      %v10378 = vld [vmem:[%s1358 + $0x198] sm:$0x1]
      %v10379 = vld [vmem:[%s1358 + $0x1c8] sm:$0xfe]
      %v10380 = vld [vmem:[%s1358 + $0x1e0] sm:$0x1]
      %v10381 = vld [vmem:[%s1358 + $0x210] sm:$0xfe]
      %v10382 = vld [vmem:[%s1358 + $0x228] sm:$0x1]
      %10383 = vrot.lane.b32.xlu0 %v9805, 32
      %v10384 = vpop.permute.xlu0 %10383
      %10385 = vrot.lane.b32.xlu0 %v9808, 32
      %v10386 = vpop.permute.xlu0 %10385
      %10387 = vrot.lane.b32.xlu0 %v9811, 32
      %v10388 = vpop.permute.xlu0 %10387
      %10389 = vrot.lane.b32.xlu0 %v9814, 32
      %v10390 = vpop.permute.xlu0 %10389
      %10391 = vrot.lane.b32.xlu0 %v9817, 32
      %v10392 = vpop.permute.xlu0 %10391
      %10393 = vrot.lane.b32.xlu0 %v9820, 32
      %v10394 = vpop.permute.xlu0 %10393
      %10395 = vrot.lane.b32.xlu0 %v9823, 32
      %v10396 = vpop.permute.xlu0 %10395
      %10397 = vrot.lane.b32.xlu0 %v9826, 32
      %v10398 = vpop.permute.xlu0 %10397
      %10407 = vrot.lane.b32.xlu0 %v10013, 64
      %v10408 = vpop.permute.xlu0 %10407
      %10409 = vrot.lane.b32.xlu0 %v10014, 64
      %v10410 = vpop.permute.xlu0 %10409
      %10411 = vrot.lane.b32.xlu0 %v10015, 64
      %v10412 = vpop.permute.xlu0 %10411
      %10413 = vrot.lane.b32.xlu0 %v10016, 64
      %v10414 = vpop.permute.xlu0 %10413
      %10415 = vrot.lane.b32.xlu0 %v10017, 64
      %v10416 = vpop.permute.xlu0 %10415
      %10417 = vrot.lane.b32.xlu0 %v10018, 64
      %v10418 = vpop.permute.xlu0 %10417
      %10419 = vrot.lane.b32.xlu0 %v10019, 64
      %v10420 = vpop.permute.xlu0 %10419
      %10421 = vrot.lane.b32.xlu0 %v10020, 64
      %v10422 = vpop.permute.xlu0 %10421
      %v10447 = vrot.slane %v10367, 1
      %v10448 = vrot.slane %v10368, 1
      %v10449 = vsel %vm9714, %v10447, %v10448
      %v10450 = vrot.slane %v10369, 1
      %v10451 = vrot.slane %v10370, 1
      %v10452 = vsel %vm9714, %v10450, %v10451
      %v10453 = vrot.slane %v10371, 1
      %v10454 = vrot.slane %v10372, 1
      %v10455 = vsel %vm9714, %v10453, %v10454
      %v10456 = vrot.slane %v10373, 1
      %v10457 = vrot.slane %v10374, 1
      %v10458 = vsel %vm9714, %v10456, %v10457
      %v10459 = vrot.slane %v10375, 1
      %v10460 = vrot.slane %v10376, 1
      %v10461 = vsel %vm9714, %v10459, %v10460
      %v10462 = vrot.slane %v10377, 1
      %v10463 = vrot.slane %v10378, 1
      %v10464 = vsel %vm9714, %v10462, %v10463
      %v10465 = vrot.slane %v10379, 1
      %v10466 = vrot.slane %v10380, 1
      %v10467 = vsel %vm9714, %v10465, %v10466
      %v10468 = vrot.slane %v10381, 1
      %v10469 = vrot.slane %v10382, 1
      %v10470 = vsel %vm9714, %v10468, %v10469
      %10471 = vrot.lane.b32.xlu0 %v10449, 96
      %v10472 = vpop.permute.xlu0 %10471
      %10473 = vrot.lane.b32.xlu0 %v10452, 96
      %v10474 = vpop.permute.xlu0 %10473
      %10475 = vrot.lane.b32.xlu0 %v10455, 96
      %v10476 = vpop.permute.xlu0 %10475
      %10477 = vrot.lane.b32.xlu0 %v10458, 96
      %v10478 = vpop.permute.xlu0 %10477
      %10479 = vrot.lane.b32.xlu0 %v10461, 96
      %v10480 = vpop.permute.xlu0 %10479
      %10481 = vrot.lane.b32.xlu0 %v10464, 96
      %v10482 = vpop.permute.xlu0 %10481
      %10483 = vrot.lane.b32.xlu0 %v10467, 96
      %v10484 = vpop.permute.xlu0 %10483
      %10485 = vrot.lane.b32.xlu0 %v10470, 96
      %v10486 = vpop.permute.xlu0 %10485
      %v10495 = vsel %vm2194, %v9290, %v10384
      %v10496 = vsel %vm2194, %v9291, %v10386
      %v10497 = vsel %vm2194, %v9292, %v10388
      %v10498 = vsel %vm2194, %v9293, %v10390
      %v10499 = vsel %vm2194, %v9294, %v10392
      %v10500 = vsel %vm2194, %v9295, %v10394
      %v10501 = vsel %vm2194, %v9296, %v10396
      %v10502 = vsel %vm2194, %v9297, %v10398
      %v10503 = vsel %vm3062, %v10495, %v10408
      %v10504 = vsel %vm3062, %v10496, %v10410
      %v10505 = vsel %vm3062, %v10497, %v10412
      %v10506 = vsel %vm3062, %v10498, %v10414
      %v10507 = vsel %vm3062, %v10499, %v10416
      %v10508 = vsel %vm3062, %v10500, %v10418
      %v10509 = vsel %vm3062, %v10501, %v10420
      %v10510 = vsel %vm3062, %v10502, %v10422
      %v10511 = vsel %vm5963, %v10503, %v10472
      %v10512 = vsel %vm5963, %v10504, %v10474
      %v10513 = vsel %vm5963, %v10505, %v10476
      %v10514 = vsel %vm5963, %v10506, %v10478
      %v10515 = vsel %vm5963, %v10507, %v10480
      %v10516 = vsel %vm5963, %v10508, %v10482
      %v10517 = vsel %vm5963, %v10509, %v10484
      %v10518 = vsel %vm5963, %v10510, %v10486
      %s10519 = scalar_lea.vmem %s11, 384
      %v10520 = vld [vmem:[%s10519] sm:$0xff]
      %v10521 = vld [vmem:[%s10519 + $0x8] sm:$0xff]
      %v10522 = vld [vmem:[%s10519 + $0x10] sm:$0xff]
      %v10523 = vld [vmem:[%s10519 + $0x18] sm:$0xff]
      %v10524 = vld [vmem:[%s10519 + $0x20] sm:$0xff]
      %v10525 = vld [vmem:[%s10519 + $0x28] sm:$0xff]
      %v10526 = vld [vmem:[%s10519 + $0x30] sm:$0xff]
      %v10527 = vld [vmem:[%s10519 + $0x38] sm:$0xff]
      %v10528 = vld [vmem:[%s10519 + $0x40] sm:$0xff]
      %v10529 = vld [vmem:[%s10519 + $0x48] sm:$0xff]
      %v10530 = vld [vmem:[%s10519 + $0x50] sm:$0xff]
      %v10531 = vld [vmem:[%s10519 + $0x58] sm:$0xff]
      %v10532 = vld [vmem:[%s10519 + $0x60] sm:$0xff]
      %v10533 = vld [vmem:[%s10519 + $0x68] sm:$0xff]
      %v10534 = vld [vmem:[%s10519 + $0x70] sm:$0xff]
      %v10535 = vld [vmem:[%s10519 + $0x78] sm:$0xff]
      %10536 = vmatprep.subr.mxu0 0.0
      %10537 = vmatpush1.msra.mxu0 %v10520
      %10538 = vmatprep.subr.mxu0 0.0
      %10539 = vmatpush1.msra.mxu0 %v10521
      %10540 = vmatprep.subr.mxu0 0.0
      %10541 = vmatpush1.msra.mxu0 %v10522
      %10542 = vmatprep.subr.mxu0 0.0
      %10543 = vmatpush1.msra.mxu0 %v10523
      %10544 = vmatprep.subr.mxu0 0.0
      %10545 = vmatpush1.msra.mxu0 %v10524
      %10546 = vmatprep.subr.mxu0 0.0
      %10547 = vmatpush1.msra.mxu0 %v10525
      %10548 = vmatprep.subr.mxu0 0.0
      %10549 = vmatpush1.msra.mxu0 %v10526
      %10550 = vmatprep.subr.mxu0 0.0
      %10551 = vmatpush1.msra.mxu0 %v10527
      %10552 = vmatprep.subr.mxu0 0.0
      %10553 = vmatpush1.msra.mxu0 %v10528
      %10554 = vmatprep.subr.mxu0 0.0
      %10555 = vmatpush1.msra.mxu0 %v10529
      %10556 = vmatprep.subr.mxu0 0.0
      %10557 = vmatpush1.msra.mxu0 %v10530
      %10558 = vmatprep.subr.mxu0 0.0
      %10559 = vmatpush1.msra.mxu0 %v10531
      %10560 = vmatprep.subr.mxu0 0.0
      %10561 = vmatpush1.msra.mxu0 %v10532
      %10562 = vmatprep.subr.mxu0 0.0
      %10563 = vmatpush1.msra.mxu0 %v10533
      %10564 = vmatprep.subr.mxu0 0.0
      %10565 = vmatpush1.msra.mxu0 %v10534
      %10566 = vmatprep.subr.mxu0 0.0
      %10567 = vmatpush1.msra.mxu0 %v10535
      %10568 = vmatprep.subr.mxu0 0.0
      %10569 = vmatpush1.msra.mxu0 0.0
      %10570 = vmatprep.subr.mxu0 0.0
      %10571 = vmatpush1.msra.mxu0 0.0
      %10572 = vmatprep.subr.mxu0 0.0
      %10573 = vmatpush1.msra.mxu0 0.0
      %10574 = vmatprep.subr.mxu0 0.0
      %10575 = vmatpush1.msra.mxu0 0.0
      %10576 = vmatprep.subr.mxu0 0.0
      %10577 = vmatpush1.msra.mxu0 0.0
      %10578 = vmatprep.subr.mxu0 0.0
      %10579 = vmatpush1.msra.mxu0 0.0
      %10580 = vmatprep.subr.mxu0 0.0
      %10581 = vmatpush1.msra.mxu0 0.0
      %10582 = vmatprep.subr.mxu0 0.0
      %10583 = vmatpush1.msra.mxu0 0.0
      %10584 = vmatprep.subr.mxu0 0.0
      %10585 = vmatpush1.msra.mxu0 0.0
      %10586 = vmatprep.subr.mxu0 0.0
      %10587 = vmatpush1.msra.mxu0 0.0
      %10588 = vmatprep.subr.mxu0 0.0
      %10589 = vmatpush1.msra.mxu0 0.0
      %10590 = vmatprep.subr.mxu0 0.0
      %10591 = vmatpush1.msra.mxu0 0.0
      %10592 = vmatprep.subr.mxu0 0.0
      %10593 = vmatpush1.msra.mxu0 0.0
      %10594 = vmatprep.subr.mxu0 0.0
      %10595 = vmatpush1.msra.mxu0 0.0
      %10596 = vmatprep.subr.mxu0 0.0
      %10597 = vmatpush1.msra.mxu0 0.0
      %10598 = vmatprep.subr.mxu0 0.0
      %10599 = vmatpush1.msra.mxu0 0.0
      %10600 = vmatprep.mubr.f32.mxu0 0.0
      %10601 = vmatmul.mubr.f32.gmra.mrb[0].mxu0 %v10511
      %v10602 = vpop.f32.mrb[0].mxu0
      %v10603 = vadd.f32 %v9559, %v10602
      %v10604 = vpop.f32.mrb[0].mxu0
      %10605 = vmatprep.mubr.f32.mxu0 0.0
      %10606 = vmatmul.mubr.f32.gmra.mrb[0].mxu0 %v10512
      %v10607 = vpop.f32.mrb[0].mxu0
      %v10608 = vadd.f32 %v9559, %v10607
      %v10609 = vpop.f32.mrb[0].mxu0
      %10610 = vmatprep.mubr.f32.mxu0 0.0
      %10611 = vmatmul.mubr.f32.gmra.mrb[0].mxu0 %v10513
      %v10612 = vpop.f32.mrb[0].mxu0
      %v10613 = vadd.f32 %v9559, %v10612
      %v10614 = vpop.f32.mrb[0].mxu0
      %10615 = vmatprep.mubr.f32.mxu0 0.0
      %10616 = vmatmul.mubr.f32.gmra.mrb[0].mxu0 %v10514
      %v10617 = vpop.f32.mrb[0].mxu0
      %v10618 = vadd.f32 %v9559, %v10617
      %v10619 = vpop.f32.mrb[0].mxu0
      %10620 = vmatprep.mubr.f32.mxu0 0.0
      %10621 = vmatmul.mubr.f32.gmra.mrb[0].mxu0 %v10515
      %v10622 = vpop.f32.mrb[0].mxu0
      %v10623 = vadd.f32 %v9559, %v10622
      %v10624 = vpop.f32.mrb[0].mxu0
      %10625 = vmatprep.mubr.f32.mxu0 0.0
      %10626 = vmatmul.mubr.f32.gmra.mrb[0].mxu0 %v10516
      %v10627 = vpop.f32.mrb[0].mxu0
      %v10628 = vadd.f32 %v9559, %v10627
      %v10629 = vpop.f32.mrb[0].mxu0
      %10630 = vmatprep.mubr.f32.mxu0 0.0
      %10631 = vmatmul.mubr.f32.gmra.mrb[0].mxu0 %v10517
      %v10632 = vpop.f32.mrb[0].mxu0
      %v10633 = vadd.f32 %v9559, %v10632
      %v10634 = vpop.f32.mrb[0].mxu0
      %10635 = vmatprep.mubr.f32.mxu0 0.0
      %10636 = vmatmul.mubr.f32.gmra.mrb[0].mxu0 %v10518
      %v10637 = vpop.f32.mrb[0].mxu0
      %v10638 = vadd.f32 %v9559, %v10637
      %v10639 = vpop.f32.mrb[0].mxu0
      %10640 = vdwg.mxu0
      %v10641 = vld [vmem:[%s13] sm:$0xff]
      %v10642 = vld [vmem:[%s13 + $0x8] sm:$0xff]
      %v10643 = vld [vmem:[%s13 + $0x10] sm:$0xff]
      %v10644 = vld [vmem:[%s13 + $0x18] sm:$0xff]
      %v10645 = vld [vmem:[%s13 + $0x20] sm:$0xff]
      %v10646 = vld [vmem:[%s13 + $0x28] sm:$0xff]
      %v10647 = vld [vmem:[%s13 + $0x30] sm:$0xff]
      %v10648 = vld [vmem:[%s13 + $0x38] sm:$0xff]
      %v10649 = vld [vmem:[%s13 + $0x40] sm:$0xff]
      %v10650 = vld [vmem:[%s13 + $0x48] sm:$0xff]
      %v10651 = vld [vmem:[%s13 + $0x50] sm:$0xff]
      %v10652 = vld [vmem:[%s13 + $0x58] sm:$0xff]
      %v10653 = vld [vmem:[%s13 + $0x60] sm:$0xff]
      %v10654 = vld [vmem:[%s13 + $0x68] sm:$0xff]
      %v10655 = vld [vmem:[%s13 + $0x70] sm:$0xff]
      %v10656 = vld [vmem:[%s13 + $0x78] sm:$0xff]
      %v10657 = vld [vmem:[%s13 + $0x80] sm:$0xff]
      %v10658 = vld [vmem:[%s13 + $0x88] sm:$0xff]
      %v10659 = vld [vmem:[%s13 + $0x90] sm:$0xff]
      %v10660 = vld [vmem:[%s13 + $0x98] sm:$0xff]
      %v10661 = vld [vmem:[%s13 + $0xa0] sm:$0xff]
      %v10662 = vld [vmem:[%s13 + $0xa8] sm:$0xff]
      %v10663 = vld [vmem:[%s13 + $0xb0] sm:$0xff]
      %v10664 = vld [vmem:[%s13 + $0xb8] sm:$0xff]
      %v10665 = vld [vmem:[%s13 + $0xc0] sm:$0xff]
      %v10666 = vld [vmem:[%s13 + $0xc8] sm:$0xff]
      %v10667 = vld [vmem:[%s13 + $0xd0] sm:$0xff]
      %v10668 = vld [vmem:[%s13 + $0xd8] sm:$0xff]
      %v10669 = vld [vmem:[%s13 + $0xe0] sm:$0xff]
      %v10670 = vld [vmem:[%s13 + $0xe8] sm:$0xff]
      %v10671 = vld [vmem:[%s13 + $0xf0] sm:$0xff]
      %v10672 = vld [vmem:[%s13 + $0xf8] sm:$0xff]
      %v10673 = vld [vmem:[%s13 + $0x100] sm:$0xff]
      %v10674 = vld [vmem:[%s13 + $0x108] sm:$0xff]
      %v10675 = vld [vmem:[%s13 + $0x110] sm:$0xff]
      %v10676 = vld [vmem:[%s13 + $0x118] sm:$0xff]
      %v10677 = vld [vmem:[%s13 + $0x120] sm:$0xff]
      %v10678 = vld [vmem:[%s13 + $0x128] sm:$0xff]
      %v10679 = vld [vmem:[%s13 + $0x130] sm:$0xff]
      %v10680 = vld [vmem:[%s13 + $0x138] sm:$0xff]
      %v10681 = vld [vmem:[%s13 + $0x140] sm:$0xff]
      %v10682 = vld [vmem:[%s13 + $0x148] sm:$0xff]
      %v10683 = vld [vmem:[%s13 + $0x150] sm:$0xff]
      %v10684 = vld [vmem:[%s13 + $0x158] sm:$0xff]
      %v10685 = vld [vmem:[%s13 + $0x160] sm:$0xff]
      %v10686 = vld [vmem:[%s13 + $0x168] sm:$0xff]
      %v10687 = vld [vmem:[%s13 + $0x170] sm:$0xff]
      %v10688 = vld [vmem:[%s13 + $0x178] sm:$0xff]
      %v10689 = vld [vmem:[%s13 + $0x180] sm:$0xff]
      %v10690 = vld [vmem:[%s13 + $0x188] sm:$0xff]
      %v10691 = vld [vmem:[%s13 + $0x190] sm:$0xff]
      %v10692 = vld [vmem:[%s13 + $0x198] sm:$0xff]
      %v10693 = vld [vmem:[%s13 + $0x1a0] sm:$0xff]
      %v10694 = vld [vmem:[%s13 + $0x1a8] sm:$0xff]
      %v10695 = vld [vmem:[%s13 + $0x1b0] sm:$0xff]
      %v10696 = vld [vmem:[%s13 + $0x1b8] sm:$0xff]
      %v10697 = vld [vmem:[%s13 + $0x1c0] sm:$0xff]
      %v10698 = vld [vmem:[%s13 + $0x1c8] sm:$0xff]
      %v10699 = vld [vmem:[%s13 + $0x1d0] sm:$0xff]
      %v10700 = vld [vmem:[%s13 + $0x1d8] sm:$0xff]
      %v10701 = vld [vmem:[%s13 + $0x1e0] sm:$0xff]
      %v10702 = vld [vmem:[%s13 + $0x1e8] sm:$0xff]
      %v10703 = vld [vmem:[%s13 + $0x1f0] sm:$0xff]
      %v10704 = vld [vmem:[%s13 + $0x1f8] sm:$0xff]
      %v10705 = vld [vmem:[%s13 + $0x200] sm:$0xff]
      %v10706 = vld [vmem:[%s13 + $0x208] sm:$0xff]
      %v10707 = vld [vmem:[%s13 + $0x210] sm:$0xff]
      %v10708 = vld [vmem:[%s13 + $0x218] sm:$0xff]
      %v10709 = vld [vmem:[%s13 + $0x220] sm:$0xff]
      %v10710 = vld [vmem:[%s13 + $0x228] sm:$0xff]
      %v10711 = vld [vmem:[%s13 + $0x230] sm:$0xff]
      %v10712 = vld [vmem:[%s13 + $0x238] sm:$0xff]
      %v10713 = vld [vmem:[%s13 + $0x240] sm:$0xff]
      %v10714 = vld [vmem:[%s13 + $0x248] sm:$0xff]
      %v10715 = vld [vmem:[%s13 + $0x250] sm:$0xff]
      %v10716 = vld [vmem:[%s13 + $0x258] sm:$0xff]
      %v10717 = vld [vmem:[%s13 + $0x260] sm:$0xff]
      %v10718 = vld [vmem:[%s13 + $0x268] sm:$0xff]
      %v10719 = vld [vmem:[%s13 + $0x270] sm:$0xff]
      %v10720 = vld [vmem:[%s13 + $0x278] sm:$0xff]
      %v10721 = vld [vmem:[%s13 + $0x280] sm:$0xff]
      %v10722 = vld [vmem:[%s13 + $0x288] sm:$0xff]
      %v10723 = vld [vmem:[%s13 + $0x290] sm:$0xff]
      %v10724 = vld [vmem:[%s13 + $0x298] sm:$0xff]
      %v10725 = vld [vmem:[%s13 + $0x2a0] sm:$0xff]
      %v10726 = vld [vmem:[%s13 + $0x2a8] sm:$0xff]
      %v10727 = vld [vmem:[%s13 + $0x2b0] sm:$0xff]
      %v10728 = vld [vmem:[%s13 + $0x2b8] sm:$0xff]
      %v10729 = vld [vmem:[%s13 + $0x2c0] sm:$0xff]
      %v10730 = vld [vmem:[%s13 + $0x2c8] sm:$0xff]
      %v10731 = vld [vmem:[%s13 + $0x2d0] sm:$0xff]
      %v10732 = vld [vmem:[%s13 + $0x2d8] sm:$0xff]
      %v10733 = vld [vmem:[%s13 + $0x2e0] sm:$0xff]
      %v10734 = vld [vmem:[%s13 + $0x2e8] sm:$0xff]
      %v10735 = vld [vmem:[%s13 + $0x2f0] sm:$0xff]
      %v10736 = vld [vmem:[%s13 + $0x2f8] sm:$0xff]
      %v10737 = vld [vmem:[%s13 + $0x300] sm:$0xff]
      %v10738 = vld [vmem:[%s13 + $0x308] sm:$0xff]
      %v10739 = vld [vmem:[%s13 + $0x310] sm:$0xff]
      %v10740 = vld [vmem:[%s13 + $0x318] sm:$0xff]
      %v10741 = vld [vmem:[%s13 + $0x320] sm:$0xff]
      %v10742 = vld [vmem:[%s13 + $0x328] sm:$0xff]
      %v10743 = vld [vmem:[%s13 + $0x330] sm:$0xff]
      %v10744 = vld [vmem:[%s13 + $0x338] sm:$0xff]
      %v10745 = vld [vmem:[%s13 + $0x340] sm:$0xff]
      %v10746 = vld [vmem:[%s13 + $0x348] sm:$0xff]
      %v10747 = vld [vmem:[%s13 + $0x350] sm:$0xff]
      %v10748 = vld [vmem:[%s13 + $0x358] sm:$0xff]
      %v10749 = vld [vmem:[%s13 + $0x360] sm:$0xff]
      %v10750 = vld [vmem:[%s13 + $0x368] sm:$0xff]
      %v10751 = vld [vmem:[%s13 + $0x370] sm:$0xff]
      %v10752 = vld [vmem:[%s13 + $0x378] sm:$0xff]
      %v10753 = vld [vmem:[%s13 + $0x380] sm:$0xff]
      %v10754 = vld [vmem:[%s13 + $0x388] sm:$0xff]
      %v10755 = vld [vmem:[%s13 + $0x390] sm:$0xff]
      %v10756 = vld [vmem:[%s13 + $0x398] sm:$0xff]
      %v10757 = vld [vmem:[%s13 + $0x3a0] sm:$0xff]
      %v10758 = vld [vmem:[%s13 + $0x3a8] sm:$0xff]
      %v10759 = vld [vmem:[%s13 + $0x3b0] sm:$0xff]
      %v10760 = vld [vmem:[%s13 + $0x3b8] sm:$0xff]
      %v10761 = vld [vmem:[%s13 + $0x3c0] sm:$0xff]
      %v10762 = vld [vmem:[%s13 + $0x3c8] sm:$0xff]
      %v10763 = vld [vmem:[%s13 + $0x3d0] sm:$0xff]
      %v10764 = vld [vmem:[%s13 + $0x3d8] sm:$0xff]
      %v10765 = vld [vmem:[%s13 + $0x3e0] sm:$0xff]
      %v10766 = vld [vmem:[%s13 + $0x3e8] sm:$0xff]
      %v10767 = vld [vmem:[%s13 + $0x3f0] sm:$0xff]
      %v10768 = vld [vmem:[%s13 + $0x3f8] sm:$0xff]
      %v10769 = vld [vmem:[%s13 + $0x400] sm:$0xff]
      %v10770 = vld [vmem:[%s13 + $0x408] sm:$0xff]
      %v10771 = vld [vmem:[%s13 + $0x410] sm:$0xff]
      %v10772 = vld [vmem:[%s13 + $0x418] sm:$0xff]
      %v10773 = vld [vmem:[%s13 + $0x420] sm:$0xff]
      %v10774 = vld [vmem:[%s13 + $0x428] sm:$0xff]
      %v10775 = vld [vmem:[%s13 + $0x430] sm:$0xff]
      %v10776 = vld [vmem:[%s13 + $0x438] sm:$0xff]
      %v10777 = vld [vmem:[%s13 + $0x440] sm:$0xff]
      %v10778 = vld [vmem:[%s13 + $0x448] sm:$0xff]
      %v10779 = vld [vmem:[%s13 + $0x450] sm:$0xff]
      %v10780 = vld [vmem:[%s13 + $0x458] sm:$0xff]
      %v10781 = vld [vmem:[%s13 + $0x460] sm:$0xff]
      %v10782 = vld [vmem:[%s13 + $0x468] sm:$0xff]
      %v10783 = vld [vmem:[%s13 + $0x470] sm:$0xff]
      %v10784 = vld [vmem:[%s13 + $0x478] sm:$0xff]
      %v10785 = vld [vmem:[%s13 + $0x480] sm:$0xff]
      %v10786 = vld [vmem:[%s13 + $0x488] sm:$0xff]
      %v10787 = vld [vmem:[%s13 + $0x490] sm:$0xff]
      %v10788 = vld [vmem:[%s13 + $0x498] sm:$0xff]
      %v10789 = vld [vmem:[%s13 + $0x4a0] sm:$0xff]
      %v10790 = vld [vmem:[%s13 + $0x4a8] sm:$0xff]
      %v10791 = vld [vmem:[%s13 + $0x4b0] sm:$0xff]
      %v10792 = vld [vmem:[%s13 + $0x4b8] sm:$0xff]
      %v10793 = vld [vmem:[%s13 + $0x4c0] sm:$0xff]
      %v10794 = vld [vmem:[%s13 + $0x4c8] sm:$0xff]
      %v10795 = vld [vmem:[%s13 + $0x4d0] sm:$0xff]
      %v10796 = vld [vmem:[%s13 + $0x4d8] sm:$0xff]
      %v10797 = vld [vmem:[%s13 + $0x4e0] sm:$0xff]
      %v10798 = vld [vmem:[%s13 + $0x4e8] sm:$0xff]
      %v10799 = vld [vmem:[%s13 + $0x4f0] sm:$0xff]
      %v10800 = vld [vmem:[%s13 + $0x4f8] sm:$0xff]
      %v10801 = vld [vmem:[%s13 + $0x500] sm:$0xff]
      %v10802 = vld [vmem:[%s13 + $0x508] sm:$0xff]
      %v10803 = vld [vmem:[%s13 + $0x510] sm:$0xff]
      %v10804 = vld [vmem:[%s13 + $0x518] sm:$0xff]
      %v10805 = vld [vmem:[%s13 + $0x520] sm:$0xff]
      %v10806 = vld [vmem:[%s13 + $0x528] sm:$0xff]
      %v10807 = vld [vmem:[%s13 + $0x530] sm:$0xff]
      %v10808 = vld [vmem:[%s13 + $0x538] sm:$0xff]
      %v10809 = vld [vmem:[%s13 + $0x540] sm:$0xff]
      %v10810 = vld [vmem:[%s13 + $0x548] sm:$0xff]
      %v10811 = vld [vmem:[%s13 + $0x550] sm:$0xff]
      %v10812 = vld [vmem:[%s13 + $0x558] sm:$0xff]
      %v10813 = vld [vmem:[%s13 + $0x560] sm:$0xff]
      %v10814 = vld [vmem:[%s13 + $0x568] sm:$0xff]
      %v10815 = vld [vmem:[%s13 + $0x570] sm:$0xff]
      %v10816 = vld [vmem:[%s13 + $0x578] sm:$0xff]
      %v10817 = vld [vmem:[%s13 + $0x580] sm:$0xff]
      %v10818 = vld [vmem:[%s13 + $0x588] sm:$0xff]
      %v10819 = vld [vmem:[%s13 + $0x590] sm:$0xff]
      %v10820 = vld [vmem:[%s13 + $0x598] sm:$0xff]
      %v10821 = vld [vmem:[%s13 + $0x5a0] sm:$0xff]
      %v10822 = vld [vmem:[%s13 + $0x5a8] sm:$0xff]
      %v10823 = vld [vmem:[%s13 + $0x5b0] sm:$0xff]
      %v10824 = vld [vmem:[%s13 + $0x5b8] sm:$0xff]
      %v10825 = vld [vmem:[%s13 + $0x5c0] sm:$0xff]
      %v10826 = vld [vmem:[%s13 + $0x5c8] sm:$0xff]
      %v10827 = vld [vmem:[%s13 + $0x5d0] sm:$0xff]
      %v10828 = vld [vmem:[%s13 + $0x5d8] sm:$0xff]
      %v10829 = vld [vmem:[%s13 + $0x5e0] sm:$0xff]
      %v10830 = vld [vmem:[%s13 + $0x5e8] sm:$0xff]
      %v10831 = vld [vmem:[%s13 + $0x5f0] sm:$0xff]
      %v10832 = vld [vmem:[%s13 + $0x5f8] sm:$0xff]
      %v10833 = vld [vmem:[%s13 + $0x600] sm:$0xff]
      %v10834 = vld [vmem:[%s13 + $0x608] sm:$0xff]
      %v10835 = vld [vmem:[%s13 + $0x610] sm:$0xff]
      %v10836 = vld [vmem:[%s13 + $0x618] sm:$0xff]
      %v10837 = vld [vmem:[%s13 + $0x620] sm:$0xff]
      %v10838 = vld [vmem:[%s13 + $0x628] sm:$0xff]
      %v10839 = vld [vmem:[%s13 + $0x630] sm:$0xff]
      %v10840 = vld [vmem:[%s13 + $0x638] sm:$0xff]
      %v10841 = vld [vmem:[%s13 + $0x640] sm:$0xff]
      %v10842 = vld [vmem:[%s13 + $0x648] sm:$0xff]
      %v10843 = vld [vmem:[%s13 + $0x650] sm:$0xff]
      %v10844 = vld [vmem:[%s13 + $0x658] sm:$0xff]
      %v10845 = vld [vmem:[%s13 + $0x660] sm:$0xff]
      %v10846 = vld [vmem:[%s13 + $0x668] sm:$0xff]
      %v10847 = vld [vmem:[%s13 + $0x670] sm:$0xff]
      %v10848 = vld [vmem:[%s13 + $0x678] sm:$0xff]
      %v10849 = vld [vmem:[%s13 + $0x680] sm:$0xff]
      %v10850 = vld [vmem:[%s13 + $0x688] sm:$0xff]
      %v10851 = vld [vmem:[%s13 + $0x690] sm:$0xff]
      %v10852 = vld [vmem:[%s13 + $0x698] sm:$0xff]
      %v10853 = vld [vmem:[%s13 + $0x6a0] sm:$0xff]
      %v10854 = vld [vmem:[%s13 + $0x6a8] sm:$0xff]
      %v10855 = vld [vmem:[%s13 + $0x6b0] sm:$0xff]
      %v10856 = vld [vmem:[%s13 + $0x6b8] sm:$0xff]
      %v10857 = vld [vmem:[%s13 + $0x6c0] sm:$0xff]
      %v10858 = vld [vmem:[%s13 + $0x6c8] sm:$0xff]
      %v10859 = vld [vmem:[%s13 + $0x6d0] sm:$0xff]
      %v10860 = vld [vmem:[%s13 + $0x6d8] sm:$0xff]
      %v10861 = vld [vmem:[%s13 + $0x6e0] sm:$0xff]
      %v10862 = vld [vmem:[%s13 + $0x6e8] sm:$0xff]
      %v10863 = vld [vmem:[%s13 + $0x6f0] sm:$0xff]
      %v10864 = vld [vmem:[%s13 + $0x6f8] sm:$0xff]
      %v10865 = vld [vmem:[%s13 + $0x700] sm:$0xff]
      %v10866 = vld [vmem:[%s13 + $0x708] sm:$0xff]
      %v10867 = vld [vmem:[%s13 + $0x710] sm:$0xff]
      %v10868 = vld [vmem:[%s13 + $0x718] sm:$0xff]
      %v10869 = vld [vmem:[%s13 + $0x720] sm:$0xff]
      %v10870 = vld [vmem:[%s13 + $0x728] sm:$0xff]
      %v10871 = vld [vmem:[%s13 + $0x730] sm:$0xff]
      %v10872 = vld [vmem:[%s13 + $0x738] sm:$0xff]
      %v10873 = vld [vmem:[%s13 + $0x740] sm:$0xff]
      %v10874 = vld [vmem:[%s13 + $0x748] sm:$0xff]
      %v10875 = vld [vmem:[%s13 + $0x750] sm:$0xff]
      %v10876 = vld [vmem:[%s13 + $0x758] sm:$0xff]
      %v10877 = vld [vmem:[%s13 + $0x760] sm:$0xff]
      %v10878 = vld [vmem:[%s13 + $0x768] sm:$0xff]
      %v10879 = vld [vmem:[%s13 + $0x770] sm:$0xff]
      %v10880 = vld [vmem:[%s13 + $0x778] sm:$0xff]
      %v10881 = vld [vmem:[%s13 + $0x780] sm:$0xff]
      %v10882 = vld [vmem:[%s13 + $0x788] sm:$0xff]
      %v10883 = vld [vmem:[%s13 + $0x790] sm:$0xff]
      %v10884 = vld [vmem:[%s13 + $0x798] sm:$0xff]
      %v10885 = vld [vmem:[%s13 + $0x7a0] sm:$0xff]
      %v10886 = vld [vmem:[%s13 + $0x7a8] sm:$0xff]
      %v10887 = vld [vmem:[%s13 + $0x7b0] sm:$0xff]
      %v10888 = vld [vmem:[%s13 + $0x7b8] sm:$0xff]
      %v10889 = vld [vmem:[%s13 + $0x7c0] sm:$0xff]
      %v10890 = vld [vmem:[%s13 + $0x7c8] sm:$0xff]
      %v10891 = vld [vmem:[%s13 + $0x7d0] sm:$0xff]
      %v10892 = vld [vmem:[%s13 + $0x7d8] sm:$0xff]
      %v10893 = vld [vmem:[%s13 + $0x7e0] sm:$0xff]
      %v10894 = vld [vmem:[%s13 + $0x7e8] sm:$0xff]
      %v10895 = vld [vmem:[%s13 + $0x7f0] sm:$0xff]
      %v10896 = vld [vmem:[%s13 + $0x7f8] sm:$0xff]
      %10897 = vmatprep.subr.mxu0 0.0
      %10898 = vmatpush1.msra.mxu0 %v9628
      %10899 = vmatprep.subr.mxu0 0.0
      %10900 = vmatpush1.msra.mxu0 %v9633
      %10901 = vmatprep.subr.mxu0 0.0
      %10902 = vmatpush1.msra.mxu0 %v9638
      %10903 = vmatprep.subr.mxu0 0.0
      %10904 = vmatpush1.msra.mxu0 %v9643
      %10905 = vmatprep.subr.mxu0 0.0
      %10906 = vmatpush1.msra.mxu0 %v9648
      %10907 = vmatprep.subr.mxu0 0.0
      %10908 = vmatpush1.msra.mxu0 %v9653
      %10909 = vmatprep.subr.mxu0 0.0
      %10910 = vmatpush1.msra.mxu0 %v9658
      %10911 = vmatprep.subr.mxu0 0.0
      %10912 = vmatpush1.msra.mxu0 %v9663
      %10913 = vmatprep.subr.mxu0 0.0
      %10914 = vmatpush1.msra.mxu0 %v9959
      %10915 = vmatprep.subr.mxu0 0.0
      %10916 = vmatpush1.msra.mxu0 %v9964
      %10917 = vmatprep.subr.mxu0 0.0
      %10918 = vmatpush1.msra.mxu0 %v9969
      %10919 = vmatprep.subr.mxu0 0.0
      %10920 = vmatpush1.msra.mxu0 %v9974
      %10921 = vmatprep.subr.mxu0 0.0
      %10922 = vmatpush1.msra.mxu0 %v9979
      %10923 = vmatprep.subr.mxu0 0.0
      %10924 = vmatpush1.msra.mxu0 %v9984
      %10925 = vmatprep.subr.mxu0 0.0
      %10926 = vmatpush1.msra.mxu0 %v9989
      %10927 = vmatprep.subr.mxu0 0.0
      %10928 = vmatpush1.msra.mxu0 %v9994
      %10929 = vmatprep.subr.mxu0 0.0
      %10930 = vmatpush1.msra.mxu0 %v10329
      %10931 = vmatprep.subr.mxu0 0.0
      %10932 = vmatpush1.msra.mxu0 %v10334
      %10933 = vmatprep.subr.mxu0 0.0
      %10934 = vmatpush1.msra.mxu0 %v10339
      %10935 = vmatprep.subr.mxu0 0.0
      %10936 = vmatpush1.msra.mxu0 %v10344
      %10937 = vmatprep.subr.mxu0 0.0
      %10938 = vmatpush1.msra.mxu0 %v10349
      %10939 = vmatprep.subr.mxu0 0.0
      %10940 = vmatpush1.msra.mxu0 %v10354
      %10941 = vmatprep.subr.mxu0 0.0
      %10942 = vmatpush1.msra.mxu0 %v10359
      %10943 = vmatprep.subr.mxu0 0.0
      %10944 = vmatpush1.msra.mxu0 %v10364
      %10945 = vmatprep.subr.mxu0 0.0
      %10946 = vmatpush1.msra.mxu0 %v10603
      %10947 = vmatprep.subr.mxu0 0.0
      %10948 = vmatpush1.msra.mxu0 %v10608
      %10949 = vmatprep.subr.mxu0 0.0
      %10950 = vmatpush1.msra.mxu0 %v10613
      %10951 = vmatprep.subr.mxu0 0.0
      %10952 = vmatpush1.msra.mxu0 %v10618
      %10953 = vmatprep.subr.mxu0 0.0
      %10954 = vmatpush1.msra.mxu0 %v10623
      %10955 = vmatprep.subr.mxu0 0.0
      %10956 = vmatpush1.msra.mxu0 %v10628
      %10957 = vmatprep.subr.mxu0 0.0
      %10958 = vmatpush1.msra.mxu0 %v10633
      %10959 = vmatprep.subr.mxu0 0.0
      %10960 = vmatpush1.msra.mxu0 %v10638
      %10961 = vmatprep.mubr.f32.mxu0 %v10642
      %10962 = vmatmul.mubr.f32.gmra.mrb[0].mxu0 %v10641
      %v10963 = vpop.f32.mrb[0].mxu0
      %v10964 = vadd.f32 0.0, %v10963
      %v10965 = vpop.f32.mrb[0].mxu0
      %10966 = vmatprep.mubr.f32.mxu0 %v10644
      %10967 = vmatmul.mubr.f32.gmra.mrb[0].mxu0 %v10643
      %v10968 = vpop.f32.mrb[0].mxu0
      %v10969 = vadd.f32 0.0, %v10968
      %v10970 = vpop.f32.mrb[0].mxu0
      %10971 = vmatprep.mubr.f32.mxu0 %v10646
      %10972 = vmatmul.mubr.f32.gmra.mrb[0].mxu0 %v10645
      %v10973 = vpop.f32.mrb[0].mxu0
      %v10974 = vadd.f32 0.0, %v10973
      %v10975 = vpop.f32.mrb[0].mxu0
      %10976 = vmatprep.mubr.f32.mxu0 %v10648
      %10977 = vmatmul.mubr.f32.gmra.mrb[0].mxu0 %v10647
      %v10978 = vpop.f32.mrb[0].mxu0
      %v10979 = vadd.f32 0.0, %v10978
      %v10980 = vpop.f32.mrb[0].mxu0
      %10981 = vmatprep.mubr.f32.mxu0 %v10650
      %10982 = vmatmul.mubr.f32.gmra.mrb[0].mxu0 %v10649
      %v10983 = vpop.f32.mrb[0].mxu0
      %v10984 = vadd.f32 0.0, %v10983
      %v10985 = vpop.f32.mrb[0].mxu0
      %10986 = vmatprep.mubr.f32.mxu0 %v10652
      %10987 = vmatmul.mubr.f32.gmra.mrb[0].mxu0 %v10651
      %v10988 = vpop.f32.mrb[0].mxu0
      %v10989 = vadd.f32 0.0, %v10988
      %v10990 = vpop.f32.mrb[0].mxu0
      %10991 = vmatprep.mubr.f32.mxu0 %v10654
      %10992 = vmatmul.mubr.f32.gmra.mrb[0].mxu0 %v10653
      %v10993 = vpop.f32.mrb[0].mxu0
      %v10994 = vadd.f32 0.0, %v10993
      %v10995 = vpop.f32.mrb[0].mxu0
      %10996 = vmatprep.mubr.f32.mxu0 %v10656
      %10997 = vmatmul.mubr.f32.gmra.mrb[0].mxu0 %v10655
      %v10998 = vpop.f32.mrb[0].mxu0
      %v10999 = vadd.f32 0.0, %v10998
      %v11000 = vpop.f32.mrb[0].mxu0
      %11001 = vmatprep.mubr.f32.mxu0 %v10658
      %11002 = vmatmul.mubr.f32.gmra.mrb[0].mxu0 %v10657
      %v11003 = vpop.f32.mrb[0].mxu0
      %v11004 = vadd.f32 0.0, %v11003
      %v11005 = vpop.f32.mrb[0].mxu0
      %11006 = vmatprep.mubr.f32.mxu0 %v10660
      %11007 = vmatmul.mubr.f32.gmra.mrb[0].mxu0 %v10659
      %v11008 = vpop.f32.mrb[0].mxu0
      %v11009 = vadd.f32 0.0, %v11008
      %v11010 = vpop.f32.mrb[0].mxu0
      %11011 = vmatprep.mubr.f32.mxu0 %v10662
      %11012 = vmatmul.mubr.f32.gmra.mrb[0].mxu0 %v10661
      %v11013 = vpop.f32.mrb[0].mxu0
      %v11014 = vadd.f32 0.0, %v11013
      %v11015 = vpop.f32.mrb[0].mxu0
      %11016 = vmatprep.mubr.f32.mxu0 %v10664
      %11017 = vmatmul.mubr.f32.gmra.mrb[0].mxu0 %v10663
      %v11018 = vpop.f32.mrb[0].mxu0
      %v11019 = vadd.f32 0.0, %v11018
      %v11020 = vpop.f32.mrb[0].mxu0
      %11021 = vmatprep.mubr.f32.mxu0 %v10666
      %11022 = vmatmul.mubr.f32.gmra.mrb[0].mxu0 %v10665
      %v11023 = vpop.f32.mrb[0].mxu0
      %v11024 = vadd.f32 0.0, %v11023
      %v11025 = vpop.f32.mrb[0].mxu0
      %11026 = vmatprep.mubr.f32.mxu0 %v10668
      %11027 = vmatmul.mubr.f32.gmra.mrb[0].mxu0 %v10667
      %v11028 = vpop.f32.mrb[0].mxu0
      %v11029 = vadd.f32 0.0, %v11028
      %v11030 = vpop.f32.mrb[0].mxu0
      %11031 = vmatprep.mubr.f32.mxu0 %v10670
      %11032 = vmatmul.mubr.f32.gmra.mrb[0].mxu0 %v10669
      %v11033 = vpop.f32.mrb[0].mxu0
      %v11034 = vadd.f32 0.0, %v11033
      %v11035 = vpop.f32.mrb[0].mxu0
      %11036 = vmatprep.mubr.f32.mxu0 %v10672
      %11037 = vmatmul.mubr.f32.gmra.mrb[0].mxu0 %v10671
      %v11038 = vpop.f32.mrb[0].mxu0
      %v11039 = vadd.f32 0.0, %v11038
      %v11040 = vpop.f32.mrb[0].mxu0
      %11041 = vmatprep.mubr.f32.mxu0 %v10674
      %11042 = vmatmul.mubr.f32.gmra.mrb[0].mxu0 %v10673
      %v11043 = vpop.f32.mrb[0].mxu0
      %v11044 = vadd.f32 0.0, %v11043
      %v11045 = vpop.f32.mrb[0].mxu0
      %11046 = vmatprep.mubr.f32.mxu0 %v10676
      %11047 = vmatmul.mubr.f32.gmra.mrb[0].mxu0 %v10675
      %v11048 = vpop.f32.mrb[0].mxu0
      %v11049 = vadd.f32 0.0, %v11048
      %v11050 = vpop.f32.mrb[0].mxu0
      %11051 = vmatprep.mubr.f32.mxu0 %v10678
      %11052 = vmatmul.mubr.f32.gmra.mrb[0].mxu0 %v10677
      %v11053 = vpop.f32.mrb[0].mxu0
      %v11054 = vadd.f32 0.0, %v11053
      %v11055 = vpop.f32.mrb[0].mxu0
      %11056 = vmatprep.mubr.f32.mxu0 %v10680
      %11057 = vmatmul.mubr.f32.gmra.mrb[0].mxu0 %v10679
      %v11058 = vpop.f32.mrb[0].mxu0
      %v11059 = vadd.f32 0.0, %v11058
      %v11060 = vpop.f32.mrb[0].mxu0
      %11061 = vmatprep.mubr.f32.mxu0 %v10682
      %11062 = vmatmul.mubr.f32.gmra.mrb[0].mxu0 %v10681
      %v11063 = vpop.f32.mrb[0].mxu0
      %v11064 = vadd.f32 0.0, %v11063
      %v11065 = vpop.f32.mrb[0].mxu0
      %11066 = vmatprep.mubr.f32.mxu0 %v10684
      %11067 = vmatmul.mubr.f32.gmra.mrb[0].mxu0 %v10683
      %v11068 = vpop.f32.mrb[0].mxu0
      %v11069 = vadd.f32 0.0, %v11068
      %v11070 = vpop.f32.mrb[0].mxu0
      %11071 = vmatprep.mubr.f32.mxu0 %v10686
      %11072 = vmatmul.mubr.f32.gmra.mrb[0].mxu0 %v10685
      %v11073 = vpop.f32.mrb[0].mxu0
      %v11074 = vadd.f32 0.0, %v11073
      %v11075 = vpop.f32.mrb[0].mxu0
      %11076 = vmatprep.mubr.f32.mxu0 %v10688
      %11077 = vmatmul.mubr.f32.gmra.mrb[0].mxu0 %v10687
      %v11078 = vpop.f32.mrb[0].mxu0
      %v11079 = vadd.f32 0.0, %v11078
      %v11080 = vpop.f32.mrb[0].mxu0
      %11081 = vmatprep.mubr.f32.mxu0 %v10690
      %11082 = vmatmul.mubr.f32.gmra.mrb[0].mxu0 %v10689
      %v11083 = vpop.f32.mrb[0].mxu0
      %v11084 = vadd.f32 0.0, %v11083
      %v11085 = vpop.f32.mrb[0].mxu0
      %11086 = vmatprep.mubr.f32.mxu0 %v10692
      %11087 = vmatmul.mubr.f32.gmra.mrb[0].mxu0 %v10691
      %v11088 = vpop.f32.mrb[0].mxu0
      %v11089 = vadd.f32 0.0, %v11088
      %v11090 = vpop.f32.mrb[0].mxu0
      %11091 = vmatprep.mubr.f32.mxu0 %v10694
      %11092 = vmatmul.mubr.f32.gmra.mrb[0].mxu0 %v10693
      %v11093 = vpop.f32.mrb[0].mxu0
      %v11094 = vadd.f32 0.0, %v11093
      %v11095 = vpop.f32.mrb[0].mxu0
      %11096 = vmatprep.mubr.f32.mxu0 %v10696
      %11097 = vmatmul.mubr.f32.gmra.mrb[0].mxu0 %v10695
      %v11098 = vpop.f32.mrb[0].mxu0
      %v11099 = vadd.f32 0.0, %v11098
      %v11100 = vpop.f32.mrb[0].mxu0
      %11101 = vmatprep.mubr.f32.mxu0 %v10698
      %11102 = vmatmul.mubr.f32.gmra.mrb[0].mxu0 %v10697
      %v11103 = vpop.f32.mrb[0].mxu0
      %v11104 = vadd.f32 0.0, %v11103
      %v11105 = vpop.f32.mrb[0].mxu0
      %11106 = vmatprep.mubr.f32.mxu0 %v10700
      %11107 = vmatmul.mubr.f32.gmra.mrb[0].mxu0 %v10699
      %v11108 = vpop.f32.mrb[0].mxu0
      %v11109 = vadd.f32 0.0, %v11108
      %v11110 = vpop.f32.mrb[0].mxu0
      %11111 = vmatprep.mubr.f32.mxu0 %v10702
      %11112 = vmatmul.mubr.f32.gmra.mrb[0].mxu0 %v10701
      %v11113 = vpop.f32.mrb[0].mxu0
      %v11114 = vadd.f32 0.0, %v11113
      %v11115 = vpop.f32.mrb[0].mxu0
      %11116 = vmatprep.mubr.f32.mxu0 %v10704
      %11117 = vmatmul.mubr.f32.gmra.mrb[0].mxu0 %v10703
      %v11118 = vpop.f32.mrb[0].mxu0
      %v11119 = vadd.f32 0.0, %v11118
      %v11120 = vpop.f32.mrb[0].mxu0
      %11121 = vmatprep.mubr.f32.mxu0 %v10706
      %11122 = vmatmul.mubr.f32.gmra.mrb[0].mxu0 %v10705
      %v11123 = vpop.f32.mrb[0].mxu0
      %v11124 = vadd.f32 0.0, %v11123
      %v11125 = vpop.f32.mrb[0].mxu0
      %11126 = vmatprep.mubr.f32.mxu0 %v10708
      %11127 = vmatmul.mubr.f32.gmra.mrb[0].mxu0 %v10707
      %v11128 = vpop.f32.mrb[0].mxu0
      %v11129 = vadd.f32 0.0, %v11128
      %v11130 = vpop.f32.mrb[0].mxu0
      %11131 = vmatprep.mubr.f32.mxu0 %v10710
      %11132 = vmatmul.mubr.f32.gmra.mrb[0].mxu0 %v10709
      %v11133 = vpop.f32.mrb[0].mxu0
      %v11134 = vadd.f32 0.0, %v11133
      %v11135 = vpop.f32.mrb[0].mxu0
      %11136 = vmatprep.mubr.f32.mxu0 %v10712
      %11137 = vmatmul.mubr.f32.gmra.mrb[0].mxu0 %v10711
      %v11138 = vpop.f32.mrb[0].mxu0
      %v11139 = vadd.f32 0.0, %v11138
      %v11140 = vpop.f32.mrb[0].mxu0
      %11141 = vmatprep.mubr.f32.mxu0 %v10714
      %11142 = vmatmul.mubr.f32.gmra.mrb[0].mxu0 %v10713
      %v11143 = vpop.f32.mrb[0].mxu0
      %v11144 = vadd.f32 0.0, %v11143
      %v11145 = vpop.f32.mrb[0].mxu0
      %11146 = vmatprep.mubr.f32.mxu0 %v10716
      %11147 = vmatmul.mubr.f32.gmra.mrb[0].mxu0 %v10715
      %v11148 = vpop.f32.mrb[0].mxu0
      %v11149 = vadd.f32 0.0, %v11148
      %v11150 = vpop.f32.mrb[0].mxu0
      %11151 = vmatprep.mubr.f32.mxu0 %v10718
      %11152 = vmatmul.mubr.f32.gmra.mrb[0].mxu0 %v10717
      %v11153 = vpop.f32.mrb[0].mxu0
      %v11154 = vadd.f32 0.0, %v11153
      %v11155 = vpop.f32.mrb[0].mxu0
      %11156 = vmatprep.mubr.f32.mxu0 %v10720
      %11157 = vmatmul.mubr.f32.gmra.mrb[0].mxu0 %v10719
      %v11158 = vpop.f32.mrb[0].mxu0
      %v11159 = vadd.f32 0.0, %v11158
      %v11160 = vpop.f32.mrb[0].mxu0
      %11161 = vmatprep.mubr.f32.mxu0 %v10722
      %11162 = vmatmul.mubr.f32.gmra.mrb[0].mxu0 %v10721
      %v11163 = vpop.f32.mrb[0].mxu0
      %v11164 = vadd.f32 0.0, %v11163
      %v11165 = vpop.f32.mrb[0].mxu0
      %11166 = vmatprep.mubr.f32.mxu0 %v10724
      %11167 = vmatmul.mubr.f32.gmra.mrb[0].mxu0 %v10723
      %v11168 = vpop.f32.mrb[0].mxu0
      %v11169 = vadd.f32 0.0, %v11168
      %v11170 = vpop.f32.mrb[0].mxu0
      %11171 = vmatprep.mubr.f32.mxu0 %v10726
      %11172 = vmatmul.mubr.f32.gmra.mrb[0].mxu0 %v10725
      %v11173 = vpop.f32.mrb[0].mxu0
      %v11174 = vadd.f32 0.0, %v11173
      %v11175 = vpop.f32.mrb[0].mxu0
      %11176 = vmatprep.mubr.f32.mxu0 %v10728
      %11177 = vmatmul.mubr.f32.gmra.mrb[0].mxu0 %v10727
      %v11178 = vpop.f32.mrb[0].mxu0
      %v11179 = vadd.f32 0.0, %v11178
      %v11180 = vpop.f32.mrb[0].mxu0
      %11181 = vmatprep.mubr.f32.mxu0 %v10730
      %11182 = vmatmul.mubr.f32.gmra.mrb[0].mxu0 %v10729
      %v11183 = vpop.f32.mrb[0].mxu0
      %v11184 = vadd.f32 0.0, %v11183
      %v11185 = vpop.f32.mrb[0].mxu0
      %11186 = vmatprep.mubr.f32.mxu0 %v10732
      %11187 = vmatmul.mubr.f32.gmra.mrb[0].mxu0 %v10731
      %v11188 = vpop.f32.mrb[0].mxu0
      %v11189 = vadd.f32 0.0, %v11188
      %v11190 = vpop.f32.mrb[0].mxu0
      %11191 = vmatprep.mubr.f32.mxu0 %v10734
      %11192 = vmatmul.mubr.f32.gmra.mrb[0].mxu0 %v10733
      %v11193 = vpop.f32.mrb[0].mxu0
      %v11194 = vadd.f32 0.0, %v11193
      %v11195 = vpop.f32.mrb[0].mxu0
      %11196 = vmatprep.mubr.f32.mxu0 %v10736
      %11197 = vmatmul.mubr.f32.gmra.mrb[0].mxu0 %v10735
      %v11198 = vpop.f32.mrb[0].mxu0
      %v11199 = vadd.f32 0.0, %v11198
      %v11200 = vpop.f32.mrb[0].mxu0
      %11201 = vmatprep.mubr.f32.mxu0 %v10738
      %11202 = vmatmul.mubr.f32.gmra.mrb[0].mxu0 %v10737
      %v11203 = vpop.f32.mrb[0].mxu0
      %v11204 = vadd.f32 0.0, %v11203
      %v11205 = vpop.f32.mrb[0].mxu0
      %11206 = vmatprep.mubr.f32.mxu0 %v10740
      %11207 = vmatmul.mubr.f32.gmra.mrb[0].mxu0 %v10739
      %v11208 = vpop.f32.mrb[0].mxu0
      %v11209 = vadd.f32 0.0, %v11208
      %v11210 = vpop.f32.mrb[0].mxu0
      %11211 = vmatprep.mubr.f32.mxu0 %v10742
      %11212 = vmatmul.mubr.f32.gmra.mrb[0].mxu0 %v10741
      %v11213 = vpop.f32.mrb[0].mxu0
      %v11214 = vadd.f32 0.0, %v11213
      %v11215 = vpop.f32.mrb[0].mxu0
      %11216 = vmatprep.mubr.f32.mxu0 %v10744
      %11217 = vmatmul.mubr.f32.gmra.mrb[0].mxu0 %v10743
      %v11218 = vpop.f32.mrb[0].mxu0
      %v11219 = vadd.f32 0.0, %v11218
      %v11220 = vpop.f32.mrb[0].mxu0
      %11221 = vmatprep.mubr.f32.mxu0 %v10746
      %11222 = vmatmul.mubr.f32.gmra.mrb[0].mxu0 %v10745
      %v11223 = vpop.f32.mrb[0].mxu0
      %v11224 = vadd.f32 0.0, %v11223
      %v11225 = vpop.f32.mrb[0].mxu0
      %11226 = vmatprep.mubr.f32.mxu0 %v10748
      %11227 = vmatmul.mubr.f32.gmra.mrb[0].mxu0 %v10747
      %v11228 = vpop.f32.mrb[0].mxu0
      %v11229 = vadd.f32 0.0, %v11228
      %v11230 = vpop.f32.mrb[0].mxu0
      %11231 = vmatprep.mubr.f32.mxu0 %v10750
      %11232 = vmatmul.mubr.f32.gmra.mrb[0].mxu0 %v10749
      %v11233 = vpop.f32.mrb[0].mxu0
      %v11234 = vadd.f32 0.0, %v11233
      %v11235 = vpop.f32.mrb[0].mxu0
      %11236 = vmatprep.mubr.f32.mxu0 %v10752
      %11237 = vmatmul.mubr.f32.gmra.mrb[0].mxu0 %v10751
      %v11238 = vpop.f32.mrb[0].mxu0
      %v11239 = vadd.f32 0.0, %v11238
      %v11240 = vpop.f32.mrb[0].mxu0
      %11241 = vmatprep.mubr.f32.mxu0 %v10754
      %11242 = vmatmul.mubr.f32.gmra.mrb[0].mxu0 %v10753
      %v11243 = vpop.f32.mrb[0].mxu0
      %v11244 = vadd.f32 0.0, %v11243
      %v11245 = vpop.f32.mrb[0].mxu0
      %11246 = vmatprep.mubr.f32.mxu0 %v10756
      %11247 = vmatmul.mubr.f32.gmra.mrb[0].mxu0 %v10755
      %v11248 = vpop.f32.mrb[0].mxu0
      %v11249 = vadd.f32 0.0, %v11248
      %v11250 = vpop.f32.mrb[0].mxu0
      %11251 = vmatprep.mubr.f32.mxu0 %v10758
      %11252 = vmatmul.mubr.f32.gmra.mrb[0].mxu0 %v10757
      %v11253 = vpop.f32.mrb[0].mxu0
      %v11254 = vadd.f32 0.0, %v11253
      %v11255 = vpop.f32.mrb[0].mxu0
      %11256 = vmatprep.mubr.f32.mxu0 %v10760
      %11257 = vmatmul.mubr.f32.gmra.mrb[0].mxu0 %v10759
      %v11258 = vpop.f32.mrb[0].mxu0
      %v11259 = vadd.f32 0.0, %v11258
      %v11260 = vpop.f32.mrb[0].mxu0
      %11261 = vmatprep.mubr.f32.mxu0 %v10762
      %11262 = vmatmul.mubr.f32.gmra.mrb[0].mxu0 %v10761
      %v11263 = vpop.f32.mrb[0].mxu0
      %v11264 = vadd.f32 0.0, %v11263
      %v11265 = vpop.f32.mrb[0].mxu0
      %11266 = vmatprep.mubr.f32.mxu0 %v10764
      %11267 = vmatmul.mubr.f32.gmra.mrb[0].mxu0 %v10763
      %v11268 = vpop.f32.mrb[0].mxu0
      %v11269 = vadd.f32 0.0, %v11268
      %v11270 = vpop.f32.mrb[0].mxu0
      %11271 = vmatprep.mubr.f32.mxu0 %v10766
      %11272 = vmatmul.mubr.f32.gmra.mrb[0].mxu0 %v10765
      %v11273 = vpop.f32.mrb[0].mxu0
      %v11274 = vadd.f32 0.0, %v11273
      %v11275 = vpop.f32.mrb[0].mxu0
      %11276 = vmatprep.mubr.f32.mxu0 %v10768
      %11277 = vmatmul.mubr.f32.gmra.mrb[0].mxu0 %v10767
      %v11278 = vpop.f32.mrb[0].mxu0
      %v11279 = vadd.f32 0.0, %v11278
      %v11280 = vpop.f32.mrb[0].mxu0
      %11281 = vmatprep.mubr.f32.mxu0 %v10770
      %11282 = vmatmul.mubr.f32.gmra.mrb[0].mxu0 %v10769
      %v11283 = vpop.f32.mrb[0].mxu0
      %v11284 = vadd.f32 0.0, %v11283
      %v11285 = vpop.f32.mrb[0].mxu0
      %11286 = vmatprep.mubr.f32.mxu0 %v10772
      %11287 = vmatmul.mubr.f32.gmra.mrb[0].mxu0 %v10771
      %v11288 = vpop.f32.mrb[0].mxu0
      %v11289 = vadd.f32 0.0, %v11288
      %v11290 = vpop.f32.mrb[0].mxu0
      %11291 = vmatprep.mubr.f32.mxu0 %v10774
      %11292 = vmatmul.mubr.f32.gmra.mrb[0].mxu0 %v10773
      %v11293 = vpop.f32.mrb[0].mxu0
      %v11294 = vadd.f32 0.0, %v11293
      %v11295 = vpop.f32.mrb[0].mxu0
      %11296 = vmatprep.mubr.f32.mxu0 %v10776
      %11297 = vmatmul.mubr.f32.gmra.mrb[0].mxu0 %v10775
      %v11298 = vpop.f32.mrb[0].mxu0
      %v11299 = vadd.f32 0.0, %v11298
      %v11300 = vpop.f32.mrb[0].mxu0
      %11301 = vmatprep.mubr.f32.mxu0 %v10778
      %11302 = vmatmul.mubr.f32.gmra.mrb[0].mxu0 %v10777
      %v11303 = vpop.f32.mrb[0].mxu0
      %v11304 = vadd.f32 0.0, %v11303
      %v11305 = vpop.f32.mrb[0].mxu0
      %11306 = vmatprep.mubr.f32.mxu0 %v10780
      %11307 = vmatmul.mubr.f32.gmra.mrb[0].mxu0 %v10779
      %v11308 = vpop.f32.mrb[0].mxu0
      %v11309 = vadd.f32 0.0, %v11308
      %v11310 = vpop.f32.mrb[0].mxu0
      %11311 = vmatprep.mubr.f32.mxu0 %v10782
      %11312 = vmatmul.mubr.f32.gmra.mrb[0].mxu0 %v10781
      %v11313 = vpop.f32.mrb[0].mxu0
      %v11314 = vadd.f32 0.0, %v11313
      %v11315 = vpop.f32.mrb[0].mxu0
      %11316 = vmatprep.mubr.f32.mxu0 %v10784
      %11317 = vmatmul.mubr.f32.gmra.mrb[0].mxu0 %v10783
      %v11318 = vpop.f32.mrb[0].mxu0
      %v11319 = vadd.f32 0.0, %v11318
      %v11320 = vpop.f32.mrb[0].mxu0
      %11321 = vmatprep.mubr.f32.mxu0 %v10786
      %11322 = vmatmul.mubr.f32.gmra.mrb[0].mxu0 %v10785
      %v11323 = vpop.f32.mrb[0].mxu0
      %v11324 = vadd.f32 0.0, %v11323
      %v11325 = vpop.f32.mrb[0].mxu0
      %11326 = vmatprep.mubr.f32.mxu0 %v10788
      %11327 = vmatmul.mubr.f32.gmra.mrb[0].mxu0 %v10787
      %v11328 = vpop.f32.mrb[0].mxu0
      %v11329 = vadd.f32 0.0, %v11328
      %v11330 = vpop.f32.mrb[0].mxu0
      %11331 = vmatprep.mubr.f32.mxu0 %v10790
      %11332 = vmatmul.mubr.f32.gmra.mrb[0].mxu0 %v10789
      %v11333 = vpop.f32.mrb[0].mxu0
      %v11334 = vadd.f32 0.0, %v11333
      %v11335 = vpop.f32.mrb[0].mxu0
      %11336 = vmatprep.mubr.f32.mxu0 %v10792
      %11337 = vmatmul.mubr.f32.gmra.mrb[0].mxu0 %v10791
      %v11338 = vpop.f32.mrb[0].mxu0
      %v11339 = vadd.f32 0.0, %v11338
      %v11340 = vpop.f32.mrb[0].mxu0
      %11341 = vmatprep.mubr.f32.mxu0 %v10794
      %11342 = vmatmul.mubr.f32.gmra.mrb[0].mxu0 %v10793
      %v11343 = vpop.f32.mrb[0].mxu0
      %v11344 = vadd.f32 0.0, %v11343
      %v11345 = vpop.f32.mrb[0].mxu0
      %11346 = vmatprep.mubr.f32.mxu0 %v10796
      %11347 = vmatmul.mubr.f32.gmra.mrb[0].mxu0 %v10795
      %v11348 = vpop.f32.mrb[0].mxu0
      %v11349 = vadd.f32 0.0, %v11348
      %v11350 = vpop.f32.mrb[0].mxu0
      %11351 = vmatprep.mubr.f32.mxu0 %v10798
      %11352 = vmatmul.mubr.f32.gmra.mrb[0].mxu0 %v10797
      %v11353 = vpop.f32.mrb[0].mxu0
      %v11354 = vadd.f32 0.0, %v11353
      %v11355 = vpop.f32.mrb[0].mxu0
      %11356 = vmatprep.mubr.f32.mxu0 %v10800
      %11357 = vmatmul.mubr.f32.gmra.mrb[0].mxu0 %v10799
      %v11358 = vpop.f32.mrb[0].mxu0
      %v11359 = vadd.f32 0.0, %v11358
      %v11360 = vpop.f32.mrb[0].mxu0
      %11361 = vmatprep.mubr.f32.mxu0 %v10802
      %11362 = vmatmul.mubr.f32.gmra.mrb[0].mxu0 %v10801
      %v11363 = vpop.f32.mrb[0].mxu0
      %v11364 = vadd.f32 0.0, %v11363
      %v11365 = vpop.f32.mrb[0].mxu0
      %11366 = vmatprep.mubr.f32.mxu0 %v10804
      %11367 = vmatmul.mubr.f32.gmra.mrb[0].mxu0 %v10803
      %v11368 = vpop.f32.mrb[0].mxu0
      %v11369 = vadd.f32 0.0, %v11368
      %v11370 = vpop.f32.mrb[0].mxu0
      %11371 = vmatprep.mubr.f32.mxu0 %v10806
      %11372 = vmatmul.mubr.f32.gmra.mrb[0].mxu0 %v10805
      %v11373 = vpop.f32.mrb[0].mxu0
      %v11374 = vadd.f32 0.0, %v11373
      %v11375 = vpop.f32.mrb[0].mxu0
      %11376 = vmatprep.mubr.f32.mxu0 %v10808
      %11377 = vmatmul.mubr.f32.gmra.mrb[0].mxu0 %v10807
      %v11378 = vpop.f32.mrb[0].mxu0
      %v11379 = vadd.f32 0.0, %v11378
      %v11380 = vpop.f32.mrb[0].mxu0
      %11381 = vmatprep.mubr.f32.mxu0 %v10810
      %11382 = vmatmul.mubr.f32.gmra.mrb[0].mxu0 %v10809
      %v11383 = vpop.f32.mrb[0].mxu0
      %v11384 = vadd.f32 0.0, %v11383
      %v11385 = vpop.f32.mrb[0].mxu0
      %11386 = vmatprep.mubr.f32.mxu0 %v10812
      %11387 = vmatmul.mubr.f32.gmra.mrb[0].mxu0 %v10811
      %v11388 = vpop.f32.mrb[0].mxu0
      %v11389 = vadd.f32 0.0, %v11388
      %v11390 = vpop.f32.mrb[0].mxu0
      %11391 = vmatprep.mubr.f32.mxu0 %v10814
      %11392 = vmatmul.mubr.f32.gmra.mrb[0].mxu0 %v10813
      %v11393 = vpop.f32.mrb[0].mxu0
      %v11394 = vadd.f32 0.0, %v11393
      %v11395 = vpop.f32.mrb[0].mxu0
      %11396 = vmatprep.mubr.f32.mxu0 %v10816
      %11397 = vmatmul.mubr.f32.gmra.mrb[0].mxu0 %v10815
      %v11398 = vpop.f32.mrb[0].mxu0
      %v11399 = vadd.f32 0.0, %v11398
      %v11400 = vpop.f32.mrb[0].mxu0
      %11401 = vmatprep.mubr.f32.mxu0 %v10818
      %11402 = vmatmul.mubr.f32.gmra.mrb[0].mxu0 %v10817
      %v11403 = vpop.f32.mrb[0].mxu0
      %v11404 = vadd.f32 0.0, %v11403
      %v11405 = vpop.f32.mrb[0].mxu0
      %11406 = vmatprep.mubr.f32.mxu0 %v10820
      %11407 = vmatmul.mubr.f32.gmra.mrb[0].mxu0 %v10819
      %v11408 = vpop.f32.mrb[0].mxu0
      %v11409 = vadd.f32 0.0, %v11408
      %v11410 = vpop.f32.mrb[0].mxu0
      %11411 = vmatprep.mubr.f32.mxu0 %v10822
      %11412 = vmatmul.mubr.f32.gmra.mrb[0].mxu0 %v10821
      %v11413 = vpop.f32.mrb[0].mxu0
      %v11414 = vadd.f32 0.0, %v11413
      %v11415 = vpop.f32.mrb[0].mxu0
      %11416 = vmatprep.mubr.f32.mxu0 %v10824
      %11417 = vmatmul.mubr.f32.gmra.mrb[0].mxu0 %v10823
      %v11418 = vpop.f32.mrb[0].mxu0
      %v11419 = vadd.f32 0.0, %v11418
      %v11420 = vpop.f32.mrb[0].mxu0
      %11421 = vmatprep.mubr.f32.mxu0 %v10826
      %11422 = vmatmul.mubr.f32.gmra.mrb[0].mxu0 %v10825
      %v11423 = vpop.f32.mrb[0].mxu0
      %v11424 = vadd.f32 0.0, %v11423
      %v11425 = vpop.f32.mrb[0].mxu0
      %11426 = vmatprep.mubr.f32.mxu0 %v10828
      %11427 = vmatmul.mubr.f32.gmra.mrb[0].mxu0 %v10827
      %v11428 = vpop.f32.mrb[0].mxu0
      %v11429 = vadd.f32 0.0, %v11428
      %v11430 = vpop.f32.mrb[0].mxu0
      %11431 = vmatprep.mubr.f32.mxu0 %v10830
      %11432 = vmatmul.mubr.f32.gmra.mrb[0].mxu0 %v10829
      %v11433 = vpop.f32.mrb[0].mxu0
      %v11434 = vadd.f32 0.0, %v11433
      %v11435 = vpop.f32.mrb[0].mxu0
      %11436 = vmatprep.mubr.f32.mxu0 %v10832
      %11437 = vmatmul.mubr.f32.gmra.mrb[0].mxu0 %v10831
      %v11438 = vpop.f32.mrb[0].mxu0
      %v11439 = vadd.f32 0.0, %v11438
      %v11440 = vpop.f32.mrb[0].mxu0
      %11441 = vmatprep.mubr.f32.mxu0 %v10834
      %11442 = vmatmul.mubr.f32.gmra.mrb[0].mxu0 %v10833
      %v11443 = vpop.f32.mrb[0].mxu0
      %v11444 = vadd.f32 0.0, %v11443
      %v11445 = vpop.f32.mrb[0].mxu0
      %11446 = vmatprep.mubr.f32.mxu0 %v10836
      %11447 = vmatmul.mubr.f32.gmra.mrb[0].mxu0 %v10835
      %v11448 = vpop.f32.mrb[0].mxu0
      %v11449 = vadd.f32 0.0, %v11448
      %v11450 = vpop.f32.mrb[0].mxu0
      %11451 = vmatprep.mubr.f32.mxu0 %v10838
      %11452 = vmatmul.mubr.f32.gmra.mrb[0].mxu0 %v10837
      %v11453 = vpop.f32.mrb[0].mxu0
      %v11454 = vadd.f32 0.0, %v11453
      %v11455 = vpop.f32.mrb[0].mxu0
      %11456 = vmatprep.mubr.f32.mxu0 %v10840
      %11457 = vmatmul.mubr.f32.gmra.mrb[0].mxu0 %v10839
      %v11458 = vpop.f32.mrb[0].mxu0
      %v11459 = vadd.f32 0.0, %v11458
      %v11460 = vpop.f32.mrb[0].mxu0
      %11461 = vmatprep.mubr.f32.mxu0 %v10842
      %11462 = vmatmul.mubr.f32.gmra.mrb[0].mxu0 %v10841
      %v11463 = vpop.f32.mrb[0].mxu0
      %v11464 = vadd.f32 0.0, %v11463
      %v11465 = vpop.f32.mrb[0].mxu0
      %11466 = vmatprep.mubr.f32.mxu0 %v10844
      %11467 = vmatmul.mubr.f32.gmra.mrb[0].mxu0 %v10843
      %v11468 = vpop.f32.mrb[0].mxu0
      %v11469 = vadd.f32 0.0, %v11468
      %v11470 = vpop.f32.mrb[0].mxu0
      %11471 = vmatprep.mubr.f32.mxu0 %v10846
      %11472 = vmatmul.mubr.f32.gmra.mrb[0].mxu0 %v10845
      %v11473 = vpop.f32.mrb[0].mxu0
      %v11474 = vadd.f32 0.0, %v11473
      %v11475 = vpop.f32.mrb[0].mxu0
      %11476 = vmatprep.mubr.f32.mxu0 %v10848
      %11477 = vmatmul.mubr.f32.gmra.mrb[0].mxu0 %v10847
      %v11478 = vpop.f32.mrb[0].mxu0
      %v11479 = vadd.f32 0.0, %v11478
      %v11480 = vpop.f32.mrb[0].mxu0
      %11481 = vmatprep.mubr.f32.mxu0 %v10850
      %11482 = vmatmul.mubr.f32.gmra.mrb[0].mxu0 %v10849
      %v11483 = vpop.f32.mrb[0].mxu0
      %v11484 = vadd.f32 0.0, %v11483
      %v11485 = vpop.f32.mrb[0].mxu0
      %11486 = vmatprep.mubr.f32.mxu0 %v10852
      %11487 = vmatmul.mubr.f32.gmra.mrb[0].mxu0 %v10851
      %v11488 = vpop.f32.mrb[0].mxu0
      %v11489 = vadd.f32 0.0, %v11488
      %v11490 = vpop.f32.mrb[0].mxu0
      %11491 = vmatprep.mubr.f32.mxu0 %v10854
      %11492 = vmatmul.mubr.f32.gmra.mrb[0].mxu0 %v10853
      %v11493 = vpop.f32.mrb[0].mxu0
      %v11494 = vadd.f32 0.0, %v11493
      %v11495 = vpop.f32.mrb[0].mxu0
      %11496 = vmatprep.mubr.f32.mxu0 %v10856
      %11497 = vmatmul.mubr.f32.gmra.mrb[0].mxu0 %v10855
      %v11498 = vpop.f32.mrb[0].mxu0
      %v11499 = vadd.f32 0.0, %v11498
      %v11500 = vpop.f32.mrb[0].mxu0
      %11501 = vmatprep.mubr.f32.mxu0 %v10858
      %11502 = vmatmul.mubr.f32.gmra.mrb[0].mxu0 %v10857
      %v11503 = vpop.f32.mrb[0].mxu0
      %v11504 = vadd.f32 0.0, %v11503
      %v11505 = vpop.f32.mrb[0].mxu0
      %11506 = vmatprep.mubr.f32.mxu0 %v10860
      %11507 = vmatmul.mubr.f32.gmra.mrb[0].mxu0 %v10859
      %v11508 = vpop.f32.mrb[0].mxu0
      %v11509 = vadd.f32 0.0, %v11508
      %v11510 = vpop.f32.mrb[0].mxu0
      %11511 = vmatprep.mubr.f32.mxu0 %v10862
      %11512 = vmatmul.mubr.f32.gmra.mrb[0].mxu0 %v10861
      %v11513 = vpop.f32.mrb[0].mxu0
      %v11514 = vadd.f32 0.0, %v11513
      %v11515 = vpop.f32.mrb[0].mxu0
      %11516 = vmatprep.mubr.f32.mxu0 %v10864
      %11517 = vmatmul.mubr.f32.gmra.mrb[0].mxu0 %v10863
      %v11518 = vpop.f32.mrb[0].mxu0
      %v11519 = vadd.f32 0.0, %v11518
      %v11520 = vpop.f32.mrb[0].mxu0
      %11521 = vmatprep.mubr.f32.mxu0 %v10866
      %11522 = vmatmul.mubr.f32.gmra.mrb[0].mxu0 %v10865
      %v11523 = vpop.f32.mrb[0].mxu0
      %v11524 = vadd.f32 0.0, %v11523
      %v11525 = vpop.f32.mrb[0].mxu0
      %11526 = vmatprep.mubr.f32.mxu0 %v10868
      %11527 = vmatmul.mubr.f32.gmra.mrb[0].mxu0 %v10867
      %v11528 = vpop.f32.mrb[0].mxu0
      %v11529 = vadd.f32 0.0, %v11528
      %v11530 = vpop.f32.mrb[0].mxu0
      %11531 = vmatprep.mubr.f32.mxu0 %v10870
      %11532 = vmatmul.mubr.f32.gmra.mrb[0].mxu0 %v10869
      %v11533 = vpop.f32.mrb[0].mxu0
      %v11534 = vadd.f32 0.0, %v11533
      %v11535 = vpop.f32.mrb[0].mxu0
      %11536 = vmatprep.mubr.f32.mxu0 %v10872
      %11537 = vmatmul.mubr.f32.gmra.mrb[0].mxu0 %v10871
      %v11538 = vpop.f32.mrb[0].mxu0
      %v11539 = vadd.f32 0.0, %v11538
      %v11540 = vpop.f32.mrb[0].mxu0
      %11541 = vmatprep.mubr.f32.mxu0 %v10874
      %11542 = vmatmul.mubr.f32.gmra.mrb[0].mxu0 %v10873
      %v11543 = vpop.f32.mrb[0].mxu0
      %v11544 = vadd.f32 0.0, %v11543
      %v11545 = vpop.f32.mrb[0].mxu0
      %11546 = vmatprep.mubr.f32.mxu0 %v10876
      %11547 = vmatmul.mubr.f32.gmra.mrb[0].mxu0 %v10875
      %v11548 = vpop.f32.mrb[0].mxu0
      %v11549 = vadd.f32 0.0, %v11548
      %v11550 = vpop.f32.mrb[0].mxu0
      %11551 = vmatprep.mubr.f32.mxu0 %v10878
      %11552 = vmatmul.mubr.f32.gmra.mrb[0].mxu0 %v10877
      %v11553 = vpop.f32.mrb[0].mxu0
      %v11554 = vadd.f32 0.0, %v11553
      %v11555 = vpop.f32.mrb[0].mxu0
      %11556 = vmatprep.mubr.f32.mxu0 %v10880
      %11557 = vmatmul.mubr.f32.gmra.mrb[0].mxu0 %v10879
      %v11558 = vpop.f32.mrb[0].mxu0
      %v11559 = vadd.f32 0.0, %v11558
      %v11560 = vpop.f32.mrb[0].mxu0
      %11561 = vmatprep.mubr.f32.mxu0 %v10882
      %11562 = vmatmul.mubr.f32.gmra.mrb[0].mxu0 %v10881
      %v11563 = vpop.f32.mrb[0].mxu0
      %v11564 = vadd.f32 0.0, %v11563
      %v11565 = vpop.f32.mrb[0].mxu0
      %11566 = vmatprep.mubr.f32.mxu0 %v10884
      %11567 = vmatmul.mubr.f32.gmra.mrb[0].mxu0 %v10883
      %v11568 = vpop.f32.mrb[0].mxu0
      %v11569 = vadd.f32 0.0, %v11568
      %v11570 = vpop.f32.mrb[0].mxu0
      %11571 = vmatprep.mubr.f32.mxu0 %v10886
      %11572 = vmatmul.mubr.f32.gmra.mrb[0].mxu0 %v10885
      %v11573 = vpop.f32.mrb[0].mxu0
      %v11574 = vadd.f32 0.0, %v11573
      %v11575 = vpop.f32.mrb[0].mxu0
      %11576 = vmatprep.mubr.f32.mxu0 %v10888
      %11577 = vmatmul.mubr.f32.gmra.mrb[0].mxu0 %v10887
      %v11578 = vpop.f32.mrb[0].mxu0
      %v11579 = vadd.f32 0.0, %v11578
      %v11580 = vpop.f32.mrb[0].mxu0
      %11581 = vmatprep.mubr.f32.mxu0 %v10890
      %11582 = vmatmul.mubr.f32.gmra.mrb[0].mxu0 %v10889
      %v11583 = vpop.f32.mrb[0].mxu0
      %v11584 = vadd.f32 0.0, %v11583
      %v11585 = vpop.f32.mrb[0].mxu0
      %11586 = vmatprep.mubr.f32.mxu0 %v10892
      %11587 = vmatmul.mubr.f32.gmra.mrb[0].mxu0 %v10891
      %v11588 = vpop.f32.mrb[0].mxu0
      %v11589 = vadd.f32 0.0, %v11588
      %v11590 = vpop.f32.mrb[0].mxu0
      %11591 = vmatprep.mubr.f32.mxu0 %v10894
      %11592 = vmatmul.mubr.f32.gmra.mrb[0].mxu0 %v10893
      %v11593 = vpop.f32.mrb[0].mxu0
      %v11594 = vadd.f32 0.0, %v11593
      %v11595 = vpop.f32.mrb[0].mxu0
      %11596 = vmatprep.mubr.f32.mxu0 %v10896
      %11597 = vmatmul.mubr.f32.gmra.mrb[0].mxu0 %v10895
      %v11598 = vpop.f32.mrb[0].mxu0
      %v11599 = vadd.f32 0.0, %v11598
      %v11600 = vpop.f32.mrb[0].mxu0
      %11601 = vdwg.mxu0
      %11602 = vst.msk [vmem:[%s487] sm:$0xff] %vm1084, %v10964
      %11603 = vst.msk [vmem:[%s487 + $0x8] sm:$0xff] %vm1084, %v10969
      %11604 = vst.msk [vmem:[%s487 + $0x10] sm:$0xff] %vm1084, %v10974
      %11605 = vst.msk [vmem:[%s487 + $0x18] sm:$0xff] %vm1084, %v10979
      %11606 = vst.msk [vmem:[%s487 + $0x20] sm:$0xff] %vm1084, %v10984
      %11607 = vst.msk [vmem:[%s487 + $0x28] sm:$0xff] %vm1084, %v10989
      %11608 = vst.msk [vmem:[%s487 + $0x30] sm:$0xff] %vm1084, %v10994
      %11609 = vst.msk [vmem:[%s487 + $0x38] sm:$0xff] %vm1084, %v10999
      %11610 = vst.msk [vmem:[%s487 + $0x40] sm:$0xff] %vm1084, %v11004
      %11611 = vst.msk [vmem:[%s487 + $0x48] sm:$0xff] %vm1084, %v11009
      %11612 = vst.msk [vmem:[%s487 + $0x50] sm:$0xff] %vm1084, %v11014
      %11613 = vst.msk [vmem:[%s487 + $0x58] sm:$0xff] %vm1084, %v11019
      %11614 = vst.msk [vmem:[%s487 + $0x60] sm:$0xff] %vm1084, %v11024
      %11615 = vst.msk [vmem:[%s487 + $0x68] sm:$0xff] %vm1084, %v11029
      %11616 = vst.msk [vmem:[%s487 + $0x70] sm:$0xff] %vm1084, %v11034
      %11617 = vst.msk [vmem:[%s487 + $0x78] sm:$0xff] %vm1084, %v11039
      %11618 = vst.msk [vmem:[%s487 + $0x80] sm:$0xff] %vm1084, %v11044
      %11619 = vst.msk [vmem:[%s487 + $0x88] sm:$0xff] %vm1084, %v11049
      %11620 = vst.msk [vmem:[%s487 + $0x90] sm:$0xff] %vm1084, %v11054
      %11621 = vst.msk [vmem:[%s487 + $0x98] sm:$0xff] %vm1084, %v11059
      %11622 = vst.msk [vmem:[%s487 + $0xa0] sm:$0xff] %vm1084, %v11064
      %11623 = vst.msk [vmem:[%s487 + $0xa8] sm:$0xff] %vm1084, %v11069
      %11624 = vst.msk [vmem:[%s487 + $0xb0] sm:$0xff] %vm1084, %v11074
      %11625 = vst.msk [vmem:[%s487 + $0xb8] sm:$0xff] %vm1084, %v11079
      %11626 = vst.msk [vmem:[%s487 + $0xc0] sm:$0xff] %vm1084, %v11084
      %11627 = vst.msk [vmem:[%s487 + $0xc8] sm:$0xff] %vm1084, %v11089
      %11628 = vst.msk [vmem:[%s487 + $0xd0] sm:$0xff] %vm1084, %v11094
      %11629 = vst.msk [vmem:[%s487 + $0xd8] sm:$0xff] %vm1084, %v11099
      %11630 = vst.msk [vmem:[%s487 + $0xe0] sm:$0xff] %vm1084, %v11104
      %11631 = vst.msk [vmem:[%s487 + $0xe8] sm:$0xff] %vm1084, %v11109
      %11632 = vst.msk [vmem:[%s487 + $0xf0] sm:$0xff] %vm1084, %v11114
      %11633 = vst.msk [vmem:[%s487 + $0xf8] sm:$0xff] %vm1084, %v11119
      %11634 = vst.msk [vmem:[%s487 + $0x100] sm:$0xff] %vm1084, %v11124
      %11635 = vst.msk [vmem:[%s487 + $0x108] sm:$0xff] %vm1084, %v11129
      %11636 = vst.msk [vmem:[%s487 + $0x110] sm:$0xff] %vm1084, %v11134
      %11637 = vst.msk [vmem:[%s487 + $0x118] sm:$0xff] %vm1084, %v11139
      %11638 = vst.msk [vmem:[%s487 + $0x120] sm:$0xff] %vm1084, %v11144
      %11639 = vst.msk [vmem:[%s487 + $0x128] sm:$0xff] %vm1084, %v11149
      %11640 = vst.msk [vmem:[%s487 + $0x130] sm:$0xff] %vm1084, %v11154
      %11641 = vst.msk [vmem:[%s487 + $0x138] sm:$0xff] %vm1084, %v11159
      %11642 = vst.msk [vmem:[%s487 + $0x140] sm:$0xff] %vm1084, %v11164
      %11643 = vst.msk [vmem:[%s487 + $0x148] sm:$0xff] %vm1084, %v11169
      %11644 = vst.msk [vmem:[%s487 + $0x150] sm:$0xff] %vm1084, %v11174
      %11645 = vst.msk [vmem:[%s487 + $0x158] sm:$0xff] %vm1084, %v11179
      %11646 = vst.msk [vmem:[%s487 + $0x160] sm:$0xff] %vm1084, %v11184
      %11647 = vst.msk [vmem:[%s487 + $0x168] sm:$0xff] %vm1084, %v11189
      %11648 = vst.msk [vmem:[%s487 + $0x170] sm:$0xff] %vm1084, %v11194
      %11649 = vst.msk [vmem:[%s487 + $0x178] sm:$0xff] %vm1084, %v11199
      %11650 = vst.msk [vmem:[%s487 + $0x180] sm:$0xff] %vm1084, %v11204
      %11651 = vst.msk [vmem:[%s487 + $0x188] sm:$0xff] %vm1084, %v11209
      %11652 = vst.msk [vmem:[%s487 + $0x190] sm:$0xff] %vm1084, %v11214
      %11653 = vst.msk [vmem:[%s487 + $0x198] sm:$0xff] %vm1084, %v11219
      %11654 = vst.msk [vmem:[%s487 + $0x1a0] sm:$0xff] %vm1084, %v11224
      %11655 = vst.msk [vmem:[%s487 + $0x1a8] sm:$0xff] %vm1084, %v11229
      %11656 = vst.msk [vmem:[%s487 + $0x1b0] sm:$0xff] %vm1084, %v11234
      %11657 = vst.msk [vmem:[%s487 + $0x1b8] sm:$0xff] %vm1084, %v11239
      %11658 = vst.msk [vmem:[%s487 + $0x1c0] sm:$0xff] %vm1084, %v11244
      %11659 = vst.msk [vmem:[%s487 + $0x1c8] sm:$0xff] %vm1084, %v11249
      %11660 = vst.msk [vmem:[%s487 + $0x1d0] sm:$0xff] %vm1084, %v11254
      %11661 = vst.msk [vmem:[%s487 + $0x1d8] sm:$0xff] %vm1084, %v11259
      %11662 = vst.msk [vmem:[%s487 + $0x1e0] sm:$0xff] %vm1084, %v11264
      %11663 = vst.msk [vmem:[%s487 + $0x1e8] sm:$0xff] %vm1084, %v11269
      %11664 = vst.msk [vmem:[%s487 + $0x1f0] sm:$0xff] %vm1084, %v11274
      %11665 = vst.msk [vmem:[%s487 + $0x1f8] sm:$0xff] %vm1084, %v11279
      %11666 = vst.msk [vmem:[%s487 + $0x200] sm:$0xff] %vm1084, %v11284
      %11667 = vst.msk [vmem:[%s487 + $0x208] sm:$0xff] %vm1084, %v11289
      %11668 = vst.msk [vmem:[%s487 + $0x210] sm:$0xff] %vm1084, %v11294
      %11669 = vst.msk [vmem:[%s487 + $0x218] sm:$0xff] %vm1084, %v11299
      %11670 = vst.msk [vmem:[%s487 + $0x220] sm:$0xff] %vm1084, %v11304
      %11671 = vst.msk [vmem:[%s487 + $0x228] sm:$0xff] %vm1084, %v11309
      %11672 = vst.msk [vmem:[%s487 + $0x230] sm:$0xff] %vm1084, %v11314
      %11673 = vst.msk [vmem:[%s487 + $0x238] sm:$0xff] %vm1084, %v11319
      %11674 = vst.msk [vmem:[%s487 + $0x240] sm:$0xff] %vm1084, %v11324
      %11675 = vst.msk [vmem:[%s487 + $0x248] sm:$0xff] %vm1084, %v11329
      %11676 = vst.msk [vmem:[%s487 + $0x250] sm:$0xff] %vm1084, %v11334
      %11677 = vst.msk [vmem:[%s487 + $0x258] sm:$0xff] %vm1084, %v11339
      %11678 = vst.msk [vmem:[%s487 + $0x260] sm:$0xff] %vm1084, %v11344
      %11679 = vst.msk [vmem:[%s487 + $0x268] sm:$0xff] %vm1084, %v11349
      %11680 = vst.msk [vmem:[%s487 + $0x270] sm:$0xff] %vm1084, %v11354
      %11681 = vst.msk [vmem:[%s487 + $0x278] sm:$0xff] %vm1084, %v11359
      %11682 = vst.msk [vmem:[%s487 + $0x280] sm:$0xff] %vm1084, %v11364
      %11683 = vst.msk [vmem:[%s487 + $0x288] sm:$0xff] %vm1084, %v11369
      %11684 = vst.msk [vmem:[%s487 + $0x290] sm:$0xff] %vm1084, %v11374
      %11685 = vst.msk [vmem:[%s487 + $0x298] sm:$0xff] %vm1084, %v11379
      %11686 = vst.msk [vmem:[%s487 + $0x2a0] sm:$0xff] %vm1084, %v11384
      %11687 = vst.msk [vmem:[%s487 + $0x2a8] sm:$0xff] %vm1084, %v11389
      %11688 = vst.msk [vmem:[%s487 + $0x2b0] sm:$0xff] %vm1084, %v11394
      %11689 = vst.msk [vmem:[%s487 + $0x2b8] sm:$0xff] %vm1084, %v11399
      %11690 = vst.msk [vmem:[%s487 + $0x2c0] sm:$0xff] %vm1084, %v11404
      %11691 = vst.msk [vmem:[%s487 + $0x2c8] sm:$0xff] %vm1084, %v11409
      %11692 = vst.msk [vmem:[%s487 + $0x2d0] sm:$0xff] %vm1084, %v11414
      %11693 = vst.msk [vmem:[%s487 + $0x2d8] sm:$0xff] %vm1084, %v11419
      %11694 = vst.msk [vmem:[%s487 + $0x2e0] sm:$0xff] %vm1084, %v11424
      %11695 = vst.msk [vmem:[%s487 + $0x2e8] sm:$0xff] %vm1084, %v11429
      %11696 = vst.msk [vmem:[%s487 + $0x2f0] sm:$0xff] %vm1084, %v11434
      %11697 = vst.msk [vmem:[%s487 + $0x2f8] sm:$0xff] %vm1084, %v11439
      %11698 = vst.msk [vmem:[%s487 + $0x300] sm:$0xff] %vm1084, %v11444
      %11699 = vst.msk [vmem:[%s487 + $0x308] sm:$0xff] %vm1084, %v11449
      %11700 = vst.msk [vmem:[%s487 + $0x310] sm:$0xff] %vm1084, %v11454
      %11701 = vst.msk [vmem:[%s487 + $0x318] sm:$0xff] %vm1084, %v11459
      %11702 = vst.msk [vmem:[%s487 + $0x320] sm:$0xff] %vm1084, %v11464
      %11703 = vst.msk [vmem:[%s487 + $0x328] sm:$0xff] %vm1084, %v11469
      %11704 = vst.msk [vmem:[%s487 + $0x330] sm:$0xff] %vm1084, %v11474
      %11705 = vst.msk [vmem:[%s487 + $0x338] sm:$0xff] %vm1084, %v11479
      %11706 = vst.msk [vmem:[%s487 + $0x340] sm:$0xff] %vm1084, %v11484
      %11707 = vst.msk [vmem:[%s487 + $0x348] sm:$0xff] %vm1084, %v11489
      %11708 = vst.msk [vmem:[%s487 + $0x350] sm:$0xff] %vm1084, %v11494
      %11709 = vst.msk [vmem:[%s487 + $0x358] sm:$0xff] %vm1084, %v11499
      %11710 = vst.msk [vmem:[%s487 + $0x360] sm:$0xff] %vm1084, %v11504
      %11711 = vst.msk [vmem:[%s487 + $0x368] sm:$0xff] %vm1084, %v11509
      %11712 = vst.msk [vmem:[%s487 + $0x370] sm:$0xff] %vm1084, %v11514
      %11713 = vst.msk [vmem:[%s487 + $0x378] sm:$0xff] %vm1084, %v11519
      %11714 = vst.msk [vmem:[%s487 + $0x380] sm:$0xff] %vm1084, %v11524
      %11715 = vst.msk [vmem:[%s487 + $0x388] sm:$0xff] %vm1084, %v11529
      %11716 = vst.msk [vmem:[%s487 + $0x390] sm:$0xff] %vm1084, %v11534
      %11717 = vst.msk [vmem:[%s487 + $0x398] sm:$0xff] %vm1084, %v11539
      %11718 = vst.msk [vmem:[%s487 + $0x3a0] sm:$0xff] %vm1084, %v11544
      %11719 = vst.msk [vmem:[%s487 + $0x3a8] sm:$0xff] %vm1084, %v11549
      %11720 = vst.msk [vmem:[%s487 + $0x3b0] sm:$0xff] %vm1084, %v11554
      %11721 = vst.msk [vmem:[%s487 + $0x3b8] sm:$0xff] %vm1084, %v11559
      %11722 = vst.msk [vmem:[%s487 + $0x3c0] sm:$0xff] %vm1084, %v11564
      %11723 = vst.msk [vmem:[%s487 + $0x3c8] sm:$0xff] %vm1084, %v11569
      %11724 = vst.msk [vmem:[%s487 + $0x3d0] sm:$0xff] %vm1084, %v11574
      %11725 = vst.msk [vmem:[%s487 + $0x3d8] sm:$0xff] %vm1084, %v11579
      %11726 = vst.msk [vmem:[%s487 + $0x3e0] sm:$0xff] %vm1084, %v11584
      %11727 = vst.msk [vmem:[%s487 + $0x3e8] sm:$0xff] %vm1084, %v11589
      %11728 = vst.msk [vmem:[%s487 + $0x3f0] sm:$0xff] %vm1084, %v11594
      %11729 = vst.msk [vmem:[%s487 + $0x3f8] sm:$0xff] %vm1084, %v11599
      %p11730 = scmp.lt.s32.totalorder %s25, 1
      %s11731 = scalar_select %p11730, %s25, 1
      %s11732 = smul.addr %s11731, 128
      %s11733 = smul.addr %s11732, 8
      %s11734 = scalar_lea.vmem %s14, %s11733
      // Predicated region
      $region77: #{corrector_forward.1} parent=75 // pred_check
        %p11735 = pneg %p347
      $region78: #{corrector_forward.1} parent=75 // pred_check_branch
        %11737 = sbr.rel (%p11735) target = $region80
      $region79: #{corrector_forward.1} parent=75 // pred_region
        _
      $region80: #{corrector_forward.1} parent=75 // pred_fallthru
        _
    $region76: #{corrector_forward.1} parent=5 // pred_fallthru
      _
    %p11738 = scmp.le.s32.totalorder 2, %s20
    // Predicated region
    $region81: #{corrector_forward.1} parent=5 // pred_check
      %p11739 = pneg %p11738
    $region82: #{corrector_forward.1} parent=5 // pred_check_branch
      %11741 = sbr.rel (%p11739) target = $region84
    $region83: #{corrector_forward.1} parent=5 // pred_region
      %s11742 = ssub.s32 %s20, 2
      // Predicated region
      $region85: #{corrector_forward.1} parent=83 // pred_check
        %p11743 = pneg %p353
      $region86: #{corrector_forward.1} parent=83 // pred_check_branch
        %11745 = sbr.rel (%p11743) target = $region88
      $region87: #{corrector_forward.1} parent=83 // pred_region
        %p11746 = scmp.lt.s32.totalorder %s26, 1
        %s11747 = scalar_select %p11746, %s26, 1
        %s11748 = smul.addr %s11747, 128
        %s11749 = smul.addr %s11748, 8
        %s11750 = scalar_lea.vmem %s14, %s11749
      $region88: #{corrector_forward.1} parent=83 // pred_fallthru
        _
    $region84: #{corrector_forward.1} parent=5 // pred_fallthru
      _
  $region6: #{corrector_forward.1} parent=0 // loop_footer
    %s24 = sadd.s32 1, %s20
  $region7: #{corrector_forward.1} parent=0 // loop_footer_branch
    %19 = sbr.rel target = $region3
  $region8: #{corrector_forward.1} parent=0 // loop_exit
    _

</llo_original>
